<compile_context>
chip_gen: v6e
topology: v6e:2x2x1
jax: 0.10.0
libtpu: 0.0.40
codegen_flags: <defaults>
</compile_context>

<pallas_src>
import functools
import math

import jax
import jax.numpy as jnp
from jax.experimental import pallas as pl
from jax.experimental.pallas import tpu as pltpu


# ----------------------------- config (small, synthetic) -----------------------------
class cfg:
    STEM_LINEAR = True
    STEM_CNN = False
    STEM_NORMALIZE = True
    STEM_RENORMALIZE = False
    D_FEAT = 64
    CTX_DIM = 32
    CMD_DIM = 32
    WRD_EMB_DIM = 32
    NAME_DIM = 32
    MSG_ITER_NUM = 2
    CMD_INPUT_ACT = "ELU"
    stemDropout = 1.0
    readDropout = 1.0
    memoryDropout = 1.0
    dropout_fc = 0.0


# ----------------------------- in-kernel math helpers -----------------------------
def _l2norm(x, eps2=1e-24):
    # F.normalize(x, dim=-1): x / max(||x||, 1e-12)  (== x * rsqrt(max(sumsq, 1e-24)))
    return x * jax.lax.rsqrt(jnp.maximum(jnp.sum(x * x, axis=-1, keepdims=True), eps2))


def _elu(x):
    # ELU(alpha=1): x if x > 0 else exp(x) - 1  (exp clamped so positives don't overflow)
    return jnp.where(x > 0, x, jnp.exp(jnp.minimum(x, 0.0)) - 1.0)


def _layernorm(x, g, b, eps=1e-5):
    mu = jnp.mean(x, axis=-1, keepdims=True)
    var = jnp.mean(jnp.square(x - mu), axis=-1, keepdims=True)
    return (x - mu) * jax.lax.rsqrt(var + eps) * g + b


def _softmax_last(logits):
    m = jnp.max(logits, axis=-1, keepdims=True)
    p = jnp.exp(logits - m)
    return p / jnp.sum(p, axis=-1, keepdims=True)     # exact recip (matches reference)


def _dot(a, b):
    return jnp.dot(a, b, preferred_element_type=jnp.float32)


def _dot_nt(a, b):
    # a (P, D) . b (Q, D)^T -> (P, Q): contraction on last dims, no explicit transpose.
    return jax.lax.dot_general(a, b, (((1,), (1,)), ((), ())),
                               preferred_element_type=jnp.float32)


# ----------------------------- fused kernel -----------------------------
def _lcgn_fused_kernel(
        # per-sample activations / masks (blocked over the batch grid axis)
        img_ref, qenc_ref, lstm_ref, qmask_ref, encsem_ref, wordsem_ref,
        notpad_ref, name_ref, mask2d_ref, mask2dn_ref, entmask_ref,
        # stem
        initKB_w, initKB_b, initMem,
        # textual command
        qInput_w, qInput_b, qInput_t_w, qInput_t_b, cmd_logit_wT,
        # semantic command (Self_Att, stacked over t)
        seman_wyg, seman_byg, seman_waT, seman_we, seman_be,
        # question graph (packed weights)
        proj_x_loc_w, proj_x_loc_b, proj_x_ctx_w, proj_x_ctx_b,
        qkv_w, qkv_b, cmd_kv_w, cmd_kv_b, mem_update_w, mem_update_b,
        # semantic graph (packed weights)
        proj_x_loc_s_w, proj_x_loc_s_b, proj_x_ctx_s_w, proj_x_ctx_s_b,
        q_s_w, q_s_b, name_kv_w, name_kv_b, cmd_kv_s_w, cmd_kv_s_b,
        mem_update_s_w, mem_update_s_b,
        # layernorm + combine
        ln_q_g, ln_q_b, ln_s_g, ln_s_b, combine_w, combine_b,
        # tiny scalar parameters (SMEM)
        cmd_logit_b, seman_ba, conv_w, conv_b,
        # output
        out_ref,
        *, msg_iters, do_norm, normalize, renormalize, scale):
    f32 = jnp.float32
    NEG = f32(-1e30)

    img = img_ref[0]                       # (N, F)
    N = img.shape[0]
    C = initKB_w.shape[1]
    M = qInput_w.shape[0]

    # ---- loc_ctx_init (STEM_LINEAR path) ----
    if normalize:
        img = _l2norm(img)
    x_loc = _dot(img, initKB_w[...]) + initKB_b[...]                     # (N, C)
    if renormalize:
        x_loc = _l2norm(x_loc)
    x_ctx_q = jnp.broadcast_to(initMem[...], (N, C))
    x_ctx_s = x_ctx_q
    # TODO(synk): stem/read/memory Dropouts and generate_scaled_var_drop_mask are
    # eval-mode identities (keep_prob=1) and therefore omitted.

    lstm = lstm_ref[0]                     # (L, M)
    q_mask = qmask_ref[0]                  # (1, L)
    enc_sem = encsem_ref[0]                # (Ls, W)
    word_sem = wordsem_ref[0]              # (Ls, W)
    not_pad = notpad_ref[0]                # (1, Ls)
    name = name_ref[0]                     # (Ln, Nm)
    mask2d = mask2d_ref[0]                 # (N, N)
    mask2dn = mask2dn_ref[0]               # (N, Ln)
    ent_mask = entmask_ref[0]              # (1, N)

    # qInput + ELU is iteration-independent -> hoist out of the t loop.
    h0 = _elu(_dot(qenc_ref[0], qInput_w[...]) + qInput_b[...])          # (1, M)

    for t in range(msg_iters):             # static unroll (MSG_ITER_NUM = 2)
        # ---- extract_textual_command ----
        q_cmd = _dot(h0, qInput_t_w[t]) + qInput_t_b[t]                  # (1, M)
        logits = _dot_nt(q_cmd * cmd_logit_wT[...], lstm) + cmd_logit_b[0]   # (1, L)
        logits = jnp.where(q_mask > 0.5, NEG, logits)
        cmd = _dot(_softmax_last(logits), lstm)                          # (1, M)

        # ---- propagate_message (question graph) ----
        p_loc = _dot(x_loc, proj_x_loc_w[...]) + proj_x_loc_b[...]
        p_ctx = _dot(x_ctx_q, proj_x_ctx_w[...]) + proj_x_ctx_b[...]
        x_joint = jnp.concatenate([x_loc, x_ctx_q, p_loc * p_ctx], axis=-1)   # (N, 3C)
        qkv = _dot(x_joint, qkv_w[...]) + qkv_b[...]                     # (N, 3C) one MXU pass
        pkpv = _dot(cmd, cmd_kv_w[...]) + cmd_kv_b[...]                  # (1, 2C) [proj_keys|vals]
        k = qkv[:, C:2 * C] * (pkpv[:, :C] * scale)      # fold 1/sqrt(C) into keys
        v = qkv[:, 2 * C:] * pkpv[:, C:]
        s = _dot_nt(qkv[:, :C], k)                                       # (N, N)
        s = jnp.where(mask2d > 0.5, NEG, s)
        msg = _dot(_softmax_last(s), v)                                  # (N, C)
        x_q = (_dot(jnp.concatenate([x_ctx_q, msg], axis=-1), mem_update_w[...])
               + mem_update_b[...])                                      # (N, C)

        # ---- extract_seman_command (Self_Att) ----
        yg = _dot(enc_sem, seman_wyg[t]) + seman_byg[t]                  # (Ls, 2M) [tanh|sigm]
        emb = _l2norm(jnp.tanh(yg[:, :M]) * jax.nn.sigmoid(yg[:, M:]))   # (Ls, M)
        slog = _dot_nt(seman_waT[t], emb) + seman_ba[t]                  # (1, Ls)
        satt = _softmax_last(slog) * not_pad
        satt = satt / jnp.sum(satt, axis=-1, keepdims=True)
        word_p = _dot(word_sem, seman_we[t]) + seman_be[t]               # (Ls, M)
        seman_cmd = _dot(satt, word_p)                                   # (1, M)

        # ---- propagate_seman_message (semantic graph) ----
        p_loc_s = _dot(x_loc, proj_x_loc_s_w[...]) + proj_x_loc_s_b[...]
        p_ctx_s = _dot(x_ctx_s, proj_x_ctx_s_w[...]) + proj_x_ctx_s_b[...]
        x_joint_s = jnp.concatenate([x_loc, x_ctx_s, p_loc_s * p_ctx_s], axis=-1)
        q_s = _dot(x_joint_s, q_s_w[...]) + q_s_b[...]                   # (N, C)
        kv_n = _dot(name, name_kv_w[...]) + name_kv_b[...]               # (Ln, 2C) [keys|vals]
        pkpv_s = _dot(seman_cmd, cmd_kv_s_w[...]) + cmd_kv_s_b[...]      # (1, 2C)
        k_s = kv_n[:, :C] * (pkpv_s[:, :C] * scale)
        v_s = kv_n[:, C:] * pkpv_s[:, C:]
        ss = _dot_nt(q_s, k_s)                                           # (N, Ln)
        ss = jnp.where(mask2dn > 0.5, NEG, ss)
        msg_s = _dot(_softmax_last(ss), v_s)                             # (N, C)
        x_s = (_dot(jnp.concatenate([x_ctx_s, msg_s], axis=-1), mem_update_s_w[...])
               + mem_update_s_b[...])                                    # (N, C)

        # ---- tensor_inter_graph_propagation (+ optional layernorm) ----
        # Replicates the reference exactly: apply_mask1d puts -1e30 at masked entries
        # and the result is used directly as bmm weights (finite only when
        # entity_num == N, as in the fully-populated GQA case).
        msum = jnp.where(ent_mask > 0.5, NEG, f32(1.0))                  # (1, N)
        s1 = _dot(msum, x_q)                                             # (1, C)
        s2 = _dot(msum, x_s)                                             # (1, C)
        # channels [xs*s1, xq*s1, xs*s2, xq*s2] stacked on the sublane axis so a
        # single L2-norm reduce chain covers all four.
        chans = _l2norm(jnp.concatenate(
            [x_s * s1, x_q * s1, x_s * s2, x_q * s2], axis=0))           # (4N, C)
        c0, c1, c2, c3 = chans[:N], chans[N:2 * N], chans[2 * N:3 * N], chans[3 * N:]
        x_ctx_q = (conv_w[0, 0] * c0 + conv_w[0, 1] * c1 + conv_w[0, 2] * c2
                   + conv_w[0, 3] * c3 + conv_b[0])
        x_ctx_s = (conv_w[1, 0] * c0 + conv_w[1, 1] * c1 + conv_w[1, 2] * c2
                   + conv_w[1, 3] * c3 + conv_b[1])
        if do_norm:
            x_ctx_q = _layernorm(x_ctx_q, ln_q_g[...], ln_q_b[...])
            x_ctx_s = _layernorm(x_ctx_s, ln_s_g[...], ln_s_b[...])

    # ---- combine_kb ----
    out = (_dot(jnp.concatenate([x_loc, x_ctx_q, x_ctx_s], axis=-1), combine_w[...])
           + combine_b[...])
    out_ref[0] = out.astype(out_ref.dtype)


# Weight ordering MUST match the kernel signature above.
_VMEM_WEIGHT_KEYS = (
    "initKB_w", "initKB_b", "initMem",
    "qInput_w", "qInput_b", "qInput_t_w", "qInput_t_b", "cmd_logit_wT",
    "seman_wyg", "seman_byg", "seman_waT", "seman_we", "seman_be",
    "proj_x_loc_w", "proj_x_loc_b", "proj_x_ctx_w", "proj_x_ctx_b",
    "qkv_w", "qkv_b", "cmd_kv_w", "cmd_kv_b", "mem_update_w", "mem_update_b",
    "proj_x_loc_s_w", "proj_x_loc_s_b", "proj_x_ctx_s_w", "proj_x_ctx_s_b",
    "q_s_w", "q_s_b", "name_kv_w", "name_kv_b", "cmd_kv_s_w", "cmd_kv_s_b",
    "mem_update_s_w", "mem_update_s_b",
    "ln_q_g", "ln_q_b", "ln_s_g", "ln_s_b", "combine_w", "combine_b",
)
_SMEM_WEIGHT_KEYS = ("cmd_logit_b", "seman_ba", "conv_w", "conv_b")


# ----------------------------- forward wrapper -----------------------------
def lcgn_forward(pp, images, q_encoding, lstm_outputs, word_seman, encode_seman,
                 semanIndices, q_length, entity_num, name_embed, nameLengths,
                 norm=True):
    B, N, _ = images.shape
    L = lstm_outputs.shape[1]
    Ls = encode_seman.shape[1]
    Ln = name_embed.shape[1]
    C, M = cfg.CTX_DIM, cfg.CMD_DIM
    f32 = jnp.float32

    # masks are cheap XLA prep ops; everything else runs inside the fused kernel
    seman_not_pad = (semanIndices != 0).astype(f32).reshape(B, 1, Ls)
    ent_mask = (jnp.arange(N)[None, :] >= entity_num[:, None]).astype(f32)      # (B, N)
    q_mask = (jnp.arange(L)[None, :] >= q_length[:, None]).astype(f32).reshape(B, 1, L)
    name_mask = (jnp.arange(Ln)[None, :] >= nameLengths[:, None]).astype(f32)   # (B, Ln)
    mask2d = jnp.maximum(ent_mask[:, :, None], ent_mask[:, None, :])             # (B, N, N)
    mask2d_name = jnp.maximum(ent_mask[:, :, None], name_mask[:, None, :])       # (B, N, Ln)

    acts = [images, q_encoding.reshape(B, 1, M), lstm_outputs, q_mask,
            encode_seman, word_seman, seman_not_pad, name_embed,
            mask2d, mask2d_name, ent_mask.reshape(B, 1, N)]

    def batch_spec(a):
        inner = tuple(a.shape[1:])
        nd = len(inner)
        return pl.BlockSpec((1,) + inner, lambda b, _nd=nd: (b,) + (0,) * _nd)

    def full_spec(a):
        nd = a.ndim
        return pl.BlockSpec(tuple(a.shape), lambda b, _nd=nd: (0,) * _nd)

    vmem_weights = [pp[k] for k in _VMEM_WEIGHT_KEYS]
    smem_weights = [pp[k] for k in _SMEM_WEIGHT_KEYS]
    smem_spec = pl.BlockSpec(memory_space=pltpu.MemorySpace.SMEM)

    kernel = functools.partial(
        _lcgn_fused_kernel,
        msg_iters=cfg.MSG_ITER_NUM, do_norm=bool(norm),
        normalize=cfg.STEM_NORMALIZE, renormalize=cfg.STEM_RENORMALIZE,
        scale=1.0 / math.sqrt(cfg.CTX_DIM))

    out = pl.pallas_call(
        kernel,
        grid=(B,),
        in_specs=([batch_spec(a) for a in acts]
                  + [full_spec(w) for w in vmem_weights]
                  + [smem_spec] * len(smem_weights)),
        out_specs=pl.BlockSpec((1, N, C), lambda b: (b, 0, 0)),
        out_shape=jax.ShapeDtypeStruct((B, N, C), images.dtype),
        compiler_params=pltpu.CompilerParams(dimension_semantics=("parallel",)),
    )(*acts, *vmem_weights, *smem_weights)
    return out


# ----------------------------- parameter init (pre-packed weights) -----------------------------
def dense_init(key, din, dout):
    kw, kb = jax.random.split(key)
    w = jax.random.normal(kw, (din, dout), jnp.float32) * (1.0 / math.sqrt(din))
    b = jax.random.normal(kb, (dout,), jnp.float32) * 0.01
    return w, b


def init_params(key):
    C, M, W, Nm, F, T = (cfg.CTX_DIM, cfg.CMD_DIM, cfg.WRD_EMB_DIM,
                         cfg.NAME_DIM, cfg.D_FEAT, cfg.MSG_ITER_NUM)
    keys = iter(jax.random.split(key, 96))
    p = {}

    # stem
    w, b = dense_init(next(keys), F, C)
    p["initKB_w"], p["initKB_b"] = w, b.reshape(1, C)
    p["initMem"] = jax.random.normal(next(keys), (1, C), jnp.float32)

    # textual command
    w, b = dense_init(next(keys), M, M)
    p["qInput_w"], p["qInput_b"] = w, b.reshape(1, M)
    ws, bs = [], []
    for _ in range(T):
        w, b = dense_init(next(keys), M, M)
        ws.append(w)
        bs.append(b.reshape(1, M))
    p["qInput_t_w"] = jnp.stack(ws)                     # (T, M, M)
    p["qInput_t_b"] = jnp.stack(bs)                     # (T, 1, M)
    w, b = dense_init(next(keys), M, 1)
    p["cmd_logit_wT"], p["cmd_logit_b"] = w.T, b.reshape(1)       # (1, M), (1,) SMEM

    # semantic command (Self_Att per iteration)
    wyg, byg, waT, ba, we, be = [], [], [], [], [], []
    for _ in range(T):
        wy, by = dense_init(next(keys), W, M)
        wg, bg = dense_init(next(keys), W, M)
        wa, b_a = dense_init(next(keys), M, 1)
        w_e, b_e = dense_init(next(keys), W, M)
        wyg.append(jnp.concatenate([wy, wg], axis=1))             # (W, 2M)
        byg.append(jnp.concatenate([by, bg]).reshape(1, 2 * M))
        waT.append(wa.T)                                          # (1, M)
        ba.append(b_a.reshape(()))
        we.append(w_e)
        be.append(b_e.reshape(1, M))
    p["seman_wyg"] = jnp.stack(wyg)                     # (T, W, 2M)
    p["seman_byg"] = jnp.stack(byg)                     # (T, 1, 2M)
    p["seman_waT"] = jnp.stack(waT)                     # (T, 1, M)
    p["seman_ba"] = jnp.stack(ba)                       # (T,) SMEM
    p["seman_we"] = jnp.stack(we)                       # (T, W, M)
    p["seman_be"] = jnp.stack(be)                       # (T, 1, M)

    # question graph (packed: queries|keys|vals, proj_keys|proj_vals)
    w, b = dense_init(next(keys), C, C)
    p["proj_x_loc_w"], p["proj_x_loc_b"] = w, b.reshape(1, C)
    w, b = dense_init(next(keys), C, C)
    p["proj_x_ctx_w"], p["proj_x_ctx_b"] = w, b.reshape(1, C)
    wq, bq = dense_init(next(keys), 3 * C, C)
    wk, bk = dense_init(next(keys), 3 * C, C)
    wv, bv = dense_init(next(keys), 3 * C, C)
    p["qkv_w"] = jnp.concatenate([wq, wk, wv], axis=1)            # (3C, 3C)
    p["qkv_b"] = jnp.concatenate([bq, bk, bv]).reshape(1, 3 * C)
    wpk, bpk = dense_init(next(keys), M, C)
    wpv, bpv = dense_init(next(keys), M, C)
    p["cmd_kv_w"] = jnp.concatenate([wpk, wpv], axis=1)           # (M, 2C)
    p["cmd_kv_b"] = jnp.concatenate([bpk, bpv]).reshape(1, 2 * C)
    w, b = dense_init(next(keys), 2 * C, C)
    p["mem_update_w"], p["mem_update_b"] = w, b.reshape(1, C)

    # semantic graph (packed: keys_name|vals_name, proj_keys|proj_vals)
    w, b = dense_init(next(keys), C, C)
    p["proj_x_loc_s_w"], p["proj_x_loc_s_b"] = w, b.reshape(1, C)
    w, b = dense_init(next(keys), C, C)
    p["proj_x_ctx_s_w"], p["proj_x_ctx_s_b"] = w, b.reshape(1, C)
    w, b = dense_init(next(keys), 3 * C, C)
    p["q_s_w"], p["q_s_b"] = w, b.reshape(1, C)
    wkn, bkn = dense_init(next(keys), Nm, C)
    wvn, bvn = dense_init(next(keys), Nm, C)
    p["name_kv_w"] = jnp.concatenate([wkn, wvn], axis=1)          # (Nm, 2C)
    p["name_kv_b"] = jnp.concatenate([bkn, bvn]).reshape(1, 2 * C)
    wpk, bpk = dense_init(next(keys), M, C)
    wpv, bpv = dense_init(next(keys), M, C)
    p["cmd_kv_s_w"] = jnp.concatenate([wpk, wpv], axis=1)
    p["cmd_kv_s_b"] = jnp.concatenate([bpk, bpv]).reshape(1, 2 * C)
    w, b = dense_init(next(keys), 2 * C, C)
    p["mem_update_s_w"], p["mem_update_s_b"] = w, b.reshape(1, C)

    # inter-graph 1x1 convs (SMEM scalars), layernorms, combine
    p["conv_w"] = jax.random.normal(next(keys), (2, 4), jnp.float32) * 0.5    # [q; s]
    p["conv_b"] = jnp.zeros((2,), jnp.float32)
    p["ln_q_g"], p["ln_q_b"] = jnp.ones((1, C), jnp.float32), jnp.zeros((1, C), jnp.float32)
    p["ln_s_g"], p["ln_s_b"] = jnp.ones((1, C), jnp.float32), jnp.zeros((1, C), jnp.float32)
    w, b = dense_init(next(keys), 3 * C, C)
    p["combine_w"], p["combine_b"] = w, b.reshape(1, C)
    return p


# ----------------------------- main -----------------------------
if __name__ == "__main__":
    key = jax.random.PRNGKey(0)
    B, N, L, Ls, Ln = 2, 16, 8, 8, 8
    kp, k1, k2, k3, k4, k5, k6 = jax.random.split(key, 7)

    params = init_params(kp)
    images = jax.random.normal(k1, (B, N, cfg.D_FEAT), jnp.float32)
    q_encoding = jax.random.normal(k2, (B, cfg.CMD_DIM), jnp.float32)
    lstm_outputs = jax.random.normal(k3, (B, L, cfg.CMD_DIM), jnp.float32)
    word_seman = jax.random.normal(k4, (B, Ls, cfg.WRD_EMB_DIM), jnp.float32)
    encode_seman = jax.random.normal(k5, (B, Ls, cfg.WRD_EMB_DIM), jnp.float32)
    semanIndices = jnp.array([[3, 5, 2, 7, 0, 0, 0, 0],
                              [1, 4, 6, 2, 9, 3, 0, 0]], jnp.int32)
    q_length = jnp.array([6, 8], jnp.int32)
    # full entity count keeps the (-1e30) inter-graph mask-sum finite, matching the
    # fully-populated GQA case that the reference implementation relies on
    entity_num = jnp.array([N, N], jnp.int32)
    name_embed = jax.random.normal(k6, (B, Ln, cfg.NAME_DIM), jnp.float32)
    nameLengths = jnp.array([5, 8], jnp.int32)

    fwd = jax.jit(lcgn_forward)
    out = fwd(params, images, q_encoding, lstm_outputs, word_seman, encode_seman,
              semanIndices, q_length, entity_num, name_embed, nameLengths)
    jax.block_until_ready(out)
    assert out.shape == (B, N, cfg.CTX_DIM)
    assert bool(jnp.all(jnp.isfinite(out)))
    print("KERNEL_OK")
</pallas_src>

<mosaic_0001>
module attributes {stable_mosaic.version = 11 : i64} {
  func.func @_lcgn_fused_kernel(%arg0: i32, %arg1: memref<1x16x64xf32, #tpu.memory_space<vmem>>, %arg2: memref<1x1x32xf32, #tpu.memory_space<vmem>>, %arg3: memref<1x8x32xf32, #tpu.memory_space<vmem>>, %arg4: memref<1x1x8xf32, #tpu.memory_space<vmem>>, %arg5: memref<1x8x32xf32, #tpu.memory_space<vmem>>, %arg6: memref<1x8x32xf32, #tpu.memory_space<vmem>>, %arg7: memref<1x1x8xf32, #tpu.memory_space<vmem>>, %arg8: memref<1x8x32xf32, #tpu.memory_space<vmem>>, %arg9: memref<1x16x16xf32, #tpu.memory_space<vmem>>, %arg10: memref<1x16x8xf32, #tpu.memory_space<vmem>>, %arg11: memref<1x1x16xf32, #tpu.memory_space<vmem>>, %arg12: memref<64x32xf32, #tpu.memory_space<vmem>>, %arg13: memref<1x32xf32, #tpu.memory_space<vmem>>, %arg14: memref<1x32xf32, #tpu.memory_space<vmem>>, %arg15: memref<32x32xf32, #tpu.memory_space<vmem>>, %arg16: memref<1x32xf32, #tpu.memory_space<vmem>>, %arg17: memref<2x32x32xf32, #tpu.memory_space<vmem>>, %arg18: memref<2x1x32xf32, #tpu.memory_space<vmem>>, %arg19: memref<1x32xf32, #tpu.memory_space<vmem>>, %arg20: memref<2x32x64xf32, #tpu.memory_space<vmem>>, %arg21: memref<2x1x64xf32, #tpu.memory_space<vmem>>, %arg22: memref<2x1x32xf32, #tpu.memory_space<vmem>>, %arg23: memref<2x32x32xf32, #tpu.memory_space<vmem>>, %arg24: memref<2x1x32xf32, #tpu.memory_space<vmem>>, %arg25: memref<32x32xf32, #tpu.memory_space<vmem>>, %arg26: memref<1x32xf32, #tpu.memory_space<vmem>>, %arg27: memref<32x32xf32, #tpu.memory_space<vmem>>, %arg28: memref<1x32xf32, #tpu.memory_space<vmem>>, %arg29: memref<96x96xf32, #tpu.memory_space<vmem>>, %arg30: memref<1x96xf32, #tpu.memory_space<vmem>>, %arg31: memref<32x64xf32, #tpu.memory_space<vmem>>, %arg32: memref<1x64xf32, #tpu.memory_space<vmem>>, %arg33: memref<64x32xf32, #tpu.memory_space<vmem>>, %arg34: memref<1x32xf32, #tpu.memory_space<vmem>>, %arg35: memref<32x32xf32, #tpu.memory_space<vmem>>, %arg36: memref<1x32xf32, #tpu.memory_space<vmem>>, %arg37: memref<32x32xf32, #tpu.memory_space<vmem>>, %arg38: memref<1x32xf32, #tpu.memory_space<vmem>>, %arg39: memref<96x32xf32, #tpu.memory_space<vmem>>, %arg40: memref<1x32xf32, #tpu.memory_space<vmem>>, %arg41: memref<32x64xf32, #tpu.memory_space<vmem>>, %arg42: memref<1x64xf32, #tpu.memory_space<vmem>>, %arg43: memref<32x64xf32, #tpu.memory_space<vmem>>, %arg44: memref<1x64xf32, #tpu.memory_space<vmem>>, %arg45: memref<64x32xf32, #tpu.memory_space<vmem>>, %arg46: memref<1x32xf32, #tpu.memory_space<vmem>>, %arg47: memref<1x32xf32, #tpu.memory_space<vmem>>, %arg48: memref<1x32xf32, #tpu.memory_space<vmem>>, %arg49: memref<1x32xf32, #tpu.memory_space<vmem>>, %arg50: memref<1x32xf32, #tpu.memory_space<vmem>>, %arg51: memref<96x32xf32, #tpu.memory_space<vmem>>, %arg52: memref<1x32xf32, #tpu.memory_space<vmem>>, %arg53: memref<1xf32, #tpu.memory_space<smem>>, %arg54: memref<2xf32, #tpu.memory_space<smem>>, %arg55: memref<2x4xf32, #tpu.memory_space<smem>>, %arg56: memref<2xf32, #tpu.memory_space<smem>>, %arg57: memref<1x16x32xf32, #tpu.memory_space<vmem>>) attributes {dimension_semantics = [#tpu.dimension_semantics<parallel>], iteration_bounds = array<i64: 2>, scalar_prefetch = 0 : i64, scratch_operands = 0 : i64, tpu.core_type = #tpu.core_type<tc>, window_params = [{transform_indices = @transform_0, window_bounds = array<i64: 1, 16, 64>}, {transform_indices = @transform_1, window_bounds = array<i64: 1, 1, 32>}, {transform_indices = @transform_2, window_bounds = array<i64: 1, 8, 32>}, {transform_indices = @transform_3, window_bounds = array<i64: 1, 1, 8>}, {transform_indices = @transform_4, window_bounds = array<i64: 1, 8, 32>}, {transform_indices = @transform_5, window_bounds = array<i64: 1, 8, 32>}, {transform_indices = @transform_6, window_bounds = array<i64: 1, 1, 8>}, {transform_indices = @transform_7, window_bounds = array<i64: 1, 8, 32>}, {transform_indices = @transform_8, window_bounds = array<i64: 1, 16, 16>}, {transform_indices = @transform_9, window_bounds = array<i64: 1, 16, 8>}, {transform_indices = @transform_10, window_bounds = array<i64: 1, 1, 16>}, {pipeline_mode = #tpu.pipeline_mode<synchronous>, transform_indices = @transform_11, window_bounds = array<i64: 64, 32>}, {pipeline_mode = #tpu.pipeline_mode<synchronous>, transform_indices = @transform_12, window_bounds = array<i64: 1, 32>}, {pipeline_mode = #tpu.pipeline_mode<synchronous>, transform_indices = @transform_13, window_bounds = array<i64: 1, 32>}, {pipeline_mode = #tpu.pipeline_mode<synchronous>, transform_indices = @transform_14, window_bounds = array<i64: 32, 32>}, {pipeline_mode = #tpu.pipeline_mode<synchronous>, transform_indices = @transform_15, window_bounds = array<i64: 1, 32>}, {pipeline_mode = #tpu.pipeline_mode<synchronous>, transform_indices = @transform_16, window_bounds = array<i64: 2, 32, 32>}, {pipeline_mode = #tpu.pipeline_mode<synchronous>, transform_indices = @transform_17, window_bounds = array<i64: 2, 1, 32>}, {pipeline_mode = #tpu.pipeline_mode<synchronous>, transform_indices = @transform_18, window_bounds = array<i64: 1, 32>}, {pipeline_mode = #tpu.pipeline_mode<synchronous>, transform_indices = @transform_19, window_bounds = array<i64: 2, 32, 64>}, {pipeline_mode = #tpu.pipeline_mode<synchronous>, transform_indices = @transform_20, window_bounds = array<i64: 2, 1, 64>}, {pipeline_mode = #tpu.pipeline_mode<synchronous>, transform_indices = @transform_21, window_bounds = array<i64: 2, 1, 32>}, {pipeline_mode = #tpu.pipeline_mode<synchronous>, transform_indices = @transform_22, window_bounds = array<i64: 2, 32, 32>}, {pipeline_mode = #tpu.pipeline_mode<synchronous>, transform_indices = @transform_23, window_bounds = array<i64: 2, 1, 32>}, {pipeline_mode = #tpu.pipeline_mode<synchronous>, transform_indices = @transform_24, window_bounds = array<i64: 32, 32>}, {pipeline_mode = #tpu.pipeline_mode<synchronous>, transform_indices = @transform_25, window_bounds = array<i64: 1, 32>}, {pipeline_mode = #tpu.pipeline_mode<synchronous>, transform_indices = @transform_26, window_bounds = array<i64: 32, 32>}, {pipeline_mode = #tpu.pipeline_mode<synchronous>, transform_indices = @transform_27, window_bounds = array<i64: 1, 32>}, {pipeline_mode = #tpu.pipeline_mode<synchronous>, transform_indices = @transform_28, window_bounds = array<i64: 96, 96>}, {pipeline_mode = #tpu.pipeline_mode<synchronous>, transform_indices = @transform_29, window_bounds = array<i64: 1, 96>}, {pipeline_mode = #tpu.pipeline_mode<synchronous>, transform_indices = @transform_30, window_bounds = array<i64: 32, 64>}, {pipeline_mode = #tpu.pipeline_mode<synchronous>, transform_indices = @transform_31, window_bounds = array<i64: 1, 64>}, {pipeline_mode = #tpu.pipeline_mode<synchronous>, transform_indices = @transform_32, window_bounds = array<i64: 64, 32>}, {pipeline_mode = #tpu.pipeline_mode<synchronous>, transform_indices = @transform_33, window_bounds = array<i64: 1, 32>}, {pipeline_mode = #tpu.pipeline_mode<synchronous>, transform_indices = @transform_34, window_bounds = array<i64: 32, 32>}, {pipeline_mode = #tpu.pipeline_mode<synchronous>, transform_indices = @transform_35, window_bounds = array<i64: 1, 32>}, {pipeline_mode = #tpu.pipeline_mode<synchronous>, transform_indices = @transform_36, window_bounds = array<i64: 32, 32>}, {pipeline_mode = #tpu.pipeline_mode<synchronous>, transform_indices = @transform_37, window_bounds = array<i64: 1, 32>}, {pipeline_mode = #tpu.pipeline_mode<synchronous>, transform_indices = @transform_38, window_bounds = array<i64: 96, 32>}, {pipeline_mode = #tpu.pipeline_mode<synchronous>, transform_indices = @transform_39, window_bounds = array<i64: 1, 32>}, {pipeline_mode = #tpu.pipeline_mode<synchronous>, transform_indices = @transform_40, window_bounds = array<i64: 32, 64>}, {pipeline_mode = #tpu.pipeline_mode<synchronous>, transform_indices = @transform_41, window_bounds = array<i64: 1, 64>}, {pipeline_mode = #tpu.pipeline_mode<synchronous>, transform_indices = @transform_42, window_bounds = array<i64: 32, 64>}, {pipeline_mode = #tpu.pipeline_mode<synchronous>, transform_indices = @transform_43, window_bounds = array<i64: 1, 64>}, {pipeline_mode = #tpu.pipeline_mode<synchronous>, transform_indices = @transform_44, window_bounds = array<i64: 64, 32>}, {pipeline_mode = #tpu.pipeline_mode<synchronous>, transform_indices = @transform_45, window_bounds = array<i64: 1, 32>}, {pipeline_mode = #tpu.pipeline_mode<synchronous>, transform_indices = @transform_46, window_bounds = array<i64: 1, 32>}, {pipeline_mode = #tpu.pipeline_mode<synchronous>, transform_indices = @transform_47, window_bounds = array<i64: 1, 32>}, {pipeline_mode = #tpu.pipeline_mode<synchronous>, transform_indices = @transform_48, window_bounds = array<i64: 1, 32>}, {pipeline_mode = #tpu.pipeline_mode<synchronous>, transform_indices = @transform_49, window_bounds = array<i64: 1, 32>}, {pipeline_mode = #tpu.pipeline_mode<synchronous>, transform_indices = @transform_50, window_bounds = array<i64: 96, 32>}, {pipeline_mode = #tpu.pipeline_mode<synchronous>, transform_indices = @transform_51, window_bounds = array<i64: 1, 32>}, {transform_indices = @transform_52, window_bounds = array<i64: 1>}, {transform_indices = @transform_53, window_bounds = array<i64: 2>}, {transform_indices = @transform_54, window_bounds = array<i64: 2, 4>}, {transform_indices = @transform_55, window_bounds = array<i64: 2>}, {transform_indices = @transform_56, window_bounds = array<i64: 1, 16, 32>}]} {
    %c0 = arith.constant 0 : index
    %c0_0 = arith.constant 0 : index
    %c0_1 = arith.constant 0 : index
    %0 = vector.load %arg1[%c0, %c0_0, %c0_1] : memref<1x16x64xf32, #tpu.memory_space<vmem>>, vector<1x16x64xf32>
    %1 = vector.shape_cast %0 : vector<1x16x64xf32> to vector<16x64xf32>
    %2 = arith.mulf %1, %1 : vector<16x64xf32>
    %cst = arith.constant dense<0.000000e+00> : vector<16xf32>
    %3 = vector.multi_reduction <add>, %2, %cst [1] : vector<16x64xf32> to vector<16xf32>
    %4 = vector.shape_cast %3 : vector<16xf32> to vector<16x1xf32>
    %cst_2 = arith.constant 1.000000e-24 : f32
    %5 = vector.broadcast %cst_2 : f32 to vector<16x1xf32>
    %6 = arith.maximumf %4, %5 : vector<16x1xf32>
    %7 = math.rsqrt %6 : vector<16x1xf32>
    %8 = vector.broadcast %7 : vector<16x1xf32> to vector<16x64xf32>
    %9 = arith.mulf %1, %8 : vector<16x64xf32>
    %c0_3 = arith.constant 0 : index
    %c0_4 = arith.constant 0 : index
    %10 = vector.load %arg12[%c0_3, %c0_4] : memref<64x32xf32, #tpu.memory_space<vmem>>, vector<64x32xf32>
    %cst_5 = arith.constant dense<0.000000e+00> : vector<16x32xf32>
    %11 = tpu.matmul %9, %10, %cst_5 {dimension_numbers = #tpu.dot_dimension_numbers<[1], [0], [0], [1], [0, 0, 1, 1], [], []>} : vector<16x64xf32>, vector<64x32xf32>, vector<16x32xf32> -> vector<16x32xf32>
    %c0_6 = arith.constant 0 : index
    %c0_7 = arith.constant 0 : index
    %12 = vector.load %arg13[%c0_6, %c0_7] : memref<1x32xf32, #tpu.memory_space<vmem>>, vector<1x32xf32>
    %13 = vector.broadcast %12 : vector<1x32xf32> to vector<16x32xf32>
    %14 = arith.addf %11, %13 : vector<16x32xf32>
    %c0_8 = arith.constant 0 : index
    %c0_9 = arith.constant 0 : index
    %15 = vector.load %arg14[%c0_8, %c0_9] : memref<1x32xf32, #tpu.memory_space<vmem>>, vector<1x32xf32>
    %16 = vector.shape_cast %15 : vector<1x32xf32> to vector<1x32xf32>
    %17 = vector.broadcast %16 : vector<1x32xf32> to vector<16x32xf32>
    %c0_10 = arith.constant 0 : index
    %c0_11 = arith.constant 0 : index
    %c0_12 = arith.constant 0 : index
    %18 = vector.load %arg3[%c0_10, %c0_11, %c0_12] : memref<1x8x32xf32, #tpu.memory_space<vmem>>, vector<1x8x32xf32>
    %19 = vector.shape_cast %18 : vector<1x8x32xf32> to vector<8x32xf32>
    %c0_13 = arith.constant 0 : index
    %c0_14 = arith.constant 0 : index
    %c0_15 = arith.constant 0 : index
    %20 = vector.load %arg4[%c0_13, %c0_14, %c0_15] : memref<1x1x8xf32, #tpu.memory_space<vmem>>, vector<1x1x8xf32>
    %21 = vector.shape_cast %20 : vector<1x1x8xf32> to vector<1x8xf32>
    %c0_16 = arith.constant 0 : index
    %c0_17 = arith.constant 0 : index
    %c0_18 = arith.constant 0 : index
    %22 = vector.load %arg5[%c0_16, %c0_17, %c0_18] : memref<1x8x32xf32, #tpu.memory_space<vmem>>, vector<1x8x32xf32>
    %23 = vector.shape_cast %22 : vector<1x8x32xf32> to vector<8x32xf32>
    %c0_19 = arith.constant 0 : index
    %c0_20 = arith.constant 0 : index
    %c0_21 = arith.constant 0 : index
    %24 = vector.load %arg6[%c0_19, %c0_20, %c0_21] : memref<1x8x32xf32, #tpu.memory_space<vmem>>, vector<1x8x32xf32>
    %25 = vector.shape_cast %24 : vector<1x8x32xf32> to vector<8x32xf32>
    %c0_22 = arith.constant 0 : index
    %c0_23 = arith.constant 0 : index
    %c0_24 = arith.constant 0 : index
    %26 = vector.load %arg7[%c0_22, %c0_23, %c0_24] : memref<1x1x8xf32, #tpu.memory_space<vmem>>, vector<1x1x8xf32>
    %27 = vector.shape_cast %26 : vector<1x1x8xf32> to vector<1x8xf32>
    %c0_25 = arith.constant 0 : index
    %c0_26 = arith.constant 0 : index
    %c0_27 = arith.constant 0 : index
    %28 = vector.load %arg8[%c0_25, %c0_26, %c0_27] : memref<1x8x32xf32, #tpu.memory_space<vmem>>, vector<1x8x32xf32>
    %29 = vector.shape_cast %28 : vector<1x8x32xf32> to vector<8x32xf32>
    %c0_28 = arith.constant 0 : index
    %c0_29 = arith.constant 0 : index
    %c0_30 = arith.constant 0 : index
    %30 = vector.load %arg9[%c0_28, %c0_29, %c0_30] : memref<1x16x16xf32, #tpu.memory_space<vmem>>, vector<1x16x16xf32>
    %31 = vector.shape_cast %30 : vector<1x16x16xf32> to vector<16x16xf32>
    %c0_31 = arith.constant 0 : index
    %c0_32 = arith.constant 0 : index
    %c0_33 = arith.constant 0 : index
    %32 = vector.load %arg10[%c0_31, %c0_32, %c0_33] : memref<1x16x8xf32, #tpu.memory_space<vmem>>, vector<1x16x8xf32>
    %33 = vector.shape_cast %32 : vector<1x16x8xf32> to vector<16x8xf32>
    %c0_34 = arith.constant 0 : index
    %c0_35 = arith.constant 0 : index
    %c0_36 = arith.constant 0 : index
    %34 = vector.load %arg11[%c0_34, %c0_35, %c0_36] : memref<1x1x16xf32, #tpu.memory_space<vmem>>, vector<1x1x16xf32>
    %35 = vector.shape_cast %34 : vector<1x1x16xf32> to vector<1x16xf32>
    %c0_37 = arith.constant 0 : index
    %c0_38 = arith.constant 0 : index
    %c0_39 = arith.constant 0 : index
    %36 = vector.load %arg2[%c0_37, %c0_38, %c0_39] : memref<1x1x32xf32, #tpu.memory_space<vmem>>, vector<1x1x32xf32>
    %37 = vector.shape_cast %36 : vector<1x1x32xf32> to vector<1x32xf32>
    %c0_40 = arith.constant 0 : index
    %c0_41 = arith.constant 0 : index
    %38 = vector.load %arg15[%c0_40, %c0_41] : memref<32x32xf32, #tpu.memory_space<vmem>>, vector<32x32xf32>
    %cst_42 = arith.constant dense<0.000000e+00> : vector<1x32xf32>
    %39 = tpu.matmul %37, %38, %cst_42 {dimension_numbers = #tpu.dot_dimension_numbers<[1], [0], [0], [1], [0, 0, 1, 1], [], []>} : vector<1x32xf32>, vector<32x32xf32>, vector<1x32xf32> -> vector<1x32xf32>
    %c0_43 = arith.constant 0 : index
    %c0_44 = arith.constant 0 : index
    %40 = vector.load %arg16[%c0_43, %c0_44] : memref<1x32xf32, #tpu.memory_space<vmem>>, vector<1x32xf32>
    %41 = arith.addf %39, %40 : vector<1x32xf32>
    %cst_45 = arith.constant 0.000000e+00 : f32
    %42 = vector.broadcast %cst_45 : f32 to vector<1x32xf32>
    %43 = arith.cmpf ogt, %41, %42 : vector<1x32xf32>
    %cst_46 = arith.constant 0.000000e+00 : f32
    %44 = vector.broadcast %cst_46 : f32 to vector<1x32xf32>
    %45 = arith.minimumf %41, %44 : vector<1x32xf32>
    %46 = math.exp %45 : vector<1x32xf32>
    %cst_47 = arith.constant 1.000000e+00 : f32
    %47 = vector.broadcast %cst_47 : f32 to vector<1x32xf32>
    %48 = arith.subf %46, %47 : vector<1x32xf32>
    %49 = arith.select %43, %41, %48 : vector<1x32xi1>, vector<1x32xf32>
    %c0_48 = arith.constant 0 : index
    %c0_49 = arith.constant 0 : index
    %c0_50 = arith.constant 0 : index
    %50 = vector.load %arg17[%c0_48, %c0_49, %c0_50] : memref<2x32x32xf32, #tpu.memory_space<vmem>>, vector<1x32x32xf32>
    %51 = vector.shape_cast %50 : vector<1x32x32xf32> to vector<32x32xf32>
    %cst_51 = arith.constant dense<0.000000e+00> : vector<1x32xf32>
    %52 = tpu.matmul %49, %51, %cst_51 {dimension_numbers = #tpu.dot_dimension_numbers<[1], [0], [0], [1], [0, 0, 1, 1], [], []>} : vector<1x32xf32>, vector<32x32xf32>, vector<1x32xf32> -> vector<1x32xf32>
    %c0_52 = arith.constant 0 : index
    %c0_53 = arith.constant 0 : index
    %c0_54 = arith.constant 0 : index
    %53 = vector.load %arg18[%c0_52, %c0_53, %c0_54] : memref<2x1x32xf32, #tpu.memory_space<vmem>>, vector<1x1x32xf32>
    %54 = vector.shape_cast %53 : vector<1x1x32xf32> to vector<1x32xf32>
    %55 = arith.addf %52, %54 : vector<1x32xf32>
    %c0_55 = arith.constant 0 : index
    %c0_56 = arith.constant 0 : index
    %56 = vector.load %arg19[%c0_55, %c0_56] : memref<1x32xf32, #tpu.memory_space<vmem>>, vector<1x32xf32>
    %57 = arith.mulf %55, %56 : vector<1x32xf32>
    %cst_57 = arith.constant dense<0.000000e+00> : vector<1x8xf32>
    %58 = tpu.matmul %57, %19, %cst_57 {dimension_numbers = #tpu.dot_dimension_numbers<[1], [1], [0], [0], [0, 0, 1, 0], [], []>} : vector<1x32xf32>, vector<8x32xf32>, vector<1x8xf32> -> vector<1x8xf32>
    %c0_58 = arith.constant 0 : index
    %59 = memref.load %arg53[%c0_58] : memref<1xf32, #tpu.memory_space<smem>>
    %60 = vector.broadcast %59 : f32 to vector<1x8xf32>
    %61 = arith.addf %58, %60 : vector<1x8xf32>
    %cst_59 = arith.constant 5.000000e-01 : f32
    %62 = vector.broadcast %cst_59 : f32 to vector<1x8xf32>
    %63 = arith.cmpf ogt, %21, %62 : vector<1x8xf32>
    %cst_60 = arith.constant -1.000000e+30 : f32
    %64 = vector.broadcast %cst_60 : f32 to vector<1x8xf32>
    %65 = arith.select %63, %64, %61 : vector<1x8xi1>, vector<1x8xf32>
    %cst_61 = arith.constant dense<0xFF800000> : vector<1xf32>
    %66 = vector.multi_reduction <maximumf>, %65, %cst_61 [1] : vector<1x8xf32> to vector<1xf32>
    %67 = vector.shape_cast %66 : vector<1xf32> to vector<1x1xf32>
    %68 = vector.broadcast %67 : vector<1x1xf32> to vector<1x8xf32>
    %69 = arith.subf %65, %68 : vector<1x8xf32>
    %70 = math.exp %69 : vector<1x8xf32>
    %cst_62 = arith.constant dense<0.000000e+00> : vector<1xf32>
    %71 = vector.multi_reduction <add>, %70, %cst_62 [1] : vector<1x8xf32> to vector<1xf32>
    %72 = vector.shape_cast %71 : vector<1xf32> to vector<1x1xf32>
    %73 = vector.broadcast %72 : vector<1x1xf32> to vector<1x8xf32>
    %74 = arith.divf %70, %73 : vector<1x8xf32>
    %cst_63 = arith.constant dense<0.000000e+00> : vector<1x32xf32>
    %75 = tpu.matmul %74, %19, %cst_63 {dimension_numbers = #tpu.dot_dimension_numbers<[1], [0], [0], [1], [0, 0, 1, 1], [], []>} : vector<1x8xf32>, vector<8x32xf32>, vector<1x32xf32> -> vector<1x32xf32>
    %c0_64 = arith.constant 0 : index
    %c0_65 = arith.constant 0 : index
    %76 = vector.load %arg25[%c0_64, %c0_65] : memref<32x32xf32, #tpu.memory_space<vmem>>, vector<32x32xf32>
    %cst_66 = arith.constant dense<0.000000e+00> : vector<16x32xf32>
    %77 = tpu.matmul %14, %76, %cst_66 {dimension_numbers = #tpu.dot_dimension_numbers<[1], [0], [0], [1], [0, 0, 1, 1], [], []>} : vector<16x32xf32>, vector<32x32xf32>, vector<16x32xf32> -> vector<16x32xf32>
    %c0_67 = arith.constant 0 : index
    %c0_68 = arith.constant 0 : index
    %78 = vector.load %arg26[%c0_67, %c0_68] : memref<1x32xf32, #tpu.memory_space<vmem>>, vector<1x32xf32>
    %79 = vector.broadcast %78 : vector<1x32xf32> to vector<16x32xf32>
    %80 = arith.addf %77, %79 : vector<16x32xf32>
    %c0_69 = arith.constant 0 : index
    %c0_70 = arith.constant 0 : index
    %81 = vector.load %arg27[%c0_69, %c0_70] : memref<32x32xf32, #tpu.memory_space<vmem>>, vector<32x32xf32>
    %cst_71 = arith.constant dense<0.000000e+00> : vector<16x32xf32>
    %82 = tpu.matmul %17, %81, %cst_71 {dimension_numbers = #tpu.dot_dimension_numbers<[1], [0], [0], [1], [0, 0, 1, 1], [], []>} : vector<16x32xf32>, vector<32x32xf32>, vector<16x32xf32> -> vector<16x32xf32>
    %c0_72 = arith.constant 0 : index
    %c0_73 = arith.constant 0 : index
    %83 = vector.load %arg28[%c0_72, %c0_73] : memref<1x32xf32, #tpu.memory_space<vmem>>, vector<1x32xf32>
    %84 = vector.broadcast %83 : vector<1x32xf32> to vector<16x32xf32>
    %85 = arith.addf %82, %84 : vector<16x32xf32>
    %86 = arith.mulf %80, %85 : vector<16x32xf32>
    %87 = tpu.concatenate %14, %17, %86 in 1 : vector<16x32xf32>, vector<16x32xf32>, vector<16x32xf32> -> vector<16x96xf32>
    %c0_74 = arith.constant 0 : index
    %c0_75 = arith.constant 0 : index
    %88 = vector.load %arg29[%c0_74, %c0_75] : memref<96x96xf32, #tpu.memory_space<vmem>>, vector<96x96xf32>
    %cst_76 = arith.constant dense<0.000000e+00> : vector<16x96xf32>
    %89 = tpu.matmul %87, %88, %cst_76 {dimension_numbers = #tpu.dot_dimension_numbers<[1], [0], [0], [1], [0, 0, 1, 1], [], []>} : vector<16x96xf32>, vector<96x96xf32>, vector<16x96xf32> -> vector<16x96xf32>
    %c0_77 = arith.constant 0 : index
    %c0_78 = arith.constant 0 : index
    %90 = vector.load %arg30[%c0_77, %c0_78] : memref<1x96xf32, #tpu.memory_space<vmem>>, vector<1x96xf32>
    %91 = vector.broadcast %90 : vector<1x96xf32> to vector<16x96xf32>
    %92 = arith.addf %89, %91 : vector<16x96xf32>
    %c0_79 = arith.constant 0 : index
    %c0_80 = arith.constant 0 : index
    %93 = vector.load %arg31[%c0_79, %c0_80] : memref<32x64xf32, #tpu.memory_space<vmem>>, vector<32x64xf32>
    %cst_81 = arith.constant dense<0.000000e+00> : vector<1x64xf32>
    %94 = tpu.matmul %75, %93, %cst_81 {dimension_numbers = #tpu.dot_dimension_numbers<[1], [0], [0], [1], [0, 0, 1, 1], [], []>} : vector<1x32xf32>, vector<32x64xf32>, vector<1x64xf32> -> vector<1x64xf32>
    %c0_82 = arith.constant 0 : index
    %c0_83 = arith.constant 0 : index
    %95 = vector.load %arg32[%c0_82, %c0_83] : memref<1x64xf32, #tpu.memory_space<vmem>>, vector<1x64xf32>
    %96 = arith.addf %94, %95 : vector<1x64xf32>
    %97 = vector.extract_strided_slice %92 {offsets = [0, 32], sizes = [16, 32], strides = [1, 1]} : vector<16x96xf32> to vector<16x32xf32>
    %98 = vector.extract_strided_slice %96 {offsets = [0, 0], sizes = [1, 32], strides = [1, 1]} : vector<1x64xf32> to vector<1x32xf32>
    %cst_84 = arith.constant 0.176776692 : f32
    %99 = vector.broadcast %cst_84 : f32 to vector<1x32xf32>
    %100 = arith.mulf %98, %99 : vector<1x32xf32>
    %101 = vector.broadcast %100 : vector<1x32xf32> to vector<16x32xf32>
    %102 = arith.mulf %97, %101 : vector<16x32xf32>
    %103 = vector.extract_strided_slice %92 {offsets = [0, 64], sizes = [16, 32], strides = [1, 1]} : vector<16x96xf32> to vector<16x32xf32>
    %104 = vector.extract_strided_slice %96 {offsets = [0, 32], sizes = [1, 32], strides = [1, 1]} : vector<1x64xf32> to vector<1x32xf32>
    %105 = vector.broadcast %104 : vector<1x32xf32> to vector<16x32xf32>
    %106 = arith.mulf %103, %105 : vector<16x32xf32>
    %107 = vector.extract_strided_slice %92 {offsets = [0, 0], sizes = [16, 32], strides = [1, 1]} : vector<16x96xf32> to vector<16x32xf32>
    %cst_85 = arith.constant dense<0.000000e+00> : vector<16x16xf32>
    %108 = tpu.matmul %107, %102, %cst_85 {dimension_numbers = #tpu.dot_dimension_numbers<[1], [1], [0], [0], [0, 0, 1, 0], [], []>} : vector<16x32xf32>, vector<16x32xf32>, vector<16x16xf32> -> vector<16x16xf32>
    %cst_86 = arith.constant 5.000000e-01 : f32
    %109 = vector.broadcast %cst_86 : f32 to vector<16x16xf32>
    %110 = arith.cmpf ogt, %31, %109 : vector<16x16xf32>
    %cst_87 = arith.constant -1.000000e+30 : f32
    %111 = vector.broadcast %cst_87 : f32 to vector<16x16xf32>
    %112 = arith.select %110, %111, %108 : vector<16x16xi1>, vector<16x16xf32>
    %cst_88 = arith.constant dense<0xFF800000> : vector<16xf32>
    %113 = vector.multi_reduction <maximumf>, %112, %cst_88 [1] : vector<16x16xf32> to vector<16xf32>
    %114 = vector.shape_cast %113 : vector<16xf32> to vector<16x1xf32>
    %115 = vector.broadcast %114 : vector<16x1xf32> to vector<16x16xf32>
    %116 = arith.subf %112, %115 : vector<16x16xf32>
    %117 = math.exp %116 : vector<16x16xf32>
    %cst_89 = arith.constant dense<0.000000e+00> : vector<16xf32>
    %118 = vector.multi_reduction <add>, %117, %cst_89 [1] : vector<16x16xf32> to vector<16xf32>
    %119 = vector.shape_cast %118 : vector<16xf32> to vector<16x1xf32>
    %120 = vector.broadcast %119 : vector<16x1xf32> to vector<16x16xf32>
    %121 = arith.divf %117, %120 : vector<16x16xf32>
    %cst_90 = arith.constant dense<0.000000e+00> : vector<16x32xf32>
    %122 = tpu.matmul %121, %106, %cst_90 {dimension_numbers = #tpu.dot_dimension_numbers<[1], [0], [0], [1], [0, 0, 1, 1], [], []>} : vector<16x16xf32>, vector<16x32xf32>, vector<16x32xf32> -> vector<16x32xf32>
    %123 = tpu.concatenate %17, %122 in 1 : vector<16x32xf32>, vector<16x32xf32> -> vector<16x64xf32>
    %c0_91 = arith.constant 0 : index
    %c0_92 = arith.constant 0 : index
    %124 = vector.load %arg33[%c0_91, %c0_92] : memref<64x32xf32, #tpu.memory_space<vmem>>, vector<64x32xf32>
    %cst_93 = arith.constant dense<0.000000e+00> : vector<16x32xf32>
    %125 = tpu.matmul %123, %124, %cst_93 {dimension_numbers = #tpu.dot_dimension_numbers<[1], [0], [0], [1], [0, 0, 1, 1], [], []>} : vector<16x64xf32>, vector<64x32xf32>, vector<16x32xf32> -> vector<16x32xf32>
    %c0_94 = arith.constant 0 : index
    %c0_95 = arith.constant 0 : index
    %126 = vector.load %arg34[%c0_94, %c0_95] : memref<1x32xf32, #tpu.memory_space<vmem>>, vector<1x32xf32>
    %127 = vector.broadcast %126 : vector<1x32xf32> to vector<16x32xf32>
    %128 = arith.addf %125, %127 : vector<16x32xf32>
    %c0_96 = arith.constant 0 : index
    %c0_97 = arith.constant 0 : index
    %c0_98 = arith.constant 0 : index
    %129 = vector.load %arg20[%c0_96, %c0_97, %c0_98] : memref<2x32x64xf32, #tpu.memory_space<vmem>>, vector<1x32x64xf32>
    %130 = vector.shape_cast %129 : vector<1x32x64xf32> to vector<32x64xf32>
    %cst_99 = arith.constant dense<0.000000e+00> : vector<8x64xf32>
    %131 = tpu.matmul %23, %130, %cst_99 {dimension_numbers = #tpu.dot_dimension_numbers<[1], [0], [0], [1], [0, 0, 1, 1], [], []>} : vector<8x32xf32>, vector<32x64xf32>, vector<8x64xf32> -> vector<8x64xf32>
    %c0_100 = arith.constant 0 : index
    %c0_101 = arith.constant 0 : index
    %c0_102 = arith.constant 0 : index
    %132 = vector.load %arg21[%c0_100, %c0_101, %c0_102] : memref<2x1x64xf32, #tpu.memory_space<vmem>>, vector<1x1x64xf32>
    %133 = vector.shape_cast %132 : vector<1x1x64xf32> to vector<1x64xf32>
    %134 = vector.broadcast %133 : vector<1x64xf32> to vector<8x64xf32>
    %135 = arith.addf %131, %134 : vector<8x64xf32>
    %136 = vector.extract_strided_slice %135 {offsets = [0, 0], sizes = [8, 32], strides = [1, 1]} : vector<8x64xf32> to vector<8x32xf32>
    %137 = math.tanh %136 : vector<8x32xf32>
    %138 = vector.extract_strided_slice %135 {offsets = [0, 32], sizes = [8, 32], strides = [1, 1]} : vector<8x64xf32> to vector<8x32xf32>
    %139 = arith.negf %138 : vector<8x32xf32>
    %140 = math.exp %139 : vector<8x32xf32>
    %cst_103 = arith.constant 1.000000e+00 : f32
    %141 = vector.broadcast %cst_103 : f32 to vector<8x32xf32>
    %142 = arith.addf %141, %140 : vector<8x32xf32>
    %143 = arith.divf %141, %142 : vector<8x32xf32>
    %144 = arith.mulf %137, %143 : vector<8x32xf32>
    %145 = arith.mulf %144, %144 : vector<8x32xf32>
    %cst_104 = arith.constant dense<0.000000e+00> : vector<8xf32>
    %146 = vector.multi_reduction <add>, %145, %cst_104 [1] : vector<8x32xf32> to vector<8xf32>
    %147 = vector.shape_cast %146 : vector<8xf32> to vector<8x1xf32>
    %cst_105 = arith.constant 1.000000e-24 : f32
    %148 = vector.broadcast %cst_105 : f32 to vector<8x1xf32>
    %149 = arith.maximumf %147, %148 : vector<8x1xf32>
    %150 = math.rsqrt %149 : vector<8x1xf32>
    %151 = vector.broadcast %150 : vector<8x1xf32> to vector<8x32xf32>
    %152 = arith.mulf %144, %151 : vector<8x32xf32>
    %c0_106 = arith.constant 0 : index
    %c0_107 = arith.constant 0 : index
    %c0_108 = arith.constant 0 : index
    %153 = vector.load %arg22[%c0_106, %c0_107, %c0_108] : memref<2x1x32xf32, #tpu.memory_space<vmem>>, vector<1x1x32xf32>
    %154 = vector.shape_cast %153 : vector<1x1x32xf32> to vector<1x32xf32>
    %cst_109 = arith.constant dense<0.000000e+00> : vector<1x8xf32>
    %155 = tpu.matmul %154, %152, %cst_109 {dimension_numbers = #tpu.dot_dimension_numbers<[1], [1], [0], [0], [0, 0, 1, 0], [], []>} : vector<1x32xf32>, vector<8x32xf32>, vector<1x8xf32> -> vector<1x8xf32>
    %c0_110 = arith.constant 0 : index
    %156 = memref.load %arg54[%c0_110] : memref<2xf32, #tpu.memory_space<smem>>
    %157 = vector.broadcast %156 : f32 to vector<1x8xf32>
    %158 = arith.addf %155, %157 : vector<1x8xf32>
    %cst_111 = arith.constant dense<0xFF800000> : vector<1xf32>
    %159 = vector.multi_reduction <maximumf>, %158, %cst_111 [1] : vector<1x8xf32> to vector<1xf32>
    %160 = vector.shape_cast %159 : vector<1xf32> to vector<1x1xf32>
    %161 = vector.broadcast %160 : vector<1x1xf32> to vector<1x8xf32>
    %162 = arith.subf %158, %161 : vector<1x8xf32>
    %163 = math.exp %162 : vector<1x8xf32>
    %cst_112 = arith.constant dense<0.000000e+00> : vector<1xf32>
    %164 = vector.multi_reduction <add>, %163, %cst_112 [1] : vector<1x8xf32> to vector<1xf32>
    %165 = vector.shape_cast %164 : vector<1xf32> to vector<1x1xf32>
    %166 = vector.broadcast %165 : vector<1x1xf32> to vector<1x8xf32>
    %167 = arith.divf %163, %166 : vector<1x8xf32>
    %168 = arith.mulf %167, %27 : vector<1x8xf32>
    %cst_113 = arith.constant dense<0.000000e+00> : vector<1xf32>
    %169 = vector.multi_reduction <add>, %168, %cst_113 [1] : vector<1x8xf32> to vector<1xf32>
    %170 = vector.shape_cast %169 : vector<1xf32> to vector<1x1xf32>
    %171 = vector.broadcast %170 : vector<1x1xf32> to vector<1x8xf32>
    %172 = arith.divf %168, %171 : vector<1x8xf32>
    %c0_114 = arith.constant 0 : index
    %c0_115 = arith.constant 0 : index
    %c0_116 = arith.constant 0 : index
    %173 = vector.load %arg23[%c0_114, %c0_115, %c0_116] : memref<2x32x32xf32, #tpu.memory_space<vmem>>, vector<1x32x32xf32>
    %174 = vector.shape_cast %173 : vector<1x32x32xf32> to vector<32x32xf32>
    %cst_117 = arith.constant dense<0.000000e+00> : vector<8x32xf32>
    %175 = tpu.matmul %25, %174, %cst_117 {dimension_numbers = #tpu.dot_dimension_numbers<[1], [0], [0], [1], [0, 0, 1, 1], [], []>} : vector<8x32xf32>, vector<32x32xf32>, vector<8x32xf32> -> vector<8x32xf32>
    %c0_118 = arith.constant 0 : index
    %c0_119 = arith.constant 0 : index
    %c0_120 = arith.constant 0 : index
    %176 = vector.load %arg24[%c0_118, %c0_119, %c0_120] : memref<2x1x32xf32, #tpu.memory_space<vmem>>, vector<1x1x32xf32>
    %177 = vector.shape_cast %176 : vector<1x1x32xf32> to vector<1x32xf32>
    %178 = vector.broadcast %177 : vector<1x32xf32> to vector<8x32xf32>
    %179 = arith.addf %175, %178 : vector<8x32xf32>
    %cst_121 = arith.constant dense<0.000000e+00> : vector<1x32xf32>
    %180 = tpu.matmul %172, %179, %cst_121 {dimension_numbers = #tpu.dot_dimension_numbers<[1], [0], [0], [1], [0, 0, 1, 1], [], []>} : vector<1x8xf32>, vector<8x32xf32>, vector<1x32xf32> -> vector<1x32xf32>
    %c0_122 = arith.constant 0 : index
    %c0_123 = arith.constant 0 : index
    %181 = vector.load %arg35[%c0_122, %c0_123] : memref<32x32xf32, #tpu.memory_space<vmem>>, vector<32x32xf32>
    %cst_124 = arith.constant dense<0.000000e+00> : vector<16x32xf32>
    %182 = tpu.matmul %14, %181, %cst_124 {dimension_numbers = #tpu.dot_dimension_numbers<[1], [0], [0], [1], [0, 0, 1, 1], [], []>} : vector<16x32xf32>, vector<32x32xf32>, vector<16x32xf32> -> vector<16x32xf32>
    %c0_125 = arith.constant 0 : index
    %c0_126 = arith.constant 0 : index
    %183 = vector.load %arg36[%c0_125, %c0_126] : memref<1x32xf32, #tpu.memory_space<vmem>>, vector<1x32xf32>
    %184 = vector.broadcast %183 : vector<1x32xf32> to vector<16x32xf32>
    %185 = arith.addf %182, %184 : vector<16x32xf32>
    %c0_127 = arith.constant 0 : index
    %c0_128 = arith.constant 0 : index
    %186 = vector.load %arg37[%c0_127, %c0_128] : memref<32x32xf32, #tpu.memory_space<vmem>>, vector<32x32xf32>
    %cst_129 = arith.constant dense<0.000000e+00> : vector<16x32xf32>
    %187 = tpu.matmul %17, %186, %cst_129 {dimension_numbers = #tpu.dot_dimension_numbers<[1], [0], [0], [1], [0, 0, 1, 1], [], []>} : vector<16x32xf32>, vector<32x32xf32>, vector<16x32xf32> -> vector<16x32xf32>
    %c0_130 = arith.constant 0 : index
    %c0_131 = arith.constant 0 : index
    %188 = vector.load %arg38[%c0_130, %c0_131] : memref<1x32xf32, #tpu.memory_space<vmem>>, vector<1x32xf32>
    %189 = vector.broadcast %188 : vector<1x32xf32> to vector<16x32xf32>
    %190 = arith.addf %187, %189 : vector<16x32xf32>
    %191 = arith.mulf %185, %190 : vector<16x32xf32>
    %192 = tpu.concatenate %14, %17, %191 in 1 : vector<16x32xf32>, vector<16x32xf32>, vector<16x32xf32> -> vector<16x96xf32>
    %c0_132 = arith.constant 0 : index
    %c0_133 = arith.constant 0 : index
    %193 = vector.load %arg39[%c0_132, %c0_133] : memref<96x32xf32, #tpu.memory_space<vmem>>, vector<96x32xf32>
    %cst_134 = arith.constant dense<0.000000e+00> : vector<16x32xf32>
    %194 = tpu.matmul %192, %193, %cst_134 {dimension_numbers = #tpu.dot_dimension_numbers<[1], [0], [0], [1], [0, 0, 1, 1], [], []>} : vector<16x96xf32>, vector<96x32xf32>, vector<16x32xf32> -> vector<16x32xf32>
    %c0_135 = arith.constant 0 : index
    %c0_136 = arith.constant 0 : index
    %195 = vector.load %arg40[%c0_135, %c0_136] : memref<1x32xf32, #tpu.memory_space<vmem>>, vector<1x32xf32>
    %196 = vector.broadcast %195 : vector<1x32xf32> to vector<16x32xf32>
    %197 = arith.addf %194, %196 : vector<16x32xf32>
    %c0_137 = arith.constant 0 : index
    %c0_138 = arith.constant 0 : index
    %198 = vector.load %arg41[%c0_137, %c0_138] : memref<32x64xf32, #tpu.memory_space<vmem>>, vector<32x64xf32>
    %cst_139 = arith.constant dense<0.000000e+00> : vector<8x64xf32>
    %199 = tpu.matmul %29, %198, %cst_139 {dimension_numbers = #tpu.dot_dimension_numbers<[1], [0], [0], [1], [0, 0, 1, 1], [], []>} : vector<8x32xf32>, vector<32x64xf32>, vector<8x64xf32> -> vector<8x64xf32>
    %c0_140 = arith.constant 0 : index
    %c0_141 = arith.constant 0 : index
    %200 = vector.load %arg42[%c0_140, %c0_141] : memref<1x64xf32, #tpu.memory_space<vmem>>, vector<1x64xf32>
    %201 = vector.broadcast %200 : vector<1x64xf32> to vector<8x64xf32>
    %202 = arith.addf %199, %201 : vector<8x64xf32>
    %c0_142 = arith.constant 0 : index
    %c0_143 = arith.constant 0 : index
    %203 = vector.load %arg43[%c0_142, %c0_143] : memref<32x64xf32, #tpu.memory_space<vmem>>, vector<32x64xf32>
    %cst_144 = arith.constant dense<0.000000e+00> : vector<1x64xf32>
    %204 = tpu.matmul %180, %203, %cst_144 {dimension_numbers = #tpu.dot_dimension_numbers<[1], [0], [0], [1], [0, 0, 1, 1], [], []>} : vector<1x32xf32>, vector<32x64xf32>, vector<1x64xf32> -> vector<1x64xf32>
    %c0_145 = arith.constant 0 : index
    %c0_146 = arith.constant 0 : index
    %205 = vector.load %arg44[%c0_145, %c0_146] : memref<1x64xf32, #tpu.memory_space<vmem>>, vector<1x64xf32>
    %206 = arith.addf %204, %205 : vector<1x64xf32>
    %207 = vector.extract_strided_slice %202 {offsets = [0, 0], sizes = [8, 32], strides = [1, 1]} : vector<8x64xf32> to vector<8x32xf32>
    %208 = vector.extract_strided_slice %206 {offsets = [0, 0], sizes = [1, 32], strides = [1, 1]} : vector<1x64xf32> to vector<1x32xf32>
    %cst_147 = arith.constant 0.176776692 : f32
    %209 = vector.broadcast %cst_147 : f32 to vector<1x32xf32>
    %210 = arith.mulf %208, %209 : vector<1x32xf32>
    %211 = vector.broadcast %210 : vector<1x32xf32> to vector<8x32xf32>
    %212 = arith.mulf %207, %211 : vector<8x32xf32>
    %213 = vector.extract_strided_slice %202 {offsets = [0, 32], sizes = [8, 32], strides = [1, 1]} : vector<8x64xf32> to vector<8x32xf32>
    %214 = vector.extract_strided_slice %206 {offsets = [0, 32], sizes = [1, 32], strides = [1, 1]} : vector<1x64xf32> to vector<1x32xf32>
    %215 = vector.broadcast %214 : vector<1x32xf32> to vector<8x32xf32>
    %216 = arith.mulf %213, %215 : vector<8x32xf32>
    %cst_148 = arith.constant dense<0.000000e+00> : vector<16x8xf32>
    %217 = tpu.matmul %197, %212, %cst_148 {dimension_numbers = #tpu.dot_dimension_numbers<[1], [1], [0], [0], [0, 0, 1, 0], [], []>} : vector<16x32xf32>, vector<8x32xf32>, vector<16x8xf32> -> vector<16x8xf32>
    %cst_149 = arith.constant 5.000000e-01 : f32
    %218 = vector.broadcast %cst_149 : f32 to vector<16x8xf32>
    %219 = arith.cmpf ogt, %33, %218 : vector<16x8xf32>
    %cst_150 = arith.constant -1.000000e+30 : f32
    %220 = vector.broadcast %cst_150 : f32 to vector<16x8xf32>
    %221 = arith.select %219, %220, %217 : vector<16x8xi1>, vector<16x8xf32>
    %cst_151 = arith.constant dense<0xFF800000> : vector<16xf32>
    %222 = vector.multi_reduction <maximumf>, %221, %cst_151 [1] : vector<16x8xf32> to vector<16xf32>
    %223 = vector.shape_cast %222 : vector<16xf32> to vector<16x1xf32>
    %224 = vector.broadcast %223 : vector<16x1xf32> to vector<16x8xf32>
    %225 = arith.subf %221, %224 : vector<16x8xf32>
    %226 = math.exp %225 : vector<16x8xf32>
    %cst_152 = arith.constant dense<0.000000e+00> : vector<16xf32>
    %227 = vector.multi_reduction <add>, %226, %cst_152 [1] : vector<16x8xf32> to vector<16xf32>
    %228 = vector.shape_cast %227 : vector<16xf32> to vector<16x1xf32>
    %229 = vector.broadcast %228 : vector<16x1xf32> to vector<16x8xf32>
    %230 = arith.divf %226, %229 : vector<16x8xf32>
    %cst_153 = arith.constant dense<0.000000e+00> : vector<16x32xf32>
    %231 = tpu.matmul %230, %216, %cst_153 {dimension_numbers = #tpu.dot_dimension_numbers<[1], [0], [0], [1], [0, 0, 1, 1], [], []>} : vector<16x8xf32>, vector<8x32xf32>, vector<16x32xf32> -> vector<16x32xf32>
    %232 = tpu.concatenate %17, %231 in 1 : vector<16x32xf32>, vector<16x32xf32> -> vector<16x64xf32>
    %c0_154 = arith.constant 0 : index
    %c0_155 = arith.constant 0 : index
    %233 = vector.load %arg45[%c0_154, %c0_155] : memref<64x32xf32, #tpu.memory_space<vmem>>, vector<64x32xf32>
    %cst_156 = arith.constant dense<0.000000e+00> : vector<16x32xf32>
    %234 = tpu.matmul %232, %233, %cst_156 {dimension_numbers = #tpu.dot_dimension_numbers<[1], [0], [0], [1], [0, 0, 1, 1], [], []>} : vector<16x64xf32>, vector<64x32xf32>, vector<16x32xf32> -> vector<16x32xf32>
    %c0_157 = arith.constant 0 : index
    %c0_158 = arith.constant 0 : index
    %235 = vector.load %arg46[%c0_157, %c0_158] : memref<1x32xf32, #tpu.memory_space<vmem>>, vector<1x32xf32>
    %236 = vector.broadcast %235 : vector<1x32xf32> to vector<16x32xf32>
    %237 = arith.addf %234, %236 : vector<16x32xf32>
    %cst_159 = arith.constant 5.000000e-01 : f32
    %238 = vector.broadcast %cst_159 : f32 to vector<1x16xf32>
    %239 = arith.cmpf ogt, %35, %238 : vector<1x16xf32>
    %cst_160 = arith.constant -1.000000e+30 : f32
    %cst_161 = arith.constant 1.000000e+00 : f32
    %240 = vector.broadcast %cst_160 : f32 to vector<1x16xf32>
    %241 = vector.broadcast %cst_161 : f32 to vector<1x16xf32>
    %242 = arith.select %239, %240, %241 : vector<1x16xi1>, vector<1x16xf32>
    %cst_162 = arith.constant dense<0.000000e+00> : vector<1x32xf32>
    %243 = tpu.matmul %242, %128, %cst_162 {dimension_numbers = #tpu.dot_dimension_numbers<[1], [0], [0], [1], [0, 0, 1, 1], [], []>} : vector<1x16xf32>, vector<16x32xf32>, vector<1x32xf32> -> vector<1x32xf32>
    %cst_163 = arith.constant dense<0.000000e+00> : vector<1x32xf32>
    %244 = tpu.matmul %242, %237, %cst_163 {dimension_numbers = #tpu.dot_dimension_numbers<[1], [0], [0], [1], [0, 0, 1, 1], [], []>} : vector<1x16xf32>, vector<16x32xf32>, vector<1x32xf32> -> vector<1x32xf32>
    %245 = vector.broadcast %243 : vector<1x32xf32> to vector<16x32xf32>
    %246 = arith.mulf %237, %245 : vector<16x32xf32>
    %247 = vector.broadcast %243 : vector<1x32xf32> to vector<16x32xf32>
    %248 = arith.mulf %128, %247 : vector<16x32xf32>
    %249 = vector.broadcast %244 : vector<1x32xf32> to vector<16x32xf32>
    %250 = arith.mulf %237, %249 : vector<16x32xf32>
    %251 = vector.broadcast %244 : vector<1x32xf32> to vector<16x32xf32>
    %252 = arith.mulf %128, %251 : vector<16x32xf32>
    %253 = tpu.concatenate %246, %248, %250, %252 in 0 : vector<16x32xf32>, vector<16x32xf32>, vector<16x32xf32>, vector<16x32xf32> -> vector<64x32xf32>
    %254 = arith.mulf %253, %253 : vector<64x32xf32>
    %cst_164 = arith.constant dense<0.000000e+00> : vector<64xf32>
    %255 = vector.multi_reduction <add>, %254, %cst_164 [1] : vector<64x32xf32> to vector<64xf32>
    %256 = vector.shape_cast %255 : vector<64xf32> to vector<64x1xf32>
    %cst_165 = arith.constant 1.000000e-24 : f32
    %257 = vector.broadcast %cst_165 : f32 to vector<64x1xf32>
    %258 = arith.maximumf %256, %257 : vector<64x1xf32>
    %259 = math.rsqrt %258 : vector<64x1xf32>
    %260 = vector.broadcast %259 : vector<64x1xf32> to vector<64x32xf32>
    %261 = arith.mulf %253, %260 : vector<64x32xf32>
    %262 = vector.extract_strided_slice %261 {offsets = [0, 0], sizes = [16, 32], strides = [1, 1]} : vector<64x32xf32> to vector<16x32xf32>
    %263 = vector.extract_strided_slice %261 {offsets = [16, 0], sizes = [16, 32], strides = [1, 1]} : vector<64x32xf32> to vector<16x32xf32>
    %264 = vector.extract_strided_slice %261 {offsets = [32, 0], sizes = [16, 32], strides = [1, 1]} : vector<64x32xf32> to vector<16x32xf32>
    %265 = vector.extract_strided_slice %261 {offsets = [48, 0], sizes = [16, 32], strides = [1, 1]} : vector<64x32xf32> to vector<16x32xf32>
    %c0_166 = arith.constant 0 : index
    %c0_167 = arith.constant 0 : index
    %266 = memref.load %arg55[%c0_166, %c0_167] : memref<2x4xf32, #tpu.memory_space<smem>>
    %267 = vector.broadcast %266 : f32 to vector<16x32xf32>
    %268 = arith.mulf %267, %262 : vector<16x32xf32>
    %c0_168 = arith.constant 0 : index
    %c1 = arith.constant 1 : index
    %269 = memref.load %arg55[%c0_168, %c1] : memref<2x4xf32, #tpu.memory_space<smem>>
    %270 = vector.broadcast %269 : f32 to vector<16x32xf32>
    %271 = arith.mulf %270, %263 : vector<16x32xf32>
    %272 = arith.addf %268, %271 : vector<16x32xf32>
    %c0_169 = arith.constant 0 : index
    %c2 = arith.constant 2 : index
    %273 = memref.load %arg55[%c0_169, %c2] : memref<2x4xf32, #tpu.memory_space<smem>>
    %274 = vector.broadcast %273 : f32 to vector<16x32xf32>
    %275 = arith.mulf %274, %264 : vector<16x32xf32>
    %276 = arith.addf %272, %275 : vector<16x32xf32>
    %c0_170 = arith.constant 0 : index
    %c3 = arith.constant 3 : index
    %277 = memref.load %arg55[%c0_170, %c3] : memref<2x4xf32, #tpu.memory_space<smem>>
    %278 = vector.broadcast %277 : f32 to vector<16x32xf32>
    %279 = arith.mulf %278, %265 : vector<16x32xf32>
    %280 = arith.addf %276, %279 : vector<16x32xf32>
    %c0_171 = arith.constant 0 : index
    %281 = memref.load %arg56[%c0_171] : memref<2xf32, #tpu.memory_space<smem>>
    %282 = vector.broadcast %281 : f32 to vector<16x32xf32>
    %283 = arith.addf %280, %282 : vector<16x32xf32>
    %c1_172 = arith.constant 1 : index
    %c0_173 = arith.constant 0 : index
    %284 = memref.load %arg55[%c1_172, %c0_173] : memref<2x4xf32, #tpu.memory_space<smem>>
    %285 = vector.broadcast %284 : f32 to vector<16x32xf32>
    %286 = arith.mulf %285, %262 : vector<16x32xf32>
    %c1_174 = arith.constant 1 : index
    %c1_175 = arith.constant 1 : index
    %287 = memref.load %arg55[%c1_174, %c1_175] : memref<2x4xf32, #tpu.memory_space<smem>>
    %288 = vector.broadcast %287 : f32 to vector<16x32xf32>
    %289 = arith.mulf %288, %263 : vector<16x32xf32>
    %290 = arith.addf %286, %289 : vector<16x32xf32>
    %c1_176 = arith.constant 1 : index
    %c2_177 = arith.constant 2 : index
    %291 = memref.load %arg55[%c1_176, %c2_177] : memref<2x4xf32, #tpu.memory_space<smem>>
    %292 = vector.broadcast %291 : f32 to vector<16x32xf32>
    %293 = arith.mulf %292, %264 : vector<16x32xf32>
    %294 = arith.addf %290, %293 : vector<16x32xf32>
    %c1_178 = arith.constant 1 : index
    %c3_179 = arith.constant 3 : index
    %295 = memref.load %arg55[%c1_178, %c3_179] : memref<2x4xf32, #tpu.memory_space<smem>>
    %296 = vector.broadcast %295 : f32 to vector<16x32xf32>
    %297 = arith.mulf %296, %265 : vector<16x32xf32>
    %298 = arith.addf %294, %297 : vector<16x32xf32>
    %c1_180 = arith.constant 1 : index
    %299 = memref.load %arg56[%c1_180] : memref<2xf32, #tpu.memory_space<smem>>
    %300 = vector.broadcast %299 : f32 to vector<16x32xf32>
    %301 = arith.addf %298, %300 : vector<16x32xf32>
    %c0_181 = arith.constant 0 : index
    %c0_182 = arith.constant 0 : index
    %302 = vector.load %arg47[%c0_181, %c0_182] : memref<1x32xf32, #tpu.memory_space<vmem>>, vector<1x32xf32>
    %c0_183 = arith.constant 0 : index
    %c0_184 = arith.constant 0 : index
    %303 = vector.load %arg48[%c0_183, %c0_184] : memref<1x32xf32, #tpu.memory_space<vmem>>, vector<1x32xf32>
    %cst_185 = arith.constant dense<0.000000e+00> : vector<16xf32>
    %304 = vector.multi_reduction <add>, %283, %cst_185 [1] : vector<16x32xf32> to vector<16xf32>
    %305 = vector.shape_cast %304 : vector<16xf32> to vector<16x1xf32>
    %cst_186 = arith.constant 3.200000e+01 : f32
    %306 = vector.broadcast %cst_186 : f32 to vector<16x1xf32>
    %307 = arith.divf %305, %306 : vector<16x1xf32>
    %308 = vector.broadcast %307 : vector<16x1xf32> to vector<16x32xf32>
    %309 = arith.subf %283, %308 : vector<16x32xf32>
    %310 = arith.mulf %309, %309 : vector<16x32xf32>
    %cst_187 = arith.constant dense<0.000000e+00> : vector<16xf32>
    %311 = vector.multi_reduction <add>, %310, %cst_187 [1] : vector<16x32xf32> to vector<16xf32>
    %312 = vector.shape_cast %311 : vector<16xf32> to vector<16x1xf32>
    %cst_188 = arith.constant 3.200000e+01 : f32
    %313 = vector.broadcast %cst_188 : f32 to vector<16x1xf32>
    %314 = arith.divf %312, %313 : vector<16x1xf32>
    %315 = vector.broadcast %307 : vector<16x1xf32> to vector<16x32xf32>
    %316 = arith.subf %283, %315 : vector<16x32xf32>
    %cst_189 = arith.constant 9.99999974E-6 : f32
    %317 = vector.broadcast %cst_189 : f32 to vector<16x1xf32>
    %318 = arith.addf %314, %317 : vector<16x1xf32>
    %319 = math.rsqrt %318 : vector<16x1xf32>
    %320 = vector.broadcast %319 : vector<16x1xf32> to vector<16x32xf32>
    %321 = arith.mulf %316, %320 : vector<16x32xf32>
    %322 = vector.broadcast %302 : vector<1x32xf32> to vector<16x32xf32>
    %323 = arith.mulf %321, %322 : vector<16x32xf32>
    %324 = vector.broadcast %303 : vector<1x32xf32> to vector<16x32xf32>
    %325 = arith.addf %323, %324 : vector<16x32xf32>
    %c0_190 = arith.constant 0 : index
    %c0_191 = arith.constant 0 : index
    %326 = vector.load %arg49[%c0_190, %c0_191] : memref<1x32xf32, #tpu.memory_space<vmem>>, vector<1x32xf32>
    %c0_192 = arith.constant 0 : index
    %c0_193 = arith.constant 0 : index
    %327 = vector.load %arg50[%c0_192, %c0_193] : memref<1x32xf32, #tpu.memory_space<vmem>>, vector<1x32xf32>
    %cst_194 = arith.constant dense<0.000000e+00> : vector<16xf32>
    %328 = vector.multi_reduction <add>, %301, %cst_194 [1] : vector<16x32xf32> to vector<16xf32>
    %329 = vector.shape_cast %328 : vector<16xf32> to vector<16x1xf32>
    %cst_195 = arith.constant 3.200000e+01 : f32
    %330 = vector.broadcast %cst_195 : f32 to vector<16x1xf32>
    %331 = arith.divf %329, %330 : vector<16x1xf32>
    %332 = vector.broadcast %331 : vector<16x1xf32> to vector<16x32xf32>
    %333 = arith.subf %301, %332 : vector<16x32xf32>
    %334 = arith.mulf %333, %333 : vector<16x32xf32>
    %cst_196 = arith.constant dense<0.000000e+00> : vector<16xf32>
    %335 = vector.multi_reduction <add>, %334, %cst_196 [1] : vector<16x32xf32> to vector<16xf32>
    %336 = vector.shape_cast %335 : vector<16xf32> to vector<16x1xf32>
    %cst_197 = arith.constant 3.200000e+01 : f32
    %337 = vector.broadcast %cst_197 : f32 to vector<16x1xf32>
    %338 = arith.divf %336, %337 : vector<16x1xf32>
    %339 = vector.broadcast %331 : vector<16x1xf32> to vector<16x32xf32>
    %340 = arith.subf %301, %339 : vector<16x32xf32>
    %cst_198 = arith.constant 9.99999974E-6 : f32
    %341 = vector.broadcast %cst_198 : f32 to vector<16x1xf32>
    %342 = arith.addf %338, %341 : vector<16x1xf32>
    %343 = math.rsqrt %342 : vector<16x1xf32>
    %344 = vector.broadcast %343 : vector<16x1xf32> to vector<16x32xf32>
    %345 = arith.mulf %340, %344 : vector<16x32xf32>
    %346 = vector.broadcast %326 : vector<1x32xf32> to vector<16x32xf32>
    %347 = arith.mulf %345, %346 : vector<16x32xf32>
    %348 = vector.broadcast %327 : vector<1x32xf32> to vector<16x32xf32>
    %349 = arith.addf %347, %348 : vector<16x32xf32>
    %c1_199 = arith.constant 1 : index
    %c0_200 = arith.constant 0 : index
    %c0_201 = arith.constant 0 : index
    %350 = vector.load %arg17[%c1_199, %c0_200, %c0_201] : memref<2x32x32xf32, #tpu.memory_space<vmem>>, vector<1x32x32xf32>
    %351 = vector.shape_cast %350 : vector<1x32x32xf32> to vector<32x32xf32>
    %cst_202 = arith.constant dense<0.000000e+00> : vector<1x32xf32>
    %352 = tpu.matmul %49, %351, %cst_202 {dimension_numbers = #tpu.dot_dimension_numbers<[1], [0], [0], [1], [0, 0, 1, 1], [], []>} : vector<1x32xf32>, vector<32x32xf32>, vector<1x32xf32> -> vector<1x32xf32>
    %c1_203 = arith.constant 1 : index
    %c0_204 = arith.constant 0 : index
    %c0_205 = arith.constant 0 : index
    %353 = vector.load %arg18[%c1_203, %c0_204, %c0_205] : memref<2x1x32xf32, #tpu.memory_space<vmem>>, vector<1x1x32xf32>
    %354 = vector.shape_cast %353 : vector<1x1x32xf32> to vector<1x32xf32>
    %355 = arith.addf %352, %354 : vector<1x32xf32>
    %c0_206 = arith.constant 0 : index
    %c0_207 = arith.constant 0 : index
    %356 = vector.load %arg19[%c0_206, %c0_207] : memref<1x32xf32, #tpu.memory_space<vmem>>, vector<1x32xf32>
    %357 = arith.mulf %355, %356 : vector<1x32xf32>
    %cst_208 = arith.constant dense<0.000000e+00> : vector<1x8xf32>
    %358 = tpu.matmul %357, %19, %cst_208 {dimension_numbers = #tpu.dot_dimension_numbers<[1], [1], [0], [0], [0, 0, 1, 0], [], []>} : vector<1x32xf32>, vector<8x32xf32>, vector<1x8xf32> -> vector<1x8xf32>
    %c0_209 = arith.constant 0 : index
    %359 = memref.load %arg53[%c0_209] : memref<1xf32, #tpu.memory_space<smem>>
    %360 = vector.broadcast %359 : f32 to vector<1x8xf32>
    %361 = arith.addf %358, %360 : vector<1x8xf32>
    %cst_210 = arith.constant 5.000000e-01 : f32
    %362 = vector.broadcast %cst_210 : f32 to vector<1x8xf32>
    %363 = arith.cmpf ogt, %21, %362 : vector<1x8xf32>
    %cst_211 = arith.constant -1.000000e+30 : f32
    %364 = vector.broadcast %cst_211 : f32 to vector<1x8xf32>
    %365 = arith.select %363, %364, %361 : vector<1x8xi1>, vector<1x8xf32>
    %cst_212 = arith.constant dense<0xFF800000> : vector<1xf32>
    %366 = vector.multi_reduction <maximumf>, %365, %cst_212 [1] : vector<1x8xf32> to vector<1xf32>
    %367 = vector.shape_cast %366 : vector<1xf32> to vector<1x1xf32>
    %368 = vector.broadcast %367 : vector<1x1xf32> to vector<1x8xf32>
    %369 = arith.subf %365, %368 : vector<1x8xf32>
    %370 = math.exp %369 : vector<1x8xf32>
    %cst_213 = arith.constant dense<0.000000e+00> : vector<1xf32>
    %371 = vector.multi_reduction <add>, %370, %cst_213 [1] : vector<1x8xf32> to vector<1xf32>
    %372 = vector.shape_cast %371 : vector<1xf32> to vector<1x1xf32>
    %373 = vector.broadcast %372 : vector<1x1xf32> to vector<1x8xf32>
    %374 = arith.divf %370, %373 : vector<1x8xf32>
    %cst_214 = arith.constant dense<0.000000e+00> : vector<1x32xf32>
    %375 = tpu.matmul %374, %19, %cst_214 {dimension_numbers = #tpu.dot_dimension_numbers<[1], [0], [0], [1], [0, 0, 1, 1], [], []>} : vector<1x8xf32>, vector<8x32xf32>, vector<1x32xf32> -> vector<1x32xf32>
    %c0_215 = arith.constant 0 : index
    %c0_216 = arith.constant 0 : index
    %376 = vector.load %arg25[%c0_215, %c0_216] : memref<32x32xf32, #tpu.memory_space<vmem>>, vector<32x32xf32>
    %cst_217 = arith.constant dense<0.000000e+00> : vector<16x32xf32>
    %377 = tpu.matmul %14, %376, %cst_217 {dimension_numbers = #tpu.dot_dimension_numbers<[1], [0], [0], [1], [0, 0, 1, 1], [], []>} : vector<16x32xf32>, vector<32x32xf32>, vector<16x32xf32> -> vector<16x32xf32>
    %c0_218 = arith.constant 0 : index
    %c0_219 = arith.constant 0 : index
    %378 = vector.load %arg26[%c0_218, %c0_219] : memref<1x32xf32, #tpu.memory_space<vmem>>, vector<1x32xf32>
    %379 = vector.broadcast %378 : vector<1x32xf32> to vector<16x32xf32>
    %380 = arith.addf %377, %379 : vector<16x32xf32>
    %c0_220 = arith.constant 0 : index
    %c0_221 = arith.constant 0 : index
    %381 = vector.load %arg27[%c0_220, %c0_221] : memref<32x32xf32, #tpu.memory_space<vmem>>, vector<32x32xf32>
    %cst_222 = arith.constant dense<0.000000e+00> : vector<16x32xf32>
    %382 = tpu.matmul %325, %381, %cst_222 {dimension_numbers = #tpu.dot_dimension_numbers<[1], [0], [0], [1], [0, 0, 1, 1], [], []>} : vector<16x32xf32>, vector<32x32xf32>, vector<16x32xf32> -> vector<16x32xf32>
    %c0_223 = arith.constant 0 : index
    %c0_224 = arith.constant 0 : index
    %383 = vector.load %arg28[%c0_223, %c0_224] : memref<1x32xf32, #tpu.memory_space<vmem>>, vector<1x32xf32>
    %384 = vector.broadcast %383 : vector<1x32xf32> to vector<16x32xf32>
    %385 = arith.addf %382, %384 : vector<16x32xf32>
    %386 = arith.mulf %380, %385 : vector<16x32xf32>
    %387 = tpu.concatenate %14, %325, %386 in 1 : vector<16x32xf32>, vector<16x32xf32>, vector<16x32xf32> -> vector<16x96xf32>
    %c0_225 = arith.constant 0 : index
    %c0_226 = arith.constant 0 : index
    %388 = vector.load %arg29[%c0_225, %c0_226] : memref<96x96xf32, #tpu.memory_space<vmem>>, vector<96x96xf32>
    %cst_227 = arith.constant dense<0.000000e+00> : vector<16x96xf32>
    %389 = tpu.matmul %387, %388, %cst_227 {dimension_numbers = #tpu.dot_dimension_numbers<[1], [0], [0], [1], [0, 0, 1, 1], [], []>} : vector<16x96xf32>, vector<96x96xf32>, vector<16x96xf32> -> vector<16x96xf32>
    %c0_228 = arith.constant 0 : index
    %c0_229 = arith.constant 0 : index
    %390 = vector.load %arg30[%c0_228, %c0_229] : memref<1x96xf32, #tpu.memory_space<vmem>>, vector<1x96xf32>
    %391 = vector.broadcast %390 : vector<1x96xf32> to vector<16x96xf32>
    %392 = arith.addf %389, %391 : vector<16x96xf32>
    %c0_230 = arith.constant 0 : index
    %c0_231 = arith.constant 0 : index
    %393 = vector.load %arg31[%c0_230, %c0_231] : memref<32x64xf32, #tpu.memory_space<vmem>>, vector<32x64xf32>
    %cst_232 = arith.constant dense<0.000000e+00> : vector<1x64xf32>
    %394 = tpu.matmul %375, %393, %cst_232 {dimension_numbers = #tpu.dot_dimension_numbers<[1], [0], [0], [1], [0, 0, 1, 1], [], []>} : vector<1x32xf32>, vector<32x64xf32>, vector<1x64xf32> -> vector<1x64xf32>
    %c0_233 = arith.constant 0 : index
    %c0_234 = arith.constant 0 : index
    %395 = vector.load %arg32[%c0_233, %c0_234] : memref<1x64xf32, #tpu.memory_space<vmem>>, vector<1x64xf32>
    %396 = arith.addf %394, %395 : vector<1x64xf32>
    %397 = vector.extract_strided_slice %392 {offsets = [0, 32], sizes = [16, 32], strides = [1, 1]} : vector<16x96xf32> to vector<16x32xf32>
    %398 = vector.extract_strided_slice %396 {offsets = [0, 0], sizes = [1, 32], strides = [1, 1]} : vector<1x64xf32> to vector<1x32xf32>
    %cst_235 = arith.constant 0.176776692 : f32
    %399 = vector.broadcast %cst_235 : f32 to vector<1x32xf32>
    %400 = arith.mulf %398, %399 : vector<1x32xf32>
    %401 = vector.broadcast %400 : vector<1x32xf32> to vector<16x32xf32>
    %402 = arith.mulf %397, %401 : vector<16x32xf32>
    %403 = vector.extract_strided_slice %392 {offsets = [0, 64], sizes = [16, 32], strides = [1, 1]} : vector<16x96xf32> to vector<16x32xf32>
    %404 = vector.extract_strided_slice %396 {offsets = [0, 32], sizes = [1, 32], strides = [1, 1]} : vector<1x64xf32> to vector<1x32xf32>
    %405 = vector.broadcast %404 : vector<1x32xf32> to vector<16x32xf32>
    %406 = arith.mulf %403, %405 : vector<16x32xf32>
    %407 = vector.extract_strided_slice %392 {offsets = [0, 0], sizes = [16, 32], strides = [1, 1]} : vector<16x96xf32> to vector<16x32xf32>
    %cst_236 = arith.constant dense<0.000000e+00> : vector<16x16xf32>
    %408 = tpu.matmul %407, %402, %cst_236 {dimension_numbers = #tpu.dot_dimension_numbers<[1], [1], [0], [0], [0, 0, 1, 0], [], []>} : vector<16x32xf32>, vector<16x32xf32>, vector<16x16xf32> -> vector<16x16xf32>
    %cst_237 = arith.constant 5.000000e-01 : f32
    %409 = vector.broadcast %cst_237 : f32 to vector<16x16xf32>
    %410 = arith.cmpf ogt, %31, %409 : vector<16x16xf32>
    %cst_238 = arith.constant -1.000000e+30 : f32
    %411 = vector.broadcast %cst_238 : f32 to vector<16x16xf32>
    %412 = arith.select %410, %411, %408 : vector<16x16xi1>, vector<16x16xf32>
    %cst_239 = arith.constant dense<0xFF800000> : vector<16xf32>
    %413 = vector.multi_reduction <maximumf>, %412, %cst_239 [1] : vector<16x16xf32> to vector<16xf32>
    %414 = vector.shape_cast %413 : vector<16xf32> to vector<16x1xf32>
    %415 = vector.broadcast %414 : vector<16x1xf32> to vector<16x16xf32>
    %416 = arith.subf %412, %415 : vector<16x16xf32>
    %417 = math.exp %416 : vector<16x16xf32>
    %cst_240 = arith.constant dense<0.000000e+00> : vector<16xf32>
    %418 = vector.multi_reduction <add>, %417, %cst_240 [1] : vector<16x16xf32> to vector<16xf32>
    %419 = vector.shape_cast %418 : vector<16xf32> to vector<16x1xf32>
    %420 = vector.broadcast %419 : vector<16x1xf32> to vector<16x16xf32>
    %421 = arith.divf %417, %420 : vector<16x16xf32>
    %cst_241 = arith.constant dense<0.000000e+00> : vector<16x32xf32>
    %422 = tpu.matmul %421, %406, %cst_241 {dimension_numbers = #tpu.dot_dimension_numbers<[1], [0], [0], [1], [0, 0, 1, 1], [], []>} : vector<16x16xf32>, vector<16x32xf32>, vector<16x32xf32> -> vector<16x32xf32>
    %423 = tpu.concatenate %325, %422 in 1 : vector<16x32xf32>, vector<16x32xf32> -> vector<16x64xf32>
    %c0_242 = arith.constant 0 : index
    %c0_243 = arith.constant 0 : index
    %424 = vector.load %arg33[%c0_242, %c0_243] : memref<64x32xf32, #tpu.memory_space<vmem>>, vector<64x32xf32>
    %cst_244 = arith.constant dense<0.000000e+00> : vector<16x32xf32>
    %425 = tpu.matmul %423, %424, %cst_244 {dimension_numbers = #tpu.dot_dimension_numbers<[1], [0], [0], [1], [0, 0, 1, 1], [], []>} : vector<16x64xf32>, vector<64x32xf32>, vector<16x32xf32> -> vector<16x32xf32>
    %c0_245 = arith.constant 0 : index
    %c0_246 = arith.constant 0 : index
    %426 = vector.load %arg34[%c0_245, %c0_246] : memref<1x32xf32, #tpu.memory_space<vmem>>, vector<1x32xf32>
    %427 = vector.broadcast %426 : vector<1x32xf32> to vector<16x32xf32>
    %428 = arith.addf %425, %427 : vector<16x32xf32>
    %c1_247 = arith.constant 1 : index
    %c0_248 = arith.constant 0 : index
    %c0_249 = arith.constant 0 : index
    %429 = vector.load %arg20[%c1_247, %c0_248, %c0_249] : memref<2x32x64xf32, #tpu.memory_space<vmem>>, vector<1x32x64xf32>
    %430 = vector.shape_cast %429 : vector<1x32x64xf32> to vector<32x64xf32>
    %cst_250 = arith.constant dense<0.000000e+00> : vector<8x64xf32>
    %431 = tpu.matmul %23, %430, %cst_250 {dimension_numbers = #tpu.dot_dimension_numbers<[1], [0], [0], [1], [0, 0, 1, 1], [], []>} : vector<8x32xf32>, vector<32x64xf32>, vector<8x64xf32> -> vector<8x64xf32>
    %c1_251 = arith.constant 1 : index
    %c0_252 = arith.constant 0 : index
    %c0_253 = arith.constant 0 : index
    %432 = vector.load %arg21[%c1_251, %c0_252, %c0_253] : memref<2x1x64xf32, #tpu.memory_space<vmem>>, vector<1x1x64xf32>
    %433 = vector.shape_cast %432 : vector<1x1x64xf32> to vector<1x64xf32>
    %434 = vector.broadcast %433 : vector<1x64xf32> to vector<8x64xf32>
    %435 = arith.addf %431, %434 : vector<8x64xf32>
    %436 = vector.extract_strided_slice %435 {offsets = [0, 0], sizes = [8, 32], strides = [1, 1]} : vector<8x64xf32> to vector<8x32xf32>
    %437 = math.tanh %436 : vector<8x32xf32>
    %438 = vector.extract_strided_slice %435 {offsets = [0, 32], sizes = [8, 32], strides = [1, 1]} : vector<8x64xf32> to vector<8x32xf32>
    %439 = arith.negf %438 : vector<8x32xf32>
    %440 = math.exp %439 : vector<8x32xf32>
    %cst_254 = arith.constant 1.000000e+00 : f32
    %441 = vector.broadcast %cst_254 : f32 to vector<8x32xf32>
    %442 = arith.addf %441, %440 : vector<8x32xf32>
    %443 = arith.divf %441, %442 : vector<8x32xf32>
    %444 = arith.mulf %437, %443 : vector<8x32xf32>
    %445 = arith.mulf %444, %444 : vector<8x32xf32>
    %cst_255 = arith.constant dense<0.000000e+00> : vector<8xf32>
    %446 = vector.multi_reduction <add>, %445, %cst_255 [1] : vector<8x32xf32> to vector<8xf32>
    %447 = vector.shape_cast %446 : vector<8xf32> to vector<8x1xf32>
    %cst_256 = arith.constant 1.000000e-24 : f32
    %448 = vector.broadcast %cst_256 : f32 to vector<8x1xf32>
    %449 = arith.maximumf %447, %448 : vector<8x1xf32>
    %450 = math.rsqrt %449 : vector<8x1xf32>
    %451 = vector.broadcast %450 : vector<8x1xf32> to vector<8x32xf32>
    %452 = arith.mulf %444, %451 : vector<8x32xf32>
    %c1_257 = arith.constant 1 : index
    %c0_258 = arith.constant 0 : index
    %c0_259 = arith.constant 0 : index
    %453 = vector.load %arg22[%c1_257, %c0_258, %c0_259] : memref<2x1x32xf32, #tpu.memory_space<vmem>>, vector<1x1x32xf32>
    %454 = vector.shape_cast %453 : vector<1x1x32xf32> to vector<1x32xf32>
    %cst_260 = arith.constant dense<0.000000e+00> : vector<1x8xf32>
    %455 = tpu.matmul %454, %452, %cst_260 {dimension_numbers = #tpu.dot_dimension_numbers<[1], [1], [0], [0], [0, 0, 1, 0], [], []>} : vector<1x32xf32>, vector<8x32xf32>, vector<1x8xf32> -> vector<1x8xf32>
    %c1_261 = arith.constant 1 : index
    %456 = memref.load %arg54[%c1_261] : memref<2xf32, #tpu.memory_space<smem>>
    %457 = vector.broadcast %456 : f32 to vector<1x8xf32>
    %458 = arith.addf %455, %457 : vector<1x8xf32>
    %cst_262 = arith.constant dense<0xFF800000> : vector<1xf32>
    %459 = vector.multi_reduction <maximumf>, %458, %cst_262 [1] : vector<1x8xf32> to vector<1xf32>
    %460 = vector.shape_cast %459 : vector<1xf32> to vector<1x1xf32>
    %461 = vector.broadcast %460 : vector<1x1xf32> to vector<1x8xf32>
    %462 = arith.subf %458, %461 : vector<1x8xf32>
    %463 = math.exp %462 : vector<1x8xf32>
    %cst_263 = arith.constant dense<0.000000e+00> : vector<1xf32>
    %464 = vector.multi_reduction <add>, %463, %cst_263 [1] : vector<1x8xf32> to vector<1xf32>
    %465 = vector.shape_cast %464 : vector<1xf32> to vector<1x1xf32>
    %466 = vector.broadcast %465 : vector<1x1xf32> to vector<1x8xf32>
    %467 = arith.divf %463, %466 : vector<1x8xf32>
    %468 = arith.mulf %467, %27 : vector<1x8xf32>
    %cst_264 = arith.constant dense<0.000000e+00> : vector<1xf32>
    %469 = vector.multi_reduction <add>, %468, %cst_264 [1] : vector<1x8xf32> to vector<1xf32>
    %470 = vector.shape_cast %469 : vector<1xf32> to vector<1x1xf32>
    %471 = vector.broadcast %470 : vector<1x1xf32> to vector<1x8xf32>
    %472 = arith.divf %468, %471 : vector<1x8xf32>
    %c1_265 = arith.constant 1 : index
    %c0_266 = arith.constant 0 : index
    %c0_267 = arith.constant 0 : index
    %473 = vector.load %arg23[%c1_265, %c0_266, %c0_267] : memref<2x32x32xf32, #tpu.memory_space<vmem>>, vector<1x32x32xf32>
    %474 = vector.shape_cast %473 : vector<1x32x32xf32> to vector<32x32xf32>
    %cst_268 = arith.constant dense<0.000000e+00> : vector<8x32xf32>
    %475 = tpu.matmul %25, %474, %cst_268 {dimension_numbers = #tpu.dot_dimension_numbers<[1], [0], [0], [1], [0, 0, 1, 1], [], []>} : vector<8x32xf32>, vector<32x32xf32>, vector<8x32xf32> -> vector<8x32xf32>
    %c1_269 = arith.constant 1 : index
    %c0_270 = arith.constant 0 : index
    %c0_271 = arith.constant 0 : index
    %476 = vector.load %arg24[%c1_269, %c0_270, %c0_271] : memref<2x1x32xf32, #tpu.memory_space<vmem>>, vector<1x1x32xf32>
    %477 = vector.shape_cast %476 : vector<1x1x32xf32> to vector<1x32xf32>
    %478 = vector.broadcast %477 : vector<1x32xf32> to vector<8x32xf32>
    %479 = arith.addf %475, %478 : vector<8x32xf32>
    %cst_272 = arith.constant dense<0.000000e+00> : vector<1x32xf32>
    %480 = tpu.matmul %472, %479, %cst_272 {dimension_numbers = #tpu.dot_dimension_numbers<[1], [0], [0], [1], [0, 0, 1, 1], [], []>} : vector<1x8xf32>, vector<8x32xf32>, vector<1x32xf32> -> vector<1x32xf32>
    %c0_273 = arith.constant 0 : index
    %c0_274 = arith.constant 0 : index
    %481 = vector.load %arg35[%c0_273, %c0_274] : memref<32x32xf32, #tpu.memory_space<vmem>>, vector<32x32xf32>
    %cst_275 = arith.constant dense<0.000000e+00> : vector<16x32xf32>
    %482 = tpu.matmul %14, %481, %cst_275 {dimension_numbers = #tpu.dot_dimension_numbers<[1], [0], [0], [1], [0, 0, 1, 1], [], []>} : vector<16x32xf32>, vector<32x32xf32>, vector<16x32xf32> -> vector<16x32xf32>
    %c0_276 = arith.constant 0 : index
    %c0_277 = arith.constant 0 : index
    %483 = vector.load %arg36[%c0_276, %c0_277] : memref<1x32xf32, #tpu.memory_space<vmem>>, vector<1x32xf32>
    %484 = vector.broadcast %483 : vector<1x32xf32> to vector<16x32xf32>
    %485 = arith.addf %482, %484 : vector<16x32xf32>
    %c0_278 = arith.constant 0 : index
    %c0_279 = arith.constant 0 : index
    %486 = vector.load %arg37[%c0_278, %c0_279] : memref<32x32xf32, #tpu.memory_space<vmem>>, vector<32x32xf32>
    %cst_280 = arith.constant dense<0.000000e+00> : vector<16x32xf32>
    %487 = tpu.matmul %349, %486, %cst_280 {dimension_numbers = #tpu.dot_dimension_numbers<[1], [0], [0], [1], [0, 0, 1, 1], [], []>} : vector<16x32xf32>, vector<32x32xf32>, vector<16x32xf32> -> vector<16x32xf32>
    %c0_281 = arith.constant 0 : index
    %c0_282 = arith.constant 0 : index
    %488 = vector.load %arg38[%c0_281, %c0_282] : memref<1x32xf32, #tpu.memory_space<vmem>>, vector<1x32xf32>
    %489 = vector.broadcast %488 : vector<1x32xf32> to vector<16x32xf32>
    %490 = arith.addf %487, %489 : vector<16x32xf32>
    %491 = arith.mulf %485, %490 : vector<16x32xf32>
    %492 = tpu.concatenate %14, %349, %491 in 1 : vector<16x32xf32>, vector<16x32xf32>, vector<16x32xf32> -> vector<16x96xf32>
    %c0_283 = arith.constant 0 : index
    %c0_284 = arith.constant 0 : index
    %493 = vector.load %arg39[%c0_283, %c0_284] : memref<96x32xf32, #tpu.memory_space<vmem>>, vector<96x32xf32>
    %cst_285 = arith.constant dense<0.000000e+00> : vector<16x32xf32>
    %494 = tpu.matmul %492, %493, %cst_285 {dimension_numbers = #tpu.dot_dimension_numbers<[1], [0], [0], [1], [0, 0, 1, 1], [], []>} : vector<16x96xf32>, vector<96x32xf32>, vector<16x32xf32> -> vector<16x32xf32>
    %c0_286 = arith.constant 0 : index
    %c0_287 = arith.constant 0 : index
    %495 = vector.load %arg40[%c0_286, %c0_287] : memref<1x32xf32, #tpu.memory_space<vmem>>, vector<1x32xf32>
    %496 = vector.broadcast %495 : vector<1x32xf32> to vector<16x32xf32>
    %497 = arith.addf %494, %496 : vector<16x32xf32>
    %c0_288 = arith.constant 0 : index
    %c0_289 = arith.constant 0 : index
    %498 = vector.load %arg41[%c0_288, %c0_289] : memref<32x64xf32, #tpu.memory_space<vmem>>, vector<32x64xf32>
    %cst_290 = arith.constant dense<0.000000e+00> : vector<8x64xf32>
    %499 = tpu.matmul %29, %498, %cst_290 {dimension_numbers = #tpu.dot_dimension_numbers<[1], [0], [0], [1], [0, 0, 1, 1], [], []>} : vector<8x32xf32>, vector<32x64xf32>, vector<8x64xf32> -> vector<8x64xf32>
    %c0_291 = arith.constant 0 : index
    %c0_292 = arith.constant 0 : index
    %500 = vector.load %arg42[%c0_291, %c0_292] : memref<1x64xf32, #tpu.memory_space<vmem>>, vector<1x64xf32>
    %501 = vector.broadcast %500 : vector<1x64xf32> to vector<8x64xf32>
    %502 = arith.addf %499, %501 : vector<8x64xf32>
    %c0_293 = arith.constant 0 : index
    %c0_294 = arith.constant 0 : index
    %503 = vector.load %arg43[%c0_293, %c0_294] : memref<32x64xf32, #tpu.memory_space<vmem>>, vector<32x64xf32>
    %cst_295 = arith.constant dense<0.000000e+00> : vector<1x64xf32>
    %504 = tpu.matmul %480, %503, %cst_295 {dimension_numbers = #tpu.dot_dimension_numbers<[1], [0], [0], [1], [0, 0, 1, 1], [], []>} : vector<1x32xf32>, vector<32x64xf32>, vector<1x64xf32> -> vector<1x64xf32>
    %c0_296 = arith.constant 0 : index
    %c0_297 = arith.constant 0 : index
    %505 = vector.load %arg44[%c0_296, %c0_297] : memref<1x64xf32, #tpu.memory_space<vmem>>, vector<1x64xf32>
    %506 = arith.addf %504, %505 : vector<1x64xf32>
    %507 = vector.extract_strided_slice %502 {offsets = [0, 0], sizes = [8, 32], strides = [1, 1]} : vector<8x64xf32> to vector<8x32xf32>
    %508 = vector.extract_strided_slice %506 {offsets = [0, 0], sizes = [1, 32], strides = [1, 1]} : vector<1x64xf32> to vector<1x32xf32>
    %cst_298 = arith.constant 0.176776692 : f32
    %509 = vector.broadcast %cst_298 : f32 to vector<1x32xf32>
    %510 = arith.mulf %508, %509 : vector<1x32xf32>
    %511 = vector.broadcast %510 : vector<1x32xf32> to vector<8x32xf32>
    %512 = arith.mulf %507, %511 : vector<8x32xf32>
    %513 = vector.extract_strided_slice %502 {offsets = [0, 32], sizes = [8, 32], strides = [1, 1]} : vector<8x64xf32> to vector<8x32xf32>
    %514 = vector.extract_strided_slice %506 {offsets = [0, 32], sizes = [1, 32], strides = [1, 1]} : vector<1x64xf32> to vector<1x32xf32>
    %515 = vector.broadcast %514 : vector<1x32xf32> to vector<8x32xf32>
    %516 = arith.mulf %513, %515 : vector<8x32xf32>
    %cst_299 = arith.constant dense<0.000000e+00> : vector<16x8xf32>
    %517 = tpu.matmul %497, %512, %cst_299 {dimension_numbers = #tpu.dot_dimension_numbers<[1], [1], [0], [0], [0, 0, 1, 0], [], []>} : vector<16x32xf32>, vector<8x32xf32>, vector<16x8xf32> -> vector<16x8xf32>
    %cst_300 = arith.constant 5.000000e-01 : f32
    %518 = vector.broadcast %cst_300 : f32 to vector<16x8xf32>
    %519 = arith.cmpf ogt, %33, %518 : vector<16x8xf32>
    %cst_301 = arith.constant -1.000000e+30 : f32
    %520 = vector.broadcast %cst_301 : f32 to vector<16x8xf32>
    %521 = arith.select %519, %520, %517 : vector<16x8xi1>, vector<16x8xf32>
    %cst_302 = arith.constant dense<0xFF800000> : vector<16xf32>
    %522 = vector.multi_reduction <maximumf>, %521, %cst_302 [1] : vector<16x8xf32> to vector<16xf32>
    %523 = vector.shape_cast %522 : vector<16xf32> to vector<16x1xf32>
    %524 = vector.broadcast %523 : vector<16x1xf32> to vector<16x8xf32>
    %525 = arith.subf %521, %524 : vector<16x8xf32>
    %526 = math.exp %525 : vector<16x8xf32>
    %cst_303 = arith.constant dense<0.000000e+00> : vector<16xf32>
    %527 = vector.multi_reduction <add>, %526, %cst_303 [1] : vector<16x8xf32> to vector<16xf32>
    %528 = vector.shape_cast %527 : vector<16xf32> to vector<16x1xf32>
    %529 = vector.broadcast %528 : vector<16x1xf32> to vector<16x8xf32>
    %530 = arith.divf %526, %529 : vector<16x8xf32>
    %cst_304 = arith.constant dense<0.000000e+00> : vector<16x32xf32>
    %531 = tpu.matmul %530, %516, %cst_304 {dimension_numbers = #tpu.dot_dimension_numbers<[1], [0], [0], [1], [0, 0, 1, 1], [], []>} : vector<16x8xf32>, vector<8x32xf32>, vector<16x32xf32> -> vector<16x32xf32>
    %532 = tpu.concatenate %349, %531 in 1 : vector<16x32xf32>, vector<16x32xf32> -> vector<16x64xf32>
    %c0_305 = arith.constant 0 : index
    %c0_306 = arith.constant 0 : index
    %533 = vector.load %arg45[%c0_305, %c0_306] : memref<64x32xf32, #tpu.memory_space<vmem>>, vector<64x32xf32>
    %cst_307 = arith.constant dense<0.000000e+00> : vector<16x32xf32>
    %534 = tpu.matmul %532, %533, %cst_307 {dimension_numbers = #tpu.dot_dimension_numbers<[1], [0], [0], [1], [0, 0, 1, 1], [], []>} : vector<16x64xf32>, vector<64x32xf32>, vector<16x32xf32> -> vector<16x32xf32>
    %c0_308 = arith.constant 0 : index
    %c0_309 = arith.constant 0 : index
    %535 = vector.load %arg46[%c0_308, %c0_309] : memref<1x32xf32, #tpu.memory_space<vmem>>, vector<1x32xf32>
    %536 = vector.broadcast %535 : vector<1x32xf32> to vector<16x32xf32>
    %537 = arith.addf %534, %536 : vector<16x32xf32>
    %cst_310 = arith.constant 5.000000e-01 : f32
    %538 = vector.broadcast %cst_310 : f32 to vector<1x16xf32>
    %539 = arith.cmpf ogt, %35, %538 : vector<1x16xf32>
    %cst_311 = arith.constant -1.000000e+30 : f32
    %cst_312 = arith.constant 1.000000e+00 : f32
    %540 = vector.broadcast %cst_311 : f32 to vector<1x16xf32>
    %541 = vector.broadcast %cst_312 : f32 to vector<1x16xf32>
    %542 = arith.select %539, %540, %541 : vector<1x16xi1>, vector<1x16xf32>
    %cst_313 = arith.constant dense<0.000000e+00> : vector<1x32xf32>
    %543 = tpu.matmul %542, %428, %cst_313 {dimension_numbers = #tpu.dot_dimension_numbers<[1], [0], [0], [1], [0, 0, 1, 1], [], []>} : vector<1x16xf32>, vector<16x32xf32>, vector<1x32xf32> -> vector<1x32xf32>
    %cst_314 = arith.constant dense<0.000000e+00> : vector<1x32xf32>
    %544 = tpu.matmul %542, %537, %cst_314 {dimension_numbers = #tpu.dot_dimension_numbers<[1], [0], [0], [1], [0, 0, 1, 1], [], []>} : vector<1x16xf32>, vector<16x32xf32>, vector<1x32xf32> -> vector<1x32xf32>
    %545 = vector.broadcast %543 : vector<1x32xf32> to vector<16x32xf32>
    %546 = arith.mulf %537, %545 : vector<16x32xf32>
    %547 = vector.broadcast %543 : vector<1x32xf32> to vector<16x32xf32>
    %548 = arith.mulf %428, %547 : vector<16x32xf32>
    %549 = vector.broadcast %544 : vector<1x32xf32> to vector<16x32xf32>
    %550 = arith.mulf %537, %549 : vector<16x32xf32>
    %551 = vector.broadcast %544 : vector<1x32xf32> to vector<16x32xf32>
    %552 = arith.mulf %428, %551 : vector<16x32xf32>
    %553 = tpu.concatenate %546, %548, %550, %552 in 0 : vector<16x32xf32>, vector<16x32xf32>, vector<16x32xf32>, vector<16x32xf32> -> vector<64x32xf32>
    %554 = arith.mulf %553, %553 : vector<64x32xf32>
    %cst_315 = arith.constant dense<0.000000e+00> : vector<64xf32>
    %555 = vector.multi_reduction <add>, %554, %cst_315 [1] : vector<64x32xf32> to vector<64xf32>
    %556 = vector.shape_cast %555 : vector<64xf32> to vector<64x1xf32>
    %cst_316 = arith.constant 1.000000e-24 : f32
    %557 = vector.broadcast %cst_316 : f32 to vector<64x1xf32>
    %558 = arith.maximumf %556, %557 : vector<64x1xf32>
    %559 = math.rsqrt %558 : vector<64x1xf32>
    %560 = vector.broadcast %559 : vector<64x1xf32> to vector<64x32xf32>
    %561 = arith.mulf %553, %560 : vector<64x32xf32>
    %562 = vector.extract_strided_slice %561 {offsets = [0, 0], sizes = [16, 32], strides = [1, 1]} : vector<64x32xf32> to vector<16x32xf32>
    %563 = vector.extract_strided_slice %561 {offsets = [16, 0], sizes = [16, 32], strides = [1, 1]} : vector<64x32xf32> to vector<16x32xf32>
    %564 = vector.extract_strided_slice %561 {offsets = [32, 0], sizes = [16, 32], strides = [1, 1]} : vector<64x32xf32> to vector<16x32xf32>
    %565 = vector.extract_strided_slice %561 {offsets = [48, 0], sizes = [16, 32], strides = [1, 1]} : vector<64x32xf32> to vector<16x32xf32>
    %c0_317 = arith.constant 0 : index
    %c0_318 = arith.constant 0 : index
    %566 = memref.load %arg55[%c0_317, %c0_318] : memref<2x4xf32, #tpu.memory_space<smem>>
    %567 = vector.broadcast %566 : f32 to vector<16x32xf32>
    %568 = arith.mulf %567, %562 : vector<16x32xf32>
    %c0_319 = arith.constant 0 : index
    %c1_320 = arith.constant 1 : index
    %569 = memref.load %arg55[%c0_319, %c1_320] : memref<2x4xf32, #tpu.memory_space<smem>>
    %570 = vector.broadcast %569 : f32 to vector<16x32xf32>
    %571 = arith.mulf %570, %563 : vector<16x32xf32>
    %572 = arith.addf %568, %571 : vector<16x32xf32>
    %c0_321 = arith.constant 0 : index
    %c2_322 = arith.constant 2 : index
    %573 = memref.load %arg55[%c0_321, %c2_322] : memref<2x4xf32, #tpu.memory_space<smem>>
    %574 = vector.broadcast %573 : f32 to vector<16x32xf32>
    %575 = arith.mulf %574, %564 : vector<16x32xf32>
    %576 = arith.addf %572, %575 : vector<16x32xf32>
    %c0_323 = arith.constant 0 : index
    %c3_324 = arith.constant 3 : index
    %577 = memref.load %arg55[%c0_323, %c3_324] : memref<2x4xf32, #tpu.memory_space<smem>>
    %578 = vector.broadcast %577 : f32 to vector<16x32xf32>
    %579 = arith.mulf %578, %565 : vector<16x32xf32>
    %580 = arith.addf %576, %579 : vector<16x32xf32>
    %c0_325 = arith.constant 0 : index
    %581 = memref.load %arg56[%c0_325] : memref<2xf32, #tpu.memory_space<smem>>
    %582 = vector.broadcast %581 : f32 to vector<16x32xf32>
    %583 = arith.addf %580, %582 : vector<16x32xf32>
    %c1_326 = arith.constant 1 : index
    %c0_327 = arith.constant 0 : index
    %584 = memref.load %arg55[%c1_326, %c0_327] : memref<2x4xf32, #tpu.memory_space<smem>>
    %585 = vector.broadcast %584 : f32 to vector<16x32xf32>
    %586 = arith.mulf %585, %562 : vector<16x32xf32>
    %c1_328 = arith.constant 1 : index
    %c1_329 = arith.constant 1 : index
    %587 = memref.load %arg55[%c1_328, %c1_329] : memref<2x4xf32, #tpu.memory_space<smem>>
    %588 = vector.broadcast %587 : f32 to vector<16x32xf32>
    %589 = arith.mulf %588, %563 : vector<16x32xf32>
    %590 = arith.addf %586, %589 : vector<16x32xf32>
    %c1_330 = arith.constant 1 : index
    %c2_331 = arith.constant 2 : index
    %591 = memref.load %arg55[%c1_330, %c2_331] : memref<2x4xf32, #tpu.memory_space<smem>>
    %592 = vector.broadcast %591 : f32 to vector<16x32xf32>
    %593 = arith.mulf %592, %564 : vector<16x32xf32>
    %594 = arith.addf %590, %593 : vector<16x32xf32>
    %c1_332 = arith.constant 1 : index
    %c3_333 = arith.constant 3 : index
    %595 = memref.load %arg55[%c1_332, %c3_333] : memref<2x4xf32, #tpu.memory_space<smem>>
    %596 = vector.broadcast %595 : f32 to vector<16x32xf32>
    %597 = arith.mulf %596, %565 : vector<16x32xf32>
    %598 = arith.addf %594, %597 : vector<16x32xf32>
    %c1_334 = arith.constant 1 : index
    %599 = memref.load %arg56[%c1_334] : memref<2xf32, #tpu.memory_space<smem>>
    %600 = vector.broadcast %599 : f32 to vector<16x32xf32>
    %601 = arith.addf %598, %600 : vector<16x32xf32>
    %c0_335 = arith.constant 0 : index
    %c0_336 = arith.constant 0 : index
    %602 = vector.load %arg47[%c0_335, %c0_336] : memref<1x32xf32, #tpu.memory_space<vmem>>, vector<1x32xf32>
    %c0_337 = arith.constant 0 : index
    %c0_338 = arith.constant 0 : index
    %603 = vector.load %arg48[%c0_337, %c0_338] : memref<1x32xf32, #tpu.memory_space<vmem>>, vector<1x32xf32>
    %cst_339 = arith.constant dense<0.000000e+00> : vector<16xf32>
    %604 = vector.multi_reduction <add>, %583, %cst_339 [1] : vector<16x32xf32> to vector<16xf32>
    %605 = vector.shape_cast %604 : vector<16xf32> to vector<16x1xf32>
    %cst_340 = arith.constant 3.200000e+01 : f32
    %606 = vector.broadcast %cst_340 : f32 to vector<16x1xf32>
    %607 = arith.divf %605, %606 : vector<16x1xf32>
    %608 = vector.broadcast %607 : vector<16x1xf32> to vector<16x32xf32>
    %609 = arith.subf %583, %608 : vector<16x32xf32>
    %610 = arith.mulf %609, %609 : vector<16x32xf32>
    %cst_341 = arith.constant dense<0.000000e+00> : vector<16xf32>
    %611 = vector.multi_reduction <add>, %610, %cst_341 [1] : vector<16x32xf32> to vector<16xf32>
    %612 = vector.shape_cast %611 : vector<16xf32> to vector<16x1xf32>
    %cst_342 = arith.constant 3.200000e+01 : f32
    %613 = vector.broadcast %cst_342 : f32 to vector<16x1xf32>
    %614 = arith.divf %612, %613 : vector<16x1xf32>
    %615 = vector.broadcast %607 : vector<16x1xf32> to vector<16x32xf32>
    %616 = arith.subf %583, %615 : vector<16x32xf32>
    %cst_343 = arith.constant 9.99999974E-6 : f32
    %617 = vector.broadcast %cst_343 : f32 to vector<16x1xf32>
    %618 = arith.addf %614, %617 : vector<16x1xf32>
    %619 = math.rsqrt %618 : vector<16x1xf32>
    %620 = vector.broadcast %619 : vector<16x1xf32> to vector<16x32xf32>
    %621 = arith.mulf %616, %620 : vector<16x32xf32>
    %622 = vector.broadcast %602 : vector<1x32xf32> to vector<16x32xf32>
    %623 = arith.mulf %621, %622 : vector<16x32xf32>
    %624 = vector.broadcast %603 : vector<1x32xf32> to vector<16x32xf32>
    %625 = arith.addf %623, %624 : vector<16x32xf32>
    %c0_344 = arith.constant 0 : index
    %c0_345 = arith.constant 0 : index
    %626 = vector.load %arg49[%c0_344, %c0_345] : memref<1x32xf32, #tpu.memory_space<vmem>>, vector<1x32xf32>
    %c0_346 = arith.constant 0 : index
    %c0_347 = arith.constant 0 : index
    %627 = vector.load %arg50[%c0_346, %c0_347] : memref<1x32xf32, #tpu.memory_space<vmem>>, vector<1x32xf32>
    %cst_348 = arith.constant dense<0.000000e+00> : vector<16xf32>
    %628 = vector.multi_reduction <add>, %601, %cst_348 [1] : vector<16x32xf32> to vector<16xf32>
    %629 = vector.shape_cast %628 : vector<16xf32> to vector<16x1xf32>
    %cst_349 = arith.constant 3.200000e+01 : f32
    %630 = vector.broadcast %cst_349 : f32 to vector<16x1xf32>
    %631 = arith.divf %629, %630 : vector<16x1xf32>
    %632 = vector.broadcast %631 : vector<16x1xf32> to vector<16x32xf32>
    %633 = arith.subf %601, %632 : vector<16x32xf32>
    %634 = arith.mulf %633, %633 : vector<16x32xf32>
    %cst_350 = arith.constant dense<0.000000e+00> : vector<16xf32>
    %635 = vector.multi_reduction <add>, %634, %cst_350 [1] : vector<16x32xf32> to vector<16xf32>
    %636 = vector.shape_cast %635 : vector<16xf32> to vector<16x1xf32>
    %cst_351 = arith.constant 3.200000e+01 : f32
    %637 = vector.broadcast %cst_351 : f32 to vector<16x1xf32>
    %638 = arith.divf %636, %637 : vector<16x1xf32>
    %639 = vector.broadcast %631 : vector<16x1xf32> to vector<16x32xf32>
    %640 = arith.subf %601, %639 : vector<16x32xf32>
    %cst_352 = arith.constant 9.99999974E-6 : f32
    %641 = vector.broadcast %cst_352 : f32 to vector<16x1xf32>
    %642 = arith.addf %638, %641 : vector<16x1xf32>
    %643 = math.rsqrt %642 : vector<16x1xf32>
    %644 = vector.broadcast %643 : vector<16x1xf32> to vector<16x32xf32>
    %645 = arith.mulf %640, %644 : vector<16x32xf32>
    %646 = vector.broadcast %626 : vector<1x32xf32> to vector<16x32xf32>
    %647 = arith.mulf %645, %646 : vector<16x32xf32>
    %648 = vector.broadcast %627 : vector<1x32xf32> to vector<16x32xf32>
    %649 = arith.addf %647, %648 : vector<16x32xf32>
    %650 = tpu.concatenate %14, %625, %649 in 1 : vector<16x32xf32>, vector<16x32xf32>, vector<16x32xf32> -> vector<16x96xf32>
    %c0_353 = arith.constant 0 : index
    %c0_354 = arith.constant 0 : index
    %651 = vector.load %arg51[%c0_353, %c0_354] : memref<96x32xf32, #tpu.memory_space<vmem>>, vector<96x32xf32>
    %cst_355 = arith.constant dense<0.000000e+00> : vector<16x32xf32>
    %652 = tpu.matmul %650, %651, %cst_355 {dimension_numbers = #tpu.dot_dimension_numbers<[1], [0], [0], [1], [0, 0, 1, 1], [], []>} : vector<16x96xf32>, vector<96x32xf32>, vector<16x32xf32> -> vector<16x32xf32>
    %c0_356 = arith.constant 0 : index
    %c0_357 = arith.constant 0 : index
    %653 = vector.load %arg52[%c0_356, %c0_357] : memref<1x32xf32, #tpu.memory_space<vmem>>, vector<1x32xf32>
    %654 = vector.broadcast %653 : vector<1x32xf32> to vector<16x32xf32>
    %655 = arith.addf %652, %654 : vector<16x32xf32>
    %c0_358 = arith.constant 0 : index
    %c0_359 = arith.constant 0 : index
    %c0_360 = arith.constant 0 : index
    %656 = vector.load %arg57[%c0_358, %c0_359, %c0_360] : memref<1x16x32xf32, #tpu.memory_space<vmem>>, vector<1x16x32xf32>
    %657 = vector.shape_cast %656 : vector<1x16x32xf32> to vector<16x32xf32>
    %658 = vector.shape_cast %655 : vector<16x32xf32> to vector<1x16x32xf32>
    tpu.vector_store %arg57[%c0_358, %c0_359, %c0_360], %658 {strides = array<i32>} : memref<1x16x32xf32, #tpu.memory_space<vmem>>, vector<1x16x32xf32>,
    return
  }
  func.func @transform_0(%arg0: i32) -> (i32, i32, i32) {
    %c0_i32 = arith.constant 0 : i32
    %c0_i32_0 = arith.constant 0 : i32
    %c0_i32_1 = arith.constant 0 : i32
    return %arg0, %c0_i32, %c0_i32_0 : i32, i32, i32
  }
  func.func @transform_1(%arg0: i32) -> (i32, i32, i32) {
    %c0_i32 = arith.constant 0 : i32
    %c0_i32_0 = arith.constant 0 : i32
    %c0_i32_1 = arith.constant 0 : i32
    return %arg0, %c0_i32, %c0_i32_0 : i32, i32, i32
  }
  func.func @transform_2(%arg0: i32) -> (i32, i32, i32) {
    %c0_i32 = arith.constant 0 : i32
    %c0_i32_0 = arith.constant 0 : i32
    %c0_i32_1 = arith.constant 0 : i32
    return %arg0, %c0_i32, %c0_i32_0 : i32, i32, i32
  }
  func.func @transform_3(%arg0: i32) -> (i32, i32, i32) {
    %c0_i32 = arith.constant 0 : i32
    %c0_i32_0 = arith.constant 0 : i32
    %c0_i32_1 = arith.constant 0 : i32
    return %arg0, %c0_i32, %c0_i32_0 : i32, i32, i32
  }
  func.func @transform_4(%arg0: i32) -> (i32, i32, i32) {
    %c0_i32 = arith.constant 0 : i32
    %c0_i32_0 = arith.constant 0 : i32
    %c0_i32_1 = arith.constant 0 : i32
    return %arg0, %c0_i32, %c0_i32_0 : i32, i32, i32
  }
  func.func @transform_5(%arg0: i32) -> (i32, i32, i32) {
    %c0_i32 = arith.constant 0 : i32
    %c0_i32_0 = arith.constant 0 : i32
    %c0_i32_1 = arith.constant 0 : i32
    return %arg0, %c0_i32, %c0_i32_0 : i32, i32, i32
  }
  func.func @transform_6(%arg0: i32) -> (i32, i32, i32) {
    %c0_i32 = arith.constant 0 : i32
    %c0_i32_0 = arith.constant 0 : i32
    %c0_i32_1 = arith.constant 0 : i32
    return %arg0, %c0_i32, %c0_i32_0 : i32, i32, i32
  }
  func.func @transform_7(%arg0: i32) -> (i32, i32, i32) {
    %c0_i32 = arith.constant 0 : i32
    %c0_i32_0 = arith.constant 0 : i32
    %c0_i32_1 = arith.constant 0 : i32
    return %arg0, %c0_i32, %c0_i32_0 : i32, i32, i32
  }
  func.func @transform_8(%arg0: i32) -> (i32, i32, i32) {
    %c0_i32 = arith.constant 0 : i32
    %c0_i32_0 = arith.constant 0 : i32
    %c0_i32_1 = arith.constant 0 : i32
    return %arg0, %c0_i32, %c0_i32_0 : i32, i32, i32
  }
  func.func @transform_9(%arg0: i32) -> (i32, i32, i32) {
    %c0_i32 = arith.constant 0 : i32
    %c0_i32_0 = arith.constant 0 : i32
    %c0_i32_1 = arith.constant 0 : i32
    return %arg0, %c0_i32, %c0_i32_0 : i32, i32, i32
  }
  func.func @transform_10(%arg0: i32) -> (i32, i32, i32) {
    %c0_i32 = arith.constant 0 : i32
    %c0_i32_0 = arith.constant 0 : i32
    %c0_i32_1 = arith.constant 0 : i32
    return %arg0, %c0_i32, %c0_i32_0 : i32, i32, i32
  }
  func.func @transform_11(%arg0: i32) -> (i32, i32) {
    %c0_i32 = arith.constant 0 : i32
    %c0_i32_0 = arith.constant 0 : i32
    %c0_i32_1 = arith.constant 0 : i32
    return %c0_i32, %c0_i32_0 : i32, i32
  }
  func.func @transform_12(%arg0: i32) -> (i32, i32) {
    %c0_i32 = arith.constant 0 : i32
    %c0_i32_0 = arith.constant 0 : i32
    %c0_i32_1 = arith.constant 0 : i32
    return %c0_i32, %c0_i32_0 : i32, i32
  }
  func.func @transform_13(%arg0: i32) -> (i32, i32) {
    %c0_i32 = arith.constant 0 : i32
    %c0_i32_0 = arith.constant 0 : i32
    %c0_i32_1 = arith.constant 0 : i32
    return %c0_i32, %c0_i32_0 : i32, i32
  }
  func.func @transform_14(%arg0: i32) -> (i32, i32) {
    %c0_i32 = arith.constant 0 : i32
    %c0_i32_0 = arith.constant 0 : i32
    %c0_i32_1 = arith.constant 0 : i32
    return %c0_i32, %c0_i32_0 : i32, i32
  }
  func.func @transform_15(%arg0: i32) -> (i32, i32) {
    %c0_i32 = arith.constant 0 : i32
    %c0_i32_0 = arith.constant 0 : i32
    %c0_i32_1 = arith.constant 0 : i32
    return %c0_i32, %c0_i32_0 : i32, i32
  }
  func.func @transform_16(%arg0: i32) -> (i32, i32, i32) {
    %c0_i32 = arith.constant 0 : i32
    %c0_i32_0 = arith.constant 0 : i32
    %c0_i32_1 = arith.constant 0 : i32
    %c0_i32_2 = arith.constant 0 : i32
    return %c0_i32, %c0_i32_0, %c0_i32_1 : i32, i32, i32
  }
  func.func @transform_17(%arg0: i32) -> (i32, i32, i32) {
    %c0_i32 = arith.constant 0 : i32
    %c0_i32_0 = arith.constant 0 : i32
    %c0_i32_1 = arith.constant 0 : i32
    %c0_i32_2 = arith.constant 0 : i32
    return %c0_i32, %c0_i32_0, %c0_i32_1 : i32, i32, i32
  }
  func.func @transform_18(%arg0: i32) -> (i32, i32) {
    %c0_i32 = arith.constant 0 : i32
    %c0_i32_0 = arith.constant 0 : i32
    %c0_i32_1 = arith.constant 0 : i32
    return %c0_i32, %c0_i32_0 : i32, i32
  }
  func.func @transform_19(%arg0: i32) -> (i32, i32, i32) {
    %c0_i32 = arith.constant 0 : i32
    %c0_i32_0 = arith.constant 0 : i32
    %c0_i32_1 = arith.constant 0 : i32
    %c0_i32_2 = arith.constant 0 : i32
    return %c0_i32, %c0_i32_0, %c0_i32_1 : i32, i32, i32
  }
  func.func @transform_20(%arg0: i32) -> (i32, i32, i32) {
    %c0_i32 = arith.constant 0 : i32
    %c0_i32_0 = arith.constant 0 : i32
    %c0_i32_1 = arith.constant 0 : i32
    %c0_i32_2 = arith.constant 0 : i32
    return %c0_i32, %c0_i32_0, %c0_i32_1 : i32, i32, i32
  }
  func.func @transform_21(%arg0: i32) -> (i32, i32, i32) {
    %c0_i32 = arith.constant 0 : i32
    %c0_i32_0 = arith.constant 0 : i32
    %c0_i32_1 = arith.constant 0 : i32
    %c0_i32_2 = arith.constant 0 : i32
    return %c0_i32, %c0_i32_0, %c0_i32_1 : i32, i32, i32
  }
  func.func @transform_22(%arg0: i32) -> (i32, i32, i32) {
    %c0_i32 = arith.constant 0 : i32
    %c0_i32_0 = arith.constant 0 : i32
    %c0_i32_1 = arith.constant 0 : i32
    %c0_i32_2 = arith.constant 0 : i32
    return %c0_i32, %c0_i32_0, %c0_i32_1 : i32, i32, i32
  }
  func.func @transform_23(%arg0: i32) -> (i32, i32, i32) {
    %c0_i32 = arith.constant 0 : i32
    %c0_i32_0 = arith.constant 0 : i32
    %c0_i32_1 = arith.constant 0 : i32
    %c0_i32_2 = arith.constant 0 : i32
    return %c0_i32, %c0_i32_0, %c0_i32_1 : i32, i32, i32
  }
  func.func @transform_24(%arg0: i32) -> (i32, i32) {
    %c0_i32 = arith.constant 0 : i32
    %c0_i32_0 = arith.constant 0 : i32
    %c0_i32_1 = arith.constant 0 : i32
    return %c0_i32, %c0_i32_0 : i32, i32
  }
  func.func @transform_25(%arg0: i32) -> (i32, i32) {
    %c0_i32 = arith.constant 0 : i32
    %c0_i32_0 = arith.constant 0 : i32
    %c0_i32_1 = arith.constant 0 : i32
    return %c0_i32, %c0_i32_0 : i32, i32
  }
  func.func @transform_26(%arg0: i32) -> (i32, i32) {
    %c0_i32 = arith.constant 0 : i32
    %c0_i32_0 = arith.constant 0 : i32
    %c0_i32_1 = arith.constant 0 : i32
    return %c0_i32, %c0_i32_0 : i32, i32
  }
  func.func @transform_27(%arg0: i32) -> (i32, i32) {
    %c0_i32 = arith.constant 0 : i32
    %c0_i32_0 = arith.constant 0 : i32
    %c0_i32_1 = arith.constant 0 : i32
    return %c0_i32, %c0_i32_0 : i32, i32
  }
  func.func @transform_28(%arg0: i32) -> (i32, i32) {
    %c0_i32 = arith.constant 0 : i32
    %c0_i32_0 = arith.constant 0 : i32
    %c0_i32_1 = arith.constant 0 : i32
    return %c0_i32, %c0_i32_0 : i32, i32
  }
  func.func @transform_29(%arg0: i32) -> (i32, i32) {
    %c0_i32 = arith.constant 0 : i32
    %c0_i32_0 = arith.constant 0 : i32
    %c0_i32_1 = arith.constant 0 : i32
    return %c0_i32, %c0_i32_0 : i32, i32
  }
  func.func @transform_30(%arg0: i32) -> (i32, i32) {
    %c0_i32 = arith.constant 0 : i32
    %c0_i32_0 = arith.constant 0 : i32
    %c0_i32_1 = arith.constant 0 : i32
    return %c0_i32, %c0_i32_0 : i32, i32
  }
  func.func @transform_31(%arg0: i32) -> (i32, i32) {
    %c0_i32 = arith.constant 0 : i32
    %c0_i32_0 = arith.constant 0 : i32
    %c0_i32_1 = arith.constant 0 : i32
    return %c0_i32, %c0_i32_0 : i32, i32
  }
  func.func @transform_32(%arg0: i32) -> (i32, i32) {
    %c0_i32 = arith.constant 0 : i32
    %c0_i32_0 = arith.constant 0 : i32
    %c0_i32_1 = arith.constant 0 : i32
    return %c0_i32, %c0_i32_0 : i32, i32
  }
  func.func @transform_33(%arg0: i32) -> (i32, i32) {
    %c0_i32 = arith.constant 0 : i32
    %c0_i32_0 = arith.constant 0 : i32
    %c0_i32_1 = arith.constant 0 : i32
    return %c0_i32, %c0_i32_0 : i32, i32
  }
  func.func @transform_34(%arg0: i32) -> (i32, i32) {
    %c0_i32 = arith.constant 0 : i32
    %c0_i32_0 = arith.constant 0 : i32
    %c0_i32_1 = arith.constant 0 : i32
    return %c0_i32, %c0_i32_0 : i32, i32
  }
  func.func @transform_35(%arg0: i32) -> (i32, i32) {
    %c0_i32 = arith.constant 0 : i32
    %c0_i32_0 = arith.constant 0 : i32
    %c0_i32_1 = arith.constant 0 : i32
    return %c0_i32, %c0_i32_0 : i32, i32
  }
  func.func @transform_36(%arg0: i32) -> (i32, i32) {
    %c0_i32 = arith.constant 0 : i32
    %c0_i32_0 = arith.constant 0 : i32
    %c0_i32_1 = arith.constant 0 : i32
    return %c0_i32, %c0_i32_0 : i32, i32
  }
  func.func @transform_37(%arg0: i32) -> (i32, i32) {
    %c0_i32 = arith.constant 0 : i32
    %c0_i32_0 = arith.constant 0 : i32
    %c0_i32_1 = arith.constant 0 : i32
    return %c0_i32, %c0_i32_0 : i32, i32
  }
  func.func @transform_38(%arg0: i32) -> (i32, i32) {
    %c0_i32 = arith.constant 0 : i32
    %c0_i32_0 = arith.constant 0 : i32
    %c0_i32_1 = arith.constant 0 : i32
    return %c0_i32, %c0_i32_0 : i32, i32
  }
  func.func @transform_39(%arg0: i32) -> (i32, i32) {
    %c0_i32 = arith.constant 0 : i32
    %c0_i32_0 = arith.constant 0 : i32
    %c0_i32_1 = arith.constant 0 : i32
    return %c0_i32, %c0_i32_0 : i32, i32
  }
  func.func @transform_40(%arg0: i32) -> (i32, i32) {
    %c0_i32 = arith.constant 0 : i32
    %c0_i32_0 = arith.constant 0 : i32
    %c0_i32_1 = arith.constant 0 : i32
    return %c0_i32, %c0_i32_0 : i32, i32
  }
  func.func @transform_41(%arg0: i32) -> (i32, i32) {
    %c0_i32 = arith.constant 0 : i32
    %c0_i32_0 = arith.constant 0 : i32
    %c0_i32_1 = arith.constant 0 : i32
    return %c0_i32, %c0_i32_0 : i32, i32
  }
  func.func @transform_42(%arg0: i32) -> (i32, i32) {
    %c0_i32 = arith.constant 0 : i32
    %c0_i32_0 = arith.constant 0 : i32
    %c0_i32_1 = arith.constant 0 : i32
    return %c0_i32, %c0_i32_0 : i32, i32
  }
  func.func @transform_43(%arg0: i32) -> (i32, i32) {
    %c0_i32 = arith.constant 0 : i32
    %c0_i32_0 = arith.constant 0 : i32
    %c0_i32_1 = arith.constant 0 : i32
    return %c0_i32, %c0_i32_0 : i32, i32
  }
  func.func @transform_44(%arg0: i32) -> (i32, i32) {
    %c0_i32 = arith.constant 0 : i32
    %c0_i32_0 = arith.constant 0 : i32
    %c0_i32_1 = arith.constant 0 : i32
    return %c0_i32, %c0_i32_0 : i32, i32
  }
  func.func @transform_45(%arg0: i32) -> (i32, i32) {
    %c0_i32 = arith.constant 0 : i32
    %c0_i32_0 = arith.constant 0 : i32
    %c0_i32_1 = arith.constant 0 : i32
    return %c0_i32, %c0_i32_0 : i32, i32
  }
  func.func @transform_46(%arg0: i32) -> (i32, i32) {
    %c0_i32 = arith.constant 0 : i32
    %c0_i32_0 = arith.constant 0 : i32
    %c0_i32_1 = arith.constant 0 : i32
    return %c0_i32, %c0_i32_0 : i32, i32
  }
  func.func @transform_47(%arg0: i32) -> (i32, i32) {
    %c0_i32 = arith.constant 0 : i32
    %c0_i32_0 = arith.constant 0 : i32
    %c0_i32_1 = arith.constant 0 : i32
    return %c0_i32, %c0_i32_0 : i32, i32
  }
  func.func @transform_48(%arg0: i32) -> (i32, i32) {
    %c0_i32 = arith.constant 0 : i32
    %c0_i32_0 = arith.constant 0 : i32
    %c0_i32_1 = arith.constant 0 : i32
    return %c0_i32, %c0_i32_0 : i32, i32
  }
  func.func @transform_49(%arg0: i32) -> (i32, i32) {
    %c0_i32 = arith.constant 0 : i32
    %c0_i32_0 = arith.constant 0 : i32
    %c0_i32_1 = arith.constant 0 : i32
    return %c0_i32, %c0_i32_0 : i32, i32
  }
  func.func @transform_50(%arg0: i32) -> (i32, i32) {
    %c0_i32 = arith.constant 0 : i32
    %c0_i32_0 = arith.constant 0 : i32
    %c0_i32_1 = arith.constant 0 : i32
    return %c0_i32, %c0_i32_0 : i32, i32
  }
  func.func @transform_51(%arg0: i32) -> (i32, i32) {
    %c0_i32 = arith.constant 0 : i32
    %c0_i32_0 = arith.constant 0 : i32
    %c0_i32_1 = arith.constant 0 : i32
    return %c0_i32, %c0_i32_0 : i32, i32
  }
  func.func @transform_52(%arg0: i32) -> i32 {
    %c0_i32 = arith.constant 0 : i32
    %c0_i32_0 = arith.constant 0 : i32
    return %c0_i32 : i32
  }
  func.func @transform_53(%arg0: i32) -> i32 {
    %c0_i32 = arith.constant 0 : i32
    %c0_i32_0 = arith.constant 0 : i32
    return %c0_i32 : i32
  }
  func.func @transform_54(%arg0: i32) -> (i32, i32) {
    %c0_i32 = arith.constant 0 : i32
    %c0_i32_0 = arith.constant 0 : i32
    %c0_i32_1 = arith.constant 0 : i32
    return %c0_i32, %c0_i32_0 : i32, i32
  }
  func.func @transform_55(%arg0: i32) -> i32 {
    %c0_i32 = arith.constant 0 : i32
    %c0_i32_0 = arith.constant 0 : i32
    return %c0_i32 : i32
  }
  func.func @transform_56(%arg0: i32) -> (i32, i32, i32) {
    %c0_i32 = arith.constant 0 : i32
    %c0_i32_0 = arith.constant 0 : i32
    %c0_i32_1 = arith.constant 0 : i32
    return %arg0, %c0_i32, %c0_i32_0 : i32, i32, i32
  }
}

</mosaic_0001>

<llo_original>
// kernel: lcgn_forward.1
$region0: #{lcgn_forward.1}
  #allocation0 [shape = 'u32[]', space=smem, size = 0x4, offset = 0x4, fixed_abs, tag = 'smem constant byte address 0x4 - core index']
  #allocation1 [shape = 'u32[144,128]{1,0:T(1,128)}', space=vmem, size = 0x12000, scoped, tag = 'internal scratch']
  #allocation2 [shape = 'f32[1]{0:T(128)S(6)}', space=smem, size = 0x200, scoped, tag = 'scoped memory for lcgn_forward.1']
  %s0 = inlined_call_operand.smem [shape: u32[57], index: -1, kind: input, shape index: {}]
  %s1 = sld [smem:[%s0]]
  %s2 = scalar_lea.smem %s0, 1
  %s3 = sld [smem:[%s2]]
  %s4 = scalar_lea.smem %s0, 2
  %s5 = sld [smem:[%s4]]
  %s6 = scalar_lea.smem %s0, 3
  %s7 = sld [smem:[%s6]]
  %s8 = scalar_lea.smem %s0, 4
  %s9 = sld [smem:[%s8]]
  %s10 = scalar_lea.smem %s0, 5
  %s11 = sld [smem:[%s10]]
  %s12 = scalar_lea.smem %s0, 6
  %s13 = sld [smem:[%s12]]
  %s14 = scalar_lea.smem %s0, 7
  %s15 = sld [smem:[%s14]]
  %s16 = scalar_lea.smem %s0, 8
  %s17 = sld [smem:[%s16]]
  %s18 = scalar_lea.smem %s0, 9
  %s19 = sld [smem:[%s18]]
  %s20 = scalar_lea.smem %s0, 10
  %s21 = sld [smem:[%s20]]
  %s22 = scalar_lea.smem %s0, 11
  %s23 = sld [smem:[%s22]]
  %s24 = scalar_lea.smem %s0, 12
  %s25 = sld [smem:[%s24]]
  %s26 = scalar_lea.smem %s0, 13
  %s27 = sld [smem:[%s26]]
  %s28 = scalar_lea.smem %s0, 14
  %s29 = sld [smem:[%s28]]
  %s30 = scalar_lea.smem %s0, 15
  %s31 = sld [smem:[%s30]]
  %s32 = scalar_lea.smem %s0, 16
  %s33 = sld [smem:[%s32]]
  %s34 = scalar_lea.smem %s0, 17
  %s35 = sld [smem:[%s34]]
  %s36 = scalar_lea.smem %s0, 18
  %s37 = sld [smem:[%s36]]
  %s38 = scalar_lea.smem %s0, 19
  %s39 = sld [smem:[%s38]]
  %s40 = scalar_lea.smem %s0, 20
  %s41 = sld [smem:[%s40]]
  %s42 = scalar_lea.smem %s0, 21
  %s43 = sld [smem:[%s42]]
  %s44 = scalar_lea.smem %s0, 22
  %s45 = sld [smem:[%s44]]
  %s46 = scalar_lea.smem %s0, 23
  %s47 = sld [smem:[%s46]]
  %s48 = scalar_lea.smem %s0, 24
  %s49 = sld [smem:[%s48]]
  %s50 = scalar_lea.smem %s0, 25
  %s51 = sld [smem:[%s50]]
  %s52 = scalar_lea.smem %s0, 26
  %s53 = sld [smem:[%s52]]
  %s54 = scalar_lea.smem %s0, 27
  %s55 = sld [smem:[%s54]]
  %s56 = scalar_lea.smem %s0, 28
  %s57 = sld [smem:[%s56]]
  %s58 = scalar_lea.smem %s0, 29
  %s59 = sld [smem:[%s58]]
  %s60 = scalar_lea.smem %s0, 30
  %s61 = sld [smem:[%s60]]
  %s62 = scalar_lea.smem %s0, 31
  %s63 = sld [smem:[%s62]]
  %s64 = scalar_lea.smem %s0, 32
  %s65 = sld [smem:[%s64]]
  %s66 = scalar_lea.smem %s0, 33
  %s67 = sld [smem:[%s66]]
  %s68 = scalar_lea.smem %s0, 34
  %s69 = sld [smem:[%s68]]
  %s70 = scalar_lea.smem %s0, 35
  %s71 = sld [smem:[%s70]]
  %s72 = scalar_lea.smem %s0, 36
  %s73 = sld [smem:[%s72]]
  %s74 = scalar_lea.smem %s0, 37
  %s75 = sld [smem:[%s74]]
  %s76 = scalar_lea.smem %s0, 38
  %s77 = sld [smem:[%s76]]
  %s78 = scalar_lea.smem %s0, 39
  %s79 = sld [smem:[%s78]]
  %s80 = scalar_lea.smem %s0, 40
  %s81 = sld [smem:[%s80]]
  %s82 = scalar_lea.smem %s0, 41
  %s83 = sld [smem:[%s82]]
  %s84 = scalar_lea.smem %s0, 42
  %s85 = sld [smem:[%s84]]
  %s86 = scalar_lea.smem %s0, 43
  %s87 = sld [smem:[%s86]]
  %s88 = scalar_lea.smem %s0, 44
  %s89 = sld [smem:[%s88]]
  %s90 = scalar_lea.smem %s0, 45
  %s91 = sld [smem:[%s90]]
  %s92 = scalar_lea.smem %s0, 46
  %s93 = sld [smem:[%s92]]
  %s94 = scalar_lea.smem %s0, 47
  %s95 = sld [smem:[%s94]]
  %s96 = scalar_lea.smem %s0, 48
  %s97 = sld [smem:[%s96]]
  %s98 = scalar_lea.smem %s0, 49
  %s99 = sld [smem:[%s98]]
  %s100 = scalar_lea.smem %s0, 50
  %s101 = sld [smem:[%s100]]
  %s102 = scalar_lea.smem %s0, 51
  %s103 = sld [smem:[%s102]]
  %s104 = scalar_lea.smem %s0, 52
  %s105 = sld [smem:[%s104]]
  %s106 = scalar_lea.smem %s0, 53
  %s107 = sld [smem:[%s106]]
  %s108 = scalar_lea.smem %s0, 54
  %s109 = sld [smem:[%s108]]
  %s110 = scalar_lea.smem %s0, 55
  %s111 = sld [smem:[%s110]]
  %s112 = scalar_lea.smem %s0, 56
  %s113 = sld [smem:[%s112]]
  %s114 = sld [smem:[#allocation0]]
  $region381: #{lcgn_forward.1} parent=0
    _
  %s116 = ssub.s32 1, %s114
  %s117 = scalar_select 0, %s116, %s114
  %118 = sst [smem:[#allocation2]] %s105
  $region1: #{lcgn_forward.1} parent=0
    #allocation3 [shape = 'u8[1024]{0}', space=vmem, size = 0x400, scoped, tag = 'input window, operand 1']
    #allocation4 [shape = 's32[2]{0}', space=sflag, size = 0x8, scoped, tag = 'scoped memory for lcgn_forward.1']
    #allocation5 [shape = 's32[2]{0}', space=sflag, size = 0x8, scoped, tag = 'scoped memory for lcgn_forward.1']
    #allocation6 [shape = 's32[2]{0}', space=sflag, size = 0x8, scoped, tag = 'scoped memory for lcgn_forward.1']
    #allocation7 [shape = 'u8[8192]{0}', space=vmem, size = 0x2000, scoped, tag = 'input window, operand 7']
    #allocation8 [shape = 's32[2]{0}', space=sflag, size = 0x8, scoped, tag = 'scoped memory for lcgn_forward.1']
    #allocation9 [shape = 'u8[512]{0}', space=vmem, size = 0x400, scoped, tag = 'input window, operand 12, single buffered']
    #allocation10 [shape = 'u8[512]{0}', space=vmem, size = 0x400, scoped, tag = 'input window, operand 13, single buffered']
    #allocation11 [shape = 's32[1]{0}', space=sflag, size = 0x4, scoped, tag = 'scoped memory for lcgn_forward.1']
    #allocation12 [shape = 'u8[512]{0}', space=vmem, size = 0x400, scoped, tag = 'input window, operand 15, single buffered']
    #allocation13 [shape = 'u8[1024]{0}', space=vmem, size = 0x400, scoped, tag = 'input window, operand 17, single buffered']
    #allocation14 [shape = 's32[1]{0}', space=sflag, size = 0x4, scoped, tag = 'scoped memory for lcgn_forward.1']
    #allocation15 [shape = 'u8[512]{0}', space=vmem, size = 0x400, scoped, tag = 'input window, operand 18, single buffered']
    #allocation16 [shape = 'u8[1024]{0}', space=vmem, size = 0x400, scoped, tag = 'input window, operand 20, single buffered']
    #allocation17 [shape = 's32[1]{0}', space=sflag, size = 0x4, scoped, tag = 'scoped memory for lcgn_forward.1']
    #allocation18 [shape = 'u8[1024]{0}', space=vmem, size = 0x400, scoped, tag = 'input window, operand 21, single buffered']
    #allocation19 [shape = 'u8[1024]{0}', space=vmem, size = 0x400, scoped, tag = 'input window, operand 23, single buffered']
    #allocation20 [shape = 's32[1]{0}', space=sflag, size = 0x4, scoped, tag = 'scoped memory for lcgn_forward.1']
    #allocation21 [shape = 'u8[512]{0}', space=vmem, size = 0x400, scoped, tag = 'input window, operand 25, single buffered']
    #allocation22 [shape = 'u8[512]{0}', space=vmem, size = 0x400, scoped, tag = 'input window, operand 27, single buffered']
    #allocation23 [shape = 's32[1]{0}', space=sflag, size = 0x4, scoped, tag = 'scoped memory for lcgn_forward.1']
    #allocation24 [shape = 'u8[512]{0}', space=vmem, size = 0x400, scoped, tag = 'input window, operand 29, single buffered']
    #allocation25 [shape = 'u8[512]{0}', space=vmem, size = 0x400, scoped, tag = 'input window, operand 31, single buffered']
    #allocation26 [shape = 's32[1]{0}', space=sflag, size = 0x4, scoped, tag = 'scoped memory for lcgn_forward.1']
    #allocation27 [shape = 'u8[512]{0}', space=vmem, size = 0x400, scoped, tag = 'input window, operand 33, single buffered']
    #allocation28 [shape = 'u8[512]{0}', space=vmem, size = 0x400, scoped, tag = 'input window, operand 35, single buffered']
    #allocation29 [shape = 's32[1]{0}', space=sflag, size = 0x4, scoped, tag = 'scoped memory for lcgn_forward.1']
    #allocation30 [shape = 'u8[512]{0}', space=vmem, size = 0x400, scoped, tag = 'input window, operand 37, single buffered']
    #allocation31 [shape = 'u8[512]{0}', space=vmem, size = 0x400, scoped, tag = 'input window, operand 39, single buffered']
    #allocation32 [shape = 's32[1]{0}', space=sflag, size = 0x4, scoped, tag = 'scoped memory for lcgn_forward.1']
    #allocation33 [shape = 'u8[16384]{0}', space=vmem, size = 0x4000, scoped, tag = 'input window, operand 40, single buffered']
    #allocation34 [shape = 'u8[512]{0}', space=vmem, size = 0x400, scoped, tag = 'input window, operand 41, single buffered']
    #allocation35 [shape = 's32[1]{0}', space=sflag, size = 0x4, scoped, tag = 'scoped memory for lcgn_forward.1']
    #allocation36 [shape = 'u8[16384]{0}', space=vmem, size = 0x4000, scoped, tag = 'input window, operand 42, single buffered']
    #allocation37 [shape = 'u8[512]{0}', space=vmem, size = 0x400, scoped, tag = 'input window, operand 43, single buffered']
    #allocation38 [shape = 's32[1]{0}', space=sflag, size = 0x4, scoped, tag = 'scoped memory for lcgn_forward.1']
    #allocation39 [shape = 'u8[512]{0}', space=vmem, size = 0x400, scoped, tag = 'input window, operand 45, single buffered']
    #allocation40 [shape = 'u8[512]{0}', space=vmem, size = 0x400, scoped, tag = 'input window, operand 46, single buffered']
    #allocation41 [shape = 's32[1]{0}', space=sflag, size = 0x4, scoped, tag = 'scoped memory for lcgn_forward.1']
    #allocation42 [shape = 'u8[512]{0}', space=vmem, size = 0x400, scoped, tag = 'input window, operand 47, single buffered']
    #allocation43 [shape = 'u8[512]{0}', space=vmem, size = 0x400, scoped, tag = 'input window, operand 48, single buffered']
    #allocation44 [shape = 's32[1]{0}', space=sflag, size = 0x4, scoped, tag = 'scoped memory for lcgn_forward.1']
    #allocation45 [shape = 'u8[512]{0}', space=vmem, size = 0x400, scoped, tag = 'input window, operand 49, single buffered']
    #allocation46 [shape = 'u8[512]{0}', space=vmem, size = 0x400, scoped, tag = 'input window, operand 51, single buffered']
    #allocation47 [shape = 's32[1]{0}', space=sflag, size = 0x4, scoped, tag = 'scoped memory for lcgn_forward.1']
    #allocation48 [shape = 'u8[512]{0}', space=smem, size = 0x200, scoped, tag = 'input window, operand 53, single buffered']
    #allocation49 [shape = 'u8[1024]{0}', space=smem, size = 0x400, scoped, tag = 'input window, operand 54, single buffered']
    #allocation50 [shape = 's32[1]{0}', space=sflag, size = 0x4, scoped, tag = 'scoped memory for lcgn_forward.1']
    #allocation51 [shape = 'u8[512]{0}', space=smem, size = 0x200, scoped, tag = 'input window, operand 55, single buffered']
    #allocation52 [shape = 'u8[16384]{0}', space=vmem, size = 0x4000, scoped, tag = 'output window, operand 0']
    %119 = vsyncpa [#allocation4], 0
    %s120 = scalar_lea.sflag [#allocation4], 1
    %121 = vsyncpa %s120, 0
    %122 = vsyncpa [#allocation8], 0
    %s123 = scalar_lea.sflag [#allocation8], 1
    %124 = vsyncpa %s123, 0
    %125 = vsyncpa [#allocation11], 0
    %126 = vsyncpa [#allocation14], 0
    %127 = vsyncpa [#allocation17], 0
    %128 = vsyncpa [#allocation20], 0
    %129 = vsyncpa [#allocation23], 0
    %130 = vsyncpa [#allocation26], 0
    %131 = vsyncpa [#allocation29], 0
    %132 = vsyncpa [#allocation32], 0
    %133 = vsyncpa [#allocation35], 0
    %134 = vsyncpa [#allocation38], 0
    %135 = vsyncpa [#allocation41], 0
    %136 = vsyncpa [#allocation44], 0
    %137 = vsyncpa [#allocation47], 0
    %138 = vsyncpa [#allocation6], 0
    %139 = vsyncpa [#allocation50], 0
    %140 = vsyncpa [#allocation5], 0
    %s141 = scalar_lea.sflag [#allocation5], 1
    %142 = vsyncpa %s141, 0
    loop: start=0, step=1, limit=4
    $region2: #{lcgn_forward.1} parent=1 // loop_pre_header
      _
    $region3: #{lcgn_forward.1} parent=1 // loop_header
      %s144 = sphi 0, %s148
      %p145 = scmp.ge.s32.totalorder %s144, 4
      %s154 = sphi 0, %s156
      %s157 = sphi 0, %s154
      %s158 = sphi 0, %s157
      %s174 = sphi 0, %s158
      %s180 = sphi 0, %s182
      %s183 = sphi 0, %s180
      %s184 = sphi 0, %s183
      %s200 = sphi 0, %s184
      %s206 = sphi 0, %s208
      %s209 = sphi 0, %s206
      %s210 = sphi 0, %s209
      %s226 = sphi 0, %s210
      %s232 = sphi 0, %s234
      %s235 = sphi 0, %s232
      %s236 = sphi 0, %s235
      %s252 = sphi 0, %s236
      %s258 = sphi 0, %s260
      %s261 = sphi 0, %s258
      %s262 = sphi 0, %s261
      %s278 = sphi 0, %s262
      %s284 = sphi 0, %s286
      %s287 = sphi 0, %s284
      %s288 = sphi 0, %s287
      %s304 = sphi 0, %s288
      %s310 = sphi 0, %s312
      %s313 = sphi 0, %s310
      %s314 = sphi 0, %s313
      %s330 = sphi 0, %s314
      %s336 = sphi 0, %s338
      %s339 = sphi 0, %s336
      %s340 = sphi 0, %s339
      %s356 = sphi 0, %s340
      %s362 = sphi 0, %s364
      %s365 = sphi 0, %s362
      %s366 = sphi 0, %s365
      %s382 = sphi 0, %s366
      %s388 = sphi 0, %s390
      %s391 = sphi 0, %s388
      %s392 = sphi 0, %s391
      %s408 = sphi 0, %s392
      %s414 = sphi 0, %s416
      %s417 = sphi 0, %s414
      %s418 = sphi 0, %s417
      %s434 = sphi 0, %s418
      %s438 = sphi 0, %s438
      %s440 = sphi 0, %s438
      %s441 = sphi 0, %s440
      %s455 = sphi 0, %s441
      %s459 = sphi 0, %s459
      %s461 = sphi 0, %s459
      %s462 = sphi 0, %s461
      %s476 = sphi 0, %s462
      %s480 = sphi 0, %s480
      %s482 = sphi 0, %s480
      %s483 = sphi 0, %s482
      %s497 = sphi 0, %s483
      %s501 = sphi 0, %s501
      %s503 = sphi 0, %s501
      %s504 = sphi 0, %s503
      %s518 = sphi 0, %s504
      %s522 = sphi 0, %s522
      %s524 = sphi 0, %s522
      %s525 = sphi 0, %s524
      %s539 = sphi 0, %s525
      %s543 = sphi 0, %s543
      %s545 = sphi 0, %s543
      %s546 = sphi 0, %s545
      %s560 = sphi 0, %s546
      %s564 = sphi 0, %s564
      %s566 = sphi 0, %s564
      %s567 = sphi 0, %s566
      %s581 = sphi 0, %s567
      %s585 = sphi 0, %s585
      %s587 = sphi 0, %s585
      %s588 = sphi 0, %s587
      %s602 = sphi 0, %s588
      %s606 = sphi 0, %s606
      %s608 = sphi 0, %s606
      %s609 = sphi 0, %s608
      %s623 = sphi 0, %s609
      %s627 = sphi 0, %s627
      %s629 = sphi 0, %s627
      %s630 = sphi 0, %s629
      %s644 = sphi 0, %s630
      %s648 = sphi 0, %s648
      %s650 = sphi 0, %s648
      %s651 = sphi 0, %s650
      %s665 = sphi 0, %s651
      %s669 = sphi 0, %s669
      %s671 = sphi 0, %s669
      %s672 = sphi 0, %s671
      %s686 = sphi 0, %s672
      %s690 = sphi 0, %s690
      %s692 = sphi 0, %s690
      %s693 = sphi 0, %s692
      %s707 = sphi 0, %s693
      %s711 = sphi 0, %s711
      %s713 = sphi 0, %s711
      %s714 = sphi 0, %s713
      %s728 = sphi 0, %s714
      %s732 = sphi 0, %s732
      %s734 = sphi 0, %s732
      %s735 = sphi 0, %s734
      %s749 = sphi 0, %s735
      %s753 = sphi 0, %s753
      %s755 = sphi 0, %s753
      %s756 = sphi 0, %s755
      %s770 = sphi 0, %s756
      %s774 = sphi 0, %s774
      %s776 = sphi 0, %s774
      %s777 = sphi 0, %s776
      %s791 = sphi 0, %s777
      %s795 = sphi 0, %s795
      %s797 = sphi 0, %s795
      %s798 = sphi 0, %s797
      %s812 = sphi 0, %s798
      %s816 = sphi 0, %s816
      %s818 = sphi 0, %s816
      %s819 = sphi 0, %s818
      %s833 = sphi 0, %s819
      %s837 = sphi 0, %s837
      %s839 = sphi 0, %s837
      %s840 = sphi 0, %s839
      %s854 = sphi 0, %s840
      %s858 = sphi 0, %s858
      %s860 = sphi 0, %s858
      %s861 = sphi 0, %s860
      %s875 = sphi 0, %s861
      %s879 = sphi 0, %s879
      %s881 = sphi 0, %s879
      %s882 = sphi 0, %s881
      %s896 = sphi 0, %s882
      %s900 = sphi 0, %s900
      %s902 = sphi 0, %s900
      %s903 = sphi 0, %s902
      %s917 = sphi 0, %s903
      %s921 = sphi 0, %s921
      %s923 = sphi 0, %s921
      %s924 = sphi 0, %s923
      %s938 = sphi 0, %s924
      %s942 = sphi 0, %s942
      %s944 = sphi 0, %s942
      %s945 = sphi 0, %s944
      %s959 = sphi 0, %s945
      %s963 = sphi 0, %s963
      %s965 = sphi 0, %s963
      %s966 = sphi 0, %s965
      %s980 = sphi 0, %s966
      %s984 = sphi 0, %s984
      %s986 = sphi 0, %s984
      %s987 = sphi 0, %s986
      %s1001 = sphi 0, %s987
      %s1005 = sphi 0, %s1005
      %s1007 = sphi 0, %s1005
      %s1008 = sphi 0, %s1007
      %s1022 = sphi 0, %s1008
      %s1026 = sphi 0, %s1026
      %s1028 = sphi 0, %s1026
      %s1029 = sphi 0, %s1028
      %s1043 = sphi 0, %s1029
      %s1047 = sphi 0, %s1047
      %s1049 = sphi 0, %s1047
      %s1050 = sphi 0, %s1049
      %s1064 = sphi 0, %s1050
      %s1068 = sphi 0, %s1068
      %s1070 = sphi 0, %s1068
      %s1071 = sphi 0, %s1070
      %s1085 = sphi 0, %s1071
      %s1089 = sphi 0, %s1089
      %s1091 = sphi 0, %s1089
      %s1092 = sphi 0, %s1091
      %s1106 = sphi 0, %s1092
      %s1110 = sphi 0, %s1110
      %s1112 = sphi 0, %s1110
      %s1113 = sphi 0, %s1112
      %s1127 = sphi 0, %s1113
      %s1131 = sphi 0, %s1131
      %s1133 = sphi 0, %s1131
      %s1134 = sphi 0, %s1133
      %s1148 = sphi 0, %s1134
      %s1152 = sphi 0, %s1152
      %s1154 = sphi 0, %s1152
      %s1155 = sphi 0, %s1154
      %s1169 = sphi 0, %s1155
      %s1173 = sphi 0, %s1173
      %s1175 = sphi 0, %s1173
      %s1176 = sphi 0, %s1175
      %s1190 = sphi 0, %s1176
      %s1194 = sphi 0, %s1194
      %s1196 = sphi 0, %s1194
      %s1197 = sphi 0, %s1196
      %s1211 = sphi 0, %s1197
      %s1215 = sphi 0, %s1215
      %s1217 = sphi 0, %s1215
      %s1218 = sphi 0, %s1217
      %s1232 = sphi 0, %s1218
      %s1236 = sphi 0, %s1236
      %s1238 = sphi 0, %s1236
      %s1239 = sphi 0, %s1238
      %s1253 = sphi 0, %s1239
      %s1257 = sphi 0, %s1257
      %s1259 = sphi 0, %s1257
      %s1260 = sphi 0, %s1259
      %s1274 = sphi 0, %s1260
      %s1278 = sphi 0, %s1278
      %s1280 = sphi 0, %s1278
      %s1281 = sphi 0, %s1280
      %s1295 = sphi 0, %s1281
      %s1299 = sphi 0, %s1299
      %s1301 = sphi 0, %s1299
      %s1302 = sphi 0, %s1301
      %s1316 = sphi 0, %s1302
      %s1320 = sphi 0, %s1320
      %s1322 = sphi 0, %s1320
      %s1323 = sphi 0, %s1322
      %s1337 = sphi 0, %s1323
      %s1341 = sphi 0, %s1341
      %s1343 = sphi 0, %s1341
      %s1344 = sphi 0, %s1343
      %s1358 = sphi 0, %s1344
      %s1362 = sphi 0, %s1362
      %s1364 = sphi 0, %s1362
      %s1365 = sphi 0, %s1364
      %s1379 = sphi 0, %s1365
      %s1385 = sphi 0, %s1387
      %s1388 = sphi 0, %s1385
      %s1389 = sphi 0, %s1388
      %s1405 = sphi 0, %s1389
    $region4: #{lcgn_forward.1} parent=1 // loop_header_branch
      %147 = sbr.rel (%p145) target = $region8
    $region5: #{lcgn_forward.1} parent=1 // loop_body
      %s149 = ssub.s32 %s144, 1
      %s150 = ssub.s32 %s144, 2
      %s151 = sadd.s32 %s144, 1
      %s152 = ssub.s32 %s144, %s151
      %p153 = scmp.eq.s32.totalorder %s152, 0
      %s155 = sadd.s32 %s154, 1
      %s156 = scalar_select %p153, %s154, %s155
      %p159 = pneg %p153
      %p160 = scmp.eq.s32.totalorder %s144, 1
      %p161 = por %p159, %p160
      %p162 = scmp.ne.s32.totalorder %s154, %s157
      %p163 = scmp.eq.s32.totalorder %s144, 0
      %p164 = por %p162, %p163
      %p165 = scmp.ne.s32.totalorder %s154, %s157
      %p166 = scmp.eq.s32.totalorder %s149, 1
      %p167 = por %p165, %p166
      %p168 = scmp.ne.s32.totalorder %s157, %s158
      %p169 = scmp.eq.s32.totalorder %s149, 0
      %p170 = por %p168, %p169
      %p171 = scmp.ne.s32.totalorder %s157, %s158
      %p172 = scmp.eq.s32.totalorder %s150, 1
      %p173 = por %p171, %p172
      %p175 = scmp.ne.s32.totalorder %s158, %s174
      %p176 = scmp.eq.s32.totalorder %s150, 0
      %p177 = por %p175, %p176
      %s178 = ssub.s32 %s144, %s151
      %p179 = scmp.eq.s32.totalorder %s178, 0
      %s181 = sadd.s32 %s180, 1
      %s182 = scalar_select %p179, %s180, %s181
      %p185 = pneg %p179
      %p186 = scmp.eq.s32.totalorder %s144, 1
      %p187 = por %p185, %p186
      %p188 = scmp.ne.s32.totalorder %s180, %s183
      %p189 = scmp.eq.s32.totalorder %s144, 0
      %p190 = por %p188, %p189
      %p191 = scmp.ne.s32.totalorder %s180, %s183
      %p192 = scmp.eq.s32.totalorder %s149, 1
      %p193 = por %p191, %p192
      %p194 = scmp.ne.s32.totalorder %s183, %s184
      %p195 = scmp.eq.s32.totalorder %s149, 0
      %p196 = por %p194, %p195
      %p197 = scmp.ne.s32.totalorder %s183, %s184
      %p198 = scmp.eq.s32.totalorder %s150, 1
      %p199 = por %p197, %p198
      %p201 = scmp.ne.s32.totalorder %s184, %s200
      %p202 = scmp.eq.s32.totalorder %s150, 0
      %p203 = por %p201, %p202
      %s204 = ssub.s32 %s144, %s151
      %p205 = scmp.eq.s32.totalorder %s204, 0
      %s207 = sadd.s32 %s206, 1
      %s208 = scalar_select %p205, %s206, %s207
      %p211 = pneg %p205
      %p212 = scmp.eq.s32.totalorder %s144, 1
      %p213 = por %p211, %p212
      %p214 = scmp.ne.s32.totalorder %s206, %s209
      %p215 = scmp.eq.s32.totalorder %s144, 0
      %p216 = por %p214, %p215
      %p217 = scmp.ne.s32.totalorder %s206, %s209
      %p218 = scmp.eq.s32.totalorder %s149, 1
      %p219 = por %p217, %p218
      %p220 = scmp.ne.s32.totalorder %s209, %s210
      %p221 = scmp.eq.s32.totalorder %s149, 0
      %p222 = por %p220, %p221
      %p223 = scmp.ne.s32.totalorder %s209, %s210
      %p224 = scmp.eq.s32.totalorder %s150, 1
      %p225 = por %p223, %p224
      %p227 = scmp.ne.s32.totalorder %s210, %s226
      %p228 = scmp.eq.s32.totalorder %s150, 0
      %p229 = por %p227, %p228
      %s230 = ssub.s32 %s144, %s151
      %p231 = scmp.eq.s32.totalorder %s230, 0
      %s233 = sadd.s32 %s232, 1
      %s234 = scalar_select %p231, %s232, %s233
      %p237 = pneg %p231
      %p238 = scmp.eq.s32.totalorder %s144, 1
      %p239 = por %p237, %p238
      %p240 = scmp.ne.s32.totalorder %s232, %s235
      %p241 = scmp.eq.s32.totalorder %s144, 0
      %p242 = por %p240, %p241
      %p243 = scmp.ne.s32.totalorder %s232, %s235
      %p244 = scmp.eq.s32.totalorder %s149, 1
      %p245 = por %p243, %p244
      %p246 = scmp.ne.s32.totalorder %s235, %s236
      %p247 = scmp.eq.s32.totalorder %s149, 0
      %p248 = por %p246, %p247
      %p249 = scmp.ne.s32.totalorder %s235, %s236
      %p250 = scmp.eq.s32.totalorder %s150, 1
      %p251 = por %p249, %p250
      %p253 = scmp.ne.s32.totalorder %s236, %s252
      %p254 = scmp.eq.s32.totalorder %s150, 0
      %p255 = por %p253, %p254
      %s256 = ssub.s32 %s144, %s151
      %p257 = scmp.eq.s32.totalorder %s256, 0
      %s259 = sadd.s32 %s258, 1
      %s260 = scalar_select %p257, %s258, %s259
      %p263 = pneg %p257
      %p264 = scmp.eq.s32.totalorder %s144, 1
      %p265 = por %p263, %p264
      %p266 = scmp.ne.s32.totalorder %s258, %s261
      %p267 = scmp.eq.s32.totalorder %s144, 0
      %p268 = por %p266, %p267
      %p269 = scmp.ne.s32.totalorder %s258, %s261
      %p270 = scmp.eq.s32.totalorder %s149, 1
      %p271 = por %p269, %p270
      %p272 = scmp.ne.s32.totalorder %s261, %s262
      %p273 = scmp.eq.s32.totalorder %s149, 0
      %p274 = por %p272, %p273
      %p275 = scmp.ne.s32.totalorder %s261, %s262
      %p276 = scmp.eq.s32.totalorder %s150, 1
      %p277 = por %p275, %p276
      %p279 = scmp.ne.s32.totalorder %s262, %s278
      %p280 = scmp.eq.s32.totalorder %s150, 0
      %p281 = por %p279, %p280
      %s282 = ssub.s32 %s144, %s151
      %p283 = scmp.eq.s32.totalorder %s282, 0
      %s285 = sadd.s32 %s284, 1
      %s286 = scalar_select %p283, %s284, %s285
      %p289 = pneg %p283
      %p290 = scmp.eq.s32.totalorder %s144, 1
      %p291 = por %p289, %p290
      %p292 = scmp.ne.s32.totalorder %s284, %s287
      %p293 = scmp.eq.s32.totalorder %s144, 0
      %p294 = por %p292, %p293
      %p295 = scmp.ne.s32.totalorder %s284, %s287
      %p296 = scmp.eq.s32.totalorder %s149, 1
      %p297 = por %p295, %p296
      %p298 = scmp.ne.s32.totalorder %s287, %s288
      %p299 = scmp.eq.s32.totalorder %s149, 0
      %p300 = por %p298, %p299
      %p301 = scmp.ne.s32.totalorder %s287, %s288
      %p302 = scmp.eq.s32.totalorder %s150, 1
      %p303 = por %p301, %p302
      %p305 = scmp.ne.s32.totalorder %s288, %s304
      %p306 = scmp.eq.s32.totalorder %s150, 0
      %p307 = por %p305, %p306
      %s308 = ssub.s32 %s144, %s151
      %p309 = scmp.eq.s32.totalorder %s308, 0
      %s311 = sadd.s32 %s310, 1
      %s312 = scalar_select %p309, %s310, %s311
      %p315 = pneg %p309
      %p316 = scmp.eq.s32.totalorder %s144, 1
      %p317 = por %p315, %p316
      %p318 = scmp.ne.s32.totalorder %s310, %s313
      %p319 = scmp.eq.s32.totalorder %s144, 0
      %p320 = por %p318, %p319
      %p321 = scmp.ne.s32.totalorder %s310, %s313
      %p322 = scmp.eq.s32.totalorder %s149, 1
      %p323 = por %p321, %p322
      %p324 = scmp.ne.s32.totalorder %s313, %s314
      %p325 = scmp.eq.s32.totalorder %s149, 0
      %p326 = por %p324, %p325
      %p327 = scmp.ne.s32.totalorder %s313, %s314
      %p328 = scmp.eq.s32.totalorder %s150, 1
      %p329 = por %p327, %p328
      %p331 = scmp.ne.s32.totalorder %s314, %s330
      %p332 = scmp.eq.s32.totalorder %s150, 0
      %p333 = por %p331, %p332
      %s334 = ssub.s32 %s144, %s151
      %p335 = scmp.eq.s32.totalorder %s334, 0
      %s337 = sadd.s32 %s336, 1
      %s338 = scalar_select %p335, %s336, %s337
      %p341 = pneg %p335
      %p342 = scmp.eq.s32.totalorder %s144, 1
      %p343 = por %p341, %p342
      %p344 = scmp.ne.s32.totalorder %s336, %s339
      %p345 = scmp.eq.s32.totalorder %s144, 0
      %p346 = por %p344, %p345
      %p347 = scmp.ne.s32.totalorder %s336, %s339
      %p348 = scmp.eq.s32.totalorder %s149, 1
      %p349 = por %p347, %p348
      %p350 = scmp.ne.s32.totalorder %s339, %s340
      %p351 = scmp.eq.s32.totalorder %s149, 0
      %p352 = por %p350, %p351
      %p353 = scmp.ne.s32.totalorder %s339, %s340
      %p354 = scmp.eq.s32.totalorder %s150, 1
      %p355 = por %p353, %p354
      %p357 = scmp.ne.s32.totalorder %s340, %s356
      %p358 = scmp.eq.s32.totalorder %s150, 0
      %p359 = por %p357, %p358
      %s360 = ssub.s32 %s144, %s151
      %p361 = scmp.eq.s32.totalorder %s360, 0
      %s363 = sadd.s32 %s362, 1
      %s364 = scalar_select %p361, %s362, %s363
      %p367 = pneg %p361
      %p368 = scmp.eq.s32.totalorder %s144, 1
      %p369 = por %p367, %p368
      %p370 = scmp.ne.s32.totalorder %s362, %s365
      %p371 = scmp.eq.s32.totalorder %s144, 0
      %p372 = por %p370, %p371
      %p373 = scmp.ne.s32.totalorder %s362, %s365
      %p374 = scmp.eq.s32.totalorder %s149, 1
      %p375 = por %p373, %p374
      %p376 = scmp.ne.s32.totalorder %s365, %s366
      %p377 = scmp.eq.s32.totalorder %s149, 0
      %p378 = por %p376, %p377
      %p379 = scmp.ne.s32.totalorder %s365, %s366
      %p380 = scmp.eq.s32.totalorder %s150, 1
      %p381 = por %p379, %p380
      %p383 = scmp.ne.s32.totalorder %s366, %s382
      %p384 = scmp.eq.s32.totalorder %s150, 0
      %p385 = por %p383, %p384
      %s386 = ssub.s32 %s144, %s151
      %p387 = scmp.eq.s32.totalorder %s386, 0
      %s389 = sadd.s32 %s388, 1
      %s390 = scalar_select %p387, %s388, %s389
      %p393 = pneg %p387
      %p394 = scmp.eq.s32.totalorder %s144, 1
      %p395 = por %p393, %p394
      %p396 = scmp.ne.s32.totalorder %s388, %s391
      %p397 = scmp.eq.s32.totalorder %s144, 0
      %p398 = por %p396, %p397
      %p399 = scmp.ne.s32.totalorder %s388, %s391
      %p400 = scmp.eq.s32.totalorder %s149, 1
      %p401 = por %p399, %p400
      %p402 = scmp.ne.s32.totalorder %s391, %s392
      %p403 = scmp.eq.s32.totalorder %s149, 0
      %p404 = por %p402, %p403
      %p405 = scmp.ne.s32.totalorder %s391, %s392
      %p406 = scmp.eq.s32.totalorder %s150, 1
      %p407 = por %p405, %p406
      %p409 = scmp.ne.s32.totalorder %s392, %s408
      %p410 = scmp.eq.s32.totalorder %s150, 0
      %p411 = por %p409, %p410
      %s412 = ssub.s32 %s144, %s151
      %p413 = scmp.eq.s32.totalorder %s412, 0
      %s415 = sadd.s32 %s414, 1
      %s416 = scalar_select %p413, %s414, %s415
      %p419 = pneg %p413
      %p420 = scmp.eq.s32.totalorder %s144, 1
      %p421 = por %p419, %p420
      %p422 = scmp.ne.s32.totalorder %s414, %s417
      %p423 = scmp.eq.s32.totalorder %s144, 0
      %p424 = por %p422, %p423
      %p425 = scmp.ne.s32.totalorder %s414, %s417
      %p426 = scmp.eq.s32.totalorder %s149, 1
      %p427 = por %p425, %p426
      %p428 = scmp.ne.s32.totalorder %s417, %s418
      %p429 = scmp.eq.s32.totalorder %s149, 0
      %p430 = por %p428, %p429
      %p431 = scmp.ne.s32.totalorder %s417, %s418
      %p432 = scmp.eq.s32.totalorder %s150, 1
      %p433 = por %p431, %p432
      %p435 = scmp.ne.s32.totalorder %s418, %s434
      %p436 = scmp.eq.s32.totalorder %s150, 0
      %p437 = por %p435, %p436
      %s439 = sadd.s32 %s438, 1
      %p442 = scmp.eq.s32.totalorder %s144, 1
      %p443 = scmp.ne.s32.totalorder %s438, %s440
      %p444 = scmp.eq.s32.totalorder %s144, 0
      %p445 = por %p443, %p444
      %p446 = scmp.ne.s32.totalorder %s438, %s440
      %p447 = scmp.eq.s32.totalorder %s149, 1
      %p448 = por %p446, %p447
      %p449 = scmp.ne.s32.totalorder %s440, %s441
      %p450 = scmp.eq.s32.totalorder %s149, 0
      %p451 = por %p449, %p450
      %p452 = scmp.ne.s32.totalorder %s440, %s441
      %p453 = scmp.eq.s32.totalorder %s150, 1
      %p454 = por %p452, %p453
      %p456 = scmp.ne.s32.totalorder %s441, %s455
      %p457 = scmp.eq.s32.totalorder %s150, 0
      %p458 = por %p456, %p457
      %s460 = sadd.s32 %s459, 1
      %p463 = scmp.eq.s32.totalorder %s144, 1
      %p464 = scmp.ne.s32.totalorder %s459, %s461
      %p465 = scmp.eq.s32.totalorder %s144, 0
      %p466 = por %p464, %p465
      %p467 = scmp.ne.s32.totalorder %s459, %s461
      %p468 = scmp.eq.s32.totalorder %s149, 1
      %p469 = por %p467, %p468
      %p470 = scmp.ne.s32.totalorder %s461, %s462
      %p471 = scmp.eq.s32.totalorder %s149, 0
      %p472 = por %p470, %p471
      %p473 = scmp.ne.s32.totalorder %s461, %s462
      %p474 = scmp.eq.s32.totalorder %s150, 1
      %p475 = por %p473, %p474
      %p477 = scmp.ne.s32.totalorder %s462, %s476
      %p478 = scmp.eq.s32.totalorder %s150, 0
      %p479 = por %p477, %p478
      %s481 = sadd.s32 %s480, 1
      %p484 = scmp.eq.s32.totalorder %s144, 1
      %p485 = scmp.ne.s32.totalorder %s480, %s482
      %p486 = scmp.eq.s32.totalorder %s144, 0
      %p487 = por %p485, %p486
      %p488 = scmp.ne.s32.totalorder %s480, %s482
      %p489 = scmp.eq.s32.totalorder %s149, 1
      %p490 = por %p488, %p489
      %p491 = scmp.ne.s32.totalorder %s482, %s483
      %p492 = scmp.eq.s32.totalorder %s149, 0
      %p493 = por %p491, %p492
      %p494 = scmp.ne.s32.totalorder %s482, %s483
      %p495 = scmp.eq.s32.totalorder %s150, 1
      %p496 = por %p494, %p495
      %p498 = scmp.ne.s32.totalorder %s483, %s497
      %p499 = scmp.eq.s32.totalorder %s150, 0
      %p500 = por %p498, %p499
      %s502 = sadd.s32 %s501, 1
      %p505 = scmp.eq.s32.totalorder %s144, 1
      %p506 = scmp.ne.s32.totalorder %s501, %s503
      %p507 = scmp.eq.s32.totalorder %s144, 0
      %p508 = por %p506, %p507
      %p509 = scmp.ne.s32.totalorder %s501, %s503
      %p510 = scmp.eq.s32.totalorder %s149, 1
      %p511 = por %p509, %p510
      %p512 = scmp.ne.s32.totalorder %s503, %s504
      %p513 = scmp.eq.s32.totalorder %s149, 0
      %p514 = por %p512, %p513
      %p515 = scmp.ne.s32.totalorder %s503, %s504
      %p516 = scmp.eq.s32.totalorder %s150, 1
      %p517 = por %p515, %p516
      %p519 = scmp.ne.s32.totalorder %s504, %s518
      %p520 = scmp.eq.s32.totalorder %s150, 0
      %p521 = por %p519, %p520
      %s523 = sadd.s32 %s522, 1
      %p526 = scmp.eq.s32.totalorder %s144, 1
      %p527 = scmp.ne.s32.totalorder %s522, %s524
      %p528 = scmp.eq.s32.totalorder %s144, 0
      %p529 = por %p527, %p528
      %p530 = scmp.ne.s32.totalorder %s522, %s524
      %p531 = scmp.eq.s32.totalorder %s149, 1
      %p532 = por %p530, %p531
      %p533 = scmp.ne.s32.totalorder %s524, %s525
      %p534 = scmp.eq.s32.totalorder %s149, 0
      %p535 = por %p533, %p534
      %p536 = scmp.ne.s32.totalorder %s524, %s525
      %p537 = scmp.eq.s32.totalorder %s150, 1
      %p538 = por %p536, %p537
      %p540 = scmp.ne.s32.totalorder %s525, %s539
      %p541 = scmp.eq.s32.totalorder %s150, 0
      %p542 = por %p540, %p541
      %s544 = sadd.s32 %s543, 1
      %p547 = scmp.eq.s32.totalorder %s144, 1
      %p548 = scmp.ne.s32.totalorder %s543, %s545
      %p549 = scmp.eq.s32.totalorder %s144, 0
      %p550 = por %p548, %p549
      %p551 = scmp.ne.s32.totalorder %s543, %s545
      %p552 = scmp.eq.s32.totalorder %s149, 1
      %p553 = por %p551, %p552
      %p554 = scmp.ne.s32.totalorder %s545, %s546
      %p555 = scmp.eq.s32.totalorder %s149, 0
      %p556 = por %p554, %p555
      %p557 = scmp.ne.s32.totalorder %s545, %s546
      %p558 = scmp.eq.s32.totalorder %s150, 1
      %p559 = por %p557, %p558
      %p561 = scmp.ne.s32.totalorder %s546, %s560
      %p562 = scmp.eq.s32.totalorder %s150, 0
      %p563 = por %p561, %p562
      %s565 = sadd.s32 %s564, 1
      %p568 = scmp.eq.s32.totalorder %s144, 1
      %p569 = scmp.ne.s32.totalorder %s564, %s566
      %p570 = scmp.eq.s32.totalorder %s144, 0
      %p571 = por %p569, %p570
      %p572 = scmp.ne.s32.totalorder %s564, %s566
      %p573 = scmp.eq.s32.totalorder %s149, 1
      %p574 = por %p572, %p573
      %p575 = scmp.ne.s32.totalorder %s566, %s567
      %p576 = scmp.eq.s32.totalorder %s149, 0
      %p577 = por %p575, %p576
      %p578 = scmp.ne.s32.totalorder %s566, %s567
      %p579 = scmp.eq.s32.totalorder %s150, 1
      %p580 = por %p578, %p579
      %p582 = scmp.ne.s32.totalorder %s567, %s581
      %p583 = scmp.eq.s32.totalorder %s150, 0
      %p584 = por %p582, %p583
      %s586 = sadd.s32 %s585, 1
      %p589 = scmp.eq.s32.totalorder %s144, 1
      %p590 = scmp.ne.s32.totalorder %s585, %s587
      %p591 = scmp.eq.s32.totalorder %s144, 0
      %p592 = por %p590, %p591
      %p593 = scmp.ne.s32.totalorder %s585, %s587
      %p594 = scmp.eq.s32.totalorder %s149, 1
      %p595 = por %p593, %p594
      %p596 = scmp.ne.s32.totalorder %s587, %s588
      %p597 = scmp.eq.s32.totalorder %s149, 0
      %p598 = por %p596, %p597
      %p599 = scmp.ne.s32.totalorder %s587, %s588
      %p600 = scmp.eq.s32.totalorder %s150, 1
      %p601 = por %p599, %p600
      %p603 = scmp.ne.s32.totalorder %s588, %s602
      %p604 = scmp.eq.s32.totalorder %s150, 0
      %p605 = por %p603, %p604
      %s607 = sadd.s32 %s606, 1
      %p610 = scmp.eq.s32.totalorder %s144, 1
      %p611 = scmp.ne.s32.totalorder %s606, %s608
      %p612 = scmp.eq.s32.totalorder %s144, 0
      %p613 = por %p611, %p612
      %p614 = scmp.ne.s32.totalorder %s606, %s608
      %p615 = scmp.eq.s32.totalorder %s149, 1
      %p616 = por %p614, %p615
      %p617 = scmp.ne.s32.totalorder %s608, %s609
      %p618 = scmp.eq.s32.totalorder %s149, 0
      %p619 = por %p617, %p618
      %p620 = scmp.ne.s32.totalorder %s608, %s609
      %p621 = scmp.eq.s32.totalorder %s150, 1
      %p622 = por %p620, %p621
      %p624 = scmp.ne.s32.totalorder %s609, %s623
      %p625 = scmp.eq.s32.totalorder %s150, 0
      %p626 = por %p624, %p625
      %s628 = sadd.s32 %s627, 1
      %p631 = scmp.eq.s32.totalorder %s144, 1
      %p632 = scmp.ne.s32.totalorder %s627, %s629
      %p633 = scmp.eq.s32.totalorder %s144, 0
      %p634 = por %p632, %p633
      %p635 = scmp.ne.s32.totalorder %s627, %s629
      %p636 = scmp.eq.s32.totalorder %s149, 1
      %p637 = por %p635, %p636
      %p638 = scmp.ne.s32.totalorder %s629, %s630
      %p639 = scmp.eq.s32.totalorder %s149, 0
      %p640 = por %p638, %p639
      %p641 = scmp.ne.s32.totalorder %s629, %s630
      %p642 = scmp.eq.s32.totalorder %s150, 1
      %p643 = por %p641, %p642
      %p645 = scmp.ne.s32.totalorder %s630, %s644
      %p646 = scmp.eq.s32.totalorder %s150, 0
      %p647 = por %p645, %p646
      %s649 = sadd.s32 %s648, 1
      %p652 = scmp.eq.s32.totalorder %s144, 1
      %p653 = scmp.ne.s32.totalorder %s648, %s650
      %p654 = scmp.eq.s32.totalorder %s144, 0
      %p655 = por %p653, %p654
      %p656 = scmp.ne.s32.totalorder %s648, %s650
      %p657 = scmp.eq.s32.totalorder %s149, 1
      %p658 = por %p656, %p657
      %p659 = scmp.ne.s32.totalorder %s650, %s651
      %p660 = scmp.eq.s32.totalorder %s149, 0
      %p661 = por %p659, %p660
      %p662 = scmp.ne.s32.totalorder %s650, %s651
      %p663 = scmp.eq.s32.totalorder %s150, 1
      %p664 = por %p662, %p663
      %p666 = scmp.ne.s32.totalorder %s651, %s665
      %p667 = scmp.eq.s32.totalorder %s150, 0
      %p668 = por %p666, %p667
      %s670 = sadd.s32 %s669, 1
      %p673 = scmp.eq.s32.totalorder %s144, 1
      %p674 = scmp.ne.s32.totalorder %s669, %s671
      %p675 = scmp.eq.s32.totalorder %s144, 0
      %p676 = por %p674, %p675
      %p677 = scmp.ne.s32.totalorder %s669, %s671
      %p678 = scmp.eq.s32.totalorder %s149, 1
      %p679 = por %p677, %p678
      %p680 = scmp.ne.s32.totalorder %s671, %s672
      %p681 = scmp.eq.s32.totalorder %s149, 0
      %p682 = por %p680, %p681
      %p683 = scmp.ne.s32.totalorder %s671, %s672
      %p684 = scmp.eq.s32.totalorder %s150, 1
      %p685 = por %p683, %p684
      %p687 = scmp.ne.s32.totalorder %s672, %s686
      %p688 = scmp.eq.s32.totalorder %s150, 0
      %p689 = por %p687, %p688
      %s691 = sadd.s32 %s690, 1
      %p694 = scmp.eq.s32.totalorder %s144, 1
      %p695 = scmp.ne.s32.totalorder %s690, %s692
      %p696 = scmp.eq.s32.totalorder %s144, 0
      %p697 = por %p695, %p696
      %p698 = scmp.ne.s32.totalorder %s690, %s692
      %p699 = scmp.eq.s32.totalorder %s149, 1
      %p700 = por %p698, %p699
      %p701 = scmp.ne.s32.totalorder %s692, %s693
      %p702 = scmp.eq.s32.totalorder %s149, 0
      %p703 = por %p701, %p702
      %p704 = scmp.ne.s32.totalorder %s692, %s693
      %p705 = scmp.eq.s32.totalorder %s150, 1
      %p706 = por %p704, %p705
      %p708 = scmp.ne.s32.totalorder %s693, %s707
      %p709 = scmp.eq.s32.totalorder %s150, 0
      %p710 = por %p708, %p709
      %s712 = sadd.s32 %s711, 1
      %p715 = scmp.eq.s32.totalorder %s144, 1
      %p716 = scmp.ne.s32.totalorder %s711, %s713
      %p717 = scmp.eq.s32.totalorder %s144, 0
      %p718 = por %p716, %p717
      %p719 = scmp.ne.s32.totalorder %s711, %s713
      %p720 = scmp.eq.s32.totalorder %s149, 1
      %p721 = por %p719, %p720
      %p722 = scmp.ne.s32.totalorder %s713, %s714
      %p723 = scmp.eq.s32.totalorder %s149, 0
      %p724 = por %p722, %p723
      %p725 = scmp.ne.s32.totalorder %s713, %s714
      %p726 = scmp.eq.s32.totalorder %s150, 1
      %p727 = por %p725, %p726
      %p729 = scmp.ne.s32.totalorder %s714, %s728
      %p730 = scmp.eq.s32.totalorder %s150, 0
      %p731 = por %p729, %p730
      %s733 = sadd.s32 %s732, 1
      %p736 = scmp.eq.s32.totalorder %s144, 1
      %p737 = scmp.ne.s32.totalorder %s732, %s734
      %p738 = scmp.eq.s32.totalorder %s144, 0
      %p739 = por %p737, %p738
      %p740 = scmp.ne.s32.totalorder %s732, %s734
      %p741 = scmp.eq.s32.totalorder %s149, 1
      %p742 = por %p740, %p741
      %p743 = scmp.ne.s32.totalorder %s734, %s735
      %p744 = scmp.eq.s32.totalorder %s149, 0
      %p745 = por %p743, %p744
      %p746 = scmp.ne.s32.totalorder %s734, %s735
      %p747 = scmp.eq.s32.totalorder %s150, 1
      %p748 = por %p746, %p747
      %p750 = scmp.ne.s32.totalorder %s735, %s749
      %p751 = scmp.eq.s32.totalorder %s150, 0
      %p752 = por %p750, %p751
      %s754 = sadd.s32 %s753, 1
      %p757 = scmp.eq.s32.totalorder %s144, 1
      %p758 = scmp.ne.s32.totalorder %s753, %s755
      %p759 = scmp.eq.s32.totalorder %s144, 0
      %p760 = por %p758, %p759
      %p761 = scmp.ne.s32.totalorder %s753, %s755
      %p762 = scmp.eq.s32.totalorder %s149, 1
      %p763 = por %p761, %p762
      %p764 = scmp.ne.s32.totalorder %s755, %s756
      %p765 = scmp.eq.s32.totalorder %s149, 0
      %p766 = por %p764, %p765
      %p767 = scmp.ne.s32.totalorder %s755, %s756
      %p768 = scmp.eq.s32.totalorder %s150, 1
      %p769 = por %p767, %p768
      %p771 = scmp.ne.s32.totalorder %s756, %s770
      %p772 = scmp.eq.s32.totalorder %s150, 0
      %p773 = por %p771, %p772
      %s775 = sadd.s32 %s774, 1
      %p778 = scmp.eq.s32.totalorder %s144, 1
      %p779 = scmp.ne.s32.totalorder %s774, %s776
      %p780 = scmp.eq.s32.totalorder %s144, 0
      %p781 = por %p779, %p780
      %p782 = scmp.ne.s32.totalorder %s774, %s776
      %p783 = scmp.eq.s32.totalorder %s149, 1
      %p784 = por %p782, %p783
      %p785 = scmp.ne.s32.totalorder %s776, %s777
      %p786 = scmp.eq.s32.totalorder %s149, 0
      %p787 = por %p785, %p786
      %p788 = scmp.ne.s32.totalorder %s776, %s777
      %p789 = scmp.eq.s32.totalorder %s150, 1
      %p790 = por %p788, %p789
      %p792 = scmp.ne.s32.totalorder %s777, %s791
      %p793 = scmp.eq.s32.totalorder %s150, 0
      %p794 = por %p792, %p793
      %s796 = sadd.s32 %s795, 1
      %p799 = scmp.eq.s32.totalorder %s144, 1
      %p800 = scmp.ne.s32.totalorder %s795, %s797
      %p801 = scmp.eq.s32.totalorder %s144, 0
      %p802 = por %p800, %p801
      %p803 = scmp.ne.s32.totalorder %s795, %s797
      %p804 = scmp.eq.s32.totalorder %s149, 1
      %p805 = por %p803, %p804
      %p806 = scmp.ne.s32.totalorder %s797, %s798
      %p807 = scmp.eq.s32.totalorder %s149, 0
      %p808 = por %p806, %p807
      %p809 = scmp.ne.s32.totalorder %s797, %s798
      %p810 = scmp.eq.s32.totalorder %s150, 1
      %p811 = por %p809, %p810
      %p813 = scmp.ne.s32.totalorder %s798, %s812
      %p814 = scmp.eq.s32.totalorder %s150, 0
      %p815 = por %p813, %p814
      %s817 = sadd.s32 %s816, 1
      %p820 = scmp.eq.s32.totalorder %s144, 1
      %p821 = scmp.ne.s32.totalorder %s816, %s818
      %p822 = scmp.eq.s32.totalorder %s144, 0
      %p823 = por %p821, %p822
      %p824 = scmp.ne.s32.totalorder %s816, %s818
      %p825 = scmp.eq.s32.totalorder %s149, 1
      %p826 = por %p824, %p825
      %p827 = scmp.ne.s32.totalorder %s818, %s819
      %p828 = scmp.eq.s32.totalorder %s149, 0
      %p829 = por %p827, %p828
      %p830 = scmp.ne.s32.totalorder %s818, %s819
      %p831 = scmp.eq.s32.totalorder %s150, 1
      %p832 = por %p830, %p831
      %p834 = scmp.ne.s32.totalorder %s819, %s833
      %p835 = scmp.eq.s32.totalorder %s150, 0
      %p836 = por %p834, %p835
      %s838 = sadd.s32 %s837, 1
      %p841 = scmp.eq.s32.totalorder %s144, 1
      %p842 = scmp.ne.s32.totalorder %s837, %s839
      %p843 = scmp.eq.s32.totalorder %s144, 0
      %p844 = por %p842, %p843
      %p845 = scmp.ne.s32.totalorder %s837, %s839
      %p846 = scmp.eq.s32.totalorder %s149, 1
      %p847 = por %p845, %p846
      %p848 = scmp.ne.s32.totalorder %s839, %s840
      %p849 = scmp.eq.s32.totalorder %s149, 0
      %p850 = por %p848, %p849
      %p851 = scmp.ne.s32.totalorder %s839, %s840
      %p852 = scmp.eq.s32.totalorder %s150, 1
      %p853 = por %p851, %p852
      %p855 = scmp.ne.s32.totalorder %s840, %s854
      %p856 = scmp.eq.s32.totalorder %s150, 0
      %p857 = por %p855, %p856
      %s859 = sadd.s32 %s858, 1
      %p862 = scmp.eq.s32.totalorder %s144, 1
      %p863 = scmp.ne.s32.totalorder %s858, %s860
      %p864 = scmp.eq.s32.totalorder %s144, 0
      %p865 = por %p863, %p864
      %p866 = scmp.ne.s32.totalorder %s858, %s860
      %p867 = scmp.eq.s32.totalorder %s149, 1
      %p868 = por %p866, %p867
      %p869 = scmp.ne.s32.totalorder %s860, %s861
      %p870 = scmp.eq.s32.totalorder %s149, 0
      %p871 = por %p869, %p870
      %p872 = scmp.ne.s32.totalorder %s860, %s861
      %p873 = scmp.eq.s32.totalorder %s150, 1
      %p874 = por %p872, %p873
      %p876 = scmp.ne.s32.totalorder %s861, %s875
      %p877 = scmp.eq.s32.totalorder %s150, 0
      %p878 = por %p876, %p877
      %s880 = sadd.s32 %s879, 1
      %p883 = scmp.eq.s32.totalorder %s144, 1
      %p884 = scmp.ne.s32.totalorder %s879, %s881
      %p885 = scmp.eq.s32.totalorder %s144, 0
      %p886 = por %p884, %p885
      %p887 = scmp.ne.s32.totalorder %s879, %s881
      %p888 = scmp.eq.s32.totalorder %s149, 1
      %p889 = por %p887, %p888
      %p890 = scmp.ne.s32.totalorder %s881, %s882
      %p891 = scmp.eq.s32.totalorder %s149, 0
      %p892 = por %p890, %p891
      %p893 = scmp.ne.s32.totalorder %s881, %s882
      %p894 = scmp.eq.s32.totalorder %s150, 1
      %p895 = por %p893, %p894
      %p897 = scmp.ne.s32.totalorder %s882, %s896
      %p898 = scmp.eq.s32.totalorder %s150, 0
      %p899 = por %p897, %p898
      %s901 = sadd.s32 %s900, 1
      %p904 = scmp.eq.s32.totalorder %s144, 1
      %p905 = scmp.ne.s32.totalorder %s900, %s902
      %p906 = scmp.eq.s32.totalorder %s144, 0
      %p907 = por %p905, %p906
      %p908 = scmp.ne.s32.totalorder %s900, %s902
      %p909 = scmp.eq.s32.totalorder %s149, 1
      %p910 = por %p908, %p909
      %p911 = scmp.ne.s32.totalorder %s902, %s903
      %p912 = scmp.eq.s32.totalorder %s149, 0
      %p913 = por %p911, %p912
      %p914 = scmp.ne.s32.totalorder %s902, %s903
      %p915 = scmp.eq.s32.totalorder %s150, 1
      %p916 = por %p914, %p915
      %p918 = scmp.ne.s32.totalorder %s903, %s917
      %p919 = scmp.eq.s32.totalorder %s150, 0
      %p920 = por %p918, %p919
      %s922 = sadd.s32 %s921, 1
      %p925 = scmp.eq.s32.totalorder %s144, 1
      %p926 = scmp.ne.s32.totalorder %s921, %s923
      %p927 = scmp.eq.s32.totalorder %s144, 0
      %p928 = por %p926, %p927
      %p929 = scmp.ne.s32.totalorder %s921, %s923
      %p930 = scmp.eq.s32.totalorder %s149, 1
      %p931 = por %p929, %p930
      %p932 = scmp.ne.s32.totalorder %s923, %s924
      %p933 = scmp.eq.s32.totalorder %s149, 0
      %p934 = por %p932, %p933
      %p935 = scmp.ne.s32.totalorder %s923, %s924
      %p936 = scmp.eq.s32.totalorder %s150, 1
      %p937 = por %p935, %p936
      %p939 = scmp.ne.s32.totalorder %s924, %s938
      %p940 = scmp.eq.s32.totalorder %s150, 0
      %p941 = por %p939, %p940
      %s943 = sadd.s32 %s942, 1
      %p946 = scmp.eq.s32.totalorder %s144, 1
      %p947 = scmp.ne.s32.totalorder %s942, %s944
      %p948 = scmp.eq.s32.totalorder %s144, 0
      %p949 = por %p947, %p948
      %p950 = scmp.ne.s32.totalorder %s942, %s944
      %p951 = scmp.eq.s32.totalorder %s149, 1
      %p952 = por %p950, %p951
      %p953 = scmp.ne.s32.totalorder %s944, %s945
      %p954 = scmp.eq.s32.totalorder %s149, 0
      %p955 = por %p953, %p954
      %p956 = scmp.ne.s32.totalorder %s944, %s945
      %p957 = scmp.eq.s32.totalorder %s150, 1
      %p958 = por %p956, %p957
      %p960 = scmp.ne.s32.totalorder %s945, %s959
      %p961 = scmp.eq.s32.totalorder %s150, 0
      %p962 = por %p960, %p961
      %s964 = sadd.s32 %s963, 1
      %p967 = scmp.eq.s32.totalorder %s144, 1
      %p968 = scmp.ne.s32.totalorder %s963, %s965
      %p969 = scmp.eq.s32.totalorder %s144, 0
      %p970 = por %p968, %p969
      %p971 = scmp.ne.s32.totalorder %s963, %s965
      %p972 = scmp.eq.s32.totalorder %s149, 1
      %p973 = por %p971, %p972
      %p974 = scmp.ne.s32.totalorder %s965, %s966
      %p975 = scmp.eq.s32.totalorder %s149, 0
      %p976 = por %p974, %p975
      %p977 = scmp.ne.s32.totalorder %s965, %s966
      %p978 = scmp.eq.s32.totalorder %s150, 1
      %p979 = por %p977, %p978
      %p981 = scmp.ne.s32.totalorder %s966, %s980
      %p982 = scmp.eq.s32.totalorder %s150, 0
      %p983 = por %p981, %p982
      %s985 = sadd.s32 %s984, 1
      %p988 = scmp.eq.s32.totalorder %s144, 1
      %p989 = scmp.ne.s32.totalorder %s984, %s986
      %p990 = scmp.eq.s32.totalorder %s144, 0
      %p991 = por %p989, %p990
      %p992 = scmp.ne.s32.totalorder %s984, %s986
      %p993 = scmp.eq.s32.totalorder %s149, 1
      %p994 = por %p992, %p993
      %p995 = scmp.ne.s32.totalorder %s986, %s987
      %p996 = scmp.eq.s32.totalorder %s149, 0
      %p997 = por %p995, %p996
      %p998 = scmp.ne.s32.totalorder %s986, %s987
      %p999 = scmp.eq.s32.totalorder %s150, 1
      %p1000 = por %p998, %p999
      %p1002 = scmp.ne.s32.totalorder %s987, %s1001
      %p1003 = scmp.eq.s32.totalorder %s150, 0
      %p1004 = por %p1002, %p1003
      %s1006 = sadd.s32 %s1005, 1
      %p1009 = scmp.eq.s32.totalorder %s144, 1
      %p1010 = scmp.ne.s32.totalorder %s1005, %s1007
      %p1011 = scmp.eq.s32.totalorder %s144, 0
      %p1012 = por %p1010, %p1011
      %p1013 = scmp.ne.s32.totalorder %s1005, %s1007
      %p1014 = scmp.eq.s32.totalorder %s149, 1
      %p1015 = por %p1013, %p1014
      %p1016 = scmp.ne.s32.totalorder %s1007, %s1008
      %p1017 = scmp.eq.s32.totalorder %s149, 0
      %p1018 = por %p1016, %p1017
      %p1019 = scmp.ne.s32.totalorder %s1007, %s1008
      %p1020 = scmp.eq.s32.totalorder %s150, 1
      %p1021 = por %p1019, %p1020
      %p1023 = scmp.ne.s32.totalorder %s1008, %s1022
      %p1024 = scmp.eq.s32.totalorder %s150, 0
      %p1025 = por %p1023, %p1024
      %s1027 = sadd.s32 %s1026, 1
      %p1030 = scmp.eq.s32.totalorder %s144, 1
      %p1031 = scmp.ne.s32.totalorder %s1026, %s1028
      %p1032 = scmp.eq.s32.totalorder %s144, 0
      %p1033 = por %p1031, %p1032
      %p1034 = scmp.ne.s32.totalorder %s1026, %s1028
      %p1035 = scmp.eq.s32.totalorder %s149, 1
      %p1036 = por %p1034, %p1035
      %p1037 = scmp.ne.s32.totalorder %s1028, %s1029
      %p1038 = scmp.eq.s32.totalorder %s149, 0
      %p1039 = por %p1037, %p1038
      %p1040 = scmp.ne.s32.totalorder %s1028, %s1029
      %p1041 = scmp.eq.s32.totalorder %s150, 1
      %p1042 = por %p1040, %p1041
      %p1044 = scmp.ne.s32.totalorder %s1029, %s1043
      %p1045 = scmp.eq.s32.totalorder %s150, 0
      %p1046 = por %p1044, %p1045
      %s1048 = sadd.s32 %s1047, 1
      %p1051 = scmp.eq.s32.totalorder %s144, 1
      %p1052 = scmp.ne.s32.totalorder %s1047, %s1049
      %p1053 = scmp.eq.s32.totalorder %s144, 0
      %p1054 = por %p1052, %p1053
      %p1055 = scmp.ne.s32.totalorder %s1047, %s1049
      %p1056 = scmp.eq.s32.totalorder %s149, 1
      %p1057 = por %p1055, %p1056
      %p1058 = scmp.ne.s32.totalorder %s1049, %s1050
      %p1059 = scmp.eq.s32.totalorder %s149, 0
      %p1060 = por %p1058, %p1059
      %p1061 = scmp.ne.s32.totalorder %s1049, %s1050
      %p1062 = scmp.eq.s32.totalorder %s150, 1
      %p1063 = por %p1061, %p1062
      %p1065 = scmp.ne.s32.totalorder %s1050, %s1064
      %p1066 = scmp.eq.s32.totalorder %s150, 0
      %p1067 = por %p1065, %p1066
      %s1069 = sadd.s32 %s1068, 1
      %p1072 = scmp.eq.s32.totalorder %s144, 1
      %p1073 = scmp.ne.s32.totalorder %s1068, %s1070
      %p1074 = scmp.eq.s32.totalorder %s144, 0
      %p1075 = por %p1073, %p1074
      %p1076 = scmp.ne.s32.totalorder %s1068, %s1070
      %p1077 = scmp.eq.s32.totalorder %s149, 1
      %p1078 = por %p1076, %p1077
      %p1079 = scmp.ne.s32.totalorder %s1070, %s1071
      %p1080 = scmp.eq.s32.totalorder %s149, 0
      %p1081 = por %p1079, %p1080
      %p1082 = scmp.ne.s32.totalorder %s1070, %s1071
      %p1083 = scmp.eq.s32.totalorder %s150, 1
      %p1084 = por %p1082, %p1083
      %p1086 = scmp.ne.s32.totalorder %s1071, %s1085
      %p1087 = scmp.eq.s32.totalorder %s150, 0
      %p1088 = por %p1086, %p1087
      %s1090 = sadd.s32 %s1089, 1
      %p1093 = scmp.eq.s32.totalorder %s144, 1
      %p1094 = scmp.ne.s32.totalorder %s1089, %s1091
      %p1095 = scmp.eq.s32.totalorder %s144, 0
      %p1096 = por %p1094, %p1095
      %p1097 = scmp.ne.s32.totalorder %s1089, %s1091
      %p1098 = scmp.eq.s32.totalorder %s149, 1
      %p1099 = por %p1097, %p1098
      %p1100 = scmp.ne.s32.totalorder %s1091, %s1092
      %p1101 = scmp.eq.s32.totalorder %s149, 0
      %p1102 = por %p1100, %p1101
      %p1103 = scmp.ne.s32.totalorder %s1091, %s1092
      %p1104 = scmp.eq.s32.totalorder %s150, 1
      %p1105 = por %p1103, %p1104
      %p1107 = scmp.ne.s32.totalorder %s1092, %s1106
      %p1108 = scmp.eq.s32.totalorder %s150, 0
      %p1109 = por %p1107, %p1108
      %s1111 = sadd.s32 %s1110, 1
      %p1114 = scmp.eq.s32.totalorder %s144, 1
      %p1115 = scmp.ne.s32.totalorder %s1110, %s1112
      %p1116 = scmp.eq.s32.totalorder %s144, 0
      %p1117 = por %p1115, %p1116
      %p1118 = scmp.ne.s32.totalorder %s1110, %s1112
      %p1119 = scmp.eq.s32.totalorder %s149, 1
      %p1120 = por %p1118, %p1119
      %p1121 = scmp.ne.s32.totalorder %s1112, %s1113
      %p1122 = scmp.eq.s32.totalorder %s149, 0
      %p1123 = por %p1121, %p1122
      %p1124 = scmp.ne.s32.totalorder %s1112, %s1113
      %p1125 = scmp.eq.s32.totalorder %s150, 1
      %p1126 = por %p1124, %p1125
      %p1128 = scmp.ne.s32.totalorder %s1113, %s1127
      %p1129 = scmp.eq.s32.totalorder %s150, 0
      %p1130 = por %p1128, %p1129
      %s1132 = sadd.s32 %s1131, 1
      %p1135 = scmp.eq.s32.totalorder %s144, 1
      %p1136 = scmp.ne.s32.totalorder %s1131, %s1133
      %p1137 = scmp.eq.s32.totalorder %s144, 0
      %p1138 = por %p1136, %p1137
      %p1139 = scmp.ne.s32.totalorder %s1131, %s1133
      %p1140 = scmp.eq.s32.totalorder %s149, 1
      %p1141 = por %p1139, %p1140
      %p1142 = scmp.ne.s32.totalorder %s1133, %s1134
      %p1143 = scmp.eq.s32.totalorder %s149, 0
      %p1144 = por %p1142, %p1143
      %p1145 = scmp.ne.s32.totalorder %s1133, %s1134
      %p1146 = scmp.eq.s32.totalorder %s150, 1
      %p1147 = por %p1145, %p1146
      %p1149 = scmp.ne.s32.totalorder %s1134, %s1148
      %p1150 = scmp.eq.s32.totalorder %s150, 0
      %p1151 = por %p1149, %p1150
      %s1153 = sadd.s32 %s1152, 1
      %p1156 = scmp.eq.s32.totalorder %s144, 1
      %p1157 = scmp.ne.s32.totalorder %s1152, %s1154
      %p1158 = scmp.eq.s32.totalorder %s144, 0
      %p1159 = por %p1157, %p1158
      %p1160 = scmp.ne.s32.totalorder %s1152, %s1154
      %p1161 = scmp.eq.s32.totalorder %s149, 1
      %p1162 = por %p1160, %p1161
      %p1163 = scmp.ne.s32.totalorder %s1154, %s1155
      %p1164 = scmp.eq.s32.totalorder %s149, 0
      %p1165 = por %p1163, %p1164
      %p1166 = scmp.ne.s32.totalorder %s1154, %s1155
      %p1167 = scmp.eq.s32.totalorder %s150, 1
      %p1168 = por %p1166, %p1167
      %p1170 = scmp.ne.s32.totalorder %s1155, %s1169
      %p1171 = scmp.eq.s32.totalorder %s150, 0
      %p1172 = por %p1170, %p1171
      %s1174 = sadd.s32 %s1173, 1
      %p1177 = scmp.eq.s32.totalorder %s144, 1
      %p1178 = scmp.ne.s32.totalorder %s1173, %s1175
      %p1179 = scmp.eq.s32.totalorder %s144, 0
      %p1180 = por %p1178, %p1179
      %p1181 = scmp.ne.s32.totalorder %s1173, %s1175
      %p1182 = scmp.eq.s32.totalorder %s149, 1
      %p1183 = por %p1181, %p1182
      %p1184 = scmp.ne.s32.totalorder %s1175, %s1176
      %p1185 = scmp.eq.s32.totalorder %s149, 0
      %p1186 = por %p1184, %p1185
      %p1187 = scmp.ne.s32.totalorder %s1175, %s1176
      %p1188 = scmp.eq.s32.totalorder %s150, 1
      %p1189 = por %p1187, %p1188
      %p1191 = scmp.ne.s32.totalorder %s1176, %s1190
      %p1192 = scmp.eq.s32.totalorder %s150, 0
      %p1193 = por %p1191, %p1192
      %s1195 = sadd.s32 %s1194, 1
      %p1198 = scmp.eq.s32.totalorder %s144, 1
      %p1199 = scmp.ne.s32.totalorder %s1194, %s1196
      %p1200 = scmp.eq.s32.totalorder %s144, 0
      %p1201 = por %p1199, %p1200
      %p1202 = scmp.ne.s32.totalorder %s1194, %s1196
      %p1203 = scmp.eq.s32.totalorder %s149, 1
      %p1204 = por %p1202, %p1203
      %p1205 = scmp.ne.s32.totalorder %s1196, %s1197
      %p1206 = scmp.eq.s32.totalorder %s149, 0
      %p1207 = por %p1205, %p1206
      %p1208 = scmp.ne.s32.totalorder %s1196, %s1197
      %p1209 = scmp.eq.s32.totalorder %s150, 1
      %p1210 = por %p1208, %p1209
      %p1212 = scmp.ne.s32.totalorder %s1197, %s1211
      %p1213 = scmp.eq.s32.totalorder %s150, 0
      %p1214 = por %p1212, %p1213
      %s1216 = sadd.s32 %s1215, 1
      %p1219 = scmp.eq.s32.totalorder %s144, 1
      %p1220 = scmp.ne.s32.totalorder %s1215, %s1217
      %p1221 = scmp.eq.s32.totalorder %s144, 0
      %p1222 = por %p1220, %p1221
      %p1223 = scmp.ne.s32.totalorder %s1215, %s1217
      %p1224 = scmp.eq.s32.totalorder %s149, 1
      %p1225 = por %p1223, %p1224
      %p1226 = scmp.ne.s32.totalorder %s1217, %s1218
      %p1227 = scmp.eq.s32.totalorder %s149, 0
      %p1228 = por %p1226, %p1227
      %p1229 = scmp.ne.s32.totalorder %s1217, %s1218
      %p1230 = scmp.eq.s32.totalorder %s150, 1
      %p1231 = por %p1229, %p1230
      %p1233 = scmp.ne.s32.totalorder %s1218, %s1232
      %p1234 = scmp.eq.s32.totalorder %s150, 0
      %p1235 = por %p1233, %p1234
      %s1237 = sadd.s32 %s1236, 1
      %p1240 = scmp.eq.s32.totalorder %s144, 1
      %p1241 = scmp.ne.s32.totalorder %s1236, %s1238
      %p1242 = scmp.eq.s32.totalorder %s144, 0
      %p1243 = por %p1241, %p1242
      %p1244 = scmp.ne.s32.totalorder %s1236, %s1238
      %p1245 = scmp.eq.s32.totalorder %s149, 1
      %p1246 = por %p1244, %p1245
      %p1247 = scmp.ne.s32.totalorder %s1238, %s1239
      %p1248 = scmp.eq.s32.totalorder %s149, 0
      %p1249 = por %p1247, %p1248
      %p1250 = scmp.ne.s32.totalorder %s1238, %s1239
      %p1251 = scmp.eq.s32.totalorder %s150, 1
      %p1252 = por %p1250, %p1251
      %p1254 = scmp.ne.s32.totalorder %s1239, %s1253
      %p1255 = scmp.eq.s32.totalorder %s150, 0
      %p1256 = por %p1254, %p1255
      %s1258 = sadd.s32 %s1257, 1
      %p1261 = scmp.eq.s32.totalorder %s144, 1
      %p1262 = scmp.ne.s32.totalorder %s1257, %s1259
      %p1263 = scmp.eq.s32.totalorder %s144, 0
      %p1264 = por %p1262, %p1263
      %p1265 = scmp.ne.s32.totalorder %s1257, %s1259
      %p1266 = scmp.eq.s32.totalorder %s149, 1
      %p1267 = por %p1265, %p1266
      %p1268 = scmp.ne.s32.totalorder %s1259, %s1260
      %p1269 = scmp.eq.s32.totalorder %s149, 0
      %p1270 = por %p1268, %p1269
      %p1271 = scmp.ne.s32.totalorder %s1259, %s1260
      %p1272 = scmp.eq.s32.totalorder %s150, 1
      %p1273 = por %p1271, %p1272
      %p1275 = scmp.ne.s32.totalorder %s1260, %s1274
      %p1276 = scmp.eq.s32.totalorder %s150, 0
      %p1277 = por %p1275, %p1276
      %s1279 = sadd.s32 %s1278, 1
      %p1282 = scmp.eq.s32.totalorder %s144, 1
      %p1283 = scmp.ne.s32.totalorder %s1278, %s1280
      %p1284 = scmp.eq.s32.totalorder %s144, 0
      %p1285 = por %p1283, %p1284
      %p1286 = scmp.ne.s32.totalorder %s1278, %s1280
      %p1287 = scmp.eq.s32.totalorder %s149, 1
      %p1288 = por %p1286, %p1287
      %p1289 = scmp.ne.s32.totalorder %s1280, %s1281
      %p1290 = scmp.eq.s32.totalorder %s149, 0
      %p1291 = por %p1289, %p1290
      %p1292 = scmp.ne.s32.totalorder %s1280, %s1281
      %p1293 = scmp.eq.s32.totalorder %s150, 1
      %p1294 = por %p1292, %p1293
      %p1296 = scmp.ne.s32.totalorder %s1281, %s1295
      %p1297 = scmp.eq.s32.totalorder %s150, 0
      %p1298 = por %p1296, %p1297
      %s1300 = sadd.s32 %s1299, 1
      %p1303 = scmp.eq.s32.totalorder %s144, 1
      %p1304 = scmp.ne.s32.totalorder %s1299, %s1301
      %p1305 = scmp.eq.s32.totalorder %s144, 0
      %p1306 = por %p1304, %p1305
      %p1307 = scmp.ne.s32.totalorder %s1299, %s1301
      %p1308 = scmp.eq.s32.totalorder %s149, 1
      %p1309 = por %p1307, %p1308
      %p1310 = scmp.ne.s32.totalorder %s1301, %s1302
      %p1311 = scmp.eq.s32.totalorder %s149, 0
      %p1312 = por %p1310, %p1311
      %p1313 = scmp.ne.s32.totalorder %s1301, %s1302
      %p1314 = scmp.eq.s32.totalorder %s150, 1
      %p1315 = por %p1313, %p1314
      %p1317 = scmp.ne.s32.totalorder %s1302, %s1316
      %p1318 = scmp.eq.s32.totalorder %s150, 0
      %p1319 = por %p1317, %p1318
      %s1321 = sadd.s32 %s1320, 1
      %p1324 = scmp.eq.s32.totalorder %s144, 1
      %p1325 = scmp.ne.s32.totalorder %s1320, %s1322
      %p1326 = scmp.eq.s32.totalorder %s144, 0
      %p1327 = por %p1325, %p1326
      %p1328 = scmp.ne.s32.totalorder %s1320, %s1322
      %p1329 = scmp.eq.s32.totalorder %s149, 1
      %p1330 = por %p1328, %p1329
      %p1331 = scmp.ne.s32.totalorder %s1322, %s1323
      %p1332 = scmp.eq.s32.totalorder %s149, 0
      %p1333 = por %p1331, %p1332
      %p1334 = scmp.ne.s32.totalorder %s1322, %s1323
      %p1335 = scmp.eq.s32.totalorder %s150, 1
      %p1336 = por %p1334, %p1335
      %p1338 = scmp.ne.s32.totalorder %s1323, %s1337
      %p1339 = scmp.eq.s32.totalorder %s150, 0
      %p1340 = por %p1338, %p1339
      %s1342 = sadd.s32 %s1341, 1
      %p1345 = scmp.eq.s32.totalorder %s144, 1
      %p1346 = scmp.ne.s32.totalorder %s1341, %s1343
      %p1347 = scmp.eq.s32.totalorder %s144, 0
      %p1348 = por %p1346, %p1347
      %p1349 = scmp.ne.s32.totalorder %s1341, %s1343
      %p1350 = scmp.eq.s32.totalorder %s149, 1
      %p1351 = por %p1349, %p1350
      %p1352 = scmp.ne.s32.totalorder %s1343, %s1344
      %p1353 = scmp.eq.s32.totalorder %s149, 0
      %p1354 = por %p1352, %p1353
      %p1355 = scmp.ne.s32.totalorder %s1343, %s1344
      %p1356 = scmp.eq.s32.totalorder %s150, 1
      %p1357 = por %p1355, %p1356
      %p1359 = scmp.ne.s32.totalorder %s1344, %s1358
      %p1360 = scmp.eq.s32.totalorder %s150, 0
      %p1361 = por %p1359, %p1360
      %s1363 = sadd.s32 %s1362, 1
      %p1366 = scmp.eq.s32.totalorder %s144, 1
      %p1367 = scmp.ne.s32.totalorder %s1362, %s1364
      %p1368 = scmp.eq.s32.totalorder %s144, 0
      %p1369 = por %p1367, %p1368
      %p1370 = scmp.ne.s32.totalorder %s1362, %s1364
      %p1371 = scmp.eq.s32.totalorder %s149, 1
      %p1372 = por %p1370, %p1371
      %p1373 = scmp.ne.s32.totalorder %s1364, %s1365
      %p1374 = scmp.eq.s32.totalorder %s149, 0
      %p1375 = por %p1373, %p1374
      %p1376 = scmp.ne.s32.totalorder %s1364, %s1365
      %p1377 = scmp.eq.s32.totalorder %s150, 1
      %p1378 = por %p1376, %p1377
      %p1380 = scmp.ne.s32.totalorder %s1365, %s1379
      %p1381 = scmp.eq.s32.totalorder %s150, 0
      %p1382 = por %p1380, %p1381
      %s1383 = ssub.s32 %s144, %s151
      %p1384 = scmp.eq.s32.totalorder %s1383, 0
      %s1386 = sadd.s32 %s1385, 1
      %s1387 = scalar_select %p1384, %s1385, %s1386
      %p1390 = pneg %p1384
      %p1391 = scmp.eq.s32.totalorder %s144, 1
      %p1392 = por %p1390, %p1391
      %p1393 = scmp.ne.s32.totalorder %s1385, %s1388
      %p1394 = scmp.eq.s32.totalorder %s144, 0
      %p1395 = por %p1393, %p1394
      %p1396 = scmp.ne.s32.totalorder %s1385, %s1388
      %p1397 = scmp.eq.s32.totalorder %s149, 1
      %p1398 = por %p1396, %p1397
      %p1399 = scmp.ne.s32.totalorder %s1388, %s1389
      %p1400 = scmp.eq.s32.totalorder %s149, 0
      %p1401 = por %p1399, %p1400
      %p1402 = scmp.ne.s32.totalorder %s1388, %s1389
      %p1403 = scmp.eq.s32.totalorder %s150, 1
      %p1404 = por %p1402, %p1403
      %p1406 = scmp.ne.s32.totalorder %s1389, %s1405
      %p1407 = scmp.eq.s32.totalorder %s150, 0
      %p1408 = por %p1406, %p1407
      %p1409 = scmp.le.s32.totalorder 1, %s144
      %p1410 = scmp.lt.s32.totalorder %s144, 3
      %p1411 = pnand %p1409, %p1410
      %p1412 = pneg %p1411
      // Predicated region
      $region9: #{lcgn_forward.1} parent=5 // pred_check
        _
      $region10: #{lcgn_forward.1} parent=5 // pred_check_branch
        %1414 = sbr.rel (%p1411) target = $region12
      $region11: #{lcgn_forward.1} parent=5 // pred_region
        %s1415 = ssub.s32 %s144, 1
        // Predicated region
        $region13: #{lcgn_forward.1} parent=11 // pred_check
          %p1416 = pneg %p451
        $region14: #{lcgn_forward.1} parent=11 // pred_check_branch
          %1418 = sbr.rel (%p1416) target = $region16
        $region15: #{lcgn_forward.1} parent=11 // pred_region
          _
        $region16: #{lcgn_forward.1} parent=11 // pred_fallthru
          _
        // Predicated region
        $region17: #{lcgn_forward.1} parent=11 // pred_check
          %p1419 = pneg %p472
        $region18: #{lcgn_forward.1} parent=11 // pred_check_branch
          %1421 = sbr.rel (%p1419) target = $region20
        $region19: #{lcgn_forward.1} parent=11 // pred_region
          %s1423 = ssub.s32 16, 16
          %1424 = vsyncadd [#allocation8], %s1423
          %s1426 = sshll.u32 [#allocation9], 4
          %s1427 = int_to_ptr.vmem [resolvable:$true] %s1426
          %1429 = dma.hbm_to_vmem [thread:$0]  %s25, 16, %s1427, [#allocation8]
        $region20: #{lcgn_forward.1} parent=11 // pred_fallthru
          _
        // Predicated region
        $region21: #{lcgn_forward.1} parent=11 // pred_check
          %p1430 = pneg %p493
        $region22: #{lcgn_forward.1} parent=11 // pred_check_branch
          %1432 = sbr.rel (%p1430) target = $region24
        $region23: #{lcgn_forward.1} parent=11 // pred_region
          %s1434 = ssub.s32 16, 16
          %1435 = vsyncadd [#allocation11], %s1434
          %s1437 = sshll.u32 [#allocation10], 4
          %s1438 = int_to_ptr.vmem [resolvable:$true] %s1437
          %1440 = dma.hbm_to_vmem [thread:$0]  %s27, 16, %s1438, [#allocation11]
        $region24: #{lcgn_forward.1} parent=11 // pred_fallthru
          _
        // Predicated region
        $region25: #{lcgn_forward.1} parent=11 // pred_check
          %p1441 = pneg %p514
        $region26: #{lcgn_forward.1} parent=11 // pred_check_branch
          %1443 = sbr.rel (%p1441) target = $region28
        $region27: #{lcgn_forward.1} parent=11 // pred_region
          _
        $region28: #{lcgn_forward.1} parent=11 // pred_fallthru
          _
        // Predicated region
        $region29: #{lcgn_forward.1} parent=11 // pred_check
          %p1444 = pneg %p535
        $region30: #{lcgn_forward.1} parent=11 // pred_check_branch
          %1446 = sbr.rel (%p1444) target = $region32
        $region31: #{lcgn_forward.1} parent=11 // pred_region
          %s1448 = ssub.s32 16, 16
          %1449 = vsyncadd [#allocation11], %s1448
          %s1451 = sshll.u32 [#allocation12], 4
          %s1452 = int_to_ptr.vmem [resolvable:$true] %s1451
          %1454 = dma.hbm_to_vmem [thread:$0]  %s31, 16, %s1452, [#allocation11]
        $region32: #{lcgn_forward.1} parent=11 // pred_fallthru
          _
        // Predicated region
        $region33: #{lcgn_forward.1} parent=11 // pred_check
          %p1455 = pneg %p556
        $region34: #{lcgn_forward.1} parent=11 // pred_check_branch
          %1457 = sbr.rel (%p1455) target = $region36
        $region35: #{lcgn_forward.1} parent=11 // pred_region
          _
        $region36: #{lcgn_forward.1} parent=11 // pred_fallthru
          _
        // Predicated region
        $region37: #{lcgn_forward.1} parent=11 // pred_check
          %p1458 = pneg %p577
        $region38: #{lcgn_forward.1} parent=11 // pred_check_branch
          %1460 = sbr.rel (%p1458) target = $region40
        $region39: #{lcgn_forward.1} parent=11 // pred_region
          %s1462 = ssub.s32 32, 32
          %1463 = vsyncadd [#allocation14], %s1462
          %s1464 = sshll.u32 [#allocation13], 4
          %s1465 = int_to_ptr.vmem [resolvable:$true] %s1464
          %1470 = dma.hbm_to_vmem [thread:$0]  %s35, 32, %s1465, [#allocation14], 16, 16, 1
        $region40: #{lcgn_forward.1} parent=11 // pred_fallthru
          _
        // Predicated region
        $region41: #{lcgn_forward.1} parent=11 // pred_check
          %p1471 = pneg %p598
        $region42: #{lcgn_forward.1} parent=11 // pred_check_branch
          %1473 = sbr.rel (%p1471) target = $region44
        $region43: #{lcgn_forward.1} parent=11 // pred_region
          %s1475 = ssub.s32 16, 16
          %1476 = vsyncadd [#allocation14], %s1475
          %s1478 = sshll.u32 [#allocation15], 4
          %s1479 = int_to_ptr.vmem [resolvable:$true] %s1478
          %1481 = dma.hbm_to_vmem [thread:$0]  %s37, 16, %s1479, [#allocation14]
        $region44: #{lcgn_forward.1} parent=11 // pred_fallthru
          _
        // Predicated region
        $region45: #{lcgn_forward.1} parent=11 // pred_check
          %p1482 = pneg %p619
        $region46: #{lcgn_forward.1} parent=11 // pred_check_branch
          %1484 = sbr.rel (%p1482) target = $region48
        $region47: #{lcgn_forward.1} parent=11 // pred_region
          _
        $region48: #{lcgn_forward.1} parent=11 // pred_fallthru
          _
        // Predicated region
        $region49: #{lcgn_forward.1} parent=11 // pred_check
          %p1485 = pneg %p640
        $region50: #{lcgn_forward.1} parent=11 // pred_check_branch
          %1487 = sbr.rel (%p1485) target = $region52
        $region51: #{lcgn_forward.1} parent=11 // pred_region
          %s1489 = ssub.s32 32, 32
          %1490 = vsyncadd [#allocation17], %s1489
          %s1491 = sshll.u32 [#allocation16], 4
          %s1492 = int_to_ptr.vmem [resolvable:$true] %s1491
          %1497 = dma.hbm_to_vmem [thread:$0]  %s41, 32, %s1492, [#allocation17], 16, 16, 1
        $region52: #{lcgn_forward.1} parent=11 // pred_fallthru
          _
        // Predicated region
        $region53: #{lcgn_forward.1} parent=11 // pred_check
          %p1498 = pneg %p661
        $region54: #{lcgn_forward.1} parent=11 // pred_check_branch
          %1500 = sbr.rel (%p1498) target = $region56
        $region55: #{lcgn_forward.1} parent=11 // pred_region
          %s1502 = ssub.s32 32, 32
          %1503 = vsyncadd [#allocation17], %s1502
          %s1504 = sshll.u32 [#allocation18], 4
          %s1505 = int_to_ptr.vmem [resolvable:$true] %s1504
          %1510 = dma.hbm_to_vmem [thread:$0]  %s43, 32, %s1505, [#allocation17], 16, 16, 1
        $region56: #{lcgn_forward.1} parent=11 // pred_fallthru
          _
        // Predicated region
        $region57: #{lcgn_forward.1} parent=11 // pred_check
          %p1511 = pneg %p682
        $region58: #{lcgn_forward.1} parent=11 // pred_check_branch
          %1513 = sbr.rel (%p1511) target = $region60
        $region59: #{lcgn_forward.1} parent=11 // pred_region
          _
        $region60: #{lcgn_forward.1} parent=11 // pred_fallthru
          _
        // Predicated region
        $region61: #{lcgn_forward.1} parent=11 // pred_check
          %p1514 = pneg %p703
        $region62: #{lcgn_forward.1} parent=11 // pred_check_branch
          %1516 = sbr.rel (%p1514) target = $region64
        $region63: #{lcgn_forward.1} parent=11 // pred_region
          %s1518 = ssub.s32 32, 32
          %1519 = vsyncadd [#allocation20], %s1518
          %s1520 = sshll.u32 [#allocation19], 4
          %s1521 = int_to_ptr.vmem [resolvable:$true] %s1520
          %1526 = dma.hbm_to_vmem [thread:$0]  %s47, 32, %s1521, [#allocation20], 16, 16, 1
        $region64: #{lcgn_forward.1} parent=11 // pred_fallthru
          _
        // Predicated region
        $region65: #{lcgn_forward.1} parent=11 // pred_check
          %p1527 = pneg %p724
        $region66: #{lcgn_forward.1} parent=11 // pred_check_branch
          %1529 = sbr.rel (%p1527) target = $region68
        $region67: #{lcgn_forward.1} parent=11 // pred_region
          _
        $region68: #{lcgn_forward.1} parent=11 // pred_fallthru
          _
        // Predicated region
        $region69: #{lcgn_forward.1} parent=11 // pred_check
          %p1530 = pneg %p745
        $region70: #{lcgn_forward.1} parent=11 // pred_check_branch
          %1532 = sbr.rel (%p1530) target = $region72
        $region71: #{lcgn_forward.1} parent=11 // pred_region
          %s1534 = ssub.s32 16, 16
          %1535 = vsyncadd [#allocation20], %s1534
          %s1537 = sshll.u32 [#allocation21], 4
          %s1538 = int_to_ptr.vmem [resolvable:$true] %s1537
          %1540 = dma.hbm_to_vmem [thread:$0]  %s51, 16, %s1538, [#allocation20]
        $region72: #{lcgn_forward.1} parent=11 // pred_fallthru
          _
        // Predicated region
        $region73: #{lcgn_forward.1} parent=11 // pred_check
          %p1541 = pneg %p766
        $region74: #{lcgn_forward.1} parent=11 // pred_check_branch
          %1543 = sbr.rel (%p1541) target = $region76
        $region75: #{lcgn_forward.1} parent=11 // pred_region
          _
        $region76: #{lcgn_forward.1} parent=11 // pred_fallthru
          _
        // Predicated region
        $region77: #{lcgn_forward.1} parent=11 // pred_check
          %p1544 = pneg %p787
        $region78: #{lcgn_forward.1} parent=11 // pred_check_branch
          %1546 = sbr.rel (%p1544) target = $region80
        $region79: #{lcgn_forward.1} parent=11 // pred_region
          %s1548 = ssub.s32 16, 16
          %1549 = vsyncadd [#allocation23], %s1548
          %s1551 = sshll.u32 [#allocation22], 4
          %s1552 = int_to_ptr.vmem [resolvable:$true] %s1551
          %1554 = dma.hbm_to_vmem [thread:$0]  %s55, 16, %s1552, [#allocation23]
        $region80: #{lcgn_forward.1} parent=11 // pred_fallthru
          _
        // Predicated region
        $region81: #{lcgn_forward.1} parent=11 // pred_check
          %p1555 = pneg %p808
        $region82: #{lcgn_forward.1} parent=11 // pred_check_branch
          %1557 = sbr.rel (%p1555) target = $region84
        $region83: #{lcgn_forward.1} parent=11 // pred_region
          _
        $region84: #{lcgn_forward.1} parent=11 // pred_fallthru
          _
        // Predicated region
        $region85: #{lcgn_forward.1} parent=11 // pred_check
          %p1558 = pneg %p829
        $region86: #{lcgn_forward.1} parent=11 // pred_check_branch
          %1560 = sbr.rel (%p1558) target = $region88
        $region87: #{lcgn_forward.1} parent=11 // pred_region
          %s1562 = ssub.s32 16, 16
          %1563 = vsyncadd [#allocation23], %s1562
          %s1565 = sshll.u32 [#allocation24], 4
          %s1566 = int_to_ptr.vmem [resolvable:$true] %s1565
          %1568 = dma.hbm_to_vmem [thread:$0]  %s59, 16, %s1566, [#allocation23]
        $region88: #{lcgn_forward.1} parent=11 // pred_fallthru
          _
        // Predicated region
        $region89: #{lcgn_forward.1} parent=11 // pred_check
          %p1569 = pneg %p850
        $region90: #{lcgn_forward.1} parent=11 // pred_check_branch
          %1571 = sbr.rel (%p1569) target = $region92
        $region91: #{lcgn_forward.1} parent=11 // pred_region
          _
        $region92: #{lcgn_forward.1} parent=11 // pred_fallthru
          _
        // Predicated region
        $region93: #{lcgn_forward.1} parent=11 // pred_check
          %p1572 = pneg %p871
        $region94: #{lcgn_forward.1} parent=11 // pred_check_branch
          %1574 = sbr.rel (%p1572) target = $region96
        $region95: #{lcgn_forward.1} parent=11 // pred_region
          %s1576 = ssub.s32 16, 16
          %1577 = vsyncadd [#allocation26], %s1576
          %s1579 = sshll.u32 [#allocation25], 4
          %s1580 = int_to_ptr.vmem [resolvable:$true] %s1579
          %1582 = dma.hbm_to_vmem [thread:$0]  %s63, 16, %s1580, [#allocation26]
        $region96: #{lcgn_forward.1} parent=11 // pred_fallthru
          _
        // Predicated region
        $region97: #{lcgn_forward.1} parent=11 // pred_check
          %p1583 = pneg %p892
        $region98: #{lcgn_forward.1} parent=11 // pred_check_branch
          %1585 = sbr.rel (%p1583) target = $region100
        $region99: #{lcgn_forward.1} parent=11 // pred_region
          _
        $region100: #{lcgn_forward.1} parent=11 // pred_fallthru
          _
        // Predicated region
        $region101: #{lcgn_forward.1} parent=11 // pred_check
          %p1586 = pneg %p913
        $region102: #{lcgn_forward.1} parent=11 // pred_check_branch
          %1588 = sbr.rel (%p1586) target = $region104
        $region103: #{lcgn_forward.1} parent=11 // pred_region
          %s1590 = ssub.s32 16, 16
          %1591 = vsyncadd [#allocation26], %s1590
          %s1593 = sshll.u32 [#allocation27], 4
          %s1594 = int_to_ptr.vmem [resolvable:$true] %s1593
          %1596 = dma.hbm_to_vmem [thread:$0]  %s67, 16, %s1594, [#allocation26]
        $region104: #{lcgn_forward.1} parent=11 // pred_fallthru
          _
        // Predicated region
        $region105: #{lcgn_forward.1} parent=11 // pred_check
          %p1597 = pneg %p934
        $region106: #{lcgn_forward.1} parent=11 // pred_check_branch
          %1599 = sbr.rel (%p1597) target = $region108
        $region107: #{lcgn_forward.1} parent=11 // pred_region
          _
        $region108: #{lcgn_forward.1} parent=11 // pred_fallthru
          _
        // Predicated region
        $region109: #{lcgn_forward.1} parent=11 // pred_check
          %p1600 = pneg %p955
        $region110: #{lcgn_forward.1} parent=11 // pred_check_branch
          %1602 = sbr.rel (%p1600) target = $region112
        $region111: #{lcgn_forward.1} parent=11 // pred_region
          %s1604 = ssub.s32 16, 16
          %1605 = vsyncadd [#allocation29], %s1604
          %s1607 = sshll.u32 [#allocation28], 4
          %s1608 = int_to_ptr.vmem [resolvable:$true] %s1607
          %1610 = dma.hbm_to_vmem [thread:$0]  %s71, 16, %s1608, [#allocation29]
        $region112: #{lcgn_forward.1} parent=11 // pred_fallthru
          _
        // Predicated region
        $region113: #{lcgn_forward.1} parent=11 // pred_check
          %p1611 = pneg %p976
        $region114: #{lcgn_forward.1} parent=11 // pred_check_branch
          %1613 = sbr.rel (%p1611) target = $region116
        $region115: #{lcgn_forward.1} parent=11 // pred_region
          _
        $region116: #{lcgn_forward.1} parent=11 // pred_fallthru
          _
        // Predicated region
        $region117: #{lcgn_forward.1} parent=11 // pred_check
          %p1614 = pneg %p997
        $region118: #{lcgn_forward.1} parent=11 // pred_check_branch
          %1616 = sbr.rel (%p1614) target = $region120
        $region119: #{lcgn_forward.1} parent=11 // pred_region
          %s1618 = ssub.s32 16, 16
          %1619 = vsyncadd [#allocation29], %s1618
          %s1621 = sshll.u32 [#allocation30], 4
          %s1622 = int_to_ptr.vmem [resolvable:$true] %s1621
          %1624 = dma.hbm_to_vmem [thread:$0]  %s75, 16, %s1622, [#allocation29]
        $region120: #{lcgn_forward.1} parent=11 // pred_fallthru
          _
        // Predicated region
        $region121: #{lcgn_forward.1} parent=11 // pred_check
          %p1625 = pneg %p1018
        $region122: #{lcgn_forward.1} parent=11 // pred_check_branch
          %1627 = sbr.rel (%p1625) target = $region124
        $region123: #{lcgn_forward.1} parent=11 // pred_region
          _
        $region124: #{lcgn_forward.1} parent=11 // pred_fallthru
          _
        // Predicated region
        $region125: #{lcgn_forward.1} parent=11 // pred_check
          %p1628 = pneg %p1039
        $region126: #{lcgn_forward.1} parent=11 // pred_check_branch
          %1630 = sbr.rel (%p1628) target = $region128
        $region127: #{lcgn_forward.1} parent=11 // pred_region
          %s1632 = ssub.s32 16, 16
          %1633 = vsyncadd [#allocation32], %s1632
          %s1635 = sshll.u32 [#allocation31], 4
          %s1636 = int_to_ptr.vmem [resolvable:$true] %s1635
          %1638 = dma.hbm_to_vmem [thread:$0]  %s79, 16, %s1636, [#allocation32]
        $region128: #{lcgn_forward.1} parent=11 // pred_fallthru
          _
        // Predicated region
        $region129: #{lcgn_forward.1} parent=11 // pred_check
          %p1639 = pneg %p1060
        $region130: #{lcgn_forward.1} parent=11 // pred_check_branch
          %1641 = sbr.rel (%p1639) target = $region132
        $region131: #{lcgn_forward.1} parent=11 // pred_region
          %s1643 = ssub.s32 512, 512
          %1644 = vsyncadd [#allocation32], %s1643
          %s1645 = sshll.u32 [#allocation33], 4
          %s1646 = int_to_ptr.vmem [resolvable:$true] %s1645
          %1651 = dma.hbm_to_vmem [thread:$0]  %s81, 512, %s1646, [#allocation32], 128, 128, 8
        $region132: #{lcgn_forward.1} parent=11 // pred_fallthru
          _
        // Predicated region
        $region133: #{lcgn_forward.1} parent=11 // pred_check
          %p1652 = pneg %p1081
        $region134: #{lcgn_forward.1} parent=11 // pred_check_branch
          %1654 = sbr.rel (%p1652) target = $region136
        $region135: #{lcgn_forward.1} parent=11 // pred_region
          %s1656 = ssub.s32 16, 16
          %1657 = vsyncadd [#allocation35], %s1656
          %s1659 = sshll.u32 [#allocation34], 4
          %s1660 = int_to_ptr.vmem [resolvable:$true] %s1659
          %1662 = dma.hbm_to_vmem [thread:$0]  %s83, 16, %s1660, [#allocation35]
        $region136: #{lcgn_forward.1} parent=11 // pred_fallthru
          _
        // Predicated region
        $region137: #{lcgn_forward.1} parent=11 // pred_check
          %p1663 = pneg %p1102
        $region138: #{lcgn_forward.1} parent=11 // pred_check_branch
          %1665 = sbr.rel (%p1663) target = $region140
        $region139: #{lcgn_forward.1} parent=11 // pred_region
          %s1667 = ssub.s32 512, 512
          %1668 = vsyncadd [#allocation35], %s1667
          %s1669 = sshll.u32 [#allocation36], 4
          %s1670 = int_to_ptr.vmem [resolvable:$true] %s1669
          %1675 = dma.hbm_to_vmem [thread:$0]  %s85, 512, %s1670, [#allocation35], 128, 128, 8
        $region140: #{lcgn_forward.1} parent=11 // pred_fallthru
          _
        // Predicated region
        $region141: #{lcgn_forward.1} parent=11 // pred_check
          %p1676 = pneg %p1123
        $region142: #{lcgn_forward.1} parent=11 // pred_check_branch
          %1678 = sbr.rel (%p1676) target = $region144
        $region143: #{lcgn_forward.1} parent=11 // pred_region
          %s1680 = ssub.s32 16, 16
          %1681 = vsyncadd [#allocation38], %s1680
          %s1683 = sshll.u32 [#allocation37], 4
          %s1684 = int_to_ptr.vmem [resolvable:$true] %s1683
          %1686 = dma.hbm_to_vmem [thread:$0]  %s87, 16, %s1684, [#allocation38]
        $region144: #{lcgn_forward.1} parent=11 // pred_fallthru
          _
        // Predicated region
        $region145: #{lcgn_forward.1} parent=11 // pred_check
          %p1687 = pneg %p1144
        $region146: #{lcgn_forward.1} parent=11 // pred_check_branch
          %1689 = sbr.rel (%p1687) target = $region148
        $region147: #{lcgn_forward.1} parent=11 // pred_region
          _
        $region148: #{lcgn_forward.1} parent=11 // pred_fallthru
          _
        // Predicated region
        $region149: #{lcgn_forward.1} parent=11 // pred_check
          %p1690 = pneg %p1165
        $region150: #{lcgn_forward.1} parent=11 // pred_check_branch
          %1692 = sbr.rel (%p1690) target = $region152
        $region151: #{lcgn_forward.1} parent=11 // pred_region
          %s1694 = ssub.s32 16, 16
          %1695 = vsyncadd [#allocation38], %s1694
          %s1697 = sshll.u32 [#allocation39], 4
          %s1698 = int_to_ptr.vmem [resolvable:$true] %s1697
          %1700 = dma.hbm_to_vmem [thread:$0]  %s91, 16, %s1698, [#allocation38]
        $region152: #{lcgn_forward.1} parent=11 // pred_fallthru
          _
        // Predicated region
        $region153: #{lcgn_forward.1} parent=11 // pred_check
          %p1701 = pneg %p1186
        $region154: #{lcgn_forward.1} parent=11 // pred_check_branch
          %1703 = sbr.rel (%p1701) target = $region156
        $region155: #{lcgn_forward.1} parent=11 // pred_region
          %s1705 = ssub.s32 16, 16
          %1706 = vsyncadd [#allocation41], %s1705
          %s1708 = sshll.u32 [#allocation40], 4
          %s1709 = int_to_ptr.vmem [resolvable:$true] %s1708
          %1711 = dma.hbm_to_vmem [thread:$0]  %s93, 16, %s1709, [#allocation41]
        $region156: #{lcgn_forward.1} parent=11 // pred_fallthru
          _
        // Predicated region
        $region157: #{lcgn_forward.1} parent=11 // pred_check
          %p1712 = pneg %p1207
        $region158: #{lcgn_forward.1} parent=11 // pred_check_branch
          %1714 = sbr.rel (%p1712) target = $region160
        $region159: #{lcgn_forward.1} parent=11 // pred_region
          %s1716 = ssub.s32 16, 16
          %1717 = vsyncadd [#allocation41], %s1716
          %s1719 = sshll.u32 [#allocation42], 4
          %s1720 = int_to_ptr.vmem [resolvable:$true] %s1719
          %1722 = dma.hbm_to_vmem [thread:$0]  %s95, 16, %s1720, [#allocation41]
        $region160: #{lcgn_forward.1} parent=11 // pred_fallthru
          _
        // Predicated region
        $region161: #{lcgn_forward.1} parent=11 // pred_check
          %p1723 = pneg %p1228
        $region162: #{lcgn_forward.1} parent=11 // pred_check_branch
          %1725 = sbr.rel (%p1723) target = $region164
        $region163: #{lcgn_forward.1} parent=11 // pred_region
          %s1727 = ssub.s32 16, 16
          %1728 = vsyncadd [#allocation44], %s1727
          %s1730 = sshll.u32 [#allocation43], 4
          %s1731 = int_to_ptr.vmem [resolvable:$true] %s1730
          %1733 = dma.hbm_to_vmem [thread:$0]  %s97, 16, %s1731, [#allocation44]
        $region164: #{lcgn_forward.1} parent=11 // pred_fallthru
          _
        // Predicated region
        $region165: #{lcgn_forward.1} parent=11 // pred_check
          %p1734 = pneg %p1249
        $region166: #{lcgn_forward.1} parent=11 // pred_check_branch
          %1736 = sbr.rel (%p1734) target = $region168
        $region167: #{lcgn_forward.1} parent=11 // pred_region
          %s1738 = ssub.s32 16, 16
          %1739 = vsyncadd [#allocation44], %s1738
          %s1741 = sshll.u32 [#allocation45], 4
          %s1742 = int_to_ptr.vmem [resolvable:$true] %s1741
          %1744 = dma.hbm_to_vmem [thread:$0]  %s99, 16, %s1742, [#allocation44]
        $region168: #{lcgn_forward.1} parent=11 // pred_fallthru
          _
        // Predicated region
        $region169: #{lcgn_forward.1} parent=11 // pred_check
          %p1745 = pneg %p1270
        $region170: #{lcgn_forward.1} parent=11 // pred_check_branch
          %1747 = sbr.rel (%p1745) target = $region172
        $region171: #{lcgn_forward.1} parent=11 // pred_region
          _
        $region172: #{lcgn_forward.1} parent=11 // pred_fallthru
          _
        // Predicated region
        $region173: #{lcgn_forward.1} parent=11 // pred_check
          %p1748 = pneg %p1291
        $region174: #{lcgn_forward.1} parent=11 // pred_check_branch
          %1750 = sbr.rel (%p1748) target = $region176
        $region175: #{lcgn_forward.1} parent=11 // pred_region
          %s1752 = ssub.s32 16, 16
          %1753 = vsyncadd [#allocation47], %s1752
          %s1755 = sshll.u32 [#allocation46], 4
          %s1756 = int_to_ptr.vmem [resolvable:$true] %s1755
          %1758 = dma.hbm_to_vmem [thread:$0]  %s103, 16, %s1756, [#allocation47]
        $region176: #{lcgn_forward.1} parent=11 // pred_fallthru
          _
        // Predicated region
        $region177: #{lcgn_forward.1} parent=11 // pred_check
          %p1759 = pneg %p1312
        $region178: #{lcgn_forward.1} parent=11 // pred_check_branch
          %1761 = sbr.rel (%p1759) target = $region180
        $region179: #{lcgn_forward.1} parent=11 // pred_region
          _
        $region180: #{lcgn_forward.1} parent=11 // pred_fallthru
          _
        // Predicated region
        $region181: #{lcgn_forward.1} parent=11 // pred_check
          %p1762 = pneg %p1333
        $region182: #{lcgn_forward.1} parent=11 // pred_check_branch
          %1764 = sbr.rel (%p1762) target = $region184
        $region183: #{lcgn_forward.1} parent=11 // pred_region
          %s1766 = ssub.s32 16, 16
          %1767 = vsyncadd [#allocation6], %s1766
          %1770 = dma.hbm_to_smem %s107, 16, [#allocation48], [#allocation6]
        $region184: #{lcgn_forward.1} parent=11 // pred_fallthru
          _
        // Predicated region
        $region185: #{lcgn_forward.1} parent=11 // pred_check
          %p1771 = pneg %p1354
        $region186: #{lcgn_forward.1} parent=11 // pred_check_branch
          %1773 = sbr.rel (%p1771) target = $region188
        $region187: #{lcgn_forward.1} parent=11 // pred_region
          %s1775 = ssub.s32 32, 32
          %1776 = vsyncadd [#allocation50], %s1775
          %1779 = dma.hbm_to_smem %s109, 32, [#allocation49], [#allocation50]
        $region188: #{lcgn_forward.1} parent=11 // pred_fallthru
          _
        // Predicated region
        $region189: #{lcgn_forward.1} parent=11 // pred_check
          %p1780 = pneg %p1375
        $region190: #{lcgn_forward.1} parent=11 // pred_check_branch
          %1782 = sbr.rel (%p1780) target = $region192
        $region191: #{lcgn_forward.1} parent=11 // pred_region
          %s1784 = ssub.s32 16, 16
          %1785 = vsyncadd [#allocation50], %s1784
          %1788 = dma.hbm_to_smem %s111, 16, [#allocation51], [#allocation50]
        $region192: #{lcgn_forward.1} parent=11 // pred_fallthru
          _
      $region12: #{lcgn_forward.1} parent=5 // pred_fallthru
        _
      %p1789 = scmp.lt.s32.totalorder %s144, 2
      // Predicated region
      $region193: #{lcgn_forward.1} parent=5 // pred_check
        %p1790 = pneg %p1789
      $region194: #{lcgn_forward.1} parent=5 // pred_check_branch
        %1792 = sbr.rel (%p1790) target = $region196
      $region195: #{lcgn_forward.1} parent=5 // pred_region
        // Predicated region
        $region197: #{lcgn_forward.1} parent=195 // pred_check
          %p1793 = pneg %p164
        $region198: #{lcgn_forward.1} parent=195 // pred_check_branch
          %1795 = sbr.rel (%p1793) target = $region200
        $region199: #{lcgn_forward.1} parent=195 // pred_region
          %p1796 = scmp.lt.s32.totalorder %s144, 1
          %s1797 = scalar_select %p1796, %s144, 1
          %s1798 = smul.addr %s1797, 2
          %s1799 = smul.addr %s1798, 8
          %s1800 = scalar_lea.vmem %s1, %s1799
        $region200: #{lcgn_forward.1} parent=195 // pred_fallthru
          _
        // Predicated region
        $region201: #{lcgn_forward.1} parent=195 // pred_check
          %p1801 = pneg %p190
        $region202: #{lcgn_forward.1} parent=195 // pred_check_branch
          %1803 = sbr.rel (%p1801) target = $region204
        $region203: #{lcgn_forward.1} parent=195 // pred_region
          %s1804 = sand.u32 %s180, 1
          %s1805 = scalar_lea.sflag [#allocation4], %s1804
          %s1806 = sand.u32 %s180, 1
          %s1807 = scalar_lea.vmem [#allocation3], %s1806
          %s1809 = ssub.s32 16, 16
          %1810 = vsyncadd %s1805, %s1809
          %s1811 = smul.addr %s144, 16
          %s1812 = scalar_lea.hbm %s3, %s1811
          %s1814 = sshll.u32 %s1807, 4
          %s1815 = int_to_ptr.vmem [resolvable:$true] %s1814
          %1817 = dma.hbm_to_vmem [thread:$0]  %s1812, 16, %s1815, %s1805
        $region204: #{lcgn_forward.1} parent=195 // pred_fallthru
          _
        // Predicated region
        $region205: #{lcgn_forward.1} parent=195 // pred_check
          %p1818 = pneg %p216
        $region206: #{lcgn_forward.1} parent=195 // pred_check_branch
          %1820 = sbr.rel (%p1818) target = $region208
        $region207: #{lcgn_forward.1} parent=195 // pred_region
          %p1821 = scmp.lt.s32.totalorder %s144, 1
          %s1822 = scalar_select %p1821, %s144, 1
          %s1823 = smul.addr %s1822, 8
          %s1824 = scalar_lea.vmem %s5, %s1823
        $region208: #{lcgn_forward.1} parent=195 // pred_fallthru
          _
        // Predicated region
        $region209: #{lcgn_forward.1} parent=195 // pred_check
          %p1825 = pneg %p242
        $region210: #{lcgn_forward.1} parent=195 // pred_check_branch
          %1827 = sbr.rel (%p1825) target = $region212
        $region211: #{lcgn_forward.1} parent=195 // pred_region
          %p1828 = scmp.lt.s32.totalorder %s144, 1
          %s1829 = scalar_select %p1828, %s144, 1
          %s1830 = scalar_lea.vmem %s7, %s1829
        $region212: #{lcgn_forward.1} parent=195 // pred_fallthru
          _
        // Predicated region
        $region213: #{lcgn_forward.1} parent=195 // pred_check
          %p1831 = pneg %p268
        $region214: #{lcgn_forward.1} parent=195 // pred_check_branch
          %1833 = sbr.rel (%p1831) target = $region216
        $region215: #{lcgn_forward.1} parent=195 // pred_region
          %p1834 = scmp.lt.s32.totalorder %s144, 1
          %s1835 = scalar_select %p1834, %s144, 1
          %s1836 = smul.addr %s1835, 8
          %s1837 = scalar_lea.vmem %s9, %s1836
        $region216: #{lcgn_forward.1} parent=195 // pred_fallthru
          _
        // Predicated region
        $region217: #{lcgn_forward.1} parent=195 // pred_check
          %p1838 = pneg %p294
        $region218: #{lcgn_forward.1} parent=195 // pred_check_branch
          %1840 = sbr.rel (%p1838) target = $region220
        $region219: #{lcgn_forward.1} parent=195 // pred_region
          %p1841 = scmp.lt.s32.totalorder %s144, 1
          %s1842 = scalar_select %p1841, %s144, 1
          %s1843 = smul.addr %s1842, 8
          %s1844 = scalar_lea.vmem %s11, %s1843
        $region220: #{lcgn_forward.1} parent=195 // pred_fallthru
          _
        // Predicated region
        $region221: #{lcgn_forward.1} parent=195 // pred_check
          %p1845 = pneg %p320
        $region222: #{lcgn_forward.1} parent=195 // pred_check_branch
          %1847 = sbr.rel (%p1845) target = $region224
        $region223: #{lcgn_forward.1} parent=195 // pred_region
          %p1848 = scmp.lt.s32.totalorder %s144, 1
          %s1849 = scalar_select %p1848, %s144, 1
          %s1850 = scalar_lea.vmem %s13, %s1849
        $region224: #{lcgn_forward.1} parent=195 // pred_fallthru
          _
        // Predicated region
        $region225: #{lcgn_forward.1} parent=195 // pred_check
          %p1851 = pneg %p346
        $region226: #{lcgn_forward.1} parent=195 // pred_check_branch
          %1853 = sbr.rel (%p1851) target = $region228
        $region227: #{lcgn_forward.1} parent=195 // pred_region
          %s1854 = sand.u32 %s144, 1
          %s1855 = scalar_lea.sflag [#allocation8], %s1854
          %s1856 = sand.u32 %s336, 1
          %s1857 = smul.addr %s1856, 8
          %s1858 = scalar_lea.vmem [#allocation7], %s1857
          %s1860 = ssub.s32 128, 128
          %1861 = vsyncadd %s1855, %s1860
          %s1862 = smul.addr %s144, 128
          %s1863 = scalar_lea.hbm %s15, %s1862
          %s1865 = sshll.u32 %s1858, 4
          %s1866 = int_to_ptr.vmem [resolvable:$true] %s1865
          %1868 = dma.hbm_to_vmem [thread:$0]  %s1863, 128, %s1866, %s1855
        $region228: #{lcgn_forward.1} parent=195 // pred_fallthru
          _
        // Predicated region
        $region229: #{lcgn_forward.1} parent=195 // pred_check
          %p1869 = pneg %p372
        $region230: #{lcgn_forward.1} parent=195 // pred_check_branch
          %1871 = sbr.rel (%p1869) target = $region232
        $region231: #{lcgn_forward.1} parent=195 // pred_region
          %p1872 = scmp.lt.s32.totalorder %s144, 1
          %s1873 = scalar_select %p1872, %s144, 1
          %s1874 = smul.addr %s1873, 2
          %s1875 = smul.addr %s1874, 8
          %s1876 = scalar_lea.vmem %s17, %s1875
        $region232: #{lcgn_forward.1} parent=195 // pred_fallthru
          _
        // Predicated region
        $region233: #{lcgn_forward.1} parent=195 // pred_check
          %p1877 = pneg %p398
        $region234: #{lcgn_forward.1} parent=195 // pred_check_branch
          %1879 = sbr.rel (%p1877) target = $region236
        $region235: #{lcgn_forward.1} parent=195 // pred_region
          %p1880 = scmp.lt.s32.totalorder %s144, 1
          %s1881 = scalar_select %p1880, %s144, 1
          %s1882 = smul.addr %s1881, 2
          %s1883 = smul.addr %s1882, 8
          %s1884 = scalar_lea.vmem %s19, %s1883
        $region236: #{lcgn_forward.1} parent=195 // pred_fallthru
          _
        // Predicated region
        $region237: #{lcgn_forward.1} parent=195 // pred_check
          %p1885 = pneg %p424
        $region238: #{lcgn_forward.1} parent=195 // pred_check_branch
          %1887 = sbr.rel (%p1885) target = $region240
        $region239: #{lcgn_forward.1} parent=195 // pred_region
          %p1888 = scmp.lt.s32.totalorder %s144, 1
          %s1889 = scalar_select %p1888, %s144, 1
          %s1890 = scalar_lea.vmem %s21, %s1889
        $region240: #{lcgn_forward.1} parent=195 // pred_fallthru
          _
      $region196: #{lcgn_forward.1} parent=5 // pred_fallthru
        _
      %p1891 = scmp.le.s32.totalorder 1, %s144
      %p1892 = scmp.lt.s32.totalorder %s144, 3
      %p1893 = pnand %p1891, %p1892
      %p1894 = pneg %p1893
      // Predicated region
      $region241: #{lcgn_forward.1} parent=5 // pred_check
        _
      $region242: #{lcgn_forward.1} parent=5 // pred_check_branch
        %1896 = sbr.rel (%p1893) target = $region244
      $region243: #{lcgn_forward.1} parent=5 // pred_region
        %s1897 = ssub.s32 %s144, 1
        %s1898 = sand.u32 %s183, 1
        %s1899 = scalar_lea.sflag [#allocation4], %s1898
        %s1900 = sand.u32 %s183, 1
        %s1901 = scalar_lea.vmem [#allocation3], %s1900
        // Predicated region
        $region245: #{lcgn_forward.1} parent=243 // pred_check
          %p1902 = pneg %p196
        $region246: #{lcgn_forward.1} parent=243 // pred_check_branch
          %1904 = sbr.rel (%p1902) target = $region248
        $region247: #{lcgn_forward.1} parent=243 // pred_region
          %1905 = dma.done %s1899, 16
        $region248: #{lcgn_forward.1} parent=243 // pred_fallthru
          _
        %s1906 = sand.u32 %s149, 1
        %s1907 = scalar_lea.sflag [#allocation8], %s1906
        %s1908 = sand.u32 %s339, 1
        %s1909 = smul.addr %s1908, 8
        %s1910 = scalar_lea.vmem [#allocation7], %s1909
        // Predicated region
        $region249: #{lcgn_forward.1} parent=243 // pred_check
          %p1911 = pneg %p352
        $region250: #{lcgn_forward.1} parent=243 // pred_check_branch
          %1913 = sbr.rel (%p1911) target = $region252
        $region251: #{lcgn_forward.1} parent=243 // pred_region
          %1914 = dma.done %s1907, 128
        $region252: #{lcgn_forward.1} parent=243 // pred_fallthru
          _
        // Predicated region
        $region253: #{lcgn_forward.1} parent=243 // pred_check
          %p1915 = pneg %p472
        $region254: #{lcgn_forward.1} parent=243 // pred_check_branch
          %1917 = sbr.rel (%p1915) target = $region256
        $region255: #{lcgn_forward.1} parent=243 // pred_region
          %1918 = dma.done [#allocation8], 16
        $region256: #{lcgn_forward.1} parent=243 // pred_fallthru
          _
        // Predicated region
        $region257: #{lcgn_forward.1} parent=243 // pred_check
          %p1919 = pneg %p493
        $region258: #{lcgn_forward.1} parent=243 // pred_check_branch
          %1921 = sbr.rel (%p1919) target = $region260
        $region259: #{lcgn_forward.1} parent=243 // pred_region
          %1922 = dma.done [#allocation11], 16
        $region260: #{lcgn_forward.1} parent=243 // pred_fallthru
          _
        // Predicated region
        $region261: #{lcgn_forward.1} parent=243 // pred_check
          %p1923 = pneg %p535
        $region262: #{lcgn_forward.1} parent=243 // pred_check_branch
          %1925 = sbr.rel (%p1923) target = $region264
        $region263: #{lcgn_forward.1} parent=243 // pred_region
          %1926 = dma.done [#allocation11], 16
        $region264: #{lcgn_forward.1} parent=243 // pred_fallthru
          _
        // Predicated region
        $region265: #{lcgn_forward.1} parent=243 // pred_check
          %p1927 = pneg %p577
        $region266: #{lcgn_forward.1} parent=243 // pred_check_branch
          %1929 = sbr.rel (%p1927) target = $region268
        $region267: #{lcgn_forward.1} parent=243 // pred_region
          %1930 = dma.done [#allocation14], 32
        $region268: #{lcgn_forward.1} parent=243 // pred_fallthru
          _
        // Predicated region
        $region269: #{lcgn_forward.1} parent=243 // pred_check
          %p1931 = pneg %p598
        $region270: #{lcgn_forward.1} parent=243 // pred_check_branch
          %1933 = sbr.rel (%p1931) target = $region272
        $region271: #{lcgn_forward.1} parent=243 // pred_region
          %1934 = dma.done [#allocation14], 16
        $region272: #{lcgn_forward.1} parent=243 // pred_fallthru
          _
        // Predicated region
        $region273: #{lcgn_forward.1} parent=243 // pred_check
          %p1935 = pneg %p640
        $region274: #{lcgn_forward.1} parent=243 // pred_check_branch
          %1937 = sbr.rel (%p1935) target = $region276
        $region275: #{lcgn_forward.1} parent=243 // pred_region
          %1938 = dma.done [#allocation17], 32
        $region276: #{lcgn_forward.1} parent=243 // pred_fallthru
          _
        // Predicated region
        $region277: #{lcgn_forward.1} parent=243 // pred_check
          %p1939 = pneg %p661
        $region278: #{lcgn_forward.1} parent=243 // pred_check_branch
          %1941 = sbr.rel (%p1939) target = $region280
        $region279: #{lcgn_forward.1} parent=243 // pred_region
          %1942 = dma.done [#allocation17], 32
        $region280: #{lcgn_forward.1} parent=243 // pred_fallthru
          _
        // Predicated region
        $region281: #{lcgn_forward.1} parent=243 // pred_check
          %p1943 = pneg %p703
        $region282: #{lcgn_forward.1} parent=243 // pred_check_branch
          %1945 = sbr.rel (%p1943) target = $region284
        $region283: #{lcgn_forward.1} parent=243 // pred_region
          %1946 = dma.done [#allocation20], 32
        $region284: #{lcgn_forward.1} parent=243 // pred_fallthru
          _
        // Predicated region
        $region285: #{lcgn_forward.1} parent=243 // pred_check
          %p1947 = pneg %p745
        $region286: #{lcgn_forward.1} parent=243 // pred_check_branch
          %1949 = sbr.rel (%p1947) target = $region288
        $region287: #{lcgn_forward.1} parent=243 // pred_region
          %1950 = dma.done [#allocation20], 16
        $region288: #{lcgn_forward.1} parent=243 // pred_fallthru
          _
        // Predicated region
        $region289: #{lcgn_forward.1} parent=243 // pred_check
          %p1951 = pneg %p787
        $region290: #{lcgn_forward.1} parent=243 // pred_check_branch
          %1953 = sbr.rel (%p1951) target = $region292
        $region291: #{lcgn_forward.1} parent=243 // pred_region
          %1954 = dma.done [#allocation23], 16
        $region292: #{lcgn_forward.1} parent=243 // pred_fallthru
          _
        // Predicated region
        $region293: #{lcgn_forward.1} parent=243 // pred_check
          %p1955 = pneg %p829
        $region294: #{lcgn_forward.1} parent=243 // pred_check_branch
          %1957 = sbr.rel (%p1955) target = $region296
        $region295: #{lcgn_forward.1} parent=243 // pred_region
          %1958 = dma.done [#allocation23], 16
        $region296: #{lcgn_forward.1} parent=243 // pred_fallthru
          _
        // Predicated region
        $region297: #{lcgn_forward.1} parent=243 // pred_check
          %p1959 = pneg %p871
        $region298: #{lcgn_forward.1} parent=243 // pred_check_branch
          %1961 = sbr.rel (%p1959) target = $region300
        $region299: #{lcgn_forward.1} parent=243 // pred_region
          %1962 = dma.done [#allocation26], 16
        $region300: #{lcgn_forward.1} parent=243 // pred_fallthru
          _
        // Predicated region
        $region301: #{lcgn_forward.1} parent=243 // pred_check
          %p1963 = pneg %p913
        $region302: #{lcgn_forward.1} parent=243 // pred_check_branch
          %1965 = sbr.rel (%p1963) target = $region304
        $region303: #{lcgn_forward.1} parent=243 // pred_region
          %1966 = dma.done [#allocation26], 16
        $region304: #{lcgn_forward.1} parent=243 // pred_fallthru
          _
        // Predicated region
        $region305: #{lcgn_forward.1} parent=243 // pred_check
          %p1967 = pneg %p955
        $region306: #{lcgn_forward.1} parent=243 // pred_check_branch
          %1969 = sbr.rel (%p1967) target = $region308
        $region307: #{lcgn_forward.1} parent=243 // pred_region
          %1970 = dma.done [#allocation29], 16
        $region308: #{lcgn_forward.1} parent=243 // pred_fallthru
          _
        // Predicated region
        $region309: #{lcgn_forward.1} parent=243 // pred_check
          %p1971 = pneg %p997
        $region310: #{lcgn_forward.1} parent=243 // pred_check_branch
          %1973 = sbr.rel (%p1971) target = $region312
        $region311: #{lcgn_forward.1} parent=243 // pred_region
          %1974 = dma.done [#allocation29], 16
        $region312: #{lcgn_forward.1} parent=243 // pred_fallthru
          _
        // Predicated region
        $region313: #{lcgn_forward.1} parent=243 // pred_check
          %p1975 = pneg %p1039
        $region314: #{lcgn_forward.1} parent=243 // pred_check_branch
          %1977 = sbr.rel (%p1975) target = $region316
        $region315: #{lcgn_forward.1} parent=243 // pred_region
          %1978 = dma.done [#allocation32], 16
        $region316: #{lcgn_forward.1} parent=243 // pred_fallthru
          _
        // Predicated region
        $region317: #{lcgn_forward.1} parent=243 // pred_check
          %p1979 = pneg %p1060
        $region318: #{lcgn_forward.1} parent=243 // pred_check_branch
          %1981 = sbr.rel (%p1979) target = $region320
        $region319: #{lcgn_forward.1} parent=243 // pred_region
          %1982 = dma.done [#allocation32], 512
        $region320: #{lcgn_forward.1} parent=243 // pred_fallthru
          _
        // Predicated region
        $region321: #{lcgn_forward.1} parent=243 // pred_check
          %p1983 = pneg %p1081
        $region322: #{lcgn_forward.1} parent=243 // pred_check_branch
          %1985 = sbr.rel (%p1983) target = $region324
        $region323: #{lcgn_forward.1} parent=243 // pred_region
          %1986 = dma.done [#allocation35], 16
        $region324: #{lcgn_forward.1} parent=243 // pred_fallthru
          _
        // Predicated region
        $region325: #{lcgn_forward.1} parent=243 // pred_check
          %p1987 = pneg %p1102
        $region326: #{lcgn_forward.1} parent=243 // pred_check_branch
          %1989 = sbr.rel (%p1987) target = $region328
        $region327: #{lcgn_forward.1} parent=243 // pred_region
          %1990 = dma.done [#allocation35], 512
        $region328: #{lcgn_forward.1} parent=243 // pred_fallthru
          _
        // Predicated region
        $region329: #{lcgn_forward.1} parent=243 // pred_check
          %p1991 = pneg %p1123
        $region330: #{lcgn_forward.1} parent=243 // pred_check_branch
          %1993 = sbr.rel (%p1991) target = $region332
        $region331: #{lcgn_forward.1} parent=243 // pred_region
          %1994 = dma.done [#allocation38], 16
        $region332: #{lcgn_forward.1} parent=243 // pred_fallthru
          _
        // Predicated region
        $region333: #{lcgn_forward.1} parent=243 // pred_check
          %p1995 = pneg %p1165
        $region334: #{lcgn_forward.1} parent=243 // pred_check_branch
          %1997 = sbr.rel (%p1995) target = $region336
        $region335: #{lcgn_forward.1} parent=243 // pred_region
          %1998 = dma.done [#allocation38], 16
        $region336: #{lcgn_forward.1} parent=243 // pred_fallthru
          _
        // Predicated region
        $region337: #{lcgn_forward.1} parent=243 // pred_check
          %p1999 = pneg %p1186
        $region338: #{lcgn_forward.1} parent=243 // pred_check_branch
          %2001 = sbr.rel (%p1999) target = $region340
        $region339: #{lcgn_forward.1} parent=243 // pred_region
          %2002 = dma.done [#allocation41], 16
        $region340: #{lcgn_forward.1} parent=243 // pred_fallthru
          _
        // Predicated region
        $region341: #{lcgn_forward.1} parent=243 // pred_check
          %p2003 = pneg %p1207
        $region342: #{lcgn_forward.1} parent=243 // pred_check_branch
          %2005 = sbr.rel (%p2003) target = $region344
        $region343: #{lcgn_forward.1} parent=243 // pred_region
          %2006 = dma.done [#allocation41], 16
        $region344: #{lcgn_forward.1} parent=243 // pred_fallthru
          _
        // Predicated region
        $region345: #{lcgn_forward.1} parent=243 // pred_check
          %p2007 = pneg %p1228
        $region346: #{lcgn_forward.1} parent=243 // pred_check_branch
          %2009 = sbr.rel (%p2007) target = $region348
        $region347: #{lcgn_forward.1} parent=243 // pred_region
          %2010 = dma.done [#allocation44], 16
        $region348: #{lcgn_forward.1} parent=243 // pred_fallthru
          _
        // Predicated region
        $region349: #{lcgn_forward.1} parent=243 // pred_check
          %p2011 = pneg %p1249
        $region350: #{lcgn_forward.1} parent=243 // pred_check_branch
          %2013 = sbr.rel (%p2011) target = $region352
        $region351: #{lcgn_forward.1} parent=243 // pred_region
          %2014 = dma.done [#allocation44], 16
        $region352: #{lcgn_forward.1} parent=243 // pred_fallthru
          _
        // Predicated region
        $region353: #{lcgn_forward.1} parent=243 // pred_check
          %p2015 = pneg %p1291
        $region354: #{lcgn_forward.1} parent=243 // pred_check_branch
          %2017 = sbr.rel (%p2015) target = $region356
        $region355: #{lcgn_forward.1} parent=243 // pred_region
          %2018 = dma.done [#allocation47], 16
        $region356: #{lcgn_forward.1} parent=243 // pred_fallthru
          _
        // Predicated region
        $region357: #{lcgn_forward.1} parent=243 // pred_check
          %p2019 = pneg %p1333
        $region358: #{lcgn_forward.1} parent=243 // pred_check_branch
          %2021 = sbr.rel (%p2019) target = $region360
        $region359: #{lcgn_forward.1} parent=243 // pred_region
          %2022 = dma.done [#allocation6], 16
        $region360: #{lcgn_forward.1} parent=243 // pred_fallthru
          _
        // Predicated region
        $region361: #{lcgn_forward.1} parent=243 // pred_check
          %p2023 = pneg %p1354
        $region362: #{lcgn_forward.1} parent=243 // pred_check_branch
          %2025 = sbr.rel (%p2023) target = $region364
        $region363: #{lcgn_forward.1} parent=243 // pred_region
          %2026 = dma.done [#allocation50], 32
        $region364: #{lcgn_forward.1} parent=243 // pred_fallthru
          _
        // Predicated region
        $region365: #{lcgn_forward.1} parent=243 // pred_check
          %p2027 = pneg %p1375
        $region366: #{lcgn_forward.1} parent=243 // pred_check_branch
          %2029 = sbr.rel (%p2027) target = $region368
        $region367: #{lcgn_forward.1} parent=243 // pred_region
          %2030 = dma.done [#allocation50], 16
        $region368: #{lcgn_forward.1} parent=243 // pred_fallthru
          _
        %2031 = sfence
        %p2032 = scmp.lt.s32.totalorder %s149, 1
        %s2033 = scalar_select %p2032, %s149, 1
        %s2034 = smul.addr %s2033, 2
        %s2035 = smul.addr %s2034, 8
        %s2036 = scalar_lea.vmem %s1, %s2035
        %p2037 = pneg %p170
        %p2038 = pneg %p167
        %s2039 = sand.u32 %s183, 1
        %s2040 = scalar_lea.sflag [#allocation4], %s2039
        %s2041 = sand.u32 %s183, 1
        %s2042 = scalar_lea.vmem [#allocation3], %s2041
        %p2043 = pneg %p196
        %p2044 = pneg %p193
        %p2045 = scmp.lt.s32.totalorder %s149, 1
        %s2046 = scalar_select %p2045, %s149, 1
        %s2047 = smul.addr %s2046, 8
        %s2048 = scalar_lea.vmem %s5, %s2047
        %p2049 = pneg %p222
        %p2050 = pneg %p219
        %p2051 = scmp.lt.s32.totalorder %s149, 1
        %s2052 = scalar_select %p2051, %s149, 1
        %s2053 = scalar_lea.vmem %s7, %s2052
        %p2054 = pneg %p248
        %p2055 = pneg %p245
        %p2056 = scmp.lt.s32.totalorder %s149, 1
        %s2057 = scalar_select %p2056, %s149, 1
        %s2058 = smul.addr %s2057, 8
        %s2059 = scalar_lea.vmem %s9, %s2058
        %p2060 = pneg %p274
        %p2061 = pneg %p271
        %p2062 = scmp.lt.s32.totalorder %s149, 1
        %s2063 = scalar_select %p2062, %s149, 1
        %s2064 = smul.addr %s2063, 8
        %s2065 = scalar_lea.vmem %s11, %s2064
        %p2066 = pneg %p300
        %p2067 = pneg %p297
        %p2068 = scmp.lt.s32.totalorder %s149, 1
        %s2069 = scalar_select %p2068, %s149, 1
        %s2070 = scalar_lea.vmem %s13, %s2069
        %p2071 = pneg %p326
        %p2072 = pneg %p323
        %s2073 = sand.u32 %s149, 1
        %s2074 = scalar_lea.sflag [#allocation8], %s2073
        %s2075 = sand.u32 %s339, 1
        %s2076 = smul.addr %s2075, 8
        %s2077 = scalar_lea.vmem [#allocation7], %s2076
        %p2078 = pneg %p352
        %p2079 = pneg %p349
        %p2080 = scmp.lt.s32.totalorder %s149, 1
        %s2081 = scalar_select %p2080, %s149, 1
        %s2082 = smul.addr %s2081, 2
        %s2083 = smul.addr %s2082, 8
        %s2084 = scalar_lea.vmem %s17, %s2083
        %p2085 = pneg %p378
        %p2086 = pneg %p375
        %p2087 = scmp.lt.s32.totalorder %s149, 1
        %s2088 = scalar_select %p2087, %s149, 1
        %s2089 = smul.addr %s2088, 2
        %s2090 = smul.addr %s2089, 8
        %s2091 = scalar_lea.vmem %s19, %s2090
        %p2092 = pneg %p404
        %p2093 = pneg %p401
        %p2094 = scmp.lt.s32.totalorder %s149, 1
        %s2095 = scalar_select %p2094, %s149, 1
        %s2096 = scalar_lea.vmem %s21, %s2095
        %p2097 = pneg %p430
        %p2098 = pneg %p427
        %p2099 = pneg %p451
        %p2100 = pneg %p448
        %p2101 = pneg %p472
        %p2102 = pneg %p469
        %p2103 = pneg %p493
        %p2104 = pneg %p490
        %p2105 = pneg %p514
        %p2106 = pneg %p511
        %p2107 = pneg %p535
        %p2108 = pneg %p532
        %p2109 = pneg %p556
        %p2110 = pneg %p553
        %p2111 = pneg %p577
        %p2112 = pneg %p574
        %p2113 = pneg %p598
        %p2114 = pneg %p595
        %p2115 = pneg %p619
        %p2116 = pneg %p616
        %p2117 = pneg %p640
        %p2118 = pneg %p637
        %p2119 = pneg %p661
        %p2120 = pneg %p658
        %p2121 = pneg %p682
        %p2122 = pneg %p679
        %p2123 = pneg %p703
        %p2124 = pneg %p700
        %p2125 = pneg %p724
        %p2126 = pneg %p721
        %p2127 = pneg %p745
        %p2128 = pneg %p742
        %p2129 = pneg %p766
        %p2130 = pneg %p763
        %p2131 = pneg %p787
        %p2132 = pneg %p784
        %p2133 = pneg %p808
        %p2134 = pneg %p805
        %p2135 = pneg %p829
        %p2136 = pneg %p826
        %p2137 = pneg %p850
        %p2138 = pneg %p847
        %p2139 = pneg %p871
        %p2140 = pneg %p868
        %p2141 = pneg %p892
        %p2142 = pneg %p889
        %p2143 = pneg %p913
        %p2144 = pneg %p910
        %p2145 = pneg %p934
        %p2146 = pneg %p931
        %p2147 = pneg %p955
        %p2148 = pneg %p952
        %p2149 = pneg %p976
        %p2150 = pneg %p973
        %p2151 = pneg %p997
        %p2152 = pneg %p994
        %p2153 = pneg %p1018
        %p2154 = pneg %p1015
        %p2155 = pneg %p1039
        %p2156 = pneg %p1036
        %p2157 = pneg %p1060
        %p2158 = pneg %p1057
        %p2159 = pneg %p1081
        %p2160 = pneg %p1078
        %p2161 = pneg %p1102
        %p2162 = pneg %p1099
        %p2163 = pneg %p1123
        %p2164 = pneg %p1120
        %p2165 = pneg %p1144
        %p2166 = pneg %p1141
        %p2167 = pneg %p1165
        %p2168 = pneg %p1162
        %p2169 = pneg %p1186
        %p2170 = pneg %p1183
        %p2171 = pneg %p1207
        %p2172 = pneg %p1204
        %p2173 = pneg %p1228
        %p2174 = pneg %p1225
        %p2175 = pneg %p1249
        %p2176 = pneg %p1246
        %p2177 = pneg %p1270
        %p2178 = pneg %p1267
        %p2179 = pneg %p1291
        %p2180 = pneg %p1288
        %p2181 = pneg %p1312
        %p2182 = pneg %p1309
        %p2183 = pneg %p1333
        %p2184 = pneg %p1330
        %p2185 = pneg %p1354
        %p2186 = pneg %p1351
        %p2187 = pneg %p1375
        %p2188 = pneg %p1372
        %p2189 = pneg %p1401
        %p2190 = pneg %p1398
        %s2191 = sand.u32 %s1388, 1
        %s2192 = scalar_lea.sflag [#allocation5], %s2191
        %s2193 = sand.u32 %s1388, 1
        %s2194 = smul.addr %s2193, 16
        %s2195 = scalar_lea.vmem [#allocation52], %s2194
        %p2196 = scmp.lt.s32.totalorder %s149, 1
        %s2197 = scalar_select %p2196, %s149, 1
        %s2198 = smul.addr %s2197, 2
        %s2199 = smul.addr %s2198, 8
        %s2200 = scalar_lea.vmem %s1, %s2199
        %p2201 = scmp.lt.s32.totalorder %s149, 1
        %s2202 = scalar_select %p2201, %s149, 1
        %s2203 = smul.addr %s2202, 8
        %s2204 = scalar_lea.vmem %s5, %s2203
        %p2205 = scmp.lt.s32.totalorder %s149, 1
        %s2206 = scalar_select %p2205, %s149, 1
        %s2207 = scalar_lea.vmem %s7, %s2206
        %p2208 = scmp.lt.s32.totalorder %s149, 1
        %s2209 = scalar_select %p2208, %s149, 1
        %s2210 = smul.addr %s2209, 8
        %s2211 = scalar_lea.vmem %s9, %s2210
        %p2212 = scmp.lt.s32.totalorder %s149, 1
        %s2213 = scalar_select %p2212, %s149, 1
        %s2214 = smul.addr %s2213, 8
        %s2215 = scalar_lea.vmem %s11, %s2214
        %p2216 = scmp.lt.s32.totalorder %s149, 1
        %s2217 = scalar_select %p2216, %s149, 1
        %s2218 = scalar_lea.vmem %s13, %s2217
        %p2219 = scmp.lt.s32.totalorder %s149, 1
        %s2220 = scalar_select %p2219, %s149, 1
        %s2221 = smul.addr %s2220, 2
        %s2222 = smul.addr %s2221, 8
        %s2223 = scalar_lea.vmem %s17, %s2222
        %p2224 = scmp.lt.s32.totalorder %s149, 1
        %s2225 = scalar_select %p2224, %s149, 1
        %s2226 = smul.addr %s2225, 2
        %s2227 = smul.addr %s2226, 8
        %s2228 = scalar_lea.vmem %s19, %s2227
        %p2229 = scmp.lt.s32.totalorder %s149, 1
        %s2230 = scalar_select %p2229, %s149, 1
        %s2231 = scalar_lea.vmem %s21, %s2230
        %v2232 = vld [vmem:[%s2200] sm:$0xff]
        %v2233 = vld [vmem:[%s2200 + $0x8] sm:$0xff]
        %v2234 = vmul.f32 %v2232, %v2232
        %v2235 = vmul.f32 %v2233, %v2233
        %vm2236 = vcmask 523264
        %v2237 = vsel %vm2236, %v2234, 0.0
        %2238 = vadd.xlane.f32.xlu0 %v2237
        %v2239 = vpop.xlane.xlu0 %2238
        %v2240 = vsel %vm2236, %v2235, 0.0
        %2241 = vadd.xlane.f32.xlu0 %v2240
        %v2242 = vpop.xlane.xlu0 %2241
        %v2243 = vmax.f32 %v2239, 1e-24
        %v2244 = vmax.f32 %v2242, 1e-24
        %v2245 = vrsqrt.pop %v2243
        %v2246 = vrsqrt.pop %v2244
        %v2247 = vmul.f32 %v2232, %v2245
        %v2248 = vmul.f32 %v2233, %v2246
        %v2249 = vld [vmem:[%s23] sm:$0xff]
        %v2250 = vld [vmem:[%s23 + $0x8] sm:$0xff]
        %v2251 = vld [vmem:[%s23 + $0x10] sm:$0xff]
        %v2252 = vld [vmem:[%s23 + $0x18] sm:$0xff]
        %v2253 = vld [vmem:[%s23 + $0x20] sm:$0xff]
        %v2254 = vld [vmem:[%s23 + $0x28] sm:$0xff]
        %v2255 = vld [vmem:[%s23 + $0x30] sm:$0xff]
        %v2256 = vld [vmem:[%s23 + $0x38] sm:$0xff]
        %v2257 = vld [vmem:[#allocation9] sm:$0x1]
        %v2259 = vlaneseq
        %v2260 = vshrl.u32 %v2259, 7
        %v2261 = vsub.s32 0, %v2260
        %v2262 = vrot.slane %v2257, %v2261
        %v2265 = vsel %vm2236, %v2247, 0
        %v2268 = vsel %vm2236, %v2248, 0
        %2270 = vmatprep.subr.mxu0 0.0
        %2271 = vmatpush1.msra.mxu0 0.0
        %2272 = vmatprep.subr.mxu0 0.0
        %2273 = vmatpush1.msra.mxu0 0.0
        %2274 = vmatprep.subr.mxu0 0.0
        %2275 = vmatpush1.msra.mxu0 0.0
        %2276 = vmatprep.subr.mxu0 0.0
        %2277 = vmatpush1.msra.mxu0 0.0
        %2278 = vmatprep.subr.mxu0 0.0
        %2279 = vmatpush1.msra.mxu0 0.0
        %2280 = vmatprep.subr.mxu0 0.0
        %2281 = vmatpush1.msra.mxu0 0.0
        %2282 = vmatprep.subr.mxu0 0.0
        %2283 = vmatpush1.msra.mxu0 0.0
        %2284 = vmatprep.subr.mxu0 0.0
        %2285 = vmatpush1.msra.mxu0 0.0
        %2286 = vmatprep.subr.mxu0 0.0
        %2287 = vmatpush1.msra.mxu0 %v2256
        %2288 = vmatprep.subr.mxu0 0.0
        %2289 = vmatpush1.msra.mxu0 %v2255
        %2290 = vmatprep.subr.mxu0 0.0
        %2291 = vmatpush1.msra.mxu0 %v2254
        %2292 = vmatprep.subr.mxu0 0.0
        %2293 = vmatpush1.msra.mxu0 %v2253
        %2294 = vmatprep.subr.mxu0 0.0
        %2295 = vmatpush1.msra.mxu0 %v2252
        %2296 = vmatprep.subr.mxu0 0.0
        %2297 = vmatpush1.msra.mxu0 %v2251
        %2298 = vmatprep.subr.mxu0 0.0
        %2299 = vmatpush1.msra.mxu0 %v2250
        %2300 = vmatprep.subr.mxu0 0.0
        %2301 = vmatpush1.msra.mxu0 %v2249
        %2302 = vmatprep.subr.mxu0 0.0
        %2303 = vmatpush2.msra.mxu0 0.0
        %2304 = vmatprep.subr.mxu0 0.0
        %2305 = vmatpush2.msra.mxu0 0.0
        %2306 = vmatprep.subr.mxu0 0.0
        %2307 = vmatpush2.msra.mxu0 0.0
        %2308 = vmatprep.subr.mxu0 0.0
        %2309 = vmatpush2.msra.mxu0 0.0
        %2310 = vmatprep.subr.mxu0 0.0
        %2311 = vmatpush2.msra.mxu0 0.0
        %2312 = vmatprep.subr.mxu0 0.0
        %2313 = vmatpush2.msra.mxu0 0.0
        %2314 = vmatprep.subr.mxu0 0.0
        %2315 = vmatpush2.msra.mxu0 0.0
        %2316 = vmatprep.subr.mxu0 0.0
        %2317 = vmatpush2.msra.mxu0 0.0
        %2318 = vmatprep.subr.mxu0 0.0
        %2319 = vmatpush2.msra.mxu0 0.0
        %2320 = vmatprep.subr.mxu0 0.0
        %2321 = vmatpush2.msra.mxu0 0.0
        %2322 = vmatprep.subr.mxu0 0.0
        %2323 = vmatpush2.msra.mxu0 0.0
        %2324 = vmatprep.subr.mxu0 0.0
        %2325 = vmatpush2.msra.mxu0 0.0
        %2326 = vmatprep.subr.mxu0 0.0
        %2327 = vmatpush2.msra.mxu0 0.0
        %2328 = vmatprep.subr.mxu0 0.0
        %2329 = vmatpush2.msra.mxu0 0.0
        %2330 = vmatprep.subr.mxu0 0.0
        %2331 = vmatpush2.msra.mxu0 0.0
        %2332 = vmatprep.subr.mxu0 0.0
        %2333 = vmatpush2.msra.mxu0 0.0
        %2334 = vmatprep.mubr.f32.mxu0 0.0
        %2335 = vmatmul.mubr.f32.gmra.mxu0 %v2265
        %v2336 = vpop.f32.mrf.mxu0
        %v2337 = vadd.f32 %v2262, %v2336
        %v2338 = vpop.f32.mrf.mxu0
        %2339 = vmatprep.mubr.f32.mxu0 0.0
        %2340 = vmatmul.mubr.f32.gmra.mxu0 %v2268
        %v2341 = vpop.f32.mrf.mxu0
        %v2342 = vadd.f32 %v2262, %v2341
        %v2343 = vpop.f32.mrf.mxu0
        %2344 = vdwg.mxu0
        %v2345 = vld [vmem:[#allocation10] sm:$0x1]
        %v2347 = vlaneseq
        %v2348 = vshrl.u32 %v2347, 7
        %v2349 = vsub.s32 0, %v2348
        %v2350 = vrot.slane %v2345, %v2349
        %v2352 = vld [vmem:[%s2204] sm:$0xff]
        %v2353 = vld [vmem:[%s2207] sm:$0x1]
        %v2354 = vld [vmem:[%s2211] sm:$0xff]
        %v2355 = vld [vmem:[%s2215] sm:$0xff]
        %v2356 = vld [vmem:[%s2218] sm:$0x1]
        %v2357 = vld [vmem:[%s1910] sm:$0xff]
        %v2358 = vld [vmem:[%s2223] sm:$0xff]
        %v2359 = vld [vmem:[%s2223 + $0x8] sm:$0xff]
        %v2360 = vld [vmem:[%s2228] sm:$0xff]
        %v2361 = vld [vmem:[%s2228 + $0x8] sm:$0xff]
        %v2362 = vld [vmem:[%s2231] sm:$0x1]
        %v2363 = vld [vmem:[%s1901] sm:$0x1]
        %v2364 = vld [vmem:[%s29] sm:$0xff]
        %v2365 = vld [vmem:[%s29 + $0x8] sm:$0xff]
        %v2366 = vld [vmem:[%s29 + $0x10] sm:$0xff]
        %v2367 = vld [vmem:[%s29 + $0x18] sm:$0xff]
        %v2368 = vld [vmem:[#allocation12] sm:$0x1]
        %vm2369 = vcmask 261120
        %v2371 = vsel %vm2369, %v2363, 0
        %2373 = vmatprep.subr.mxu0 0.0
        %2374 = vmatpush1.msra.mxu0 0.0
        %2375 = vmatprep.subr.mxu0 0.0
        %2376 = vmatpush1.msra.mxu0 0.0
        %2377 = vmatprep.subr.mxu0 0.0
        %2378 = vmatpush1.msra.mxu0 0.0
        %2379 = vmatprep.subr.mxu0 0.0
        %2380 = vmatpush1.msra.mxu0 0.0
        %2381 = vmatprep.subr.mxu0 0.0
        %2382 = vmatpush1.msra.mxu0 0.0
        %2383 = vmatprep.subr.mxu0 0.0
        %2384 = vmatpush1.msra.mxu0 0.0
        %2385 = vmatprep.subr.mxu0 0.0
        %2386 = vmatpush1.msra.mxu0 0.0
        %2387 = vmatprep.subr.mxu0 0.0
        %2388 = vmatpush1.msra.mxu0 0.0
        %2389 = vmatprep.subr.mxu0 0.0
        %2390 = vmatpush1.msra.mxu0 0.0
        %2391 = vmatprep.subr.mxu0 0.0
        %2392 = vmatpush1.msra.mxu0 0.0
        %2393 = vmatprep.subr.mxu0 0.0
        %2394 = vmatpush1.msra.mxu0 0.0
        %2395 = vmatprep.subr.mxu0 0.0
        %2396 = vmatpush1.msra.mxu0 0.0
        %2397 = vmatprep.subr.mxu0 0.0
        %2398 = vmatpush1.msra.mxu0 %v2367
        %2399 = vmatprep.subr.mxu0 0.0
        %2400 = vmatpush1.msra.mxu0 %v2366
        %2401 = vmatprep.subr.mxu0 0.0
        %2402 = vmatpush1.msra.mxu0 %v2365
        %2403 = vmatprep.subr.mxu0 0.0
        %2404 = vmatpush1.msra.mxu0 %v2364
        %2405 = vmatprep.subr.mxu0 0.0
        %2406 = vmatpush2.msra.mxu0 0.0
        %2407 = vmatprep.subr.mxu0 0.0
        %2408 = vmatpush2.msra.mxu0 0.0
        %2409 = vmatprep.subr.mxu0 0.0
        %2410 = vmatpush2.msra.mxu0 0.0
        %2411 = vmatprep.subr.mxu0 0.0
        %2412 = vmatpush2.msra.mxu0 0.0
        %2413 = vmatprep.subr.mxu0 0.0
        %2414 = vmatpush2.msra.mxu0 0.0
        %2415 = vmatprep.subr.mxu0 0.0
        %2416 = vmatpush2.msra.mxu0 0.0
        %2417 = vmatprep.subr.mxu0 0.0
        %2418 = vmatpush2.msra.mxu0 0.0
        %2419 = vmatprep.subr.mxu0 0.0
        %2420 = vmatpush2.msra.mxu0 0.0
        %2421 = vmatprep.subr.mxu0 0.0
        %2422 = vmatpush2.msra.mxu0 0.0
        %2423 = vmatprep.subr.mxu0 0.0
        %2424 = vmatpush2.msra.mxu0 0.0
        %2425 = vmatprep.subr.mxu0 0.0
        %2426 = vmatpush2.msra.mxu0 0.0
        %2427 = vmatprep.subr.mxu0 0.0
        %2428 = vmatpush2.msra.mxu0 0.0
        %2429 = vmatprep.subr.mxu0 0.0
        %2430 = vmatpush2.msra.mxu0 0.0
        %2431 = vmatprep.subr.mxu0 0.0
        %2432 = vmatpush2.msra.mxu0 0.0
        %2433 = vmatprep.subr.mxu0 0.0
        %2434 = vmatpush2.msra.mxu0 0.0
        %2435 = vmatprep.subr.mxu0 0.0
        %2436 = vmatpush2.msra.mxu0 0.0
        %2437 = vmatprep.mubr.f32.mxu0 0.0
        %2438 = vmatmul.mubr.f32.gmra.mxu0 %v2371
        %v2439 = vpop.f32.mrf.mxu0
        %v2440 = vadd.f32 %v2368, %v2439
        %v2441 = vpop.f32.mrf.mxu0
        %2442 = vdwg.mxu0
        %vm2443 = vcmp.gt.f32.partialorder %v2440, 0.0
        %v2444 = vmin.f32 %v2440, 0.0
        %v2445 = vmul.f32 %v2444, 1.442695
        %v2446 = vpow.pop %v2445
        %v2447 = vsub.f32 %v2446, 1.0
        %v2448 = vsel %vm2443, %v2440, %v2447
        %v2449 = vld [vmem:[%s33] sm:$0xff]
        %v2450 = vld [vmem:[%s33 + $0x8] sm:$0xff]
        %v2451 = vld [vmem:[%s33 + $0x10] sm:$0xff]
        %v2452 = vld [vmem:[%s33 + $0x18] sm:$0xff]
        %v2453 = vld [vmem:[#allocation13] sm:$0x1]
        %v2455 = vsel %vm2369, %v2448, 0
        %2457 = vmatprep.subr.mxu0 0.0
        %2458 = vmatpush1.msra.mxu0 0.0
        %2459 = vmatprep.subr.mxu0 0.0
        %2460 = vmatpush1.msra.mxu0 0.0
        %2461 = vmatprep.subr.mxu0 0.0
        %2462 = vmatpush1.msra.mxu0 0.0
        %2463 = vmatprep.subr.mxu0 0.0
        %2464 = vmatpush1.msra.mxu0 0.0
        %2465 = vmatprep.subr.mxu0 0.0
        %2466 = vmatpush1.msra.mxu0 0.0
        %2467 = vmatprep.subr.mxu0 0.0
        %2468 = vmatpush1.msra.mxu0 0.0
        %2469 = vmatprep.subr.mxu0 0.0
        %2470 = vmatpush1.msra.mxu0 0.0
        %2471 = vmatprep.subr.mxu0 0.0
        %2472 = vmatpush1.msra.mxu0 0.0
        %2473 = vmatprep.subr.mxu0 0.0
        %2474 = vmatpush1.msra.mxu0 0.0
        %2475 = vmatprep.subr.mxu0 0.0
        %2476 = vmatpush1.msra.mxu0 0.0
        %2477 = vmatprep.subr.mxu0 0.0
        %2478 = vmatpush1.msra.mxu0 0.0
        %2479 = vmatprep.subr.mxu0 0.0
        %2480 = vmatpush1.msra.mxu0 0.0
        %2481 = vmatprep.subr.mxu0 0.0
        %2482 = vmatpush1.msra.mxu0 %v2452
        %2483 = vmatprep.subr.mxu0 0.0
        %2484 = vmatpush1.msra.mxu0 %v2451
        %2485 = vmatprep.subr.mxu0 0.0
        %2486 = vmatpush1.msra.mxu0 %v2450
        %2487 = vmatprep.subr.mxu0 0.0
        %2488 = vmatpush1.msra.mxu0 %v2449
        %2489 = vmatprep.subr.mxu0 0.0
        %2490 = vmatpush2.msra.mxu0 0.0
        %2491 = vmatprep.subr.mxu0 0.0
        %2492 = vmatpush2.msra.mxu0 0.0
        %2493 = vmatprep.subr.mxu0 0.0
        %2494 = vmatpush2.msra.mxu0 0.0
        %2495 = vmatprep.subr.mxu0 0.0
        %2496 = vmatpush2.msra.mxu0 0.0
        %2497 = vmatprep.subr.mxu0 0.0
        %2498 = vmatpush2.msra.mxu0 0.0
        %2499 = vmatprep.subr.mxu0 0.0
        %2500 = vmatpush2.msra.mxu0 0.0
        %2501 = vmatprep.subr.mxu0 0.0
        %2502 = vmatpush2.msra.mxu0 0.0
        %2503 = vmatprep.subr.mxu0 0.0
        %2504 = vmatpush2.msra.mxu0 0.0
        %2505 = vmatprep.subr.mxu0 0.0
        %2506 = vmatpush2.msra.mxu0 0.0
        %2507 = vmatprep.subr.mxu0 0.0
        %2508 = vmatpush2.msra.mxu0 0.0
        %2509 = vmatprep.subr.mxu0 0.0
        %2510 = vmatpush2.msra.mxu0 0.0
        %2511 = vmatprep.subr.mxu0 0.0
        %2512 = vmatpush2.msra.mxu0 0.0
        %2513 = vmatprep.subr.mxu0 0.0
        %2514 = vmatpush2.msra.mxu0 0.0
        %2515 = vmatprep.subr.mxu0 0.0
        %2516 = vmatpush2.msra.mxu0 0.0
        %2517 = vmatprep.subr.mxu0 0.0
        %2518 = vmatpush2.msra.mxu0 0.0
        %2519 = vmatprep.subr.mxu0 0.0
        %2520 = vmatpush2.msra.mxu0 0.0
        %2521 = vmatprep.mubr.f32.mxu0 0.0
        %2522 = vmatmul.mubr.f32.gmra.mxu0 %v2455
        %v2523 = vpop.f32.mrf.mxu0
        %v2524 = vadd.f32 %v2453, %v2523
        %v2525 = vpop.f32.mrf.mxu0
        %2526 = vdwg.mxu0
        %v2527 = vld [vmem:[#allocation15] sm:$0x1]
        %v2528 = vmul.f32 %v2524, %v2527
        %s2529 = sld [smem:[#allocation2]]
        %v2530 = vstv %s2529
        %v2532 = vsel %vm2369, %v2528, 0
        %v2535 = vsel %vm2369, %v2352, 0
        %2537 = vmatprep.subr.mxu0 0.0
        %2538 = vmatpush1.xpose.msra.mxu0 0.0
        %2539 = vmatprep.subr.mxu0 0.0
        %2540 = vmatpush1.xpose.msra.mxu0 0.0
        %2541 = vmatprep.subr.mxu0 0.0
        %2542 = vmatpush1.xpose.msra.mxu0 0.0
        %2543 = vmatprep.subr.mxu0 0.0
        %2544 = vmatpush1.xpose.msra.mxu0 0.0
        %2545 = vmatprep.subr.mxu0 0.0
        %2546 = vmatpush1.xpose.msra.mxu0 0.0
        %2547 = vmatprep.subr.mxu0 0.0
        %2548 = vmatpush1.xpose.msra.mxu0 0.0
        %2549 = vmatprep.subr.mxu0 0.0
        %2550 = vmatpush1.xpose.msra.mxu0 0.0
        %2551 = vmatprep.subr.mxu0 0.0
        %2552 = vmatpush1.xpose.msra.mxu0 0.0
        %2553 = vmatprep.subr.mxu0 0.0
        %2554 = vmatpush1.xpose.msra.mxu0 0.0
        %2555 = vmatprep.subr.mxu0 0.0
        %2556 = vmatpush1.xpose.msra.mxu0 0.0
        %2557 = vmatprep.subr.mxu0 0.0
        %2558 = vmatpush1.xpose.msra.mxu0 0.0
        %2559 = vmatprep.subr.mxu0 0.0
        %2560 = vmatpush1.xpose.msra.mxu0 0.0
        %2561 = vmatprep.subr.mxu0 0.0
        %2562 = vmatpush1.xpose.msra.mxu0 0.0
        %2563 = vmatprep.subr.mxu0 0.0
        %2564 = vmatpush1.xpose.msra.mxu0 0.0
        %2565 = vmatprep.subr.mxu0 0.0
        %2566 = vmatpush1.xpose.msra.mxu0 0.0
        %2567 = vmatprep.subr.mxu0 0.0
        %2568 = vmatpush1.xpose.msra.mxu0 %v2535
        %2569 = vmatprep.subr.mxu0 0.0
        %2570 = vmatpush2.xpose.msra.mxu0 0.0
        %2571 = vmatprep.subr.mxu0 0.0
        %2572 = vmatpush2.xpose.msra.mxu0 0.0
        %2573 = vmatprep.subr.mxu0 0.0
        %2574 = vmatpush2.xpose.msra.mxu0 0.0
        %2575 = vmatprep.subr.mxu0 0.0
        %2576 = vmatpush2.xpose.msra.mxu0 0.0
        %2577 = vmatprep.subr.mxu0 0.0
        %2578 = vmatpush2.xpose.msra.mxu0 0.0
        %2579 = vmatprep.subr.mxu0 0.0
        %2580 = vmatpush2.xpose.msra.mxu0 0.0
        %2581 = vmatprep.subr.mxu0 0.0
        %2582 = vmatpush2.xpose.msra.mxu0 0.0
        %2583 = vmatprep.subr.mxu0 0.0
        %2584 = vmatpush2.xpose.msra.mxu0 0.0
        %2585 = vmatprep.subr.mxu0 0.0
        %2586 = vmatpush2.xpose.msra.mxu0 0.0
        %2587 = vmatprep.subr.mxu0 0.0
        %2588 = vmatpush2.xpose.msra.mxu0 0.0
        %2589 = vmatprep.subr.mxu0 0.0
        %2590 = vmatpush2.xpose.msra.mxu0 0.0
        %2591 = vmatprep.subr.mxu0 0.0
        %2592 = vmatpush2.xpose.msra.mxu0 0.0
        %2593 = vmatprep.subr.mxu0 0.0
        %2594 = vmatpush2.xpose.msra.mxu0 0.0
        %2595 = vmatprep.subr.mxu0 0.0
        %2596 = vmatpush2.xpose.msra.mxu0 0.0
        %2597 = vmatprep.subr.mxu0 0.0
        %2598 = vmatpush2.xpose.msra.mxu0 0.0
        %2599 = vmatprep.subr.mxu0 0.0
        %2600 = vmatpush2.xpose.msra.mxu0 0.0
        %2601 = vmatprep.mubr.f32.mxu0 0.0
        %2602 = vmatmul.mubr.f32.gmra.mxu0 %v2532
        %v2603 = vpop.f32.mrf.mxu0
        %v2604 = vadd.f32 %v2530, %v2603
        %v2605 = vpop.f32.mrf.mxu0
        %2606 = vdwg.mxu0
        %vm2607 = vcmp.gt.f32.partialorder %v2353, 0.5
        %v2608 = vsel %vm2607, -1e+30, %v2604
        %vm2609 = vcmask 57344
        %v2610 = vsel %vm2609, %v2608, -inf
        %2611 = vmax.xlane.f32.xlu0 %v2610
        %v2612 = vpop.xlane.xlu0 %2611
        %v2613 = vsub.f32 %v2608, %v2612
        %v2614 = vmul.f32 %v2613, 1.442695
        %v2615 = vpow.pop %v2614
        %v2616 = vsel %vm2609, %v2615, 0.0
        %2617 = vadd.xlane.f32.xlu0 %v2616
        %v2618 = vpop.xlane.xlu0 %2617
        %v2619 = vrcp.pop %v2618
        %v2620 = vmul.f32 %v2615, %v2619
        %vm2621 = vcmask 64512
        %v2623 = vsel %vm2621, %v2620, 0
        %2625 = vmatprep.subr.mxu0 0.0
        %2626 = vmatpush1.msra.mxu0 0.0
        %2627 = vmatprep.subr.mxu0 0.0
        %2628 = vmatpush1.msra.mxu0 0.0
        %2629 = vmatprep.subr.mxu0 0.0
        %2630 = vmatpush1.msra.mxu0 0.0
        %2631 = vmatprep.subr.mxu0 0.0
        %2632 = vmatpush1.msra.mxu0 0.0
        %2633 = vmatprep.subr.mxu0 0.0
        %2634 = vmatpush1.msra.mxu0 0.0
        %2635 = vmatprep.subr.mxu0 0.0
        %2636 = vmatpush1.msra.mxu0 0.0
        %2637 = vmatprep.subr.mxu0 0.0
        %2638 = vmatpush1.msra.mxu0 0.0
        %2639 = vmatprep.subr.mxu0 0.0
        %2640 = vmatpush1.msra.mxu0 0.0
        %2641 = vmatprep.subr.mxu0 0.0
        %2642 = vmatpush1.msra.mxu0 0.0
        %2643 = vmatprep.subr.mxu0 0.0
        %2644 = vmatpush1.msra.mxu0 0.0
        %2645 = vmatprep.subr.mxu0 0.0
        %2646 = vmatpush1.msra.mxu0 0.0
        %2647 = vmatprep.subr.mxu0 0.0
        %2648 = vmatpush1.msra.mxu0 0.0
        %2649 = vmatprep.subr.mxu0 0.0
        %2650 = vmatpush1.msra.mxu0 0.0
        %2651 = vmatprep.subr.mxu0 0.0
        %2652 = vmatpush1.msra.mxu0 0.0
        %2653 = vmatprep.subr.mxu0 0.0
        %2654 = vmatpush1.msra.mxu0 0.0
        %2655 = vmatprep.subr.mxu0 0.0
        %2656 = vmatpush1.msra.mxu0 %v2352
        %2657 = vmatprep.subr.mxu0 0.0
        %2658 = vmatpush2.msra.mxu0 0.0
        %2659 = vmatprep.subr.mxu0 0.0
        %2660 = vmatpush2.msra.mxu0 0.0
        %2661 = vmatprep.subr.mxu0 0.0
        %2662 = vmatpush2.msra.mxu0 0.0
        %2663 = vmatprep.subr.mxu0 0.0
        %2664 = vmatpush2.msra.mxu0 0.0
        %2665 = vmatprep.subr.mxu0 0.0
        %2666 = vmatpush2.msra.mxu0 0.0
        %2667 = vmatprep.subr.mxu0 0.0
        %2668 = vmatpush2.msra.mxu0 0.0
        %2669 = vmatprep.subr.mxu0 0.0
        %2670 = vmatpush2.msra.mxu0 0.0
        %2671 = vmatprep.subr.mxu0 0.0
        %2672 = vmatpush2.msra.mxu0 0.0
        %2673 = vmatprep.subr.mxu0 0.0
        %2674 = vmatpush2.msra.mxu0 0.0
        %2675 = vmatprep.subr.mxu0 0.0
        %2676 = vmatpush2.msra.mxu0 0.0
        %2677 = vmatprep.subr.mxu0 0.0
        %2678 = vmatpush2.msra.mxu0 0.0
        %2679 = vmatprep.subr.mxu0 0.0
        %2680 = vmatpush2.msra.mxu0 0.0
        %2681 = vmatprep.subr.mxu0 0.0
        %2682 = vmatpush2.msra.mxu0 0.0
        %2683 = vmatprep.subr.mxu0 0.0
        %2684 = vmatpush2.msra.mxu0 0.0
        %2685 = vmatprep.subr.mxu0 0.0
        %2686 = vmatpush2.msra.mxu0 0.0
        %2687 = vmatprep.subr.mxu0 0.0
        %2688 = vmatpush2.msra.mxu0 0.0
        %2689 = vmatprep.mubr.f32.mxu0 0.0
        %2690 = vmatmul.mubr.f32.gmra.mxu0 %v2623
        %v2691 = vpop.f32.mrf.mxu0
        %v2692 = vadd.f32 0.0, %v2691
        %v2693 = vpop.f32.mrf.mxu0
        %2694 = vdwg.mxu0
        %v2695 = vld [vmem:[%s49] sm:$0xff]
        %v2696 = vld [vmem:[%s49 + $0x8] sm:$0xff]
        %v2697 = vld [vmem:[%s49 + $0x10] sm:$0xff]
        %v2698 = vld [vmem:[%s49 + $0x18] sm:$0xff]
        %v2699 = vld [vmem:[#allocation21] sm:$0x1]
        %v2701 = vlaneseq
        %v2702 = vshrl.u32 %v2701, 7
        %v2703 = vsub.s32 0, %v2702
        %v2704 = vrot.slane %v2699, %v2703
        %v2707 = vsel %vm2369, %v2337, 0
        %v2710 = vsel %vm2369, %v2342, 0
        %2712 = vmatprep.subr.mxu0 0.0
        %2713 = vmatpush1.msra.mxu0 0.0
        %2714 = vmatprep.subr.mxu0 0.0
        %2715 = vmatpush1.msra.mxu0 0.0
        %2716 = vmatprep.subr.mxu0 0.0
        %2717 = vmatpush1.msra.mxu0 0.0
        %2718 = vmatprep.subr.mxu0 0.0
        %2719 = vmatpush1.msra.mxu0 0.0
        %2720 = vmatprep.subr.mxu0 0.0
        %2721 = vmatpush1.msra.mxu0 0.0
        %2722 = vmatprep.subr.mxu0 0.0
        %2723 = vmatpush1.msra.mxu0 0.0
        %2724 = vmatprep.subr.mxu0 0.0
        %2725 = vmatpush1.msra.mxu0 0.0
        %2726 = vmatprep.subr.mxu0 0.0
        %2727 = vmatpush1.msra.mxu0 0.0
        %2728 = vmatprep.subr.mxu0 0.0
        %2729 = vmatpush1.msra.mxu0 0.0
        %2730 = vmatprep.subr.mxu0 0.0
        %2731 = vmatpush1.msra.mxu0 0.0
        %2732 = vmatprep.subr.mxu0 0.0
        %2733 = vmatpush1.msra.mxu0 0.0
        %2734 = vmatprep.subr.mxu0 0.0
        %2735 = vmatpush1.msra.mxu0 0.0
        %2736 = vmatprep.subr.mxu0 0.0
        %2737 = vmatpush1.msra.mxu0 %v2698
        %2738 = vmatprep.subr.mxu0 0.0
        %2739 = vmatpush1.msra.mxu0 %v2697
        %2740 = vmatprep.subr.mxu0 0.0
        %2741 = vmatpush1.msra.mxu0 %v2696
        %2742 = vmatprep.subr.mxu0 0.0
        %2743 = vmatpush1.msra.mxu0 %v2695
        %2744 = vmatprep.subr.mxu0 0.0
        %2745 = vmatpush2.msra.mxu0 0.0
        %2746 = vmatprep.subr.mxu0 0.0
        %2747 = vmatpush2.msra.mxu0 0.0
        %2748 = vmatprep.subr.mxu0 0.0
        %2749 = vmatpush2.msra.mxu0 0.0
        %2750 = vmatprep.subr.mxu0 0.0
        %2751 = vmatpush2.msra.mxu0 0.0
        %2752 = vmatprep.subr.mxu0 0.0
        %2753 = vmatpush2.msra.mxu0 0.0
        %2754 = vmatprep.subr.mxu0 0.0
        %2755 = vmatpush2.msra.mxu0 0.0
        %2756 = vmatprep.subr.mxu0 0.0
        %2757 = vmatpush2.msra.mxu0 0.0
        %2758 = vmatprep.subr.mxu0 0.0
        %2759 = vmatpush2.msra.mxu0 0.0
        %2760 = vmatprep.subr.mxu0 0.0
        %2761 = vmatpush2.msra.mxu0 0.0
        %2762 = vmatprep.subr.mxu0 0.0
        %2763 = vmatpush2.msra.mxu0 0.0
        %2764 = vmatprep.subr.mxu0 0.0
        %2765 = vmatpush2.msra.mxu0 0.0
        %2766 = vmatprep.subr.mxu0 0.0
        %2767 = vmatpush2.msra.mxu0 0.0
        %2768 = vmatprep.subr.mxu0 0.0
        %2769 = vmatpush2.msra.mxu0 0.0
        %2770 = vmatprep.subr.mxu0 0.0
        %2771 = vmatpush2.msra.mxu0 0.0
        %2772 = vmatprep.subr.mxu0 0.0
        %2773 = vmatpush2.msra.mxu0 0.0
        %2774 = vmatprep.subr.mxu0 0.0
        %2775 = vmatpush2.msra.mxu0 0.0
        %2776 = vmatprep.mubr.f32.mxu0 0.0
        %2777 = vmatmul.mubr.f32.gmra.mxu0 %v2707
        %v2778 = vpop.f32.mrf.mxu0
        %v2779 = vadd.f32 %v2704, %v2778
        %v2780 = vpop.f32.mrf.mxu0
        %2781 = vmatprep.mubr.f32.mxu0 0.0
        %2782 = vmatmul.mubr.f32.gmra.mxu0 %v2710
        %v2783 = vpop.f32.mrf.mxu0
        %v2784 = vadd.f32 %v2704, %v2783
        %v2785 = vpop.f32.mrf.mxu0
        %2786 = vdwg.mxu0
        %v2787 = vld [vmem:[%s53] sm:$0xff]
        %v2788 = vld [vmem:[%s53 + $0x8] sm:$0xff]
        %v2789 = vld [vmem:[%s53 + $0x10] sm:$0xff]
        %v2790 = vld [vmem:[%s53 + $0x18] sm:$0xff]
        %v2791 = vld [vmem:[#allocation22] sm:$0x1]
        %v2793 = vlaneseq
        %v2794 = vshrl.u32 %v2793, 7
        %v2795 = vsub.s32 0, %v2794
        %v2796 = vrot.slane %v2791, %v2795
        %v2798 = vsel %vm2369, %v2350, 0
        %2800 = vmatprep.subr.mxu0 0.0
        %2801 = vmatpush1.msra.mxu0 0.0
        %2802 = vmatprep.subr.mxu0 0.0
        %2803 = vmatpush1.msra.mxu0 0.0
        %2804 = vmatprep.subr.mxu0 0.0
        %2805 = vmatpush1.msra.mxu0 0.0
        %2806 = vmatprep.subr.mxu0 0.0
        %2807 = vmatpush1.msra.mxu0 0.0
        %2808 = vmatprep.subr.mxu0 0.0
        %2809 = vmatpush1.msra.mxu0 0.0
        %2810 = vmatprep.subr.mxu0 0.0
        %2811 = vmatpush1.msra.mxu0 0.0
        %2812 = vmatprep.subr.mxu0 0.0
        %2813 = vmatpush1.msra.mxu0 0.0
        %2814 = vmatprep.subr.mxu0 0.0
        %2815 = vmatpush1.msra.mxu0 0.0
        %2816 = vmatprep.subr.mxu0 0.0
        %2817 = vmatpush1.msra.mxu0 0.0
        %2818 = vmatprep.subr.mxu0 0.0
        %2819 = vmatpush1.msra.mxu0 0.0
        %2820 = vmatprep.subr.mxu0 0.0
        %2821 = vmatpush1.msra.mxu0 0.0
        %2822 = vmatprep.subr.mxu0 0.0
        %2823 = vmatpush1.msra.mxu0 0.0
        %2824 = vmatprep.subr.mxu0 0.0
        %2825 = vmatpush1.msra.mxu0 %v2790
        %2826 = vmatprep.subr.mxu0 0.0
        %2827 = vmatpush1.msra.mxu0 %v2789
        %2828 = vmatprep.subr.mxu0 0.0
        %2829 = vmatpush1.msra.mxu0 %v2788
        %2830 = vmatprep.subr.mxu0 0.0
        %2831 = vmatpush1.msra.mxu0 %v2787
        %2832 = vmatprep.subr.mxu0 0.0
        %2833 = vmatpush2.msra.mxu0 0.0
        %2834 = vmatprep.subr.mxu0 0.0
        %2835 = vmatpush2.msra.mxu0 0.0
        %2836 = vmatprep.subr.mxu0 0.0
        %2837 = vmatpush2.msra.mxu0 0.0
        %2838 = vmatprep.subr.mxu0 0.0
        %2839 = vmatpush2.msra.mxu0 0.0
        %2840 = vmatprep.subr.mxu0 0.0
        %2841 = vmatpush2.msra.mxu0 0.0
        %2842 = vmatprep.subr.mxu0 0.0
        %2843 = vmatpush2.msra.mxu0 0.0
        %2844 = vmatprep.subr.mxu0 0.0
        %2845 = vmatpush2.msra.mxu0 0.0
        %2846 = vmatprep.subr.mxu0 0.0
        %2847 = vmatpush2.msra.mxu0 0.0
        %2848 = vmatprep.subr.mxu0 0.0
        %2849 = vmatpush2.msra.mxu0 0.0
        %2850 = vmatprep.subr.mxu0 0.0
        %2851 = vmatpush2.msra.mxu0 0.0
        %2852 = vmatprep.subr.mxu0 0.0
        %2853 = vmatpush2.msra.mxu0 0.0
        %2854 = vmatprep.subr.mxu0 0.0
        %2855 = vmatpush2.msra.mxu0 0.0
        %2856 = vmatprep.subr.mxu0 0.0
        %2857 = vmatpush2.msra.mxu0 0.0
        %2858 = vmatprep.subr.mxu0 0.0
        %2859 = vmatpush2.msra.mxu0 0.0
        %2860 = vmatprep.subr.mxu0 0.0
        %2861 = vmatpush2.msra.mxu0 0.0
        %2862 = vmatprep.subr.mxu0 0.0
        %2863 = vmatpush2.msra.mxu0 0.0
        %2864 = vmatprep.mubr.f32.mxu0 0.0
        %2865 = vmatmul.mubr.f32.gmra.mxu0 %v2798
        %v2866 = vpop.f32.mrf.mxu0
        %v2867 = vadd.f32 %v2796, %v2866
        %v2868 = vpop.f32.mrf.mxu0
        %2869 = vmatprep.mubr.f32.mxu0 0.0
        %2870 = vmatmul.mubr.f32.gmra.mxu0 %v2798
        %v2871 = vpop.f32.mrf.mxu0
        %v2872 = vadd.f32 %v2796, %v2871
        %v2873 = vpop.f32.mrf.mxu0
        %2874 = vdwg.mxu0
        %v2875 = vmul.f32 %v2779, %v2867
        %v2876 = vmul.f32 %v2784, %v2872
        %2877 = vrot.lane.b32.xlu0 %v2350, 32
        %v2878 = vpop.permute.xlu0 %2877
        %2882 = vrot.lane.b32.xlu0 %v2875, 64
        %v2883 = vpop.permute.xlu0 %2882
        %2884 = vrot.lane.b32.xlu0 %v2876, 64
        %v2885 = vpop.permute.xlu0 %2884
        %v2888 = vsel %vm2369, %v2337, %v2878
        %v2889 = vsel %vm2369, %v2342, %v2878
        %v2890 = vsel %vm2236, %v2888, %v2883
        %v2891 = vsel %vm2236, %v2889, %v2885
        %v2892 = vld [vmem:[%s57] sm:$0xff]
        %v2893 = vld [vmem:[%s57 + $0x8] sm:$0xff]
        %v2894 = vld [vmem:[%s57 + $0x10] sm:$0xff]
        %v2895 = vld [vmem:[%s57 + $0x18] sm:$0xff]
        %v2896 = vld [vmem:[%s57 + $0x20] sm:$0xff]
        %v2897 = vld [vmem:[%s57 + $0x28] sm:$0xff]
        %v2898 = vld [vmem:[%s57 + $0x30] sm:$0xff]
        %v2899 = vld [vmem:[%s57 + $0x38] sm:$0xff]
        %v2900 = vld [vmem:[%s57 + $0x40] sm:$0xff]
        %v2901 = vld [vmem:[%s57 + $0x48] sm:$0xff]
        %v2902 = vld [vmem:[%s57 + $0x50] sm:$0xff]
        %v2903 = vld [vmem:[%s57 + $0x58] sm:$0xff]
        %v2904 = vld [vmem:[#allocation24] sm:$0x1]
        %v2906 = vlaneseq
        %v2907 = vshrl.u32 %v2906, 7
        %v2908 = vsub.s32 0, %v2907
        %v2909 = vrot.slane %v2904, %v2908
        %vm2911 = vcmask 785408
        %v2913 = vsel %vm2911, %v2890, 0
        %v2916 = vsel %vm2911, %v2891, 0
        %2918 = vmatprep.subr.mxu0 0.0
        %2919 = vmatpush1.msra.mxu0 0.0
        %2920 = vmatprep.subr.mxu0 0.0
        %2921 = vmatpush1.msra.mxu0 0.0
        %2922 = vmatprep.subr.mxu0 0.0
        %2923 = vmatpush1.msra.mxu0 0.0
        %2924 = vmatprep.subr.mxu0 0.0
        %2925 = vmatpush1.msra.mxu0 0.0
        %2926 = vmatprep.subr.mxu0 0.0
        %2927 = vmatpush1.msra.mxu0 %v2903
        %2928 = vmatprep.subr.mxu0 0.0
        %2929 = vmatpush1.msra.mxu0 %v2902
        %2930 = vmatprep.subr.mxu0 0.0
        %2931 = vmatpush1.msra.mxu0 %v2901
        %2932 = vmatprep.subr.mxu0 0.0
        %2933 = vmatpush1.msra.mxu0 %v2900
        %2934 = vmatprep.subr.mxu0 0.0
        %2935 = vmatpush1.msra.mxu0 %v2899
        %2936 = vmatprep.subr.mxu0 0.0
        %2937 = vmatpush1.msra.mxu0 %v2898
        %2938 = vmatprep.subr.mxu0 0.0
        %2939 = vmatpush1.msra.mxu0 %v2897
        %2940 = vmatprep.subr.mxu0 0.0
        %2941 = vmatpush1.msra.mxu0 %v2896
        %2942 = vmatprep.subr.mxu0 0.0
        %2943 = vmatpush1.msra.mxu0 %v2895
        %2944 = vmatprep.subr.mxu0 0.0
        %2945 = vmatpush1.msra.mxu0 %v2894
        %2946 = vmatprep.subr.mxu0 0.0
        %2947 = vmatpush1.msra.mxu0 %v2893
        %2948 = vmatprep.subr.mxu0 0.0
        %2949 = vmatpush1.msra.mxu0 %v2892
        %2950 = vmatprep.subr.mxu0 0.0
        %2951 = vmatpush2.msra.mxu0 0.0
        %2952 = vmatprep.subr.mxu0 0.0
        %2953 = vmatpush2.msra.mxu0 0.0
        %2954 = vmatprep.subr.mxu0 0.0
        %2955 = vmatpush2.msra.mxu0 0.0
        %2956 = vmatprep.subr.mxu0 0.0
        %2957 = vmatpush2.msra.mxu0 0.0
        %2958 = vmatprep.subr.mxu0 0.0
        %2959 = vmatpush2.msra.mxu0 0.0
        %2960 = vmatprep.subr.mxu0 0.0
        %2961 = vmatpush2.msra.mxu0 0.0
        %2962 = vmatprep.subr.mxu0 0.0
        %2963 = vmatpush2.msra.mxu0 0.0
        %2964 = vmatprep.subr.mxu0 0.0
        %2965 = vmatpush2.msra.mxu0 0.0
        %2966 = vmatprep.subr.mxu0 0.0
        %2967 = vmatpush2.msra.mxu0 0.0
        %2968 = vmatprep.subr.mxu0 0.0
        %2969 = vmatpush2.msra.mxu0 0.0
        %2970 = vmatprep.subr.mxu0 0.0
        %2971 = vmatpush2.msra.mxu0 0.0
        %2972 = vmatprep.subr.mxu0 0.0
        %2973 = vmatpush2.msra.mxu0 0.0
        %2974 = vmatprep.subr.mxu0 0.0
        %2975 = vmatpush2.msra.mxu0 0.0
        %2976 = vmatprep.subr.mxu0 0.0
        %2977 = vmatpush2.msra.mxu0 0.0
        %2978 = vmatprep.subr.mxu0 0.0
        %2979 = vmatpush2.msra.mxu0 0.0
        %2980 = vmatprep.subr.mxu0 0.0
        %2981 = vmatpush2.msra.mxu0 0.0
        %2982 = vmatprep.mubr.f32.mxu0 0.0
        %2983 = vmatmul.mubr.f32.gmra.mxu0 %v2913
        %v2984 = vpop.f32.mrf.mxu0
        %v2985 = vadd.f32 %v2909, %v2984
        %v2986 = vpop.f32.mrf.mxu0
        %2987 = vmatprep.mubr.f32.mxu0 0.0
        %2988 = vmatmul.mubr.f32.gmra.mxu0 %v2916
        %v2989 = vpop.f32.mrf.mxu0
        %v2990 = vadd.f32 %v2909, %v2989
        %v2991 = vpop.f32.mrf.mxu0
        %2992 = vdwg.mxu0
        %v2993 = vld [vmem:[%s61] sm:$0xff]
        %v2994 = vld [vmem:[%s61 + $0x8] sm:$0xff]
        %v2995 = vld [vmem:[%s61 + $0x10] sm:$0xff]
        %v2996 = vld [vmem:[%s61 + $0x18] sm:$0xff]
        %v2997 = vld [vmem:[#allocation25] sm:$0x1]
        %v2999 = vsel %vm2369, %v2692, 0
        %3001 = vmatprep.subr.mxu0 0.0
        %3002 = vmatpush1.msra.mxu0 0.0
        %3003 = vmatprep.subr.mxu0 0.0
        %3004 = vmatpush1.msra.mxu0 0.0
        %3005 = vmatprep.subr.mxu0 0.0
        %3006 = vmatpush1.msra.mxu0 0.0
        %3007 = vmatprep.subr.mxu0 0.0
        %3008 = vmatpush1.msra.mxu0 0.0
        %3009 = vmatprep.subr.mxu0 0.0
        %3010 = vmatpush1.msra.mxu0 0.0
        %3011 = vmatprep.subr.mxu0 0.0
        %3012 = vmatpush1.msra.mxu0 0.0
        %3013 = vmatprep.subr.mxu0 0.0
        %3014 = vmatpush1.msra.mxu0 0.0
        %3015 = vmatprep.subr.mxu0 0.0
        %3016 = vmatpush1.msra.mxu0 0.0
        %3017 = vmatprep.subr.mxu0 0.0
        %3018 = vmatpush1.msra.mxu0 0.0
        %3019 = vmatprep.subr.mxu0 0.0
        %3020 = vmatpush1.msra.mxu0 0.0
        %3021 = vmatprep.subr.mxu0 0.0
        %3022 = vmatpush1.msra.mxu0 0.0
        %3023 = vmatprep.subr.mxu0 0.0
        %3024 = vmatpush1.msra.mxu0 0.0
        %3025 = vmatprep.subr.mxu0 0.0
        %3026 = vmatpush1.msra.mxu0 %v2996
        %3027 = vmatprep.subr.mxu0 0.0
        %3028 = vmatpush1.msra.mxu0 %v2995
        %3029 = vmatprep.subr.mxu0 0.0
        %3030 = vmatpush1.msra.mxu0 %v2994
        %3031 = vmatprep.subr.mxu0 0.0
        %3032 = vmatpush1.msra.mxu0 %v2993
        %3033 = vmatprep.subr.mxu0 0.0
        %3034 = vmatpush2.msra.mxu0 0.0
        %3035 = vmatprep.subr.mxu0 0.0
        %3036 = vmatpush2.msra.mxu0 0.0
        %3037 = vmatprep.subr.mxu0 0.0
        %3038 = vmatpush2.msra.mxu0 0.0
        %3039 = vmatprep.subr.mxu0 0.0
        %3040 = vmatpush2.msra.mxu0 0.0
        %3041 = vmatprep.subr.mxu0 0.0
        %3042 = vmatpush2.msra.mxu0 0.0
        %3043 = vmatprep.subr.mxu0 0.0
        %3044 = vmatpush2.msra.mxu0 0.0
        %3045 = vmatprep.subr.mxu0 0.0
        %3046 = vmatpush2.msra.mxu0 0.0
        %3047 = vmatprep.subr.mxu0 0.0
        %3048 = vmatpush2.msra.mxu0 0.0
        %3049 = vmatprep.subr.mxu0 0.0
        %3050 = vmatpush2.msra.mxu0 0.0
        %3051 = vmatprep.subr.mxu0 0.0
        %3052 = vmatpush2.msra.mxu0 0.0
        %3053 = vmatprep.subr.mxu0 0.0
        %3054 = vmatpush2.msra.mxu0 0.0
        %3055 = vmatprep.subr.mxu0 0.0
        %3056 = vmatpush2.msra.mxu0 0.0
        %3057 = vmatprep.subr.mxu0 0.0
        %3058 = vmatpush2.msra.mxu0 0.0
        %3059 = vmatprep.subr.mxu0 0.0
        %3060 = vmatpush2.msra.mxu0 0.0
        %3061 = vmatprep.subr.mxu0 0.0
        %3062 = vmatpush2.msra.mxu0 0.0
        %3063 = vmatprep.subr.mxu0 0.0
        %3064 = vmatpush2.msra.mxu0 0.0
        %3065 = vmatprep.mubr.f32.mxu0 0.0
        %3066 = vmatmul.mubr.f32.gmra.mxu0 %v2999
        %v3067 = vpop.f32.mrf.mxu0
        %v3068 = vadd.f32 %v2997, %v3067
        %v3069 = vpop.f32.mrf.mxu0
        %3070 = vdwg.mxu0
        %v3071 = vmul.f32 %v3068, 0.17677669
        %v3072 = vlaneseq
        %v3073 = vshrl.u32 %v3072, 7
        %v3074 = vsub.s32 0, %v3073
        %v3075 = vrot.slane %v3071, %v3074
        %3077 = vrot.lane.b32.xlu0 %v3075, 32
        %v3078 = vpop.permute.xlu0 %3077
        %v3080 = vmul.f32 %v2985, %v3078
        %v3081 = vmul.f32 %v2990, %v3078
        %v3082 = vlaneseq
        %v3083 = vshrl.u32 %v3082, 7
        %v3084 = vsub.s32 0, %v3083
        %v3085 = vrot.slane %v3068, %v3084
        %3087 = vrot.lane.b32.xlu0 %v3085, 32
        %v3088 = vpop.permute.xlu0 %3087
        %v3090 = vmul.f32 %v2985, %v3088
        %v3091 = vmul.f32 %v2990, %v3088
        %3094 = vrot.lane.b32.xlu0 %v3080, 96
        %v3095 = vpop.permute.xlu0 %3094
        %3096 = vrot.lane.b32.xlu0 %v3081, 96
        %v3097 = vpop.permute.xlu0 %3096
        %v3099 = vsel %vm2369, %v2985, 0
        %v3102 = vsel %vm2369, %v2990, 0
        %v3104 = vsel %vm2369, %v3095, 0
        %v3106 = vsel %vm2369, %v3097, 0
        %3108 = vmatprep.subr.mxu0 0.0
        %3109 = vmatpush1.xpose.msra.mxu0 0.0
        %3110 = vmatprep.subr.mxu0 0.0
        %3111 = vmatpush1.xpose.msra.mxu0 0.0
        %3112 = vmatprep.subr.mxu0 0.0
        %3113 = vmatpush1.xpose.msra.mxu0 0.0
        %3114 = vmatprep.subr.mxu0 0.0
        %3115 = vmatpush1.xpose.msra.mxu0 0.0
        %3116 = vmatprep.subr.mxu0 0.0
        %3117 = vmatpush1.xpose.msra.mxu0 0.0
        %3118 = vmatprep.subr.mxu0 0.0
        %3119 = vmatpush1.xpose.msra.mxu0 0.0
        %3120 = vmatprep.subr.mxu0 0.0
        %3121 = vmatpush1.xpose.msra.mxu0 0.0
        %3122 = vmatprep.subr.mxu0 0.0
        %3123 = vmatpush1.xpose.msra.mxu0 0.0
        %3124 = vmatprep.subr.mxu0 0.0
        %3125 = vmatpush1.xpose.msra.mxu0 0.0
        %3126 = vmatprep.subr.mxu0 0.0
        %3127 = vmatpush1.xpose.msra.mxu0 0.0
        %3128 = vmatprep.subr.mxu0 0.0
        %3129 = vmatpush1.xpose.msra.mxu0 0.0
        %3130 = vmatprep.subr.mxu0 0.0
        %3131 = vmatpush1.xpose.msra.mxu0 0.0
        %3132 = vmatprep.subr.mxu0 0.0
        %3133 = vmatpush1.xpose.msra.mxu0 0.0
        %3134 = vmatprep.subr.mxu0 0.0
        %3135 = vmatpush1.xpose.msra.mxu0 0.0
        %3136 = vmatprep.subr.mxu0 0.0
        %3137 = vmatpush1.xpose.msra.mxu0 %v3106
        %3138 = vmatprep.subr.mxu0 0.0
        %3139 = vmatpush1.xpose.msra.mxu0 %v3104
        %3140 = vmatprep.subr.mxu0 0.0
        %3141 = vmatpush2.xpose.msra.mxu0 0.0
        %3142 = vmatprep.subr.mxu0 0.0
        %3143 = vmatpush2.xpose.msra.mxu0 0.0
        %3144 = vmatprep.subr.mxu0 0.0
        %3145 = vmatpush2.xpose.msra.mxu0 0.0
        %3146 = vmatprep.subr.mxu0 0.0
        %3147 = vmatpush2.xpose.msra.mxu0 0.0
        %3148 = vmatprep.subr.mxu0 0.0
        %3149 = vmatpush2.xpose.msra.mxu0 0.0
        %3150 = vmatprep.subr.mxu0 0.0
        %3151 = vmatpush2.xpose.msra.mxu0 0.0
        %3152 = vmatprep.subr.mxu0 0.0
        %3153 = vmatpush2.xpose.msra.mxu0 0.0
        %3154 = vmatprep.subr.mxu0 0.0
        %3155 = vmatpush2.xpose.msra.mxu0 0.0
        %3156 = vmatprep.subr.mxu0 0.0
        %3157 = vmatpush2.xpose.msra.mxu0 0.0
        %3158 = vmatprep.subr.mxu0 0.0
        %3159 = vmatpush2.xpose.msra.mxu0 0.0
        %3160 = vmatprep.subr.mxu0 0.0
        %3161 = vmatpush2.xpose.msra.mxu0 0.0
        %3162 = vmatprep.subr.mxu0 0.0
        %3163 = vmatpush2.xpose.msra.mxu0 0.0
        %3164 = vmatprep.subr.mxu0 0.0
        %3165 = vmatpush2.xpose.msra.mxu0 0.0
        %3166 = vmatprep.subr.mxu0 0.0
        %3167 = vmatpush2.xpose.msra.mxu0 0.0
        %3168 = vmatprep.subr.mxu0 0.0
        %3169 = vmatpush2.xpose.msra.mxu0 0.0
        %3170 = vmatprep.subr.mxu0 0.0
        %3171 = vmatpush2.xpose.msra.mxu0 0.0
        %3172 = vmatprep.mubr.f32.mxu0 0.0
        %3173 = vmatmul.mubr.f32.gmra.mxu0 %v3099
        %v3174 = vpop.f32.mrf.mxu0
        %v3175 = vadd.f32 0.0, %v3174
        %v3176 = vpop.f32.mrf.mxu0
        %3177 = vmatprep.mubr.f32.mxu0 0.0
        %3178 = vmatmul.mubr.f32.gmra.mxu0 %v3102
        %v3179 = vpop.f32.mrf.mxu0
        %v3180 = vadd.f32 0.0, %v3179
        %v3181 = vpop.f32.mrf.mxu0
        %3182 = vdwg.mxu0
        %vm3183 = vcmp.gt.f32.partialorder %v2358, 0.5
        %vm3184 = vcmp.gt.f32.partialorder %v2359, 0.5
        %v3185 = vsel %vm3183, -1e+30, %v3175
        %v3186 = vsel %vm3184, -1e+30, %v3180
        %vm3187 = vcmask 130048
        %v3188 = vsel %vm3187, %v3185, -inf
        %3189 = vmax.xlane.f32.xlu0 %v3188
        %v3190 = vpop.xlane.xlu0 %3189
        %v3191 = vsel %vm3187, %v3186, -inf
        %3192 = vmax.xlane.f32.xlu0 %v3191
        %v3193 = vpop.xlane.xlu0 %3192
        %v3194 = vsub.f32 %v3185, %v3190
        %v3195 = vsub.f32 %v3186, %v3193
        %v3196 = vmul.f32 %v3194, 1.442695
        %v3197 = vpow.pop %v3196
        %v3198 = vmul.f32 %v3195, 1.442695
        %v3199 = vpow.pop %v3198
        %v3200 = vsel %vm3187, %v3197, 0.0
        %3201 = vadd.xlane.f32.xlu0 %v3200
        %v3202 = vpop.xlane.xlu0 %3201
        %v3203 = vsel %vm3187, %v3199, 0.0
        %3204 = vadd.xlane.f32.xlu0 %v3203
        %v3205 = vpop.xlane.xlu0 %3204
        %v3206 = vrcp.pop %v3202
        %v3207 = vmul.f32 %v3197, %v3206
        %v3208 = vrcp.pop %v3205
        %v3209 = vmul.f32 %v3199, %v3208
        %3212 = vrot.lane.b32.xlu0 %v3090, 64
        %v3213 = vpop.permute.xlu0 %3212
        %3214 = vrot.lane.b32.xlu0 %v3091, 64
        %v3215 = vpop.permute.xlu0 %3214
        %v3219 = vsel %vm3187, %v3207, 0
        %v3222 = vsel %vm3187, %v3209, 0
        %3224 = vmatprep.subr.mxu0 0.0
        %3225 = vmatpush1.msra.mxu0 0.0
        %3226 = vmatprep.subr.mxu0 0.0
        %3227 = vmatpush1.msra.mxu0 0.0
        %3228 = vmatprep.subr.mxu0 0.0
        %3229 = vmatpush1.msra.mxu0 0.0
        %3230 = vmatprep.subr.mxu0 0.0
        %3231 = vmatpush1.msra.mxu0 0.0
        %3232 = vmatprep.subr.mxu0 0.0
        %3233 = vmatpush1.msra.mxu0 0.0
        %3234 = vmatprep.subr.mxu0 0.0
        %3235 = vmatpush1.msra.mxu0 0.0
        %3236 = vmatprep.subr.mxu0 0.0
        %3237 = vmatpush1.msra.mxu0 0.0
        %3238 = vmatprep.subr.mxu0 0.0
        %3239 = vmatpush1.msra.mxu0 0.0
        %3240 = vmatprep.subr.mxu0 0.0
        %3241 = vmatpush1.msra.mxu0 0.0
        %3242 = vmatprep.subr.mxu0 0.0
        %3243 = vmatpush1.msra.mxu0 0.0
        %3244 = vmatprep.subr.mxu0 0.0
        %3245 = vmatpush1.msra.mxu0 0.0
        %3246 = vmatprep.subr.mxu0 0.0
        %3247 = vmatpush1.msra.mxu0 0.0
        %3248 = vmatprep.subr.mxu0 0.0
        %3249 = vmatpush1.msra.mxu0 0.0
        %3250 = vmatprep.subr.mxu0 0.0
        %3251 = vmatpush1.msra.mxu0 0.0
        %3252 = vmatprep.subr.mxu0 0.0
        %3253 = vmatpush1.msra.mxu0 %v3215
        %3254 = vmatprep.subr.mxu0 0.0
        %3255 = vmatpush1.msra.mxu0 %v3213
        %3256 = vmatprep.subr.mxu0 0.0
        %3257 = vmatpush2.msra.mxu0 0.0
        %3258 = vmatprep.subr.mxu0 0.0
        %3259 = vmatpush2.msra.mxu0 0.0
        %3260 = vmatprep.subr.mxu0 0.0
        %3261 = vmatpush2.msra.mxu0 0.0
        %3262 = vmatprep.subr.mxu0 0.0
        %3263 = vmatpush2.msra.mxu0 0.0
        %3264 = vmatprep.subr.mxu0 0.0
        %3265 = vmatpush2.msra.mxu0 0.0
        %3266 = vmatprep.subr.mxu0 0.0
        %3267 = vmatpush2.msra.mxu0 0.0
        %3268 = vmatprep.subr.mxu0 0.0
        %3269 = vmatpush2.msra.mxu0 0.0
        %3270 = vmatprep.subr.mxu0 0.0
        %3271 = vmatpush2.msra.mxu0 0.0
        %3272 = vmatprep.subr.mxu0 0.0
        %3273 = vmatpush2.msra.mxu0 0.0
        %3274 = vmatprep.subr.mxu0 0.0
        %3275 = vmatpush2.msra.mxu0 0.0
        %3276 = vmatprep.subr.mxu0 0.0
        %3277 = vmatpush2.msra.mxu0 0.0
        %3278 = vmatprep.subr.mxu0 0.0
        %3279 = vmatpush2.msra.mxu0 0.0
        %3280 = vmatprep.subr.mxu0 0.0
        %3281 = vmatpush2.msra.mxu0 0.0
        %3282 = vmatprep.subr.mxu0 0.0
        %3283 = vmatpush2.msra.mxu0 0.0
        %3284 = vmatprep.subr.mxu0 0.0
        %3285 = vmatpush2.msra.mxu0 0.0
        %3286 = vmatprep.subr.mxu0 0.0
        %3287 = vmatpush2.msra.mxu0 0.0
        %3288 = vmatprep.mubr.f32.mxu0 0.0
        %3289 = vmatmul.mubr.f32.gmra.mxu0 %v3219
        %v3290 = vpop.f32.mrf.mxu0
        %v3291 = vadd.f32 0.0, %v3290
        %v3292 = vpop.f32.mrf.mxu0
        %3293 = vmatprep.mubr.f32.mxu0 0.0
        %3294 = vmatmul.mubr.f32.gmra.mxu0 %v3222
        %v3295 = vpop.f32.mrf.mxu0
        %v3296 = vadd.f32 0.0, %v3295
        %v3297 = vpop.f32.mrf.mxu0
        %3298 = vdwg.mxu0
        %3301 = vrot.lane.b32.xlu0 %v3291, 32
        %v3302 = vpop.permute.xlu0 %3301
        %3303 = vrot.lane.b32.xlu0 %v3296, 32
        %v3304 = vpop.permute.xlu0 %3303
        %v3307 = vsel %vm2369, %v2350, %v3302
        %v3308 = vsel %vm2369, %v2350, %v3304
        %v3309 = vld [vmem:[%s65] sm:$0xff]
        %v3310 = vld [vmem:[%s65 + $0x8] sm:$0xff]
        %v3311 = vld [vmem:[%s65 + $0x10] sm:$0xff]
        %v3312 = vld [vmem:[%s65 + $0x18] sm:$0xff]
        %v3313 = vld [vmem:[%s65 + $0x20] sm:$0xff]
        %v3314 = vld [vmem:[%s65 + $0x28] sm:$0xff]
        %v3315 = vld [vmem:[%s65 + $0x30] sm:$0xff]
        %v3316 = vld [vmem:[%s65 + $0x38] sm:$0xff]
        %v3317 = vld [vmem:[#allocation27] sm:$0x1]
        %v3319 = vlaneseq
        %v3320 = vshrl.u32 %v3319, 7
        %v3321 = vsub.s32 0, %v3320
        %v3322 = vrot.slane %v3317, %v3321
        %v3325 = vsel %vm2236, %v3307, 0
        %v3328 = vsel %vm2236, %v3308, 0
        %3330 = vmatprep.subr.mxu0 0.0
        %3331 = vmatpush1.msra.mxu0 0.0
        %3332 = vmatprep.subr.mxu0 0.0
        %3333 = vmatpush1.msra.mxu0 0.0
        %3334 = vmatprep.subr.mxu0 0.0
        %3335 = vmatpush1.msra.mxu0 0.0
        %3336 = vmatprep.subr.mxu0 0.0
        %3337 = vmatpush1.msra.mxu0 0.0
        %3338 = vmatprep.subr.mxu0 0.0
        %3339 = vmatpush1.msra.mxu0 0.0
        %3340 = vmatprep.subr.mxu0 0.0
        %3341 = vmatpush1.msra.mxu0 0.0
        %3342 = vmatprep.subr.mxu0 0.0
        %3343 = vmatpush1.msra.mxu0 0.0
        %3344 = vmatprep.subr.mxu0 0.0
        %3345 = vmatpush1.msra.mxu0 0.0
        %3346 = vmatprep.subr.mxu0 0.0
        %3347 = vmatpush1.msra.mxu0 %v3316
        %3348 = vmatprep.subr.mxu0 0.0
        %3349 = vmatpush1.msra.mxu0 %v3315
        %3350 = vmatprep.subr.mxu0 0.0
        %3351 = vmatpush1.msra.mxu0 %v3314
        %3352 = vmatprep.subr.mxu0 0.0
        %3353 = vmatpush1.msra.mxu0 %v3313
        %3354 = vmatprep.subr.mxu0 0.0
        %3355 = vmatpush1.msra.mxu0 %v3312
        %3356 = vmatprep.subr.mxu0 0.0
        %3357 = vmatpush1.msra.mxu0 %v3311
        %3358 = vmatprep.subr.mxu0 0.0
        %3359 = vmatpush1.msra.mxu0 %v3310
        %3360 = vmatprep.subr.mxu0 0.0
        %3361 = vmatpush1.msra.mxu0 %v3309
        %3362 = vmatprep.subr.mxu0 0.0
        %3363 = vmatpush2.msra.mxu0 0.0
        %3364 = vmatprep.subr.mxu0 0.0
        %3365 = vmatpush2.msra.mxu0 0.0
        %3366 = vmatprep.subr.mxu0 0.0
        %3367 = vmatpush2.msra.mxu0 0.0
        %3368 = vmatprep.subr.mxu0 0.0
        %3369 = vmatpush2.msra.mxu0 0.0
        %3370 = vmatprep.subr.mxu0 0.0
        %3371 = vmatpush2.msra.mxu0 0.0
        %3372 = vmatprep.subr.mxu0 0.0
        %3373 = vmatpush2.msra.mxu0 0.0
        %3374 = vmatprep.subr.mxu0 0.0
        %3375 = vmatpush2.msra.mxu0 0.0
        %3376 = vmatprep.subr.mxu0 0.0
        %3377 = vmatpush2.msra.mxu0 0.0
        %3378 = vmatprep.subr.mxu0 0.0
        %3379 = vmatpush2.msra.mxu0 0.0
        %3380 = vmatprep.subr.mxu0 0.0
        %3381 = vmatpush2.msra.mxu0 0.0
        %3382 = vmatprep.subr.mxu0 0.0
        %3383 = vmatpush2.msra.mxu0 0.0
        %3384 = vmatprep.subr.mxu0 0.0
        %3385 = vmatpush2.msra.mxu0 0.0
        %3386 = vmatprep.subr.mxu0 0.0
        %3387 = vmatpush2.msra.mxu0 0.0
        %3388 = vmatprep.subr.mxu0 0.0
        %3389 = vmatpush2.msra.mxu0 0.0
        %3390 = vmatprep.subr.mxu0 0.0
        %3391 = vmatpush2.msra.mxu0 0.0
        %3392 = vmatprep.subr.mxu0 0.0
        %3393 = vmatpush2.msra.mxu0 0.0
        %3394 = vmatprep.mubr.f32.mxu0 0.0
        %3395 = vmatmul.mubr.f32.gmra.mxu0 %v3325
        %v3396 = vpop.f32.mrf.mxu0
        %v3397 = vadd.f32 %v3322, %v3396
        %v3398 = vpop.f32.mrf.mxu0
        %3399 = vmatprep.mubr.f32.mxu0 0.0
        %3400 = vmatmul.mubr.f32.gmra.mxu0 %v3328
        %v3401 = vpop.f32.mrf.mxu0
        %v3402 = vadd.f32 %v3322, %v3401
        %v3403 = vpop.f32.mrf.mxu0
        %3404 = vdwg.mxu0
        %v3405 = vld [vmem:[%s39] sm:$0xff]
        %v3406 = vld [vmem:[%s39 + $0x8] sm:$0xff]
        %v3407 = vld [vmem:[%s39 + $0x10] sm:$0xff]
        %v3408 = vld [vmem:[%s39 + $0x18] sm:$0xff]
        %v3409 = vld [vmem:[#allocation16] sm:$0x1]
        %v3411 = vlaneseq
        %v3412 = vshrl.u32 %v3411, 7
        %v3413 = vsub.s32 0, %v3412
        %v3414 = vrot.slane %v3409, %v3413
        %v3417 = vsel %vm2369, %v2354, 0
        %3419 = vmatprep.subr.mxu0 0.0
        %3420 = vmatpush1.msra.mxu0 0.0
        %3421 = vmatprep.subr.mxu0 0.0
        %3422 = vmatpush1.msra.mxu0 0.0
        %3423 = vmatprep.subr.mxu0 0.0
        %3424 = vmatpush1.msra.mxu0 0.0
        %3425 = vmatprep.subr.mxu0 0.0
        %3426 = vmatpush1.msra.mxu0 0.0
        %3427 = vmatprep.subr.mxu0 0.0
        %3428 = vmatpush1.msra.mxu0 0.0
        %3429 = vmatprep.subr.mxu0 0.0
        %3430 = vmatpush1.msra.mxu0 0.0
        %3431 = vmatprep.subr.mxu0 0.0
        %3432 = vmatpush1.msra.mxu0 0.0
        %3433 = vmatprep.subr.mxu0 0.0
        %3434 = vmatpush1.msra.mxu0 0.0
        %3435 = vmatprep.subr.mxu0 0.0
        %3436 = vmatpush1.msra.mxu0 0.0
        %3437 = vmatprep.subr.mxu0 0.0
        %3438 = vmatpush1.msra.mxu0 0.0
        %3439 = vmatprep.subr.mxu0 0.0
        %3440 = vmatpush1.msra.mxu0 0.0
        %3441 = vmatprep.subr.mxu0 0.0
        %3442 = vmatpush1.msra.mxu0 0.0
        %3443 = vmatprep.subr.mxu0 0.0
        %3444 = vmatpush1.msra.mxu0 %v3408
        %3445 = vmatprep.subr.mxu0 0.0
        %3446 = vmatpush1.msra.mxu0 %v3407
        %3447 = vmatprep.subr.mxu0 0.0
        %3448 = vmatpush1.msra.mxu0 %v3406
        %3449 = vmatprep.subr.mxu0 0.0
        %3450 = vmatpush1.msra.mxu0 %v3405
        %3451 = vmatprep.subr.mxu0 0.0
        %3452 = vmatpush2.msra.mxu0 0.0
        %3453 = vmatprep.subr.mxu0 0.0
        %3454 = vmatpush2.msra.mxu0 0.0
        %3455 = vmatprep.subr.mxu0 0.0
        %3456 = vmatpush2.msra.mxu0 0.0
        %3457 = vmatprep.subr.mxu0 0.0
        %3458 = vmatpush2.msra.mxu0 0.0
        %3459 = vmatprep.subr.mxu0 0.0
        %3460 = vmatpush2.msra.mxu0 0.0
        %3461 = vmatprep.subr.mxu0 0.0
        %3462 = vmatpush2.msra.mxu0 0.0
        %3463 = vmatprep.subr.mxu0 0.0
        %3464 = vmatpush2.msra.mxu0 0.0
        %3465 = vmatprep.subr.mxu0 0.0
        %3466 = vmatpush2.msra.mxu0 0.0
        %3467 = vmatprep.subr.mxu0 0.0
        %3468 = vmatpush2.msra.mxu0 0.0
        %3469 = vmatprep.subr.mxu0 0.0
        %3470 = vmatpush2.msra.mxu0 0.0
        %3471 = vmatprep.subr.mxu0 0.0
        %3472 = vmatpush2.msra.mxu0 0.0
        %3473 = vmatprep.subr.mxu0 0.0
        %3474 = vmatpush2.msra.mxu0 0.0
        %3475 = vmatprep.subr.mxu0 0.0
        %3476 = vmatpush2.msra.mxu0 0.0
        %3477 = vmatprep.subr.mxu0 0.0
        %3478 = vmatpush2.msra.mxu0 0.0
        %3479 = vmatprep.subr.mxu0 0.0
        %3480 = vmatpush2.msra.mxu0 0.0
        %3481 = vmatprep.subr.mxu0 0.0
        %3482 = vmatpush2.msra.mxu0 0.0
        %3483 = vmatprep.mubr.f32.mxu0 0.0
        %3484 = vmatmul.mubr.f32.gmra.mxu0 %v3417
        %v3485 = vpop.f32.mrf.mxu0
        %v3486 = vadd.f32 %v3414, %v3485
        %v3487 = vpop.f32.mrf.mxu0
        %3488 = vdwg.mxu0
        %v3489 = vtanh.pop %v3486
        %v3490 = vxor.u32 %v3486, 2147483648
        %v3491 = vmul.f32 %v3490, 1.442695
        %v3492 = vpow.pop %v3491
        %v3493 = vadd.f32 %v3492, 1.0
        %v3494 = vrcp.pop %v3493
        %v3495 = vmul.f32 1.0, %v3494
        %3497 = vrot.lane.b32.xlu0 %v3495, 96
        %v3498 = vpop.permute.xlu0 %3497
        %v3500 = vmul.f32 %v3489, %v3498
        %v3501 = vmul.f32 %v3500, %v3500
        %v3502 = vsel %vm2369, %v3501, 0.0
        %3503 = vadd.xlane.f32.xlu0 %v3502
        %v3504 = vpop.xlane.xlu0 %3503
        %v3505 = vmax.f32 %v3504, 1e-24
        %v3506 = vrsqrt.pop %v3505
        %v3507 = vmul.f32 %v3500, %v3506
        %v3508 = vld [vmem:[#allocation18] sm:$0x1]
        %s3509 = sld [smem:[#allocation48]]
        %v3510 = vstv %s3509
        %v3512 = vsel %vm2369, %v3508, 0
        %v3515 = vsel %vm2369, %v3507, 0
        %3517 = vmatprep.subr.mxu0 0.0
        %3518 = vmatpush1.xpose.msra.mxu0 0.0
        %3519 = vmatprep.subr.mxu0 0.0
        %3520 = vmatpush1.xpose.msra.mxu0 0.0
        %3521 = vmatprep.subr.mxu0 0.0
        %3522 = vmatpush1.xpose.msra.mxu0 0.0
        %3523 = vmatprep.subr.mxu0 0.0
        %3524 = vmatpush1.xpose.msra.mxu0 0.0
        %3525 = vmatprep.subr.mxu0 0.0
        %3526 = vmatpush1.xpose.msra.mxu0 0.0
        %3527 = vmatprep.subr.mxu0 0.0
        %3528 = vmatpush1.xpose.msra.mxu0 0.0
        %3529 = vmatprep.subr.mxu0 0.0
        %3530 = vmatpush1.xpose.msra.mxu0 0.0
        %3531 = vmatprep.subr.mxu0 0.0
        %3532 = vmatpush1.xpose.msra.mxu0 0.0
        %3533 = vmatprep.subr.mxu0 0.0
        %3534 = vmatpush1.xpose.msra.mxu0 0.0
        %3535 = vmatprep.subr.mxu0 0.0
        %3536 = vmatpush1.xpose.msra.mxu0 0.0
        %3537 = vmatprep.subr.mxu0 0.0
        %3538 = vmatpush1.xpose.msra.mxu0 0.0
        %3539 = vmatprep.subr.mxu0 0.0
        %3540 = vmatpush1.xpose.msra.mxu0 0.0
        %3541 = vmatprep.subr.mxu0 0.0
        %3542 = vmatpush1.xpose.msra.mxu0 0.0
        %3543 = vmatprep.subr.mxu0 0.0
        %3544 = vmatpush1.xpose.msra.mxu0 0.0
        %3545 = vmatprep.subr.mxu0 0.0
        %3546 = vmatpush1.xpose.msra.mxu0 0.0
        %3547 = vmatprep.subr.mxu0 0.0
        %3548 = vmatpush1.xpose.msra.mxu0 %v3515
        %3549 = vmatprep.subr.mxu0 0.0
        %3550 = vmatpush2.xpose.msra.mxu0 0.0
        %3551 = vmatprep.subr.mxu0 0.0
        %3552 = vmatpush2.xpose.msra.mxu0 0.0
        %3553 = vmatprep.subr.mxu0 0.0
        %3554 = vmatpush2.xpose.msra.mxu0 0.0
        %3555 = vmatprep.subr.mxu0 0.0
        %3556 = vmatpush2.xpose.msra.mxu0 0.0
        %3557 = vmatprep.subr.mxu0 0.0
        %3558 = vmatpush2.xpose.msra.mxu0 0.0
        %3559 = vmatprep.subr.mxu0 0.0
        %3560 = vmatpush2.xpose.msra.mxu0 0.0
        %3561 = vmatprep.subr.mxu0 0.0
        %3562 = vmatpush2.xpose.msra.mxu0 0.0
        %3563 = vmatprep.subr.mxu0 0.0
        %3564 = vmatpush2.xpose.msra.mxu0 0.0
        %3565 = vmatprep.subr.mxu0 0.0
        %3566 = vmatpush2.xpose.msra.mxu0 0.0
        %3567 = vmatprep.subr.mxu0 0.0
        %3568 = vmatpush2.xpose.msra.mxu0 0.0
        %3569 = vmatprep.subr.mxu0 0.0
        %3570 = vmatpush2.xpose.msra.mxu0 0.0
        %3571 = vmatprep.subr.mxu0 0.0
        %3572 = vmatpush2.xpose.msra.mxu0 0.0
        %3573 = vmatprep.subr.mxu0 0.0
        %3574 = vmatpush2.xpose.msra.mxu0 0.0
        %3575 = vmatprep.subr.mxu0 0.0
        %3576 = vmatpush2.xpose.msra.mxu0 0.0
        %3577 = vmatprep.subr.mxu0 0.0
        %3578 = vmatpush2.xpose.msra.mxu0 0.0
        %3579 = vmatprep.subr.mxu0 0.0
        %3580 = vmatpush2.xpose.msra.mxu0 0.0
        %3581 = vmatprep.mubr.f32.mxu0 0.0
        %3582 = vmatmul.mubr.f32.gmra.mxu0 %v3512
        %v3583 = vpop.f32.mrf.mxu0
        %v3584 = vadd.f32 %v3510, %v3583
        %v3585 = vpop.f32.mrf.mxu0
        %3586 = vdwg.mxu0
        %v3587 = vsel %vm2609, %v3584, -inf
        %3588 = vmax.xlane.f32.xlu0 %v3587
        %v3589 = vpop.xlane.xlu0 %3588
        %v3590 = vsub.f32 %v3584, %v3589
        %v3591 = vmul.f32 %v3590, 1.442695
        %v3592 = vpow.pop %v3591
        %v3593 = vsel %vm2609, %v3592, 0.0
        %3594 = vadd.xlane.f32.xlu0 %v3593
        %v3595 = vpop.xlane.xlu0 %3594
        %v3596 = vrcp.pop %v3595
        %v3597 = vmul.f32 %v3592, %v3596
        %v3598 = vmul.f32 %v3597, %v2356
        %v3599 = vsel %vm2609, %v3598, 0.0
        %3600 = vadd.xlane.f32.xlu0 %v3599
        %v3601 = vpop.xlane.xlu0 %3600
        %v3602 = vrcp.pop %v3601
        %v3603 = vmul.f32 %v3598, %v3602
        %v3604 = vld [vmem:[%s45] sm:$0xff]
        %v3605 = vld [vmem:[%s45 + $0x8] sm:$0xff]
        %v3606 = vld [vmem:[%s45 + $0x10] sm:$0xff]
        %v3607 = vld [vmem:[%s45 + $0x18] sm:$0xff]
        %v3608 = vld [vmem:[#allocation19] sm:$0x1]
        %v3610 = vlaneseq
        %v3611 = vshrl.u32 %v3610, 7
        %v3612 = vsub.s32 0, %v3611
        %v3613 = vrot.slane %v3608, %v3612
        %v3616 = vsel %vm2369, %v2355, 0
        %3618 = vmatprep.subr.mxu0 0.0
        %3619 = vmatpush1.msra.mxu0 0.0
        %3620 = vmatprep.subr.mxu0 0.0
        %3621 = vmatpush1.msra.mxu0 0.0
        %3622 = vmatprep.subr.mxu0 0.0
        %3623 = vmatpush1.msra.mxu0 0.0
        %3624 = vmatprep.subr.mxu0 0.0
        %3625 = vmatpush1.msra.mxu0 0.0
        %3626 = vmatprep.subr.mxu0 0.0
        %3627 = vmatpush1.msra.mxu0 0.0
        %3628 = vmatprep.subr.mxu0 0.0
        %3629 = vmatpush1.msra.mxu0 0.0
        %3630 = vmatprep.subr.mxu0 0.0
        %3631 = vmatpush1.msra.mxu0 0.0
        %3632 = vmatprep.subr.mxu0 0.0
        %3633 = vmatpush1.msra.mxu0 0.0
        %3634 = vmatprep.subr.mxu0 0.0
        %3635 = vmatpush1.msra.mxu0 0.0
        %3636 = vmatprep.subr.mxu0 0.0
        %3637 = vmatpush1.msra.mxu0 0.0
        %3638 = vmatprep.subr.mxu0 0.0
        %3639 = vmatpush1.msra.mxu0 0.0
        %3640 = vmatprep.subr.mxu0 0.0
        %3641 = vmatpush1.msra.mxu0 0.0
        %3642 = vmatprep.subr.mxu0 0.0
        %3643 = vmatpush1.msra.mxu0 %v3607
        %3644 = vmatprep.subr.mxu0 0.0
        %3645 = vmatpush1.msra.mxu0 %v3606
        %3646 = vmatprep.subr.mxu0 0.0
        %3647 = vmatpush1.msra.mxu0 %v3605
        %3648 = vmatprep.subr.mxu0 0.0
        %3649 = vmatpush1.msra.mxu0 %v3604
        %3650 = vmatprep.subr.mxu0 0.0
        %3651 = vmatpush2.msra.mxu0 0.0
        %3652 = vmatprep.subr.mxu0 0.0
        %3653 = vmatpush2.msra.mxu0 0.0
        %3654 = vmatprep.subr.mxu0 0.0
        %3655 = vmatpush2.msra.mxu0 0.0
        %3656 = vmatprep.subr.mxu0 0.0
        %3657 = vmatpush2.msra.mxu0 0.0
        %3658 = vmatprep.subr.mxu0 0.0
        %3659 = vmatpush2.msra.mxu0 0.0
        %3660 = vmatprep.subr.mxu0 0.0
        %3661 = vmatpush2.msra.mxu0 0.0
        %3662 = vmatprep.subr.mxu0 0.0
        %3663 = vmatpush2.msra.mxu0 0.0
        %3664 = vmatprep.subr.mxu0 0.0
        %3665 = vmatpush2.msra.mxu0 0.0
        %3666 = vmatprep.subr.mxu0 0.0
        %3667 = vmatpush2.msra.mxu0 0.0
        %3668 = vmatprep.subr.mxu0 0.0
        %3669 = vmatpush2.msra.mxu0 0.0
        %3670 = vmatprep.subr.mxu0 0.0
        %3671 = vmatpush2.msra.mxu0 0.0
        %3672 = vmatprep.subr.mxu0 0.0
        %3673 = vmatpush2.msra.mxu0 0.0
        %3674 = vmatprep.subr.mxu0 0.0
        %3675 = vmatpush2.msra.mxu0 0.0
        %3676 = vmatprep.subr.mxu0 0.0
        %3677 = vmatpush2.msra.mxu0 0.0
        %3678 = vmatprep.subr.mxu0 0.0
        %3679 = vmatpush2.msra.mxu0 0.0
        %3680 = vmatprep.subr.mxu0 0.0
        %3681 = vmatpush2.msra.mxu0 0.0
        %3682 = vmatprep.mubr.f32.mxu0 0.0
        %3683 = vmatmul.mubr.f32.gmra.mxu0 %v3616
        %v3684 = vpop.f32.mrf.mxu0
        %v3685 = vadd.f32 %v3613, %v3684
        %v3686 = vpop.f32.mrf.mxu0
        %3687 = vdwg.mxu0
        %v3689 = vsel %vm2621, %v3603, 0
        %3691 = vmatprep.subr.mxu0 0.0
        %3692 = vmatpush1.msra.mxu0 0.0
        %3693 = vmatprep.subr.mxu0 0.0
        %3694 = vmatpush1.msra.mxu0 0.0
        %3695 = vmatprep.subr.mxu0 0.0
        %3696 = vmatpush1.msra.mxu0 0.0
        %3697 = vmatprep.subr.mxu0 0.0
        %3698 = vmatpush1.msra.mxu0 0.0
        %3699 = vmatprep.subr.mxu0 0.0
        %3700 = vmatpush1.msra.mxu0 0.0
        %3701 = vmatprep.subr.mxu0 0.0
        %3702 = vmatpush1.msra.mxu0 0.0
        %3703 = vmatprep.subr.mxu0 0.0
        %3704 = vmatpush1.msra.mxu0 0.0
        %3705 = vmatprep.subr.mxu0 0.0
        %3706 = vmatpush1.msra.mxu0 0.0
        %3707 = vmatprep.subr.mxu0 0.0
        %3708 = vmatpush1.msra.mxu0 0.0
        %3709 = vmatprep.subr.mxu0 0.0
        %3710 = vmatpush1.msra.mxu0 0.0
        %3711 = vmatprep.subr.mxu0 0.0
        %3712 = vmatpush1.msra.mxu0 0.0
        %3713 = vmatprep.subr.mxu0 0.0
        %3714 = vmatpush1.msra.mxu0 0.0
        %3715 = vmatprep.subr.mxu0 0.0
        %3716 = vmatpush1.msra.mxu0 0.0
        %3717 = vmatprep.subr.mxu0 0.0
        %3718 = vmatpush1.msra.mxu0 0.0
        %3719 = vmatprep.subr.mxu0 0.0
        %3720 = vmatpush1.msra.mxu0 0.0
        %3721 = vmatprep.subr.mxu0 0.0
        %3722 = vmatpush1.msra.mxu0 %v3685
        %3723 = vmatprep.subr.mxu0 0.0
        %3724 = vmatpush2.msra.mxu0 0.0
        %3725 = vmatprep.subr.mxu0 0.0
        %3726 = vmatpush2.msra.mxu0 0.0
        %3727 = vmatprep.subr.mxu0 0.0
        %3728 = vmatpush2.msra.mxu0 0.0
        %3729 = vmatprep.subr.mxu0 0.0
        %3730 = vmatpush2.msra.mxu0 0.0
        %3731 = vmatprep.subr.mxu0 0.0
        %3732 = vmatpush2.msra.mxu0 0.0
        %3733 = vmatprep.subr.mxu0 0.0
        %3734 = vmatpush2.msra.mxu0 0.0
        %3735 = vmatprep.subr.mxu0 0.0
        %3736 = vmatpush2.msra.mxu0 0.0
        %3737 = vmatprep.subr.mxu0 0.0
        %3738 = vmatpush2.msra.mxu0 0.0
        %3739 = vmatprep.subr.mxu0 0.0
        %3740 = vmatpush2.msra.mxu0 0.0
        %3741 = vmatprep.subr.mxu0 0.0
        %3742 = vmatpush2.msra.mxu0 0.0
        %3743 = vmatprep.subr.mxu0 0.0
        %3744 = vmatpush2.msra.mxu0 0.0
        %3745 = vmatprep.subr.mxu0 0.0
        %3746 = vmatpush2.msra.mxu0 0.0
        %3747 = vmatprep.subr.mxu0 0.0
        %3748 = vmatpush2.msra.mxu0 0.0
        %3749 = vmatprep.subr.mxu0 0.0
        %3750 = vmatpush2.msra.mxu0 0.0
        %3751 = vmatprep.subr.mxu0 0.0
        %3752 = vmatpush2.msra.mxu0 0.0
        %3753 = vmatprep.subr.mxu0 0.0
        %3754 = vmatpush2.msra.mxu0 0.0
        %3755 = vmatprep.mubr.f32.mxu0 0.0
        %3756 = vmatmul.mubr.f32.gmra.mxu0 %v3689
        %v3757 = vpop.f32.mrf.mxu0
        %v3758 = vadd.f32 0.0, %v3757
        %v3759 = vpop.f32.mrf.mxu0
        %3760 = vdwg.mxu0
        %v3761 = vld [vmem:[%s69] sm:$0xff]
        %v3762 = vld [vmem:[%s69 + $0x8] sm:$0xff]
        %v3763 = vld [vmem:[%s69 + $0x10] sm:$0xff]
        %v3764 = vld [vmem:[%s69 + $0x18] sm:$0xff]
        %v3765 = vld [vmem:[#allocation28] sm:$0x1]
        %v3767 = vlaneseq
        %v3768 = vshrl.u32 %v3767, 7
        %v3769 = vsub.s32 0, %v3768
        %v3770 = vrot.slane %v3765, %v3769
        %3772 = vmatprep.subr.mxu0 0.0
        %3773 = vmatpush1.msra.mxu0 0.0
        %3774 = vmatprep.subr.mxu0 0.0
        %3775 = vmatpush1.msra.mxu0 0.0
        %3776 = vmatprep.subr.mxu0 0.0
        %3777 = vmatpush1.msra.mxu0 0.0
        %3778 = vmatprep.subr.mxu0 0.0
        %3779 = vmatpush1.msra.mxu0 0.0
        %3780 = vmatprep.subr.mxu0 0.0
        %3781 = vmatpush1.msra.mxu0 0.0
        %3782 = vmatprep.subr.mxu0 0.0
        %3783 = vmatpush1.msra.mxu0 0.0
        %3784 = vmatprep.subr.mxu0 0.0
        %3785 = vmatpush1.msra.mxu0 0.0
        %3786 = vmatprep.subr.mxu0 0.0
        %3787 = vmatpush1.msra.mxu0 0.0
        %3788 = vmatprep.subr.mxu0 0.0
        %3789 = vmatpush1.msra.mxu0 0.0
        %3790 = vmatprep.subr.mxu0 0.0
        %3791 = vmatpush1.msra.mxu0 0.0
        %3792 = vmatprep.subr.mxu0 0.0
        %3793 = vmatpush1.msra.mxu0 0.0
        %3794 = vmatprep.subr.mxu0 0.0
        %3795 = vmatpush1.msra.mxu0 0.0
        %3796 = vmatprep.subr.mxu0 0.0
        %3797 = vmatpush1.msra.mxu0 %v3764
        %3798 = vmatprep.subr.mxu0 0.0
        %3799 = vmatpush1.msra.mxu0 %v3763
        %3800 = vmatprep.subr.mxu0 0.0
        %3801 = vmatpush1.msra.mxu0 %v3762
        %3802 = vmatprep.subr.mxu0 0.0
        %3803 = vmatpush1.msra.mxu0 %v3761
        %3804 = vmatprep.subr.mxu0 0.0
        %3805 = vmatpush2.msra.mxu0 0.0
        %3806 = vmatprep.subr.mxu0 0.0
        %3807 = vmatpush2.msra.mxu0 0.0
        %3808 = vmatprep.subr.mxu0 0.0
        %3809 = vmatpush2.msra.mxu0 0.0
        %3810 = vmatprep.subr.mxu0 0.0
        %3811 = vmatpush2.msra.mxu0 0.0
        %3812 = vmatprep.subr.mxu0 0.0
        %3813 = vmatpush2.msra.mxu0 0.0
        %3814 = vmatprep.subr.mxu0 0.0
        %3815 = vmatpush2.msra.mxu0 0.0
        %3816 = vmatprep.subr.mxu0 0.0
        %3817 = vmatpush2.msra.mxu0 0.0
        %3818 = vmatprep.subr.mxu0 0.0
        %3819 = vmatpush2.msra.mxu0 0.0
        %3820 = vmatprep.subr.mxu0 0.0
        %3821 = vmatpush2.msra.mxu0 0.0
        %3822 = vmatprep.subr.mxu0 0.0
        %3823 = vmatpush2.msra.mxu0 0.0
        %3824 = vmatprep.subr.mxu0 0.0
        %3825 = vmatpush2.msra.mxu0 0.0
        %3826 = vmatprep.subr.mxu0 0.0
        %3827 = vmatpush2.msra.mxu0 0.0
        %3828 = vmatprep.subr.mxu0 0.0
        %3829 = vmatpush2.msra.mxu0 0.0
        %3830 = vmatprep.subr.mxu0 0.0
        %3831 = vmatpush2.msra.mxu0 0.0
        %3832 = vmatprep.subr.mxu0 0.0
        %3833 = vmatpush2.msra.mxu0 0.0
        %3834 = vmatprep.subr.mxu0 0.0
        %3835 = vmatpush2.msra.mxu0 0.0
        %3836 = vmatprep.mubr.f32.mxu0 0.0
        %3837 = vmatmul.mubr.f32.gmra.mxu0 %v2707
        %v3838 = vpop.f32.mrf.mxu0
        %v3839 = vadd.f32 %v3770, %v3838
        %v3840 = vpop.f32.mrf.mxu0
        %3841 = vmatprep.mubr.f32.mxu0 0.0
        %3842 = vmatmul.mubr.f32.gmra.mxu0 %v2710
        %v3843 = vpop.f32.mrf.mxu0
        %v3844 = vadd.f32 %v3770, %v3843
        %v3845 = vpop.f32.mrf.mxu0
        %3846 = vdwg.mxu0
        %v3847 = vld [vmem:[%s73] sm:$0xff]
        %v3848 = vld [vmem:[%s73 + $0x8] sm:$0xff]
        %v3849 = vld [vmem:[%s73 + $0x10] sm:$0xff]
        %v3850 = vld [vmem:[%s73 + $0x18] sm:$0xff]
        %v3851 = vld [vmem:[#allocation30] sm:$0x1]
        %v3853 = vlaneseq
        %v3854 = vshrl.u32 %v3853, 7
        %v3855 = vsub.s32 0, %v3854
        %v3856 = vrot.slane %v3851, %v3855
        %3858 = vmatprep.subr.mxu0 0.0
        %3859 = vmatpush1.msra.mxu0 0.0
        %3860 = vmatprep.subr.mxu0 0.0
        %3861 = vmatpush1.msra.mxu0 0.0
        %3862 = vmatprep.subr.mxu0 0.0
        %3863 = vmatpush1.msra.mxu0 0.0
        %3864 = vmatprep.subr.mxu0 0.0
        %3865 = vmatpush1.msra.mxu0 0.0
        %3866 = vmatprep.subr.mxu0 0.0
        %3867 = vmatpush1.msra.mxu0 0.0
        %3868 = vmatprep.subr.mxu0 0.0
        %3869 = vmatpush1.msra.mxu0 0.0
        %3870 = vmatprep.subr.mxu0 0.0
        %3871 = vmatpush1.msra.mxu0 0.0
        %3872 = vmatprep.subr.mxu0 0.0
        %3873 = vmatpush1.msra.mxu0 0.0
        %3874 = vmatprep.subr.mxu0 0.0
        %3875 = vmatpush1.msra.mxu0 0.0
        %3876 = vmatprep.subr.mxu0 0.0
        %3877 = vmatpush1.msra.mxu0 0.0
        %3878 = vmatprep.subr.mxu0 0.0
        %3879 = vmatpush1.msra.mxu0 0.0
        %3880 = vmatprep.subr.mxu0 0.0
        %3881 = vmatpush1.msra.mxu0 0.0
        %3882 = vmatprep.subr.mxu0 0.0
        %3883 = vmatpush1.msra.mxu0 %v3850
        %3884 = vmatprep.subr.mxu0 0.0
        %3885 = vmatpush1.msra.mxu0 %v3849
        %3886 = vmatprep.subr.mxu0 0.0
        %3887 = vmatpush1.msra.mxu0 %v3848
        %3888 = vmatprep.subr.mxu0 0.0
        %3889 = vmatpush1.msra.mxu0 %v3847
        %3890 = vmatprep.subr.mxu0 0.0
        %3891 = vmatpush2.msra.mxu0 0.0
        %3892 = vmatprep.subr.mxu0 0.0
        %3893 = vmatpush2.msra.mxu0 0.0
        %3894 = vmatprep.subr.mxu0 0.0
        %3895 = vmatpush2.msra.mxu0 0.0
        %3896 = vmatprep.subr.mxu0 0.0
        %3897 = vmatpush2.msra.mxu0 0.0
        %3898 = vmatprep.subr.mxu0 0.0
        %3899 = vmatpush2.msra.mxu0 0.0
        %3900 = vmatprep.subr.mxu0 0.0
        %3901 = vmatpush2.msra.mxu0 0.0
        %3902 = vmatprep.subr.mxu0 0.0
        %3903 = vmatpush2.msra.mxu0 0.0
        %3904 = vmatprep.subr.mxu0 0.0
        %3905 = vmatpush2.msra.mxu0 0.0
        %3906 = vmatprep.subr.mxu0 0.0
        %3907 = vmatpush2.msra.mxu0 0.0
        %3908 = vmatprep.subr.mxu0 0.0
        %3909 = vmatpush2.msra.mxu0 0.0
        %3910 = vmatprep.subr.mxu0 0.0
        %3911 = vmatpush2.msra.mxu0 0.0
        %3912 = vmatprep.subr.mxu0 0.0
        %3913 = vmatpush2.msra.mxu0 0.0
        %3914 = vmatprep.subr.mxu0 0.0
        %3915 = vmatpush2.msra.mxu0 0.0
        %3916 = vmatprep.subr.mxu0 0.0
        %3917 = vmatpush2.msra.mxu0 0.0
        %3918 = vmatprep.subr.mxu0 0.0
        %3919 = vmatpush2.msra.mxu0 0.0
        %3920 = vmatprep.subr.mxu0 0.0
        %3921 = vmatpush2.msra.mxu0 0.0
        %3922 = vmatprep.mubr.f32.mxu0 0.0
        %3923 = vmatmul.mubr.f32.gmra.mxu0 %v2798
        %v3924 = vpop.f32.mrf.mxu0
        %v3925 = vadd.f32 %v3856, %v3924
        %v3926 = vpop.f32.mrf.mxu0
        %3927 = vmatprep.mubr.f32.mxu0 0.0
        %3928 = vmatmul.mubr.f32.gmra.mxu0 %v2798
        %v3929 = vpop.f32.mrf.mxu0
        %v3930 = vadd.f32 %v3856, %v3929
        %v3931 = vpop.f32.mrf.mxu0
        %3932 = vdwg.mxu0
        %v3933 = vmul.f32 %v3839, %v3925
        %v3934 = vmul.f32 %v3844, %v3930
        %3937 = vrot.lane.b32.xlu0 %v3933, 64
        %v3938 = vpop.permute.xlu0 %3937
        %3939 = vrot.lane.b32.xlu0 %v3934, 64
        %v3940 = vpop.permute.xlu0 %3939
        %v3943 = vsel %vm2236, %v2888, %v3938
        %v3944 = vsel %vm2236, %v2889, %v3940
        %v3945 = vld [vmem:[%s77] sm:$0xff]
        %v3946 = vld [vmem:[%s77 + $0x8] sm:$0xff]
        %v3947 = vld [vmem:[%s77 + $0x10] sm:$0xff]
        %v3948 = vld [vmem:[%s77 + $0x18] sm:$0xff]
        %v3949 = vld [vmem:[%s77 + $0x20] sm:$0xff]
        %v3950 = vld [vmem:[%s77 + $0x28] sm:$0xff]
        %v3951 = vld [vmem:[%s77 + $0x30] sm:$0xff]
        %v3952 = vld [vmem:[%s77 + $0x38] sm:$0xff]
        %v3953 = vld [vmem:[%s77 + $0x40] sm:$0xff]
        %v3954 = vld [vmem:[%s77 + $0x48] sm:$0xff]
        %v3955 = vld [vmem:[%s77 + $0x50] sm:$0xff]
        %v3956 = vld [vmem:[%s77 + $0x58] sm:$0xff]
        %v3957 = vld [vmem:[#allocation31] sm:$0x1]
        %v3959 = vlaneseq
        %v3960 = vshrl.u32 %v3959, 7
        %v3961 = vsub.s32 0, %v3960
        %v3962 = vrot.slane %v3957, %v3961
        %v3965 = vsel %vm2911, %v3943, 0
        %v3968 = vsel %vm2911, %v3944, 0
        %3970 = vmatprep.subr.mxu0 0.0
        %3971 = vmatpush1.msra.mxu0 0.0
        %3972 = vmatprep.subr.mxu0 0.0
        %3973 = vmatpush1.msra.mxu0 0.0
        %3974 = vmatprep.subr.mxu0 0.0
        %3975 = vmatpush1.msra.mxu0 0.0
        %3976 = vmatprep.subr.mxu0 0.0
        %3977 = vmatpush1.msra.mxu0 0.0
        %3978 = vmatprep.subr.mxu0 0.0
        %3979 = vmatpush1.msra.mxu0 %v3956
        %3980 = vmatprep.subr.mxu0 0.0
        %3981 = vmatpush1.msra.mxu0 %v3955
        %3982 = vmatprep.subr.mxu0 0.0
        %3983 = vmatpush1.msra.mxu0 %v3954
        %3984 = vmatprep.subr.mxu0 0.0
        %3985 = vmatpush1.msra.mxu0 %v3953
        %3986 = vmatprep.subr.mxu0 0.0
        %3987 = vmatpush1.msra.mxu0 %v3952
        %3988 = vmatprep.subr.mxu0 0.0
        %3989 = vmatpush1.msra.mxu0 %v3951
        %3990 = vmatprep.subr.mxu0 0.0
        %3991 = vmatpush1.msra.mxu0 %v3950
        %3992 = vmatprep.subr.mxu0 0.0
        %3993 = vmatpush1.msra.mxu0 %v3949
        %3994 = vmatprep.subr.mxu0 0.0
        %3995 = vmatpush1.msra.mxu0 %v3948
        %3996 = vmatprep.subr.mxu0 0.0
        %3997 = vmatpush1.msra.mxu0 %v3947
        %3998 = vmatprep.subr.mxu0 0.0
        %3999 = vmatpush1.msra.mxu0 %v3946
        %4000 = vmatprep.subr.mxu0 0.0
        %4001 = vmatpush1.msra.mxu0 %v3945
        %4002 = vmatprep.subr.mxu0 0.0
        %4003 = vmatpush2.msra.mxu0 0.0
        %4004 = vmatprep.subr.mxu0 0.0
        %4005 = vmatpush2.msra.mxu0 0.0
        %4006 = vmatprep.subr.mxu0 0.0
        %4007 = vmatpush2.msra.mxu0 0.0
        %4008 = vmatprep.subr.mxu0 0.0
        %4009 = vmatpush2.msra.mxu0 0.0
        %4010 = vmatprep.subr.mxu0 0.0
        %4011 = vmatpush2.msra.mxu0 0.0
        %4012 = vmatprep.subr.mxu0 0.0
        %4013 = vmatpush2.msra.mxu0 0.0
        %4014 = vmatprep.subr.mxu0 0.0
        %4015 = vmatpush2.msra.mxu0 0.0
        %4016 = vmatprep.subr.mxu0 0.0
        %4017 = vmatpush2.msra.mxu0 0.0
        %4018 = vmatprep.subr.mxu0 0.0
        %4019 = vmatpush2.msra.mxu0 0.0
        %4020 = vmatprep.subr.mxu0 0.0
        %4021 = vmatpush2.msra.mxu0 0.0
        %4022 = vmatprep.subr.mxu0 0.0
        %4023 = vmatpush2.msra.mxu0 0.0
        %4024 = vmatprep.subr.mxu0 0.0
        %4025 = vmatpush2.msra.mxu0 0.0
        %4026 = vmatprep.subr.mxu0 0.0
        %4027 = vmatpush2.msra.mxu0 0.0
        %4028 = vmatprep.subr.mxu0 0.0
        %4029 = vmatpush2.msra.mxu0 0.0
        %4030 = vmatprep.subr.mxu0 0.0
        %4031 = vmatpush2.msra.mxu0 0.0
        %4032 = vmatprep.subr.mxu0 0.0
        %4033 = vmatpush2.msra.mxu0 0.0
        %4034 = vmatprep.mubr.f32.mxu0 0.0
        %4035 = vmatmul.mubr.f32.gmra.mxu0 %v3965
        %v4036 = vpop.f32.mrf.mxu0
        %v4037 = vadd.f32 %v3962, %v4036
        %v4038 = vpop.f32.mrf.mxu0
        %4039 = vmatprep.mubr.f32.mxu0 0.0
        %4040 = vmatmul.mubr.f32.gmra.mxu0 %v3968
        %v4041 = vpop.f32.mrf.mxu0
        %v4042 = vadd.f32 %v3962, %v4041
        %v4043 = vpop.f32.mrf.mxu0
        %4044 = vdwg.mxu0
        %v4045 = vld [vmem:[#allocation33] sm:$0xff]
        %v4046 = vld [vmem:[#allocation33 + $0x8] sm:$0xff]
        %v4047 = vld [vmem:[#allocation33 + $0x10] sm:$0xff]
        %v4048 = vld [vmem:[#allocation33 + $0x18] sm:$0xff]
        %v4049 = vld [vmem:[#allocation34] sm:$0x1]
        %v4051 = vlaneseq
        %v4052 = vshrl.u32 %v4051, 7
        %v4053 = vsub.s32 0, %v4052
        %v4054 = vrot.slane %v4049, %v4053
        %v4057 = vsel %vm2369, %v2357, 0
        %4059 = vmatprep.subr.mxu0 0.0
        %4060 = vmatpush1.msra.mxu0 0.0
        %4061 = vmatprep.subr.mxu0 0.0
        %4062 = vmatpush1.msra.mxu0 0.0
        %4063 = vmatprep.subr.mxu0 0.0
        %4064 = vmatpush1.msra.mxu0 0.0
        %4065 = vmatprep.subr.mxu0 0.0
        %4066 = vmatpush1.msra.mxu0 0.0
        %4067 = vmatprep.subr.mxu0 0.0
        %4068 = vmatpush1.msra.mxu0 0.0
        %4069 = vmatprep.subr.mxu0 0.0
        %4070 = vmatpush1.msra.mxu0 0.0
        %4071 = vmatprep.subr.mxu0 0.0
        %4072 = vmatpush1.msra.mxu0 0.0
        %4073 = vmatprep.subr.mxu0 0.0
        %4074 = vmatpush1.msra.mxu0 0.0
        %4075 = vmatprep.subr.mxu0 0.0
        %4076 = vmatpush1.msra.mxu0 0.0
        %4077 = vmatprep.subr.mxu0 0.0
        %4078 = vmatpush1.msra.mxu0 0.0
        %4079 = vmatprep.subr.mxu0 0.0
        %4080 = vmatpush1.msra.mxu0 0.0
        %4081 = vmatprep.subr.mxu0 0.0
        %4082 = vmatpush1.msra.mxu0 0.0
        %4083 = vmatprep.subr.mxu0 0.0
        %4084 = vmatpush1.msra.mxu0 %v4048
        %4085 = vmatprep.subr.mxu0 0.0
        %4086 = vmatpush1.msra.mxu0 %v4047
        %4087 = vmatprep.subr.mxu0 0.0
        %4088 = vmatpush1.msra.mxu0 %v4046
        %4089 = vmatprep.subr.mxu0 0.0
        %4090 = vmatpush1.msra.mxu0 %v4045
        %4091 = vmatprep.subr.mxu0 0.0
        %4092 = vmatpush2.msra.mxu0 0.0
        %4093 = vmatprep.subr.mxu0 0.0
        %4094 = vmatpush2.msra.mxu0 0.0
        %4095 = vmatprep.subr.mxu0 0.0
        %4096 = vmatpush2.msra.mxu0 0.0
        %4097 = vmatprep.subr.mxu0 0.0
        %4098 = vmatpush2.msra.mxu0 0.0
        %4099 = vmatprep.subr.mxu0 0.0
        %4100 = vmatpush2.msra.mxu0 0.0
        %4101 = vmatprep.subr.mxu0 0.0
        %4102 = vmatpush2.msra.mxu0 0.0
        %4103 = vmatprep.subr.mxu0 0.0
        %4104 = vmatpush2.msra.mxu0 0.0
        %4105 = vmatprep.subr.mxu0 0.0
        %4106 = vmatpush2.msra.mxu0 0.0
        %4107 = vmatprep.subr.mxu0 0.0
        %4108 = vmatpush2.msra.mxu0 0.0
        %4109 = vmatprep.subr.mxu0 0.0
        %4110 = vmatpush2.msra.mxu0 0.0
        %4111 = vmatprep.subr.mxu0 0.0
        %4112 = vmatpush2.msra.mxu0 0.0
        %4113 = vmatprep.subr.mxu0 0.0
        %4114 = vmatpush2.msra.mxu0 0.0
        %4115 = vmatprep.subr.mxu0 0.0
        %4116 = vmatpush2.msra.mxu0 0.0
        %4117 = vmatprep.subr.mxu0 0.0
        %4118 = vmatpush2.msra.mxu0 0.0
        %4119 = vmatprep.subr.mxu0 0.0
        %4120 = vmatpush2.msra.mxu0 0.0
        %4121 = vmatprep.subr.mxu0 0.0
        %4122 = vmatpush2.msra.mxu0 0.0
        %4123 = vmatprep.mubr.f32.mxu0 0.0
        %4124 = vmatmul.mubr.f32.gmra.mxu0 %v4057
        %v4125 = vpop.f32.mrf.mxu0
        %v4126 = vadd.f32 %v4054, %v4125
        %v4127 = vpop.f32.mrf.mxu0
        %4128 = vdwg.mxu0
        %v4129 = vld [vmem:[#allocation36] sm:$0xff]
        %v4130 = vld [vmem:[#allocation36 + $0x8] sm:$0xff]
        %v4131 = vld [vmem:[#allocation36 + $0x10] sm:$0xff]
        %v4132 = vld [vmem:[#allocation36 + $0x18] sm:$0xff]
        %v4133 = vld [vmem:[#allocation37] sm:$0x1]
        %v4135 = vsel %vm2369, %v3758, 0
        %4137 = vmatprep.subr.mxu0 0.0
        %4138 = vmatpush1.msra.mxu0 0.0
        %4139 = vmatprep.subr.mxu0 0.0
        %4140 = vmatpush1.msra.mxu0 0.0
        %4141 = vmatprep.subr.mxu0 0.0
        %4142 = vmatpush1.msra.mxu0 0.0
        %4143 = vmatprep.subr.mxu0 0.0
        %4144 = vmatpush1.msra.mxu0 0.0
        %4145 = vmatprep.subr.mxu0 0.0
        %4146 = vmatpush1.msra.mxu0 0.0
        %4147 = vmatprep.subr.mxu0 0.0
        %4148 = vmatpush1.msra.mxu0 0.0
        %4149 = vmatprep.subr.mxu0 0.0
        %4150 = vmatpush1.msra.mxu0 0.0
        %4151 = vmatprep.subr.mxu0 0.0
        %4152 = vmatpush1.msra.mxu0 0.0
        %4153 = vmatprep.subr.mxu0 0.0
        %4154 = vmatpush1.msra.mxu0 0.0
        %4155 = vmatprep.subr.mxu0 0.0
        %4156 = vmatpush1.msra.mxu0 0.0
        %4157 = vmatprep.subr.mxu0 0.0
        %4158 = vmatpush1.msra.mxu0 0.0
        %4159 = vmatprep.subr.mxu0 0.0
        %4160 = vmatpush1.msra.mxu0 0.0
        %4161 = vmatprep.subr.mxu0 0.0
        %4162 = vmatpush1.msra.mxu0 %v4132
        %4163 = vmatprep.subr.mxu0 0.0
        %4164 = vmatpush1.msra.mxu0 %v4131
        %4165 = vmatprep.subr.mxu0 0.0
        %4166 = vmatpush1.msra.mxu0 %v4130
        %4167 = vmatprep.subr.mxu0 0.0
        %4168 = vmatpush1.msra.mxu0 %v4129
        %4169 = vmatprep.subr.mxu0 0.0
        %4170 = vmatpush2.msra.mxu0 0.0
        %4171 = vmatprep.subr.mxu0 0.0
        %4172 = vmatpush2.msra.mxu0 0.0
        %4173 = vmatprep.subr.mxu0 0.0
        %4174 = vmatpush2.msra.mxu0 0.0
        %4175 = vmatprep.subr.mxu0 0.0
        %4176 = vmatpush2.msra.mxu0 0.0
        %4177 = vmatprep.subr.mxu0 0.0
        %4178 = vmatpush2.msra.mxu0 0.0
        %4179 = vmatprep.subr.mxu0 0.0
        %4180 = vmatpush2.msra.mxu0 0.0
        %4181 = vmatprep.subr.mxu0 0.0
        %4182 = vmatpush2.msra.mxu0 0.0
        %4183 = vmatprep.subr.mxu0 0.0
        %4184 = vmatpush2.msra.mxu0 0.0
        %4185 = vmatprep.subr.mxu0 0.0
        %4186 = vmatpush2.msra.mxu0 0.0
        %4187 = vmatprep.subr.mxu0 0.0
        %4188 = vmatpush2.msra.mxu0 0.0
        %4189 = vmatprep.subr.mxu0 0.0
        %4190 = vmatpush2.msra.mxu0 0.0
        %4191 = vmatprep.subr.mxu0 0.0
        %4192 = vmatpush2.msra.mxu0 0.0
        %4193 = vmatprep.subr.mxu0 0.0
        %4194 = vmatpush2.msra.mxu0 0.0
        %4195 = vmatprep.subr.mxu0 0.0
        %4196 = vmatpush2.msra.mxu0 0.0
        %4197 = vmatprep.subr.mxu0 0.0
        %4198 = vmatpush2.msra.mxu0 0.0
        %4199 = vmatprep.subr.mxu0 0.0
        %4200 = vmatpush2.msra.mxu0 0.0
        %4201 = vmatprep.mubr.f32.mxu0 0.0
        %4202 = vmatmul.mubr.f32.gmra.mxu0 %v4135
        %v4203 = vpop.f32.mrf.mxu0
        %v4204 = vadd.f32 %v4133, %v4203
        %v4205 = vpop.f32.mrf.mxu0
        %4206 = vdwg.mxu0
        %v4207 = vmul.f32 %v4204, 0.17677669
        %v4208 = vlaneseq
        %v4209 = vshrl.u32 %v4208, 7
        %v4210 = vsub.s32 0, %v4209
        %v4211 = vrot.slane %v4207, %v4210
        %v4212 = vmul.f32 %v4126, %v4211
        %v4213 = vlaneseq
        %v4214 = vshrl.u32 %v4213, 7
        %v4215 = vsub.s32 0, %v4214
        %v4216 = vrot.slane %v4204, %v4215
        %v4217 = vmul.f32 %v4126, %v4216
        %v4219 = vsel %vm2369, %v4037, 0
        %v4222 = vsel %vm2369, %v4042, 0
        %v4225 = vsel %vm2369, %v4212, 0
        %4227 = vmatprep.subr.mxu0 0.0
        %4228 = vmatpush1.xpose.msra.mxu0 0.0
        %4229 = vmatprep.subr.mxu0 0.0
        %4230 = vmatpush1.xpose.msra.mxu0 0.0
        %4231 = vmatprep.subr.mxu0 0.0
        %4232 = vmatpush1.xpose.msra.mxu0 0.0
        %4233 = vmatprep.subr.mxu0 0.0
        %4234 = vmatpush1.xpose.msra.mxu0 0.0
        %4235 = vmatprep.subr.mxu0 0.0
        %4236 = vmatpush1.xpose.msra.mxu0 0.0
        %4237 = vmatprep.subr.mxu0 0.0
        %4238 = vmatpush1.xpose.msra.mxu0 0.0
        %4239 = vmatprep.subr.mxu0 0.0
        %4240 = vmatpush1.xpose.msra.mxu0 0.0
        %4241 = vmatprep.subr.mxu0 0.0
        %4242 = vmatpush1.xpose.msra.mxu0 0.0
        %4243 = vmatprep.subr.mxu0 0.0
        %4244 = vmatpush1.xpose.msra.mxu0 0.0
        %4245 = vmatprep.subr.mxu0 0.0
        %4246 = vmatpush1.xpose.msra.mxu0 0.0
        %4247 = vmatprep.subr.mxu0 0.0
        %4248 = vmatpush1.xpose.msra.mxu0 0.0
        %4249 = vmatprep.subr.mxu0 0.0
        %4250 = vmatpush1.xpose.msra.mxu0 0.0
        %4251 = vmatprep.subr.mxu0 0.0
        %4252 = vmatpush1.xpose.msra.mxu0 0.0
        %4253 = vmatprep.subr.mxu0 0.0
        %4254 = vmatpush1.xpose.msra.mxu0 0.0
        %4255 = vmatprep.subr.mxu0 0.0
        %4256 = vmatpush1.xpose.msra.mxu0 0.0
        %4257 = vmatprep.subr.mxu0 0.0
        %4258 = vmatpush1.xpose.msra.mxu0 %v4225
        %4259 = vmatprep.subr.mxu0 0.0
        %4260 = vmatpush2.xpose.msra.mxu0 0.0
        %4261 = vmatprep.subr.mxu0 0.0
        %4262 = vmatpush2.xpose.msra.mxu0 0.0
        %4263 = vmatprep.subr.mxu0 0.0
        %4264 = vmatpush2.xpose.msra.mxu0 0.0
        %4265 = vmatprep.subr.mxu0 0.0
        %4266 = vmatpush2.xpose.msra.mxu0 0.0
        %4267 = vmatprep.subr.mxu0 0.0
        %4268 = vmatpush2.xpose.msra.mxu0 0.0
        %4269 = vmatprep.subr.mxu0 0.0
        %4270 = vmatpush2.xpose.msra.mxu0 0.0
        %4271 = vmatprep.subr.mxu0 0.0
        %4272 = vmatpush2.xpose.msra.mxu0 0.0
        %4273 = vmatprep.subr.mxu0 0.0
        %4274 = vmatpush2.xpose.msra.mxu0 0.0
        %4275 = vmatprep.subr.mxu0 0.0
        %4276 = vmatpush2.xpose.msra.mxu0 0.0
        %4277 = vmatprep.subr.mxu0 0.0
        %4278 = vmatpush2.xpose.msra.mxu0 0.0
        %4279 = vmatprep.subr.mxu0 0.0
        %4280 = vmatpush2.xpose.msra.mxu0 0.0
        %4281 = vmatprep.subr.mxu0 0.0
        %4282 = vmatpush2.xpose.msra.mxu0 0.0
        %4283 = vmatprep.subr.mxu0 0.0
        %4284 = vmatpush2.xpose.msra.mxu0 0.0
        %4285 = vmatprep.subr.mxu0 0.0
        %4286 = vmatpush2.xpose.msra.mxu0 0.0
        %4287 = vmatprep.subr.mxu0 0.0
        %4288 = vmatpush2.xpose.msra.mxu0 0.0
        %4289 = vmatprep.subr.mxu0 0.0
        %4290 = vmatpush2.xpose.msra.mxu0 0.0
        %4291 = vmatprep.mubr.f32.mxu0 0.0
        %4292 = vmatmul.mubr.f32.gmra.mxu0 %v4219
        %v4293 = vpop.f32.mrf.mxu0
        %v4294 = vadd.f32 0.0, %v4293
        %v4295 = vpop.f32.mrf.mxu0
        %4296 = vmatprep.mubr.f32.mxu0 0.0
        %4297 = vmatmul.mubr.f32.gmra.mxu0 %v4222
        %v4298 = vpop.f32.mrf.mxu0
        %v4299 = vadd.f32 0.0, %v4298
        %v4300 = vpop.f32.mrf.mxu0
        %4301 = vdwg.mxu0
        %vm4302 = vcmp.gt.f32.partialorder %v2360, 0.5
        %vm4303 = vcmp.gt.f32.partialorder %v2361, 0.5
        %v4304 = vsel %vm4302, -1e+30, %v4294
        %v4305 = vsel %vm4303, -1e+30, %v4299
        %v4306 = vsel %vm2621, %v4304, -inf
        %4307 = vmax.xlane.f32.xlu0 %v4306
        %v4308 = vpop.xlane.xlu0 %4307
        %v4309 = vsel %vm2621, %v4305, -inf
        %4310 = vmax.xlane.f32.xlu0 %v4309
        %v4311 = vpop.xlane.xlu0 %4310
        %v4312 = vsub.f32 %v4304, %v4308
        %v4313 = vsub.f32 %v4305, %v4311
        %v4314 = vmul.f32 %v4312, 1.442695
        %v4315 = vpow.pop %v4314
        %v4316 = vmul.f32 %v4313, 1.442695
        %v4317 = vpow.pop %v4316
        %v4318 = vsel %vm2621, %v4315, 0.0
        %4319 = vadd.xlane.f32.xlu0 %v4318
        %v4320 = vpop.xlane.xlu0 %4319
        %v4321 = vsel %vm2621, %v4317, 0.0
        %4322 = vadd.xlane.f32.xlu0 %v4321
        %v4323 = vpop.xlane.xlu0 %4322
        %v4324 = vrcp.pop %v4320
        %v4325 = vmul.f32 %v4315, %v4324
        %v4326 = vrcp.pop %v4323
        %v4327 = vmul.f32 %v4317, %v4326
        %4329 = vrot.lane.b32.xlu0 %v4217, 96
        %v4330 = vpop.permute.xlu0 %4329
        %v4333 = vsel %vm2621, %v4325, 0
        %v4336 = vsel %vm2621, %v4327, 0
        %4338 = vmatprep.subr.mxu0 0.0
        %4339 = vmatpush1.msra.mxu0 0.0
        %4340 = vmatprep.subr.mxu0 0.0
        %4341 = vmatpush1.msra.mxu0 0.0
        %4342 = vmatprep.subr.mxu0 0.0
        %4343 = vmatpush1.msra.mxu0 0.0
        %4344 = vmatprep.subr.mxu0 0.0
        %4345 = vmatpush1.msra.mxu0 0.0
        %4346 = vmatprep.subr.mxu0 0.0
        %4347 = vmatpush1.msra.mxu0 0.0
        %4348 = vmatprep.subr.mxu0 0.0
        %4349 = vmatpush1.msra.mxu0 0.0
        %4350 = vmatprep.subr.mxu0 0.0
        %4351 = vmatpush1.msra.mxu0 0.0
        %4352 = vmatprep.subr.mxu0 0.0
        %4353 = vmatpush1.msra.mxu0 0.0
        %4354 = vmatprep.subr.mxu0 0.0
        %4355 = vmatpush1.msra.mxu0 0.0
        %4356 = vmatprep.subr.mxu0 0.0
        %4357 = vmatpush1.msra.mxu0 0.0
        %4358 = vmatprep.subr.mxu0 0.0
        %4359 = vmatpush1.msra.mxu0 0.0
        %4360 = vmatprep.subr.mxu0 0.0
        %4361 = vmatpush1.msra.mxu0 0.0
        %4362 = vmatprep.subr.mxu0 0.0
        %4363 = vmatpush1.msra.mxu0 0.0
        %4364 = vmatprep.subr.mxu0 0.0
        %4365 = vmatpush1.msra.mxu0 0.0
        %4366 = vmatprep.subr.mxu0 0.0
        %4367 = vmatpush1.msra.mxu0 0.0
        %4368 = vmatprep.subr.mxu0 0.0
        %4369 = vmatpush1.msra.mxu0 %v4330
        %4370 = vmatprep.subr.mxu0 0.0
        %4371 = vmatpush2.msra.mxu0 0.0
        %4372 = vmatprep.subr.mxu0 0.0
        %4373 = vmatpush2.msra.mxu0 0.0
        %4374 = vmatprep.subr.mxu0 0.0
        %4375 = vmatpush2.msra.mxu0 0.0
        %4376 = vmatprep.subr.mxu0 0.0
        %4377 = vmatpush2.msra.mxu0 0.0
        %4378 = vmatprep.subr.mxu0 0.0
        %4379 = vmatpush2.msra.mxu0 0.0
        %4380 = vmatprep.subr.mxu0 0.0
        %4381 = vmatpush2.msra.mxu0 0.0
        %4382 = vmatprep.subr.mxu0 0.0
        %4383 = vmatpush2.msra.mxu0 0.0
        %4384 = vmatprep.subr.mxu0 0.0
        %4385 = vmatpush2.msra.mxu0 0.0
        %4386 = vmatprep.subr.mxu0 0.0
        %4387 = vmatpush2.msra.mxu0 0.0
        %4388 = vmatprep.subr.mxu0 0.0
        %4389 = vmatpush2.msra.mxu0 0.0
        %4390 = vmatprep.subr.mxu0 0.0
        %4391 = vmatpush2.msra.mxu0 0.0
        %4392 = vmatprep.subr.mxu0 0.0
        %4393 = vmatpush2.msra.mxu0 0.0
        %4394 = vmatprep.subr.mxu0 0.0
        %4395 = vmatpush2.msra.mxu0 0.0
        %4396 = vmatprep.subr.mxu0 0.0
        %4397 = vmatpush2.msra.mxu0 0.0
        %4398 = vmatprep.subr.mxu0 0.0
        %4399 = vmatpush2.msra.mxu0 0.0
        %4400 = vmatprep.subr.mxu0 0.0
        %4401 = vmatpush2.msra.mxu0 0.0
        %4402 = vmatprep.mubr.f32.mxu0 0.0
        %4403 = vmatmul.mubr.f32.gmra.mxu0 %v4333
        %v4404 = vpop.f32.mrf.mxu0
        %v4405 = vadd.f32 0.0, %v4404
        %v4406 = vpop.f32.mrf.mxu0
        %4407 = vmatprep.mubr.f32.mxu0 0.0
        %4408 = vmatmul.mubr.f32.gmra.mxu0 %v4336
        %v4409 = vpop.f32.mrf.mxu0
        %v4410 = vadd.f32 0.0, %v4409
        %v4411 = vpop.f32.mrf.mxu0
        %4412 = vdwg.mxu0
        %4415 = vrot.lane.b32.xlu0 %v4405, 32
        %v4416 = vpop.permute.xlu0 %4415
        %4417 = vrot.lane.b32.xlu0 %v4410, 32
        %v4418 = vpop.permute.xlu0 %4417
        %v4421 = vsel %vm2369, %v2350, %v4416
        %v4422 = vsel %vm2369, %v2350, %v4418
        %v4423 = vld [vmem:[%s89] sm:$0xff]
        %v4424 = vld [vmem:[%s89 + $0x8] sm:$0xff]
        %v4425 = vld [vmem:[%s89 + $0x10] sm:$0xff]
        %v4426 = vld [vmem:[%s89 + $0x18] sm:$0xff]
        %v4427 = vld [vmem:[%s89 + $0x20] sm:$0xff]
        %v4428 = vld [vmem:[%s89 + $0x28] sm:$0xff]
        %v4429 = vld [vmem:[%s89 + $0x30] sm:$0xff]
        %v4430 = vld [vmem:[%s89 + $0x38] sm:$0xff]
        %v4431 = vld [vmem:[#allocation39] sm:$0x1]
        %v4433 = vlaneseq
        %v4434 = vshrl.u32 %v4433, 7
        %v4435 = vsub.s32 0, %v4434
        %v4436 = vrot.slane %v4431, %v4435
        %v4439 = vsel %vm2236, %v4421, 0
        %v4442 = vsel %vm2236, %v4422, 0
        %4444 = vmatprep.subr.mxu0 0.0
        %4445 = vmatpush1.msra.mxu0 0.0
        %4446 = vmatprep.subr.mxu0 0.0
        %4447 = vmatpush1.msra.mxu0 0.0
        %4448 = vmatprep.subr.mxu0 0.0
        %4449 = vmatpush1.msra.mxu0 0.0
        %4450 = vmatprep.subr.mxu0 0.0
        %4451 = vmatpush1.msra.mxu0 0.0
        %4452 = vmatprep.subr.mxu0 0.0
        %4453 = vmatpush1.msra.mxu0 0.0
        %4454 = vmatprep.subr.mxu0 0.0
        %4455 = vmatpush1.msra.mxu0 0.0
        %4456 = vmatprep.subr.mxu0 0.0
        %4457 = vmatpush1.msra.mxu0 0.0
        %4458 = vmatprep.subr.mxu0 0.0
        %4459 = vmatpush1.msra.mxu0 0.0
        %4460 = vmatprep.subr.mxu0 0.0
        %4461 = vmatpush1.msra.mxu0 %v4430
        %4462 = vmatprep.subr.mxu0 0.0
        %4463 = vmatpush1.msra.mxu0 %v4429
        %4464 = vmatprep.subr.mxu0 0.0
        %4465 = vmatpush1.msra.mxu0 %v4428
        %4466 = vmatprep.subr.mxu0 0.0
        %4467 = vmatpush1.msra.mxu0 %v4427
        %4468 = vmatprep.subr.mxu0 0.0
        %4469 = vmatpush1.msra.mxu0 %v4426
        %4470 = vmatprep.subr.mxu0 0.0
        %4471 = vmatpush1.msra.mxu0 %v4425
        %4472 = vmatprep.subr.mxu0 0.0
        %4473 = vmatpush1.msra.mxu0 %v4424
        %4474 = vmatprep.subr.mxu0 0.0
        %4475 = vmatpush1.msra.mxu0 %v4423
        %4476 = vmatprep.subr.mxu0 0.0
        %4477 = vmatpush2.msra.mxu0 0.0
        %4478 = vmatprep.subr.mxu0 0.0
        %4479 = vmatpush2.msra.mxu0 0.0
        %4480 = vmatprep.subr.mxu0 0.0
        %4481 = vmatpush2.msra.mxu0 0.0
        %4482 = vmatprep.subr.mxu0 0.0
        %4483 = vmatpush2.msra.mxu0 0.0
        %4484 = vmatprep.subr.mxu0 0.0
        %4485 = vmatpush2.msra.mxu0 0.0
        %4486 = vmatprep.subr.mxu0 0.0
        %4487 = vmatpush2.msra.mxu0 0.0
        %4488 = vmatprep.subr.mxu0 0.0
        %4489 = vmatpush2.msra.mxu0 0.0
        %4490 = vmatprep.subr.mxu0 0.0
        %4491 = vmatpush2.msra.mxu0 0.0
        %4492 = vmatprep.subr.mxu0 0.0
        %4493 = vmatpush2.msra.mxu0 0.0
        %4494 = vmatprep.subr.mxu0 0.0
        %4495 = vmatpush2.msra.mxu0 0.0
        %4496 = vmatprep.subr.mxu0 0.0
        %4497 = vmatpush2.msra.mxu0 0.0
        %4498 = vmatprep.subr.mxu0 0.0
        %4499 = vmatpush2.msra.mxu0 0.0
        %4500 = vmatprep.subr.mxu0 0.0
        %4501 = vmatpush2.msra.mxu0 0.0
        %4502 = vmatprep.subr.mxu0 0.0
        %4503 = vmatpush2.msra.mxu0 0.0
        %4504 = vmatprep.subr.mxu0 0.0
        %4505 = vmatpush2.msra.mxu0 0.0
        %4506 = vmatprep.subr.mxu0 0.0
        %4507 = vmatpush2.msra.mxu0 0.0
        %4508 = vmatprep.mubr.f32.mxu0 0.0
        %4509 = vmatmul.mubr.f32.gmra.mxu0 %v4439
        %v4510 = vpop.f32.mrf.mxu0
        %v4511 = vadd.f32 %v4436, %v4510
        %v4512 = vpop.f32.mrf.mxu0
        %4513 = vmatprep.mubr.f32.mxu0 0.0
        %4514 = vmatmul.mubr.f32.gmra.mxu0 %v4442
        %v4515 = vpop.f32.mrf.mxu0
        %v4516 = vadd.f32 %v4436, %v4515
        %v4517 = vpop.f32.mrf.mxu0
        %4518 = vdwg.mxu0
        %vm4519 = vcmp.gt.f32.partialorder %v2362, 0.5
        %v4520 = vsel %vm4519, -1e+30, 1.0
        %v4522 = vsel %vm3187, %v4520, 0
        %4524 = vmatprep.subr.mxu0 0.0
        %4525 = vmatpush1.msra.mxu0 0.0
        %4526 = vmatprep.subr.mxu0 0.0
        %4527 = vmatpush1.msra.mxu0 0.0
        %4528 = vmatprep.subr.mxu0 0.0
        %4529 = vmatpush1.msra.mxu0 0.0
        %4530 = vmatprep.subr.mxu0 0.0
        %4531 = vmatpush1.msra.mxu0 0.0
        %4532 = vmatprep.subr.mxu0 0.0
        %4533 = vmatpush1.msra.mxu0 0.0
        %4534 = vmatprep.subr.mxu0 0.0
        %4535 = vmatpush1.msra.mxu0 0.0
        %4536 = vmatprep.subr.mxu0 0.0
        %4537 = vmatpush1.msra.mxu0 0.0
        %4538 = vmatprep.subr.mxu0 0.0
        %4539 = vmatpush1.msra.mxu0 0.0
        %4540 = vmatprep.subr.mxu0 0.0
        %4541 = vmatpush1.msra.mxu0 0.0
        %4542 = vmatprep.subr.mxu0 0.0
        %4543 = vmatpush1.msra.mxu0 0.0
        %4544 = vmatprep.subr.mxu0 0.0
        %4545 = vmatpush1.msra.mxu0 0.0
        %4546 = vmatprep.subr.mxu0 0.0
        %4547 = vmatpush1.msra.mxu0 0.0
        %4548 = vmatprep.subr.mxu0 0.0
        %4549 = vmatpush1.msra.mxu0 0.0
        %4550 = vmatprep.subr.mxu0 0.0
        %4551 = vmatpush1.msra.mxu0 0.0
        %4552 = vmatprep.subr.mxu0 0.0
        %4553 = vmatpush1.msra.mxu0 %v3402
        %4554 = vmatprep.subr.mxu0 0.0
        %4555 = vmatpush1.msra.mxu0 %v3397
        %4556 = vmatprep.subr.mxu0 0.0
        %4557 = vmatpush2.msra.mxu0 0.0
        %4558 = vmatprep.subr.mxu0 0.0
        %4559 = vmatpush2.msra.mxu0 0.0
        %4560 = vmatprep.subr.mxu0 0.0
        %4561 = vmatpush2.msra.mxu0 0.0
        %4562 = vmatprep.subr.mxu0 0.0
        %4563 = vmatpush2.msra.mxu0 0.0
        %4564 = vmatprep.subr.mxu0 0.0
        %4565 = vmatpush2.msra.mxu0 0.0
        %4566 = vmatprep.subr.mxu0 0.0
        %4567 = vmatpush2.msra.mxu0 0.0
        %4568 = vmatprep.subr.mxu0 0.0
        %4569 = vmatpush2.msra.mxu0 0.0
        %4570 = vmatprep.subr.mxu0 0.0
        %4571 = vmatpush2.msra.mxu0 0.0
        %4572 = vmatprep.subr.mxu0 0.0
        %4573 = vmatpush2.msra.mxu0 0.0
        %4574 = vmatprep.subr.mxu0 0.0
        %4575 = vmatpush2.msra.mxu0 0.0
        %4576 = vmatprep.subr.mxu0 0.0
        %4577 = vmatpush2.msra.mxu0 0.0
        %4578 = vmatprep.subr.mxu0 0.0
        %4579 = vmatpush2.msra.mxu0 0.0
        %4580 = vmatprep.subr.mxu0 0.0
        %4581 = vmatpush2.msra.mxu0 0.0
        %4582 = vmatprep.subr.mxu0 0.0
        %4583 = vmatpush2.msra.mxu0 0.0
        %4584 = vmatprep.subr.mxu0 0.0
        %4585 = vmatpush2.msra.mxu0 0.0
        %4586 = vmatprep.subr.mxu0 0.0
        %4587 = vmatpush2.msra.mxu0 0.0
        %4588 = vmatprep.mubr.f32.mxu0 0.0
        %4589 = vmatmul.mubr.f32.gmra.mxu0 %v4522
        %v4590 = vpop.f32.mrf.mxu0
        %v4591 = vadd.f32 0.0, %v4590
        %v4592 = vpop.f32.mrf.mxu0
        %4593 = vdwg.mxu0
        %4594 = vmatprep.subr.mxu0 0.0
        %4595 = vmatpush1.msra.mxu0 0.0
        %4596 = vmatprep.subr.mxu0 0.0
        %4597 = vmatpush1.msra.mxu0 0.0
        %4598 = vmatprep.subr.mxu0 0.0
        %4599 = vmatpush1.msra.mxu0 0.0
        %4600 = vmatprep.subr.mxu0 0.0
        %4601 = vmatpush1.msra.mxu0 0.0
        %4602 = vmatprep.subr.mxu0 0.0
        %4603 = vmatpush1.msra.mxu0 0.0
        %4604 = vmatprep.subr.mxu0 0.0
        %4605 = vmatpush1.msra.mxu0 0.0
        %4606 = vmatprep.subr.mxu0 0.0
        %4607 = vmatpush1.msra.mxu0 0.0
        %4608 = vmatprep.subr.mxu0 0.0
        %4609 = vmatpush1.msra.mxu0 0.0
        %4610 = vmatprep.subr.mxu0 0.0
        %4611 = vmatpush1.msra.mxu0 0.0
        %4612 = vmatprep.subr.mxu0 0.0
        %4613 = vmatpush1.msra.mxu0 0.0
        %4614 = vmatprep.subr.mxu0 0.0
        %4615 = vmatpush1.msra.mxu0 0.0
        %4616 = vmatprep.subr.mxu0 0.0
        %4617 = vmatpush1.msra.mxu0 0.0
        %4618 = vmatprep.subr.mxu0 0.0
        %4619 = vmatpush1.msra.mxu0 0.0
        %4620 = vmatprep.subr.mxu0 0.0
        %4621 = vmatpush1.msra.mxu0 0.0
        %4622 = vmatprep.subr.mxu0 0.0
        %4623 = vmatpush1.msra.mxu0 %v4516
        %4624 = vmatprep.subr.mxu0 0.0
        %4625 = vmatpush1.msra.mxu0 %v4511
        %4626 = vmatprep.subr.mxu0 0.0
        %4627 = vmatpush2.msra.mxu0 0.0
        %4628 = vmatprep.subr.mxu0 0.0
        %4629 = vmatpush2.msra.mxu0 0.0
        %4630 = vmatprep.subr.mxu0 0.0
        %4631 = vmatpush2.msra.mxu0 0.0
        %4632 = vmatprep.subr.mxu0 0.0
        %4633 = vmatpush2.msra.mxu0 0.0
        %4634 = vmatprep.subr.mxu0 0.0
        %4635 = vmatpush2.msra.mxu0 0.0
        %4636 = vmatprep.subr.mxu0 0.0
        %4637 = vmatpush2.msra.mxu0 0.0
        %4638 = vmatprep.subr.mxu0 0.0
        %4639 = vmatpush2.msra.mxu0 0.0
        %4640 = vmatprep.subr.mxu0 0.0
        %4641 = vmatpush2.msra.mxu0 0.0
        %4642 = vmatprep.subr.mxu0 0.0
        %4643 = vmatpush2.msra.mxu0 0.0
        %4644 = vmatprep.subr.mxu0 0.0
        %4645 = vmatpush2.msra.mxu0 0.0
        %4646 = vmatprep.subr.mxu0 0.0
        %4647 = vmatpush2.msra.mxu0 0.0
        %4648 = vmatprep.subr.mxu0 0.0
        %4649 = vmatpush2.msra.mxu0 0.0
        %4650 = vmatprep.subr.mxu0 0.0
        %4651 = vmatpush2.msra.mxu0 0.0
        %4652 = vmatprep.subr.mxu0 0.0
        %4653 = vmatpush2.msra.mxu0 0.0
        %4654 = vmatprep.subr.mxu0 0.0
        %4655 = vmatpush2.msra.mxu0 0.0
        %4656 = vmatprep.subr.mxu0 0.0
        %4657 = vmatpush2.msra.mxu0 0.0
        %4658 = vmatprep.mubr.f32.mxu0 0.0
        %4659 = vmatmul.mubr.f32.gmra.mxu0 %v4522
        %v4660 = vpop.f32.mrf.mxu0
        %v4661 = vadd.f32 0.0, %v4660
        %v4662 = vpop.f32.mrf.mxu0
        %4663 = vdwg.mxu0
        %v4664 = vlaneseq
        %v4665 = vshrl.u32 %v4664, 7
        %v4666 = vsub.s32 0, %v4665
        %v4667 = vrot.slane %v4591, %v4666
        %v4668 = vmul.f32 %v4511, %v4667
        %v4669 = vmul.f32 %v4516, %v4667
        %v4670 = vmul.f32 %v3397, %v4667
        %v4671 = vmul.f32 %v3402, %v4667
        %v4672 = vlaneseq
        %v4673 = vshrl.u32 %v4672, 7
        %v4674 = vsub.s32 0, %v4673
        %v4675 = vrot.slane %v4661, %v4674
        %v4676 = vmul.f32 %v4511, %v4675
        %v4677 = vmul.f32 %v4516, %v4675
        %v4678 = vmul.f32 %v3397, %v4675
        %v4679 = vmul.f32 %v3402, %v4675
        %v4680 = vmul.f32 %v4668, %v4668
        %v4681 = vmul.f32 %v4669, %v4669
        %v4682 = vmul.f32 %v4670, %v4670
        %v4683 = vmul.f32 %v4671, %v4671
        %v4684 = vmul.f32 %v4676, %v4676
        %v4685 = vmul.f32 %v4677, %v4677
        %v4686 = vmul.f32 %v4678, %v4678
        %v4687 = vmul.f32 %v4679, %v4679
        %v4688 = vsel %vm2369, %v4680, 0.0
        %4689 = vadd.xlane.f32.xlu0 %v4688
        %v4690 = vpop.xlane.xlu0 %4689
        %v4691 = vsel %vm2369, %v4681, 0.0
        %4692 = vadd.xlane.f32.xlu0 %v4691
        %v4693 = vpop.xlane.xlu0 %4692
        %v4694 = vsel %vm2369, %v4682, 0.0
        %4695 = vadd.xlane.f32.xlu0 %v4694
        %v4696 = vpop.xlane.xlu0 %4695
        %v4697 = vsel %vm2369, %v4683, 0.0
        %4698 = vadd.xlane.f32.xlu0 %v4697
        %v4699 = vpop.xlane.xlu0 %4698
        %v4700 = vsel %vm2369, %v4684, 0.0
        %4701 = vadd.xlane.f32.xlu0 %v4700
        %v4702 = vpop.xlane.xlu0 %4701
        %v4703 = vsel %vm2369, %v4685, 0.0
        %4704 = vadd.xlane.f32.xlu0 %v4703
        %v4705 = vpop.xlane.xlu0 %4704
        %v4706 = vsel %vm2369, %v4686, 0.0
        %4707 = vadd.xlane.f32.xlu0 %v4706
        %v4708 = vpop.xlane.xlu0 %4707
        %v4709 = vsel %vm2369, %v4687, 0.0
        %4710 = vadd.xlane.f32.xlu0 %v4709
        %v4711 = vpop.xlane.xlu0 %4710
        %v4712 = vmax.f32 %v4690, 1e-24
        %v4713 = vmax.f32 %v4693, 1e-24
        %v4714 = vmax.f32 %v4696, 1e-24
        %v4715 = vmax.f32 %v4699, 1e-24
        %v4716 = vmax.f32 %v4702, 1e-24
        %v4717 = vmax.f32 %v4705, 1e-24
        %v4718 = vmax.f32 %v4708, 1e-24
        %v4719 = vmax.f32 %v4711, 1e-24
        %v4720 = vrsqrt.pop %v4712
        %v4721 = vrsqrt.pop %v4713
        %v4722 = vrsqrt.pop %v4714
        %v4723 = vrsqrt.pop %v4715
        %v4724 = vrsqrt.pop %v4716
        %v4725 = vrsqrt.pop %v4717
        %v4726 = vrsqrt.pop %v4718
        %v4727 = vrsqrt.pop %v4719
        %v4728 = vmul.f32 %v4668, %v4720
        %v4729 = vmul.f32 %v4669, %v4721
        %v4730 = vmul.f32 %v4670, %v4722
        %v4731 = vmul.f32 %v4671, %v4723
        %v4732 = vmul.f32 %v4676, %v4724
        %v4733 = vmul.f32 %v4677, %v4725
        %v4734 = vmul.f32 %v4678, %v4726
        %v4735 = vmul.f32 %v4679, %v4727
        %s4736 = sld [smem:[#allocation49]]
        %v4737 = vstv %s4736
        %v4738 = vmul.f32 %v4737, %v4728
        %v4739 = vmul.f32 %v4737, %v4729
        %s4740 = sld [smem:[#allocation49 + $0x1]]
        %v4741 = vstv %s4740
        %v4742 = vmul.f32 %v4741, %v4730
        %v4743 = vmul.f32 %v4741, %v4731
        %v4744 = vadd.f32 %v4738, %v4742
        %v4745 = vadd.f32 %v4739, %v4743
        %s4746 = sld [smem:[#allocation49 + $0x2]]
        %v4747 = vstv %s4746
        %v4748 = vmul.f32 %v4747, %v4732
        %v4749 = vmul.f32 %v4747, %v4733
        %v4750 = vadd.f32 %v4744, %v4748
        %v4751 = vadd.f32 %v4745, %v4749
        %s4752 = sld [smem:[#allocation49 + $0x3]]
        %v4753 = vstv %s4752
        %v4754 = vmul.f32 %v4753, %v4734
        %v4755 = vmul.f32 %v4753, %v4735
        %v4756 = vadd.f32 %v4750, %v4754
        %v4757 = vadd.f32 %v4751, %v4755
        %s4758 = sld [smem:[#allocation51]]
        %v4759 = vstv %s4758
        %v4760 = vadd.f32 %v4756, %v4759
        %v4761 = vadd.f32 %v4757, %v4759
        %s4762 = sld [smem:[#allocation49 + $0x80]]
        %v4763 = vstv %s4762
        %v4764 = vmul.f32 %v4763, %v4728
        %v4765 = vmul.f32 %v4763, %v4729
        %s4766 = sld [smem:[#allocation49 + $0x81]]
        %v4767 = vstv %s4766
        %v4768 = vmul.f32 %v4767, %v4730
        %v4769 = vmul.f32 %v4767, %v4731
        %v4770 = vadd.f32 %v4764, %v4768
        %v4771 = vadd.f32 %v4765, %v4769
        %s4772 = sld [smem:[#allocation49 + $0x82]]
        %v4773 = vstv %s4772
        %v4774 = vmul.f32 %v4773, %v4732
        %v4775 = vmul.f32 %v4773, %v4733
        %v4776 = vadd.f32 %v4770, %v4774
        %v4777 = vadd.f32 %v4771, %v4775
        %s4778 = sld [smem:[#allocation49 + $0x83]]
        %v4779 = vstv %s4778
        %v4780 = vmul.f32 %v4779, %v4734
        %v4781 = vmul.f32 %v4779, %v4735
        %v4782 = vadd.f32 %v4776, %v4780
        %v4783 = vadd.f32 %v4777, %v4781
        %s4784 = sld [smem:[#allocation51 + $0x1]]
        %v4785 = vstv %s4784
        %v4786 = vadd.f32 %v4782, %v4785
        %v4787 = vadd.f32 %v4783, %v4785
        %v4788 = vld [vmem:[#allocation40] sm:$0x1]
        %v4789 = vld [vmem:[#allocation42] sm:$0x1]
        %v4790 = vsel %vm2369, %v4760, 0.0
        %4791 = vadd.xlane.f32.xlu0 %v4790
        %v4792 = vpop.xlane.xlu0 %4791
        %v4793 = vsel %vm2369, %v4761, 0.0
        %4794 = vadd.xlane.f32.xlu0 %v4793
        %v4795 = vpop.xlane.xlu0 %4794
        %v4796 = vrcp.pop 32.0
        %v4797 = vmul.f32 %v4792, %v4796
        %v4798 = vmul.f32 %v4795, %v4796
        %v4799 = vsub.f32 %v4760, %v4797
        %v4800 = vsub.f32 %v4761, %v4798
        %v4801 = vmul.f32 %v4799, %v4799
        %v4802 = vmul.f32 %v4800, %v4800
        %v4803 = vsel %vm2369, %v4801, 0.0
        %4804 = vadd.xlane.f32.xlu0 %v4803
        %v4805 = vpop.xlane.xlu0 %4804
        %v4806 = vsel %vm2369, %v4802, 0.0
        %4807 = vadd.xlane.f32.xlu0 %v4806
        %v4808 = vpop.xlane.xlu0 %4807
        %v4809 = vmul.f32 %v4805, %v4796
        %v4810 = vmul.f32 %v4808, %v4796
        %v4811 = vadd.f32 %v4809, 1e-05
        %v4812 = vadd.f32 %v4810, 1e-05
        %v4813 = vrsqrt.pop %v4811
        %v4814 = vrsqrt.pop %v4812
        %v4815 = vmul.f32 %v4799, %v4813
        %v4816 = vmul.f32 %v4800, %v4814
        %v4818 = vlaneseq
        %v4819 = vshrl.u32 %v4818, 7
        %v4820 = vsub.s32 0, %v4819
        %v4821 = vrot.slane %v4788, %v4820
        %v4823 = vmul.f32 %v4815, %v4821
        %v4824 = vmul.f32 %v4816, %v4821
        %v4826 = vlaneseq
        %v4827 = vshrl.u32 %v4826, 7
        %v4828 = vsub.s32 0, %v4827
        %v4829 = vrot.slane %v4789, %v4828
        %v4831 = vadd.f32 %v4823, %v4829
        %v4832 = vadd.f32 %v4824, %v4829
        %v4833 = vld [vmem:[#allocation43] sm:$0x1]
        %v4834 = vld [vmem:[#allocation45] sm:$0x1]
        %v4835 = vsel %vm2369, %v4786, 0.0
        %4836 = vadd.xlane.f32.xlu0 %v4835
        %v4837 = vpop.xlane.xlu0 %4836
        %v4838 = vsel %vm2369, %v4787, 0.0
        %4839 = vadd.xlane.f32.xlu0 %v4838
        %v4840 = vpop.xlane.xlu0 %4839
        %v4841 = vmul.f32 %v4837, %v4796
        %v4842 = vmul.f32 %v4840, %v4796
        %v4843 = vsub.f32 %v4786, %v4841
        %v4844 = vsub.f32 %v4787, %v4842
        %v4845 = vmul.f32 %v4843, %v4843
        %v4846 = vmul.f32 %v4844, %v4844
        %v4847 = vsel %vm2369, %v4845, 0.0
        %4848 = vadd.xlane.f32.xlu0 %v4847
        %v4849 = vpop.xlane.xlu0 %4848
        %v4850 = vsel %vm2369, %v4846, 0.0
        %4851 = vadd.xlane.f32.xlu0 %v4850
        %v4852 = vpop.xlane.xlu0 %4851
        %v4853 = vmul.f32 %v4849, %v4796
        %v4854 = vmul.f32 %v4852, %v4796
        %v4855 = vadd.f32 %v4853, 1e-05
        %v4856 = vadd.f32 %v4854, 1e-05
        %v4857 = vrsqrt.pop %v4855
        %v4858 = vrsqrt.pop %v4856
        %v4859 = vmul.f32 %v4843, %v4857
        %v4860 = vmul.f32 %v4844, %v4858
        %v4862 = vlaneseq
        %v4863 = vshrl.u32 %v4862, 7
        %v4864 = vsub.s32 0, %v4863
        %v4865 = vrot.slane %v4833, %v4864
        %v4867 = vmul.f32 %v4859, %v4865
        %v4868 = vmul.f32 %v4860, %v4865
        %v4870 = vlaneseq
        %v4871 = vshrl.u32 %v4870, 7
        %v4872 = vsub.s32 0, %v4871
        %v4873 = vrot.slane %v4834, %v4872
        %v4875 = vadd.f32 %v4867, %v4873
        %v4876 = vadd.f32 %v4868, %v4873
        %s4877 = scalar_lea.vmem %s33, 32
        %v4878 = vld [vmem:[%s4877] sm:$0xff]
        %v4879 = vld [vmem:[%s4877 + $0x8] sm:$0xff]
        %v4880 = vld [vmem:[%s4877 + $0x10] sm:$0xff]
        %v4881 = vld [vmem:[%s4877 + $0x18] sm:$0xff]
        %s4882 = scalar_lea.vmem [#allocation13], 1
        %v4883 = vld [vmem:[%s4882] sm:$0x1]
        %4884 = vmatprep.subr.mxu0 0.0
        %4885 = vmatpush1.msra.mxu0 0.0
        %4886 = vmatprep.subr.mxu0 0.0
        %4887 = vmatpush1.msra.mxu0 0.0
        %4888 = vmatprep.subr.mxu0 0.0
        %4889 = vmatpush1.msra.mxu0 0.0
        %4890 = vmatprep.subr.mxu0 0.0
        %4891 = vmatpush1.msra.mxu0 0.0
        %4892 = vmatprep.subr.mxu0 0.0
        %4893 = vmatpush1.msra.mxu0 0.0
        %4894 = vmatprep.subr.mxu0 0.0
        %4895 = vmatpush1.msra.mxu0 0.0
        %4896 = vmatprep.subr.mxu0 0.0
        %4897 = vmatpush1.msra.mxu0 0.0
        %4898 = vmatprep.subr.mxu0 0.0
        %4899 = vmatpush1.msra.mxu0 0.0
        %4900 = vmatprep.subr.mxu0 0.0
        %4901 = vmatpush1.msra.mxu0 0.0
        %4902 = vmatprep.subr.mxu0 0.0
        %4903 = vmatpush1.msra.mxu0 0.0
        %4904 = vmatprep.subr.mxu0 0.0
        %4905 = vmatpush1.msra.mxu0 0.0
        %4906 = vmatprep.subr.mxu0 0.0
        %4907 = vmatpush1.msra.mxu0 0.0
        %4908 = vmatprep.subr.mxu0 0.0
        %4909 = vmatpush1.msra.mxu0 %v4881
        %4910 = vmatprep.subr.mxu0 0.0
        %4911 = vmatpush1.msra.mxu0 %v4880
        %4912 = vmatprep.subr.mxu0 0.0
        %4913 = vmatpush1.msra.mxu0 %v4879
        %4914 = vmatprep.subr.mxu0 0.0
        %4915 = vmatpush1.msra.mxu0 %v4878
        %4916 = vmatprep.subr.mxu0 0.0
        %4917 = vmatpush2.msra.mxu0 0.0
        %4918 = vmatprep.subr.mxu0 0.0
        %4919 = vmatpush2.msra.mxu0 0.0
        %4920 = vmatprep.subr.mxu0 0.0
        %4921 = vmatpush2.msra.mxu0 0.0
        %4922 = vmatprep.subr.mxu0 0.0
        %4923 = vmatpush2.msra.mxu0 0.0
        %4924 = vmatprep.subr.mxu0 0.0
        %4925 = vmatpush2.msra.mxu0 0.0
        %4926 = vmatprep.subr.mxu0 0.0
        %4927 = vmatpush2.msra.mxu0 0.0
        %4928 = vmatprep.subr.mxu0 0.0
        %4929 = vmatpush2.msra.mxu0 0.0
        %4930 = vmatprep.subr.mxu0 0.0
        %4931 = vmatpush2.msra.mxu0 0.0
        %4932 = vmatprep.subr.mxu0 0.0
        %4933 = vmatpush2.msra.mxu0 0.0
        %4934 = vmatprep.subr.mxu0 0.0
        %4935 = vmatpush2.msra.mxu0 0.0
        %4936 = vmatprep.subr.mxu0 0.0
        %4937 = vmatpush2.msra.mxu0 0.0
        %4938 = vmatprep.subr.mxu0 0.0
        %4939 = vmatpush2.msra.mxu0 0.0
        %4940 = vmatprep.subr.mxu0 0.0
        %4941 = vmatpush2.msra.mxu0 0.0
        %4942 = vmatprep.subr.mxu0 0.0
        %4943 = vmatpush2.msra.mxu0 0.0
        %4944 = vmatprep.subr.mxu0 0.0
        %4945 = vmatpush2.msra.mxu0 0.0
        %4946 = vmatprep.subr.mxu0 0.0
        %4947 = vmatpush2.msra.mxu0 0.0
        %4948 = vmatprep.mubr.f32.mxu0 0.0
        %4949 = vmatmul.mubr.f32.gmra.mxu0 %v2455
        %v4950 = vpop.f32.mrf.mxu0
        %v4951 = vadd.f32 %v4883, %v4950
        %v4952 = vpop.f32.mrf.mxu0
        %4953 = vdwg.mxu0
        %v4954 = vmul.f32 %v4951, %v2527
        %v4956 = vsel %vm2369, %v4954, 0
        %4958 = vmatprep.subr.mxu0 0.0
        %4959 = vmatpush1.xpose.msra.mxu0 0.0
        %4960 = vmatprep.subr.mxu0 0.0
        %4961 = vmatpush1.xpose.msra.mxu0 0.0
        %4962 = vmatprep.subr.mxu0 0.0
        %4963 = vmatpush1.xpose.msra.mxu0 0.0
        %4964 = vmatprep.subr.mxu0 0.0
        %4965 = vmatpush1.xpose.msra.mxu0 0.0
        %4966 = vmatprep.subr.mxu0 0.0
        %4967 = vmatpush1.xpose.msra.mxu0 0.0
        %4968 = vmatprep.subr.mxu0 0.0
        %4969 = vmatpush1.xpose.msra.mxu0 0.0
        %4970 = vmatprep.subr.mxu0 0.0
        %4971 = vmatpush1.xpose.msra.mxu0 0.0
        %4972 = vmatprep.subr.mxu0 0.0
        %4973 = vmatpush1.xpose.msra.mxu0 0.0
        %4974 = vmatprep.subr.mxu0 0.0
        %4975 = vmatpush1.xpose.msra.mxu0 0.0
        %4976 = vmatprep.subr.mxu0 0.0
        %4977 = vmatpush1.xpose.msra.mxu0 0.0
        %4978 = vmatprep.subr.mxu0 0.0
        %4979 = vmatpush1.xpose.msra.mxu0 0.0
        %4980 = vmatprep.subr.mxu0 0.0
        %4981 = vmatpush1.xpose.msra.mxu0 0.0
        %4982 = vmatprep.subr.mxu0 0.0
        %4983 = vmatpush1.xpose.msra.mxu0 0.0
        %4984 = vmatprep.subr.mxu0 0.0
        %4985 = vmatpush1.xpose.msra.mxu0 0.0
        %4986 = vmatprep.subr.mxu0 0.0
        %4987 = vmatpush1.xpose.msra.mxu0 0.0
        %4988 = vmatprep.subr.mxu0 0.0
        %4989 = vmatpush1.xpose.msra.mxu0 %v2535
        %4990 = vmatprep.subr.mxu0 0.0
        %4991 = vmatpush2.xpose.msra.mxu0 0.0
        %4992 = vmatprep.subr.mxu0 0.0
        %4993 = vmatpush2.xpose.msra.mxu0 0.0
        %4994 = vmatprep.subr.mxu0 0.0
        %4995 = vmatpush2.xpose.msra.mxu0 0.0
        %4996 = vmatprep.subr.mxu0 0.0
        %4997 = vmatpush2.xpose.msra.mxu0 0.0
        %4998 = vmatprep.subr.mxu0 0.0
        %4999 = vmatpush2.xpose.msra.mxu0 0.0
        %5000 = vmatprep.subr.mxu0 0.0
        %5001 = vmatpush2.xpose.msra.mxu0 0.0
        %5002 = vmatprep.subr.mxu0 0.0
        %5003 = vmatpush2.xpose.msra.mxu0 0.0
        %5004 = vmatprep.subr.mxu0 0.0
        %5005 = vmatpush2.xpose.msra.mxu0 0.0
        %5006 = vmatprep.subr.mxu0 0.0
        %5007 = vmatpush2.xpose.msra.mxu0 0.0
        %5008 = vmatprep.subr.mxu0 0.0
        %5009 = vmatpush2.xpose.msra.mxu0 0.0
        %5010 = vmatprep.subr.mxu0 0.0
        %5011 = vmatpush2.xpose.msra.mxu0 0.0
        %5012 = vmatprep.subr.mxu0 0.0
        %5013 = vmatpush2.xpose.msra.mxu0 0.0
        %5014 = vmatprep.subr.mxu0 0.0
        %5015 = vmatpush2.xpose.msra.mxu0 0.0
        %5016 = vmatprep.subr.mxu0 0.0
        %5017 = vmatpush2.xpose.msra.mxu0 0.0
        %5018 = vmatprep.subr.mxu0 0.0
        %5019 = vmatpush2.xpose.msra.mxu0 0.0
        %5020 = vmatprep.subr.mxu0 0.0
        %5021 = vmatpush2.xpose.msra.mxu0 0.0
        %5022 = vmatprep.mubr.f32.mxu0 0.0
        %5023 = vmatmul.mubr.f32.gmra.mxu0 %v4956
        %v5024 = vpop.f32.mrf.mxu0
        %v5025 = vadd.f32 %v2530, %v5024
        %v5026 = vpop.f32.mrf.mxu0
        %5027 = vdwg.mxu0
        %v5028 = vsel %vm2607, -1e+30, %v5025
        %v5029 = vsel %vm2609, %v5028, -inf
        %5030 = vmax.xlane.f32.xlu0 %v5029
        %v5031 = vpop.xlane.xlu0 %5030
        %v5032 = vsub.f32 %v5028, %v5031
        %v5033 = vmul.f32 %v5032, 1.442695
        %v5034 = vpow.pop %v5033
        %v5035 = vsel %vm2609, %v5034, 0.0
        %5036 = vadd.xlane.f32.xlu0 %v5035
        %v5037 = vpop.xlane.xlu0 %5036
        %v5038 = vrcp.pop %v5037
        %v5039 = vmul.f32 %v5034, %v5038
        %v5041 = vsel %vm2621, %v5039, 0
        %5043 = vmatprep.subr.mxu0 0.0
        %5044 = vmatpush1.msra.mxu0 0.0
        %5045 = vmatprep.subr.mxu0 0.0
        %5046 = vmatpush1.msra.mxu0 0.0
        %5047 = vmatprep.subr.mxu0 0.0
        %5048 = vmatpush1.msra.mxu0 0.0
        %5049 = vmatprep.subr.mxu0 0.0
        %5050 = vmatpush1.msra.mxu0 0.0
        %5051 = vmatprep.subr.mxu0 0.0
        %5052 = vmatpush1.msra.mxu0 0.0
        %5053 = vmatprep.subr.mxu0 0.0
        %5054 = vmatpush1.msra.mxu0 0.0
        %5055 = vmatprep.subr.mxu0 0.0
        %5056 = vmatpush1.msra.mxu0 0.0
        %5057 = vmatprep.subr.mxu0 0.0
        %5058 = vmatpush1.msra.mxu0 0.0
        %5059 = vmatprep.subr.mxu0 0.0
        %5060 = vmatpush1.msra.mxu0 0.0
        %5061 = vmatprep.subr.mxu0 0.0
        %5062 = vmatpush1.msra.mxu0 0.0
        %5063 = vmatprep.subr.mxu0 0.0
        %5064 = vmatpush1.msra.mxu0 0.0
        %5065 = vmatprep.subr.mxu0 0.0
        %5066 = vmatpush1.msra.mxu0 0.0
        %5067 = vmatprep.subr.mxu0 0.0
        %5068 = vmatpush1.msra.mxu0 0.0
        %5069 = vmatprep.subr.mxu0 0.0
        %5070 = vmatpush1.msra.mxu0 0.0
        %5071 = vmatprep.subr.mxu0 0.0
        %5072 = vmatpush1.msra.mxu0 0.0
        %5073 = vmatprep.subr.mxu0 0.0
        %5074 = vmatpush1.msra.mxu0 %v2352
        %5075 = vmatprep.subr.mxu0 0.0
        %5076 = vmatpush2.msra.mxu0 0.0
        %5077 = vmatprep.subr.mxu0 0.0
        %5078 = vmatpush2.msra.mxu0 0.0
        %5079 = vmatprep.subr.mxu0 0.0
        %5080 = vmatpush2.msra.mxu0 0.0
        %5081 = vmatprep.subr.mxu0 0.0
        %5082 = vmatpush2.msra.mxu0 0.0
        %5083 = vmatprep.subr.mxu0 0.0
        %5084 = vmatpush2.msra.mxu0 0.0
        %5085 = vmatprep.subr.mxu0 0.0
        %5086 = vmatpush2.msra.mxu0 0.0
        %5087 = vmatprep.subr.mxu0 0.0
        %5088 = vmatpush2.msra.mxu0 0.0
        %5089 = vmatprep.subr.mxu0 0.0
        %5090 = vmatpush2.msra.mxu0 0.0
        %5091 = vmatprep.subr.mxu0 0.0
        %5092 = vmatpush2.msra.mxu0 0.0
        %5093 = vmatprep.subr.mxu0 0.0
        %5094 = vmatpush2.msra.mxu0 0.0
        %5095 = vmatprep.subr.mxu0 0.0
        %5096 = vmatpush2.msra.mxu0 0.0
        %5097 = vmatprep.subr.mxu0 0.0
        %5098 = vmatpush2.msra.mxu0 0.0
        %5099 = vmatprep.subr.mxu0 0.0
        %5100 = vmatpush2.msra.mxu0 0.0
        %5101 = vmatprep.subr.mxu0 0.0
        %5102 = vmatpush2.msra.mxu0 0.0
        %5103 = vmatprep.subr.mxu0 0.0
        %5104 = vmatpush2.msra.mxu0 0.0
        %5105 = vmatprep.subr.mxu0 0.0
        %5106 = vmatpush2.msra.mxu0 0.0
        %5107 = vmatprep.mubr.f32.mxu0 0.0
        %5108 = vmatmul.mubr.f32.gmra.mxu0 %v5041
        %v5109 = vpop.f32.mrf.mxu0
        %v5110 = vadd.f32 0.0, %v5109
        %v5111 = vpop.f32.mrf.mxu0
        %5112 = vdwg.mxu0
        %v5114 = vsel %vm2369, %v4831, 0
        %v5117 = vsel %vm2369, %v4832, 0
        %5119 = vmatprep.subr.mxu0 0.0
        %5120 = vmatpush1.msra.mxu0 0.0
        %5121 = vmatprep.subr.mxu0 0.0
        %5122 = vmatpush1.msra.mxu0 0.0
        %5123 = vmatprep.subr.mxu0 0.0
        %5124 = vmatpush1.msra.mxu0 0.0
        %5125 = vmatprep.subr.mxu0 0.0
        %5126 = vmatpush1.msra.mxu0 0.0
        %5127 = vmatprep.subr.mxu0 0.0
        %5128 = vmatpush1.msra.mxu0 0.0
        %5129 = vmatprep.subr.mxu0 0.0
        %5130 = vmatpush1.msra.mxu0 0.0
        %5131 = vmatprep.subr.mxu0 0.0
        %5132 = vmatpush1.msra.mxu0 0.0
        %5133 = vmatprep.subr.mxu0 0.0
        %5134 = vmatpush1.msra.mxu0 0.0
        %5135 = vmatprep.subr.mxu0 0.0
        %5136 = vmatpush1.msra.mxu0 0.0
        %5137 = vmatprep.subr.mxu0 0.0
        %5138 = vmatpush1.msra.mxu0 0.0
        %5139 = vmatprep.subr.mxu0 0.0
        %5140 = vmatpush1.msra.mxu0 0.0
        %5141 = vmatprep.subr.mxu0 0.0
        %5142 = vmatpush1.msra.mxu0 0.0
        %5143 = vmatprep.subr.mxu0 0.0
        %5144 = vmatpush1.msra.mxu0 %v2790
        %5145 = vmatprep.subr.mxu0 0.0
        %5146 = vmatpush1.msra.mxu0 %v2789
        %5147 = vmatprep.subr.mxu0 0.0
        %5148 = vmatpush1.msra.mxu0 %v2788
        %5149 = vmatprep.subr.mxu0 0.0
        %5150 = vmatpush1.msra.mxu0 %v2787
        %5151 = vmatprep.subr.mxu0 0.0
        %5152 = vmatpush2.msra.mxu0 0.0
        %5153 = vmatprep.subr.mxu0 0.0
        %5154 = vmatpush2.msra.mxu0 0.0
        %5155 = vmatprep.subr.mxu0 0.0
        %5156 = vmatpush2.msra.mxu0 0.0
        %5157 = vmatprep.subr.mxu0 0.0
        %5158 = vmatpush2.msra.mxu0 0.0
        %5159 = vmatprep.subr.mxu0 0.0
        %5160 = vmatpush2.msra.mxu0 0.0
        %5161 = vmatprep.subr.mxu0 0.0
        %5162 = vmatpush2.msra.mxu0 0.0
        %5163 = vmatprep.subr.mxu0 0.0
        %5164 = vmatpush2.msra.mxu0 0.0
        %5165 = vmatprep.subr.mxu0 0.0
        %5166 = vmatpush2.msra.mxu0 0.0
        %5167 = vmatprep.subr.mxu0 0.0
        %5168 = vmatpush2.msra.mxu0 0.0
        %5169 = vmatprep.subr.mxu0 0.0
        %5170 = vmatpush2.msra.mxu0 0.0
        %5171 = vmatprep.subr.mxu0 0.0
        %5172 = vmatpush2.msra.mxu0 0.0
        %5173 = vmatprep.subr.mxu0 0.0
        %5174 = vmatpush2.msra.mxu0 0.0
        %5175 = vmatprep.subr.mxu0 0.0
        %5176 = vmatpush2.msra.mxu0 0.0
        %5177 = vmatprep.subr.mxu0 0.0
        %5178 = vmatpush2.msra.mxu0 0.0
        %5179 = vmatprep.subr.mxu0 0.0
        %5180 = vmatpush2.msra.mxu0 0.0
        %5181 = vmatprep.subr.mxu0 0.0
        %5182 = vmatpush2.msra.mxu0 0.0
        %5183 = vmatprep.mubr.f32.mxu0 0.0
        %5184 = vmatmul.mubr.f32.gmra.mxu0 %v5114
        %v5185 = vpop.f32.mrf.mxu0
        %v5186 = vadd.f32 %v2796, %v5185
        %v5187 = vpop.f32.mrf.mxu0
        %5188 = vmatprep.mubr.f32.mxu0 0.0
        %5189 = vmatmul.mubr.f32.gmra.mxu0 %v5117
        %v5190 = vpop.f32.mrf.mxu0
        %v5191 = vadd.f32 %v2796, %v5190
        %v5192 = vpop.f32.mrf.mxu0
        %5193 = vdwg.mxu0
        %v5194 = vmul.f32 %v2779, %v5186
        %v5195 = vmul.f32 %v2784, %v5191
        %5196 = vrot.lane.b32.xlu0 %v4831, 32
        %v5197 = vpop.permute.xlu0 %5196
        %5198 = vrot.lane.b32.xlu0 %v4832, 32
        %v5199 = vpop.permute.xlu0 %5198
        %5204 = vrot.lane.b32.xlu0 %v5194, 64
        %v5205 = vpop.permute.xlu0 %5204
        %5206 = vrot.lane.b32.xlu0 %v5195, 64
        %v5207 = vpop.permute.xlu0 %5206
        %v5210 = vsel %vm2369, %v2337, %v5197
        %v5211 = vsel %vm2369, %v2342, %v5199
        %v5212 = vsel %vm2236, %v5210, %v5205
        %v5213 = vsel %vm2236, %v5211, %v5207
        %v5215 = vsel %vm2911, %v5212, 0
        %v5218 = vsel %vm2911, %v5213, 0
        %5220 = vmatprep.subr.mxu0 0.0
        %5221 = vmatpush1.msra.mxu0 0.0
        %5222 = vmatprep.subr.mxu0 0.0
        %5223 = vmatpush1.msra.mxu0 0.0
        %5224 = vmatprep.subr.mxu0 0.0
        %5225 = vmatpush1.msra.mxu0 0.0
        %5226 = vmatprep.subr.mxu0 0.0
        %5227 = vmatpush1.msra.mxu0 0.0
        %5228 = vmatprep.subr.mxu0 0.0
        %5229 = vmatpush1.msra.mxu0 %v2903
        %5230 = vmatprep.subr.mxu0 0.0
        %5231 = vmatpush1.msra.mxu0 %v2902
        %5232 = vmatprep.subr.mxu0 0.0
        %5233 = vmatpush1.msra.mxu0 %v2901
        %5234 = vmatprep.subr.mxu0 0.0
        %5235 = vmatpush1.msra.mxu0 %v2900
        %5236 = vmatprep.subr.mxu0 0.0
        %5237 = vmatpush1.msra.mxu0 %v2899
        %5238 = vmatprep.subr.mxu0 0.0
        %5239 = vmatpush1.msra.mxu0 %v2898
        %5240 = vmatprep.subr.mxu0 0.0
        %5241 = vmatpush1.msra.mxu0 %v2897
        %5242 = vmatprep.subr.mxu0 0.0
        %5243 = vmatpush1.msra.mxu0 %v2896
        %5244 = vmatprep.subr.mxu0 0.0
        %5245 = vmatpush1.msra.mxu0 %v2895
        %5246 = vmatprep.subr.mxu0 0.0
        %5247 = vmatpush1.msra.mxu0 %v2894
        %5248 = vmatprep.subr.mxu0 0.0
        %5249 = vmatpush1.msra.mxu0 %v2893
        %5250 = vmatprep.subr.mxu0 0.0
        %5251 = vmatpush1.msra.mxu0 %v2892
        %5252 = vmatprep.subr.mxu0 0.0
        %5253 = vmatpush2.msra.mxu0 0.0
        %5254 = vmatprep.subr.mxu0 0.0
        %5255 = vmatpush2.msra.mxu0 0.0
        %5256 = vmatprep.subr.mxu0 0.0
        %5257 = vmatpush2.msra.mxu0 0.0
        %5258 = vmatprep.subr.mxu0 0.0
        %5259 = vmatpush2.msra.mxu0 0.0
        %5260 = vmatprep.subr.mxu0 0.0
        %5261 = vmatpush2.msra.mxu0 0.0
        %5262 = vmatprep.subr.mxu0 0.0
        %5263 = vmatpush2.msra.mxu0 0.0
        %5264 = vmatprep.subr.mxu0 0.0
        %5265 = vmatpush2.msra.mxu0 0.0
        %5266 = vmatprep.subr.mxu0 0.0
        %5267 = vmatpush2.msra.mxu0 0.0
        %5268 = vmatprep.subr.mxu0 0.0
        %5269 = vmatpush2.msra.mxu0 0.0
        %5270 = vmatprep.subr.mxu0 0.0
        %5271 = vmatpush2.msra.mxu0 0.0
        %5272 = vmatprep.subr.mxu0 0.0
        %5273 = vmatpush2.msra.mxu0 0.0
        %5274 = vmatprep.subr.mxu0 0.0
        %5275 = vmatpush2.msra.mxu0 0.0
        %5276 = vmatprep.subr.mxu0 0.0
        %5277 = vmatpush2.msra.mxu0 0.0
        %5278 = vmatprep.subr.mxu0 0.0
        %5279 = vmatpush2.msra.mxu0 0.0
        %5280 = vmatprep.subr.mxu0 0.0
        %5281 = vmatpush2.msra.mxu0 0.0
        %5282 = vmatprep.subr.mxu0 0.0
        %5283 = vmatpush2.msra.mxu0 0.0
        %5284 = vmatprep.mubr.f32.mxu0 0.0
        %5285 = vmatmul.mubr.f32.gmra.mxu0 %v5215
        %v5286 = vpop.f32.mrf.mxu0
        %v5287 = vadd.f32 %v2909, %v5286
        %v5288 = vpop.f32.mrf.mxu0
        %5289 = vmatprep.mubr.f32.mxu0 0.0
        %5290 = vmatmul.mubr.f32.gmra.mxu0 %v5218
        %v5291 = vpop.f32.mrf.mxu0
        %v5292 = vadd.f32 %v2909, %v5291
        %v5293 = vpop.f32.mrf.mxu0
        %5294 = vdwg.mxu0
        %v5296 = vsel %vm2369, %v5110, 0
        %5298 = vmatprep.subr.mxu0 0.0
        %5299 = vmatpush1.msra.mxu0 0.0
        %5300 = vmatprep.subr.mxu0 0.0
        %5301 = vmatpush1.msra.mxu0 0.0
        %5302 = vmatprep.subr.mxu0 0.0
        %5303 = vmatpush1.msra.mxu0 0.0
        %5304 = vmatprep.subr.mxu0 0.0
        %5305 = vmatpush1.msra.mxu0 0.0
        %5306 = vmatprep.subr.mxu0 0.0
        %5307 = vmatpush1.msra.mxu0 0.0
        %5308 = vmatprep.subr.mxu0 0.0
        %5309 = vmatpush1.msra.mxu0 0.0
        %5310 = vmatprep.subr.mxu0 0.0
        %5311 = vmatpush1.msra.mxu0 0.0
        %5312 = vmatprep.subr.mxu0 0.0
        %5313 = vmatpush1.msra.mxu0 0.0
        %5314 = vmatprep.subr.mxu0 0.0
        %5315 = vmatpush1.msra.mxu0 0.0
        %5316 = vmatprep.subr.mxu0 0.0
        %5317 = vmatpush1.msra.mxu0 0.0
        %5318 = vmatprep.subr.mxu0 0.0
        %5319 = vmatpush1.msra.mxu0 0.0
        %5320 = vmatprep.subr.mxu0 0.0
        %5321 = vmatpush1.msra.mxu0 0.0
        %5322 = vmatprep.subr.mxu0 0.0
        %5323 = vmatpush1.msra.mxu0 %v2996
        %5324 = vmatprep.subr.mxu0 0.0
        %5325 = vmatpush1.msra.mxu0 %v2995
        %5326 = vmatprep.subr.mxu0 0.0
        %5327 = vmatpush1.msra.mxu0 %v2994
        %5328 = vmatprep.subr.mxu0 0.0
        %5329 = vmatpush1.msra.mxu0 %v2993
        %5330 = vmatprep.subr.mxu0 0.0
        %5331 = vmatpush2.msra.mxu0 0.0
        %5332 = vmatprep.subr.mxu0 0.0
        %5333 = vmatpush2.msra.mxu0 0.0
        %5334 = vmatprep.subr.mxu0 0.0
        %5335 = vmatpush2.msra.mxu0 0.0
        %5336 = vmatprep.subr.mxu0 0.0
        %5337 = vmatpush2.msra.mxu0 0.0
        %5338 = vmatprep.subr.mxu0 0.0
        %5339 = vmatpush2.msra.mxu0 0.0
        %5340 = vmatprep.subr.mxu0 0.0
        %5341 = vmatpush2.msra.mxu0 0.0
        %5342 = vmatprep.subr.mxu0 0.0
        %5343 = vmatpush2.msra.mxu0 0.0
        %5344 = vmatprep.subr.mxu0 0.0
        %5345 = vmatpush2.msra.mxu0 0.0
        %5346 = vmatprep.subr.mxu0 0.0
        %5347 = vmatpush2.msra.mxu0 0.0
        %5348 = vmatprep.subr.mxu0 0.0
        %5349 = vmatpush2.msra.mxu0 0.0
        %5350 = vmatprep.subr.mxu0 0.0
        %5351 = vmatpush2.msra.mxu0 0.0
        %5352 = vmatprep.subr.mxu0 0.0
        %5353 = vmatpush2.msra.mxu0 0.0
        %5354 = vmatprep.subr.mxu0 0.0
        %5355 = vmatpush2.msra.mxu0 0.0
        %5356 = vmatprep.subr.mxu0 0.0
        %5357 = vmatpush2.msra.mxu0 0.0
        %5358 = vmatprep.subr.mxu0 0.0
        %5359 = vmatpush2.msra.mxu0 0.0
        %5360 = vmatprep.subr.mxu0 0.0
        %5361 = vmatpush2.msra.mxu0 0.0
        %5362 = vmatprep.mubr.f32.mxu0 0.0
        %5363 = vmatmul.mubr.f32.gmra.mxu0 %v5296
        %v5364 = vpop.f32.mrf.mxu0
        %v5365 = vadd.f32 %v2997, %v5364
        %v5366 = vpop.f32.mrf.mxu0
        %5367 = vdwg.mxu0
        %v5368 = vmul.f32 %v5365, 0.17677669
        %v5369 = vlaneseq
        %v5370 = vshrl.u32 %v5369, 7
        %v5371 = vsub.s32 0, %v5370
        %v5372 = vrot.slane %v5368, %v5371
        %5374 = vrot.lane.b32.xlu0 %v5372, 32
        %v5375 = vpop.permute.xlu0 %5374
        %v5377 = vmul.f32 %v5287, %v5375
        %v5378 = vmul.f32 %v5292, %v5375
        %v5379 = vlaneseq
        %v5380 = vshrl.u32 %v5379, 7
        %v5381 = vsub.s32 0, %v5380
        %v5382 = vrot.slane %v5365, %v5381
        %5384 = vrot.lane.b32.xlu0 %v5382, 32
        %v5385 = vpop.permute.xlu0 %5384
        %v5387 = vmul.f32 %v5287, %v5385
        %v5388 = vmul.f32 %v5292, %v5385
        %5391 = vrot.lane.b32.xlu0 %v5377, 96
        %v5392 = vpop.permute.xlu0 %5391
        %5393 = vrot.lane.b32.xlu0 %v5378, 96
        %v5394 = vpop.permute.xlu0 %5393
        %v5396 = vsel %vm2369, %v5287, 0
        %v5399 = vsel %vm2369, %v5292, 0
        %v5401 = vsel %vm2369, %v5392, 0
        %v5403 = vsel %vm2369, %v5394, 0
        %5405 = vmatprep.subr.mxu0 0.0
        %5406 = vmatpush1.xpose.msra.mxu0 0.0
        %5407 = vmatprep.subr.mxu0 0.0
        %5408 = vmatpush1.xpose.msra.mxu0 0.0
        %5409 = vmatprep.subr.mxu0 0.0
        %5410 = vmatpush1.xpose.msra.mxu0 0.0
        %5411 = vmatprep.subr.mxu0 0.0
        %5412 = vmatpush1.xpose.msra.mxu0 0.0
        %5413 = vmatprep.subr.mxu0 0.0
        %5414 = vmatpush1.xpose.msra.mxu0 0.0
        %5415 = vmatprep.subr.mxu0 0.0
        %5416 = vmatpush1.xpose.msra.mxu0 0.0
        %5417 = vmatprep.subr.mxu0 0.0
        %5418 = vmatpush1.xpose.msra.mxu0 0.0
        %5419 = vmatprep.subr.mxu0 0.0
        %5420 = vmatpush1.xpose.msra.mxu0 0.0
        %5421 = vmatprep.subr.mxu0 0.0
        %5422 = vmatpush1.xpose.msra.mxu0 0.0
        %5423 = vmatprep.subr.mxu0 0.0
        %5424 = vmatpush1.xpose.msra.mxu0 0.0
        %5425 = vmatprep.subr.mxu0 0.0
        %5426 = vmatpush1.xpose.msra.mxu0 0.0
        %5427 = vmatprep.subr.mxu0 0.0
        %5428 = vmatpush1.xpose.msra.mxu0 0.0
        %5429 = vmatprep.subr.mxu0 0.0
        %5430 = vmatpush1.xpose.msra.mxu0 0.0
        %5431 = vmatprep.subr.mxu0 0.0
        %5432 = vmatpush1.xpose.msra.mxu0 0.0
        %5433 = vmatprep.subr.mxu0 0.0
        %5434 = vmatpush1.xpose.msra.mxu0 %v5403
        %5435 = vmatprep.subr.mxu0 0.0
        %5436 = vmatpush1.xpose.msra.mxu0 %v5401
        %5437 = vmatprep.subr.mxu0 0.0
        %5438 = vmatpush2.xpose.msra.mxu0 0.0
        %5439 = vmatprep.subr.mxu0 0.0
        %5440 = vmatpush2.xpose.msra.mxu0 0.0
        %5441 = vmatprep.subr.mxu0 0.0
        %5442 = vmatpush2.xpose.msra.mxu0 0.0
        %5443 = vmatprep.subr.mxu0 0.0
        %5444 = vmatpush2.xpose.msra.mxu0 0.0
        %5445 = vmatprep.subr.mxu0 0.0
        %5446 = vmatpush2.xpose.msra.mxu0 0.0
        %5447 = vmatprep.subr.mxu0 0.0
        %5448 = vmatpush2.xpose.msra.mxu0 0.0
        %5449 = vmatprep.subr.mxu0 0.0
        %5450 = vmatpush2.xpose.msra.mxu0 0.0
        %5451 = vmatprep.subr.mxu0 0.0
        %5452 = vmatpush2.xpose.msra.mxu0 0.0
        %5453 = vmatprep.subr.mxu0 0.0
        %5454 = vmatpush2.xpose.msra.mxu0 0.0
        %5455 = vmatprep.subr.mxu0 0.0
        %5456 = vmatpush2.xpose.msra.mxu0 0.0
        %5457 = vmatprep.subr.mxu0 0.0
        %5458 = vmatpush2.xpose.msra.mxu0 0.0
        %5459 = vmatprep.subr.mxu0 0.0
        %5460 = vmatpush2.xpose.msra.mxu0 0.0
        %5461 = vmatprep.subr.mxu0 0.0
        %5462 = vmatpush2.xpose.msra.mxu0 0.0
        %5463 = vmatprep.subr.mxu0 0.0
        %5464 = vmatpush2.xpose.msra.mxu0 0.0
        %5465 = vmatprep.subr.mxu0 0.0
        %5466 = vmatpush2.xpose.msra.mxu0 0.0
        %5467 = vmatprep.subr.mxu0 0.0
        %5468 = vmatpush2.xpose.msra.mxu0 0.0
        %5469 = vmatprep.mubr.f32.mxu0 0.0
        %5470 = vmatmul.mubr.f32.gmra.mxu0 %v5396
        %v5471 = vpop.f32.mrf.mxu0
        %v5472 = vadd.f32 0.0, %v5471
        %v5473 = vpop.f32.mrf.mxu0
        %5474 = vmatprep.mubr.f32.mxu0 0.0
        %5475 = vmatmul.mubr.f32.gmra.mxu0 %v5399
        %v5476 = vpop.f32.mrf.mxu0
        %v5477 = vadd.f32 0.0, %v5476
        %v5478 = vpop.f32.mrf.mxu0
        %5479 = vdwg.mxu0
        %v5480 = vsel %vm3183, -1e+30, %v5472
        %v5481 = vsel %vm3184, -1e+30, %v5477
        %v5482 = vsel %vm3187, %v5480, -inf
        %5483 = vmax.xlane.f32.xlu0 %v5482
        %v5484 = vpop.xlane.xlu0 %5483
        %v5485 = vsel %vm3187, %v5481, -inf
        %5486 = vmax.xlane.f32.xlu0 %v5485
        %v5487 = vpop.xlane.xlu0 %5486
        %v5488 = vsub.f32 %v5480, %v5484
        %v5489 = vsub.f32 %v5481, %v5487
        %v5490 = vmul.f32 %v5488, 1.442695
        %v5491 = vpow.pop %v5490
        %v5492 = vmul.f32 %v5489, 1.442695
        %v5493 = vpow.pop %v5492
        %v5494 = vsel %vm3187, %v5491, 0.0
        %5495 = vadd.xlane.f32.xlu0 %v5494
        %v5496 = vpop.xlane.xlu0 %5495
        %v5497 = vsel %vm3187, %v5493, 0.0
        %5498 = vadd.xlane.f32.xlu0 %v5497
        %v5499 = vpop.xlane.xlu0 %5498
        %v5500 = vrcp.pop %v5496
        %v5501 = vmul.f32 %v5491, %v5500
        %v5502 = vrcp.pop %v5499
        %v5503 = vmul.f32 %v5493, %v5502
        %5506 = vrot.lane.b32.xlu0 %v5387, 64
        %v5507 = vpop.permute.xlu0 %5506
        %5508 = vrot.lane.b32.xlu0 %v5388, 64
        %v5509 = vpop.permute.xlu0 %5508
        %v5513 = vsel %vm3187, %v5501, 0
        %v5516 = vsel %vm3187, %v5503, 0
        %5518 = vmatprep.subr.mxu0 0.0
        %5519 = vmatpush1.msra.mxu0 0.0
        %5520 = vmatprep.subr.mxu0 0.0
        %5521 = vmatpush1.msra.mxu0 0.0
        %5522 = vmatprep.subr.mxu0 0.0
        %5523 = vmatpush1.msra.mxu0 0.0
        %5524 = vmatprep.subr.mxu0 0.0
        %5525 = vmatpush1.msra.mxu0 0.0
        %5526 = vmatprep.subr.mxu0 0.0
        %5527 = vmatpush1.msra.mxu0 0.0
        %5528 = vmatprep.subr.mxu0 0.0
        %5529 = vmatpush1.msra.mxu0 0.0
        %5530 = vmatprep.subr.mxu0 0.0
        %5531 = vmatpush1.msra.mxu0 0.0
        %5532 = vmatprep.subr.mxu0 0.0
        %5533 = vmatpush1.msra.mxu0 0.0
        %5534 = vmatprep.subr.mxu0 0.0
        %5535 = vmatpush1.msra.mxu0 0.0
        %5536 = vmatprep.subr.mxu0 0.0
        %5537 = vmatpush1.msra.mxu0 0.0
        %5538 = vmatprep.subr.mxu0 0.0
        %5539 = vmatpush1.msra.mxu0 0.0
        %5540 = vmatprep.subr.mxu0 0.0
        %5541 = vmatpush1.msra.mxu0 0.0
        %5542 = vmatprep.subr.mxu0 0.0
        %5543 = vmatpush1.msra.mxu0 0.0
        %5544 = vmatprep.subr.mxu0 0.0
        %5545 = vmatpush1.msra.mxu0 0.0
        %5546 = vmatprep.subr.mxu0 0.0
        %5547 = vmatpush1.msra.mxu0 %v5509
        %5548 = vmatprep.subr.mxu0 0.0
        %5549 = vmatpush1.msra.mxu0 %v5507
        %5550 = vmatprep.subr.mxu0 0.0
        %5551 = vmatpush2.msra.mxu0 0.0
        %5552 = vmatprep.subr.mxu0 0.0
        %5553 = vmatpush2.msra.mxu0 0.0
        %5554 = vmatprep.subr.mxu0 0.0
        %5555 = vmatpush2.msra.mxu0 0.0
        %5556 = vmatprep.subr.mxu0 0.0
        %5557 = vmatpush2.msra.mxu0 0.0
        %5558 = vmatprep.subr.mxu0 0.0
        %5559 = vmatpush2.msra.mxu0 0.0
        %5560 = vmatprep.subr.mxu0 0.0
        %5561 = vmatpush2.msra.mxu0 0.0
        %5562 = vmatprep.subr.mxu0 0.0
        %5563 = vmatpush2.msra.mxu0 0.0
        %5564 = vmatprep.subr.mxu0 0.0
        %5565 = vmatpush2.msra.mxu0 0.0
        %5566 = vmatprep.subr.mxu0 0.0
        %5567 = vmatpush2.msra.mxu0 0.0
        %5568 = vmatprep.subr.mxu0 0.0
        %5569 = vmatpush2.msra.mxu0 0.0
        %5570 = vmatprep.subr.mxu0 0.0
        %5571 = vmatpush2.msra.mxu0 0.0
        %5572 = vmatprep.subr.mxu0 0.0
        %5573 = vmatpush2.msra.mxu0 0.0
        %5574 = vmatprep.subr.mxu0 0.0
        %5575 = vmatpush2.msra.mxu0 0.0
        %5576 = vmatprep.subr.mxu0 0.0
        %5577 = vmatpush2.msra.mxu0 0.0
        %5578 = vmatprep.subr.mxu0 0.0
        %5579 = vmatpush2.msra.mxu0 0.0
        %5580 = vmatprep.subr.mxu0 0.0
        %5581 = vmatpush2.msra.mxu0 0.0
        %5582 = vmatprep.mubr.f32.mxu0 0.0
        %5583 = vmatmul.mubr.f32.gmra.mxu0 %v5513
        %v5584 = vpop.f32.mrf.mxu0
        %v5585 = vadd.f32 0.0, %v5584
        %v5586 = vpop.f32.mrf.mxu0
        %5587 = vmatprep.mubr.f32.mxu0 0.0
        %5588 = vmatmul.mubr.f32.gmra.mxu0 %v5516
        %v5589 = vpop.f32.mrf.mxu0
        %v5590 = vadd.f32 0.0, %v5589
        %v5591 = vpop.f32.mrf.mxu0
        %5592 = vdwg.mxu0
        %5595 = vrot.lane.b32.xlu0 %v5585, 32
        %v5596 = vpop.permute.xlu0 %5595
        %5597 = vrot.lane.b32.xlu0 %v5590, 32
        %v5598 = vpop.permute.xlu0 %5597
        %v5601 = vsel %vm2369, %v4831, %v5596
        %v5602 = vsel %vm2369, %v4832, %v5598
        %v5604 = vsel %vm2236, %v5601, 0
        %v5607 = vsel %vm2236, %v5602, 0
        %5609 = vmatprep.subr.mxu0 0.0
        %5610 = vmatpush1.msra.mxu0 0.0
        %5611 = vmatprep.subr.mxu0 0.0
        %5612 = vmatpush1.msra.mxu0 0.0
        %5613 = vmatprep.subr.mxu0 0.0
        %5614 = vmatpush1.msra.mxu0 0.0
        %5615 = vmatprep.subr.mxu0 0.0
        %5616 = vmatpush1.msra.mxu0 0.0
        %5617 = vmatprep.subr.mxu0 0.0
        %5618 = vmatpush1.msra.mxu0 0.0
        %5619 = vmatprep.subr.mxu0 0.0
        %5620 = vmatpush1.msra.mxu0 0.0
        %5621 = vmatprep.subr.mxu0 0.0
        %5622 = vmatpush1.msra.mxu0 0.0
        %5623 = vmatprep.subr.mxu0 0.0
        %5624 = vmatpush1.msra.mxu0 0.0
        %5625 = vmatprep.subr.mxu0 0.0
        %5626 = vmatpush1.msra.mxu0 %v3316
        %5627 = vmatprep.subr.mxu0 0.0
        %5628 = vmatpush1.msra.mxu0 %v3315
        %5629 = vmatprep.subr.mxu0 0.0
        %5630 = vmatpush1.msra.mxu0 %v3314
        %5631 = vmatprep.subr.mxu0 0.0
        %5632 = vmatpush1.msra.mxu0 %v3313
        %5633 = vmatprep.subr.mxu0 0.0
        %5634 = vmatpush1.msra.mxu0 %v3312
        %5635 = vmatprep.subr.mxu0 0.0
        %5636 = vmatpush1.msra.mxu0 %v3311
        %5637 = vmatprep.subr.mxu0 0.0
        %5638 = vmatpush1.msra.mxu0 %v3310
        %5639 = vmatprep.subr.mxu0 0.0
        %5640 = vmatpush1.msra.mxu0 %v3309
        %5641 = vmatprep.subr.mxu0 0.0
        %5642 = vmatpush2.msra.mxu0 0.0
        %5643 = vmatprep.subr.mxu0 0.0
        %5644 = vmatpush2.msra.mxu0 0.0
        %5645 = vmatprep.subr.mxu0 0.0
        %5646 = vmatpush2.msra.mxu0 0.0
        %5647 = vmatprep.subr.mxu0 0.0
        %5648 = vmatpush2.msra.mxu0 0.0
        %5649 = vmatprep.subr.mxu0 0.0
        %5650 = vmatpush2.msra.mxu0 0.0
        %5651 = vmatprep.subr.mxu0 0.0
        %5652 = vmatpush2.msra.mxu0 0.0
        %5653 = vmatprep.subr.mxu0 0.0
        %5654 = vmatpush2.msra.mxu0 0.0
        %5655 = vmatprep.subr.mxu0 0.0
        %5656 = vmatpush2.msra.mxu0 0.0
        %5657 = vmatprep.subr.mxu0 0.0
        %5658 = vmatpush2.msra.mxu0 0.0
        %5659 = vmatprep.subr.mxu0 0.0
        %5660 = vmatpush2.msra.mxu0 0.0
        %5661 = vmatprep.subr.mxu0 0.0
        %5662 = vmatpush2.msra.mxu0 0.0
        %5663 = vmatprep.subr.mxu0 0.0
        %5664 = vmatpush2.msra.mxu0 0.0
        %5665 = vmatprep.subr.mxu0 0.0
        %5666 = vmatpush2.msra.mxu0 0.0
        %5667 = vmatprep.subr.mxu0 0.0
        %5668 = vmatpush2.msra.mxu0 0.0
        %5669 = vmatprep.subr.mxu0 0.0
        %5670 = vmatpush2.msra.mxu0 0.0
        %5671 = vmatprep.subr.mxu0 0.0
        %5672 = vmatpush2.msra.mxu0 0.0
        %5673 = vmatprep.mubr.f32.mxu0 0.0
        %5674 = vmatmul.mubr.f32.gmra.mxu0 %v5604
        %v5675 = vpop.f32.mrf.mxu0
        %v5676 = vadd.f32 %v3322, %v5675
        %v5677 = vpop.f32.mrf.mxu0
        %5678 = vmatprep.mubr.f32.mxu0 0.0
        %5679 = vmatmul.mubr.f32.gmra.mxu0 %v5607
        %v5680 = vpop.f32.mrf.mxu0
        %v5681 = vadd.f32 %v3322, %v5680
        %v5682 = vpop.f32.mrf.mxu0
        %5683 = vdwg.mxu0
        %s5684 = scalar_lea.vmem %s39, 32
        %v5685 = vld [vmem:[%s5684] sm:$0xff]
        %v5686 = vld [vmem:[%s5684 + $0x8] sm:$0xff]
        %v5687 = vld [vmem:[%s5684 + $0x10] sm:$0xff]
        %v5688 = vld [vmem:[%s5684 + $0x18] sm:$0xff]
        %s5689 = scalar_lea.vmem [#allocation16], 1
        %v5690 = vld [vmem:[%s5689] sm:$0x1]
        %v5692 = vlaneseq
        %v5693 = vshrl.u32 %v5692, 7
        %v5694 = vsub.s32 0, %v5693
        %v5695 = vrot.slane %v5690, %v5694
        %5697 = vmatprep.subr.mxu0 0.0
        %5698 = vmatpush1.msra.mxu0 0.0
        %5699 = vmatprep.subr.mxu0 0.0
        %5700 = vmatpush1.msra.mxu0 0.0
        %5701 = vmatprep.subr.mxu0 0.0
        %5702 = vmatpush1.msra.mxu0 0.0
        %5703 = vmatprep.subr.mxu0 0.0
        %5704 = vmatpush1.msra.mxu0 0.0
        %5705 = vmatprep.subr.mxu0 0.0
        %5706 = vmatpush1.msra.mxu0 0.0
        %5707 = vmatprep.subr.mxu0 0.0
        %5708 = vmatpush1.msra.mxu0 0.0
        %5709 = vmatprep.subr.mxu0 0.0
        %5710 = vmatpush1.msra.mxu0 0.0
        %5711 = vmatprep.subr.mxu0 0.0
        %5712 = vmatpush1.msra.mxu0 0.0
        %5713 = vmatprep.subr.mxu0 0.0
        %5714 = vmatpush1.msra.mxu0 0.0
        %5715 = vmatprep.subr.mxu0 0.0
        %5716 = vmatpush1.msra.mxu0 0.0
        %5717 = vmatprep.subr.mxu0 0.0
        %5718 = vmatpush1.msra.mxu0 0.0
        %5719 = vmatprep.subr.mxu0 0.0
        %5720 = vmatpush1.msra.mxu0 0.0
        %5721 = vmatprep.subr.mxu0 0.0
        %5722 = vmatpush1.msra.mxu0 %v5688
        %5723 = vmatprep.subr.mxu0 0.0
        %5724 = vmatpush1.msra.mxu0 %v5687
        %5725 = vmatprep.subr.mxu0 0.0
        %5726 = vmatpush1.msra.mxu0 %v5686
        %5727 = vmatprep.subr.mxu0 0.0
        %5728 = vmatpush1.msra.mxu0 %v5685
        %5729 = vmatprep.subr.mxu0 0.0
        %5730 = vmatpush2.msra.mxu0 0.0
        %5731 = vmatprep.subr.mxu0 0.0
        %5732 = vmatpush2.msra.mxu0 0.0
        %5733 = vmatprep.subr.mxu0 0.0
        %5734 = vmatpush2.msra.mxu0 0.0
        %5735 = vmatprep.subr.mxu0 0.0
        %5736 = vmatpush2.msra.mxu0 0.0
        %5737 = vmatprep.subr.mxu0 0.0
        %5738 = vmatpush2.msra.mxu0 0.0
        %5739 = vmatprep.subr.mxu0 0.0
        %5740 = vmatpush2.msra.mxu0 0.0
        %5741 = vmatprep.subr.mxu0 0.0
        %5742 = vmatpush2.msra.mxu0 0.0
        %5743 = vmatprep.subr.mxu0 0.0
        %5744 = vmatpush2.msra.mxu0 0.0
        %5745 = vmatprep.subr.mxu0 0.0
        %5746 = vmatpush2.msra.mxu0 0.0
        %5747 = vmatprep.subr.mxu0 0.0
        %5748 = vmatpush2.msra.mxu0 0.0
        %5749 = vmatprep.subr.mxu0 0.0
        %5750 = vmatpush2.msra.mxu0 0.0
        %5751 = vmatprep.subr.mxu0 0.0
        %5752 = vmatpush2.msra.mxu0 0.0
        %5753 = vmatprep.subr.mxu0 0.0
        %5754 = vmatpush2.msra.mxu0 0.0
        %5755 = vmatprep.subr.mxu0 0.0
        %5756 = vmatpush2.msra.mxu0 0.0
        %5757 = vmatprep.subr.mxu0 0.0
        %5758 = vmatpush2.msra.mxu0 0.0
        %5759 = vmatprep.subr.mxu0 0.0
        %5760 = vmatpush2.msra.mxu0 0.0
        %5761 = vmatprep.mubr.f32.mxu0 0.0
        %5762 = vmatmul.mubr.f32.gmra.mxu0 %v3417
        %v5763 = vpop.f32.mrf.mxu0
        %v5764 = vadd.f32 %v5695, %v5763
        %v5765 = vpop.f32.mrf.mxu0
        %5766 = vdwg.mxu0
        %v5767 = vtanh.pop %v5764
        %v5768 = vxor.u32 %v5764, 2147483648
        %v5769 = vmul.f32 %v5768, 1.442695
        %v5770 = vpow.pop %v5769
        %v5771 = vadd.f32 %v5770, 1.0
        %v5772 = vrcp.pop %v5771
        %v5773 = vmul.f32 1.0, %v5772
        %5775 = vrot.lane.b32.xlu0 %v5773, 96
        %v5776 = vpop.permute.xlu0 %5775
        %v5778 = vmul.f32 %v5767, %v5776
        %v5779 = vmul.f32 %v5778, %v5778
        %v5780 = vsel %vm2369, %v5779, 0.0
        %5781 = vadd.xlane.f32.xlu0 %v5780
        %v5782 = vpop.xlane.xlu0 %5781
        %v5783 = vmax.f32 %v5782, 1e-24
        %v5784 = vrsqrt.pop %v5783
        %v5785 = vmul.f32 %v5778, %v5784
        %s5786 = scalar_lea.vmem [#allocation18], 1
        %v5787 = vld [vmem:[%s5786] sm:$0x1]
        %s5788 = sld [smem:[#allocation48 + $0x1]]
        %v5789 = vstv %s5788
        %v5791 = vsel %vm2369, %v5787, 0
        %v5794 = vsel %vm2369, %v5785, 0
        %5796 = vmatprep.subr.mxu0 0.0
        %5797 = vmatpush1.xpose.msra.mxu0 0.0
        %5798 = vmatprep.subr.mxu0 0.0
        %5799 = vmatpush1.xpose.msra.mxu0 0.0
        %5800 = vmatprep.subr.mxu0 0.0
        %5801 = vmatpush1.xpose.msra.mxu0 0.0
        %5802 = vmatprep.subr.mxu0 0.0
        %5803 = vmatpush1.xpose.msra.mxu0 0.0
        %5804 = vmatprep.subr.mxu0 0.0
        %5805 = vmatpush1.xpose.msra.mxu0 0.0
        %5806 = vmatprep.subr.mxu0 0.0
        %5807 = vmatpush1.xpose.msra.mxu0 0.0
        %5808 = vmatprep.subr.mxu0 0.0
        %5809 = vmatpush1.xpose.msra.mxu0 0.0
        %5810 = vmatprep.subr.mxu0 0.0
        %5811 = vmatpush1.xpose.msra.mxu0 0.0
        %5812 = vmatprep.subr.mxu0 0.0
        %5813 = vmatpush1.xpose.msra.mxu0 0.0
        %5814 = vmatprep.subr.mxu0 0.0
        %5815 = vmatpush1.xpose.msra.mxu0 0.0
        %5816 = vmatprep.subr.mxu0 0.0
        %5817 = vmatpush1.xpose.msra.mxu0 0.0
        %5818 = vmatprep.subr.mxu0 0.0
        %5819 = vmatpush1.xpose.msra.mxu0 0.0
        %5820 = vmatprep.subr.mxu0 0.0
        %5821 = vmatpush1.xpose.msra.mxu0 0.0
        %5822 = vmatprep.subr.mxu0 0.0
        %5823 = vmatpush1.xpose.msra.mxu0 0.0
        %5824 = vmatprep.subr.mxu0 0.0
        %5825 = vmatpush1.xpose.msra.mxu0 0.0
        %5826 = vmatprep.subr.mxu0 0.0
        %5827 = vmatpush1.xpose.msra.mxu0 %v5794
        %5828 = vmatprep.subr.mxu0 0.0
        %5829 = vmatpush2.xpose.msra.mxu0 0.0
        %5830 = vmatprep.subr.mxu0 0.0
        %5831 = vmatpush2.xpose.msra.mxu0 0.0
        %5832 = vmatprep.subr.mxu0 0.0
        %5833 = vmatpush2.xpose.msra.mxu0 0.0
        %5834 = vmatprep.subr.mxu0 0.0
        %5835 = vmatpush2.xpose.msra.mxu0 0.0
        %5836 = vmatprep.subr.mxu0 0.0
        %5837 = vmatpush2.xpose.msra.mxu0 0.0
        %5838 = vmatprep.subr.mxu0 0.0
        %5839 = vmatpush2.xpose.msra.mxu0 0.0
        %5840 = vmatprep.subr.mxu0 0.0
        %5841 = vmatpush2.xpose.msra.mxu0 0.0
        %5842 = vmatprep.subr.mxu0 0.0
        %5843 = vmatpush2.xpose.msra.mxu0 0.0
        %5844 = vmatprep.subr.mxu0 0.0
        %5845 = vmatpush2.xpose.msra.mxu0 0.0
        %5846 = vmatprep.subr.mxu0 0.0
        %5847 = vmatpush2.xpose.msra.mxu0 0.0
        %5848 = vmatprep.subr.mxu0 0.0
        %5849 = vmatpush2.xpose.msra.mxu0 0.0
        %5850 = vmatprep.subr.mxu0 0.0
        %5851 = vmatpush2.xpose.msra.mxu0 0.0
        %5852 = vmatprep.subr.mxu0 0.0
        %5853 = vmatpush2.xpose.msra.mxu0 0.0
        %5854 = vmatprep.subr.mxu0 0.0
        %5855 = vmatpush2.xpose.msra.mxu0 0.0
        %5856 = vmatprep.subr.mxu0 0.0
        %5857 = vmatpush2.xpose.msra.mxu0 0.0
        %5858 = vmatprep.subr.mxu0 0.0
        %5859 = vmatpush2.xpose.msra.mxu0 0.0
        %5860 = vmatprep.mubr.f32.mxu0 0.0
        %5861 = vmatmul.mubr.f32.gmra.mxu0 %v5791
        %v5862 = vpop.f32.mrf.mxu0
        %v5863 = vadd.f32 %v5789, %v5862
        %v5864 = vpop.f32.mrf.mxu0
        %5865 = vdwg.mxu0
        %v5866 = vsel %vm2609, %v5863, -inf
        %5867 = vmax.xlane.f32.xlu0 %v5866
        %v5868 = vpop.xlane.xlu0 %5867
        %v5869 = vsub.f32 %v5863, %v5868
        %v5870 = vmul.f32 %v5869, 1.442695
        %v5871 = vpow.pop %v5870
        %v5872 = vsel %vm2609, %v5871, 0.0
        %5873 = vadd.xlane.f32.xlu0 %v5872
        %v5874 = vpop.xlane.xlu0 %5873
        %v5875 = vrcp.pop %v5874
        %v5876 = vmul.f32 %v5871, %v5875
        %v5877 = vmul.f32 %v5876, %v2356
        %v5878 = vsel %vm2609, %v5877, 0.0
        %5879 = vadd.xlane.f32.xlu0 %v5878
        %v5880 = vpop.xlane.xlu0 %5879
        %v5881 = vrcp.pop %v5880
        %v5882 = vmul.f32 %v5877, %v5881
        %s5883 = scalar_lea.vmem %s45, 32
        %v5884 = vld [vmem:[%s5883] sm:$0xff]
        %v5885 = vld [vmem:[%s5883 + $0x8] sm:$0xff]
        %v5886 = vld [vmem:[%s5883 + $0x10] sm:$0xff]
        %v5887 = vld [vmem:[%s5883 + $0x18] sm:$0xff]
        %s5888 = scalar_lea.vmem [#allocation19], 1
        %v5889 = vld [vmem:[%s5888] sm:$0x1]
        %v5891 = vlaneseq
        %v5892 = vshrl.u32 %v5891, 7
        %v5893 = vsub.s32 0, %v5892
        %v5894 = vrot.slane %v5889, %v5893
        %5896 = vmatprep.subr.mxu0 0.0
        %5897 = vmatpush1.msra.mxu0 0.0
        %5898 = vmatprep.subr.mxu0 0.0
        %5899 = vmatpush1.msra.mxu0 0.0
        %5900 = vmatprep.subr.mxu0 0.0
        %5901 = vmatpush1.msra.mxu0 0.0
        %5902 = vmatprep.subr.mxu0 0.0
        %5903 = vmatpush1.msra.mxu0 0.0
        %5904 = vmatprep.subr.mxu0 0.0
        %5905 = vmatpush1.msra.mxu0 0.0
        %5906 = vmatprep.subr.mxu0 0.0
        %5907 = vmatpush1.msra.mxu0 0.0
        %5908 = vmatprep.subr.mxu0 0.0
        %5909 = vmatpush1.msra.mxu0 0.0
        %5910 = vmatprep.subr.mxu0 0.0
        %5911 = vmatpush1.msra.mxu0 0.0
        %5912 = vmatprep.subr.mxu0 0.0
        %5913 = vmatpush1.msra.mxu0 0.0
        %5914 = vmatprep.subr.mxu0 0.0
        %5915 = vmatpush1.msra.mxu0 0.0
        %5916 = vmatprep.subr.mxu0 0.0
        %5917 = vmatpush1.msra.mxu0 0.0
        %5918 = vmatprep.subr.mxu0 0.0
        %5919 = vmatpush1.msra.mxu0 0.0
        %5920 = vmatprep.subr.mxu0 0.0
        %5921 = vmatpush1.msra.mxu0 %v5887
        %5922 = vmatprep.subr.mxu0 0.0
        %5923 = vmatpush1.msra.mxu0 %v5886
        %5924 = vmatprep.subr.mxu0 0.0
        %5925 = vmatpush1.msra.mxu0 %v5885
        %5926 = vmatprep.subr.mxu0 0.0
        %5927 = vmatpush1.msra.mxu0 %v5884
        %5928 = vmatprep.subr.mxu0 0.0
        %5929 = vmatpush2.msra.mxu0 0.0
        %5930 = vmatprep.subr.mxu0 0.0
        %5931 = vmatpush2.msra.mxu0 0.0
        %5932 = vmatprep.subr.mxu0 0.0
        %5933 = vmatpush2.msra.mxu0 0.0
        %5934 = vmatprep.subr.mxu0 0.0
        %5935 = vmatpush2.msra.mxu0 0.0
        %5936 = vmatprep.subr.mxu0 0.0
        %5937 = vmatpush2.msra.mxu0 0.0
        %5938 = vmatprep.subr.mxu0 0.0
        %5939 = vmatpush2.msra.mxu0 0.0
        %5940 = vmatprep.subr.mxu0 0.0
        %5941 = vmatpush2.msra.mxu0 0.0
        %5942 = vmatprep.subr.mxu0 0.0
        %5943 = vmatpush2.msra.mxu0 0.0
        %5944 = vmatprep.subr.mxu0 0.0
        %5945 = vmatpush2.msra.mxu0 0.0
        %5946 = vmatprep.subr.mxu0 0.0
        %5947 = vmatpush2.msra.mxu0 0.0
        %5948 = vmatprep.subr.mxu0 0.0
        %5949 = vmatpush2.msra.mxu0 0.0
        %5950 = vmatprep.subr.mxu0 0.0
        %5951 = vmatpush2.msra.mxu0 0.0
        %5952 = vmatprep.subr.mxu0 0.0
        %5953 = vmatpush2.msra.mxu0 0.0
        %5954 = vmatprep.subr.mxu0 0.0
        %5955 = vmatpush2.msra.mxu0 0.0
        %5956 = vmatprep.subr.mxu0 0.0
        %5957 = vmatpush2.msra.mxu0 0.0
        %5958 = vmatprep.subr.mxu0 0.0
        %5959 = vmatpush2.msra.mxu0 0.0
        %5960 = vmatprep.mubr.f32.mxu0 0.0
        %5961 = vmatmul.mubr.f32.gmra.mxu0 %v3616
        %v5962 = vpop.f32.mrf.mxu0
        %v5963 = vadd.f32 %v5894, %v5962
        %v5964 = vpop.f32.mrf.mxu0
        %5965 = vdwg.mxu0
        %v5967 = vsel %vm2621, %v5882, 0
        %5969 = vmatprep.subr.mxu0 0.0
        %5970 = vmatpush1.msra.mxu0 0.0
        %5971 = vmatprep.subr.mxu0 0.0
        %5972 = vmatpush1.msra.mxu0 0.0
        %5973 = vmatprep.subr.mxu0 0.0
        %5974 = vmatpush1.msra.mxu0 0.0
        %5975 = vmatprep.subr.mxu0 0.0
        %5976 = vmatpush1.msra.mxu0 0.0
        %5977 = vmatprep.subr.mxu0 0.0
        %5978 = vmatpush1.msra.mxu0 0.0
        %5979 = vmatprep.subr.mxu0 0.0
        %5980 = vmatpush1.msra.mxu0 0.0
        %5981 = vmatprep.subr.mxu0 0.0
        %5982 = vmatpush1.msra.mxu0 0.0
        %5983 = vmatprep.subr.mxu0 0.0
        %5984 = vmatpush1.msra.mxu0 0.0
        %5985 = vmatprep.subr.mxu0 0.0
        %5986 = vmatpush1.msra.mxu0 0.0
        %5987 = vmatprep.subr.mxu0 0.0
        %5988 = vmatpush1.msra.mxu0 0.0
        %5989 = vmatprep.subr.mxu0 0.0
        %5990 = vmatpush1.msra.mxu0 0.0
        %5991 = vmatprep.subr.mxu0 0.0
        %5992 = vmatpush1.msra.mxu0 0.0
        %5993 = vmatprep.subr.mxu0 0.0
        %5994 = vmatpush1.msra.mxu0 0.0
        %5995 = vmatprep.subr.mxu0 0.0
        %5996 = vmatpush1.msra.mxu0 0.0
        %5997 = vmatprep.subr.mxu0 0.0
        %5998 = vmatpush1.msra.mxu0 0.0
        %5999 = vmatprep.subr.mxu0 0.0
        %6000 = vmatpush1.msra.mxu0 %v5963
        %6001 = vmatprep.subr.mxu0 0.0
        %6002 = vmatpush2.msra.mxu0 0.0
        %6003 = vmatprep.subr.mxu0 0.0
        %6004 = vmatpush2.msra.mxu0 0.0
        %6005 = vmatprep.subr.mxu0 0.0
        %6006 = vmatpush2.msra.mxu0 0.0
        %6007 = vmatprep.subr.mxu0 0.0
        %6008 = vmatpush2.msra.mxu0 0.0
        %6009 = vmatprep.subr.mxu0 0.0
        %6010 = vmatpush2.msra.mxu0 0.0
        %6011 = vmatprep.subr.mxu0 0.0
        %6012 = vmatpush2.msra.mxu0 0.0
        %6013 = vmatprep.subr.mxu0 0.0
        %6014 = vmatpush2.msra.mxu0 0.0
        %6015 = vmatprep.subr.mxu0 0.0
        %6016 = vmatpush2.msra.mxu0 0.0
        %6017 = vmatprep.subr.mxu0 0.0
        %6018 = vmatpush2.msra.mxu0 0.0
        %6019 = vmatprep.subr.mxu0 0.0
        %6020 = vmatpush2.msra.mxu0 0.0
        %6021 = vmatprep.subr.mxu0 0.0
        %6022 = vmatpush2.msra.mxu0 0.0
        %6023 = vmatprep.subr.mxu0 0.0
        %6024 = vmatpush2.msra.mxu0 0.0
        %6025 = vmatprep.subr.mxu0 0.0
        %6026 = vmatpush2.msra.mxu0 0.0
        %6027 = vmatprep.subr.mxu0 0.0
        %6028 = vmatpush2.msra.mxu0 0.0
        %6029 = vmatprep.subr.mxu0 0.0
        %6030 = vmatpush2.msra.mxu0 0.0
        %6031 = vmatprep.subr.mxu0 0.0
        %6032 = vmatpush2.msra.mxu0 0.0
        %6033 = vmatprep.mubr.f32.mxu0 0.0
        %6034 = vmatmul.mubr.f32.gmra.mxu0 %v5967
        %v6035 = vpop.f32.mrf.mxu0
        %v6036 = vadd.f32 0.0, %v6035
        %v6037 = vpop.f32.mrf.mxu0
        %6038 = vdwg.mxu0
        %v6040 = vsel %vm2369, %v4875, 0
        %v6043 = vsel %vm2369, %v4876, 0
        %6045 = vmatprep.subr.mxu0 0.0
        %6046 = vmatpush1.msra.mxu0 0.0
        %6047 = vmatprep.subr.mxu0 0.0
        %6048 = vmatpush1.msra.mxu0 0.0
        %6049 = vmatprep.subr.mxu0 0.0
        %6050 = vmatpush1.msra.mxu0 0.0
        %6051 = vmatprep.subr.mxu0 0.0
        %6052 = vmatpush1.msra.mxu0 0.0
        %6053 = vmatprep.subr.mxu0 0.0
        %6054 = vmatpush1.msra.mxu0 0.0
        %6055 = vmatprep.subr.mxu0 0.0
        %6056 = vmatpush1.msra.mxu0 0.0
        %6057 = vmatprep.subr.mxu0 0.0
        %6058 = vmatpush1.msra.mxu0 0.0
        %6059 = vmatprep.subr.mxu0 0.0
        %6060 = vmatpush1.msra.mxu0 0.0
        %6061 = vmatprep.subr.mxu0 0.0
        %6062 = vmatpush1.msra.mxu0 0.0
        %6063 = vmatprep.subr.mxu0 0.0
        %6064 = vmatpush1.msra.mxu0 0.0
        %6065 = vmatprep.subr.mxu0 0.0
        %6066 = vmatpush1.msra.mxu0 0.0
        %6067 = vmatprep.subr.mxu0 0.0
        %6068 = vmatpush1.msra.mxu0 0.0
        %6069 = vmatprep.subr.mxu0 0.0
        %6070 = vmatpush1.msra.mxu0 %v3850
        %6071 = vmatprep.subr.mxu0 0.0
        %6072 = vmatpush1.msra.mxu0 %v3849
        %6073 = vmatprep.subr.mxu0 0.0
        %6074 = vmatpush1.msra.mxu0 %v3848
        %6075 = vmatprep.subr.mxu0 0.0
        %6076 = vmatpush1.msra.mxu0 %v3847
        %6077 = vmatprep.subr.mxu0 0.0
        %6078 = vmatpush2.msra.mxu0 0.0
        %6079 = vmatprep.subr.mxu0 0.0
        %6080 = vmatpush2.msra.mxu0 0.0
        %6081 = vmatprep.subr.mxu0 0.0
        %6082 = vmatpush2.msra.mxu0 0.0
        %6083 = vmatprep.subr.mxu0 0.0
        %6084 = vmatpush2.msra.mxu0 0.0
        %6085 = vmatprep.subr.mxu0 0.0
        %6086 = vmatpush2.msra.mxu0 0.0
        %6087 = vmatprep.subr.mxu0 0.0
        %6088 = vmatpush2.msra.mxu0 0.0
        %6089 = vmatprep.subr.mxu0 0.0
        %6090 = vmatpush2.msra.mxu0 0.0
        %6091 = vmatprep.subr.mxu0 0.0
        %6092 = vmatpush2.msra.mxu0 0.0
        %6093 = vmatprep.subr.mxu0 0.0
        %6094 = vmatpush2.msra.mxu0 0.0
        %6095 = vmatprep.subr.mxu0 0.0
        %6096 = vmatpush2.msra.mxu0 0.0
        %6097 = vmatprep.subr.mxu0 0.0
        %6098 = vmatpush2.msra.mxu0 0.0
        %6099 = vmatprep.subr.mxu0 0.0
        %6100 = vmatpush2.msra.mxu0 0.0
        %6101 = vmatprep.subr.mxu0 0.0
        %6102 = vmatpush2.msra.mxu0 0.0
        %6103 = vmatprep.subr.mxu0 0.0
        %6104 = vmatpush2.msra.mxu0 0.0
        %6105 = vmatprep.subr.mxu0 0.0
        %6106 = vmatpush2.msra.mxu0 0.0
        %6107 = vmatprep.subr.mxu0 0.0
        %6108 = vmatpush2.msra.mxu0 0.0
        %6109 = vmatprep.mubr.f32.mxu0 0.0
        %6110 = vmatmul.mubr.f32.gmra.mxu0 %v6040
        %v6111 = vpop.f32.mrf.mxu0
        %v6112 = vadd.f32 %v3856, %v6111
        %v6113 = vpop.f32.mrf.mxu0
        %6114 = vmatprep.mubr.f32.mxu0 0.0
        %6115 = vmatmul.mubr.f32.gmra.mxu0 %v6043
        %v6116 = vpop.f32.mrf.mxu0
        %v6117 = vadd.f32 %v3856, %v6116
        %v6118 = vpop.f32.mrf.mxu0
        %6119 = vdwg.mxu0
        %v6120 = vmul.f32 %v3839, %v6112
        %v6121 = vmul.f32 %v3844, %v6117
        %6122 = vrot.lane.b32.xlu0 %v4875, 32
        %v6123 = vpop.permute.xlu0 %6122
        %6124 = vrot.lane.b32.xlu0 %v4876, 32
        %v6125 = vpop.permute.xlu0 %6124
        %6130 = vrot.lane.b32.xlu0 %v6120, 64
        %v6131 = vpop.permute.xlu0 %6130
        %6132 = vrot.lane.b32.xlu0 %v6121, 64
        %v6133 = vpop.permute.xlu0 %6132
        %v6136 = vsel %vm2369, %v2337, %v6123
        %v6137 = vsel %vm2369, %v2342, %v6125
        %v6138 = vsel %vm2236, %v6136, %v6131
        %v6139 = vsel %vm2236, %v6137, %v6133
        %v6141 = vsel %vm2911, %v6138, 0
        %v6144 = vsel %vm2911, %v6139, 0
        %6146 = vmatprep.subr.mxu0 0.0
        %6147 = vmatpush1.msra.mxu0 0.0
        %6148 = vmatprep.subr.mxu0 0.0
        %6149 = vmatpush1.msra.mxu0 0.0
        %6150 = vmatprep.subr.mxu0 0.0
        %6151 = vmatpush1.msra.mxu0 0.0
        %6152 = vmatprep.subr.mxu0 0.0
        %6153 = vmatpush1.msra.mxu0 0.0
        %6154 = vmatprep.subr.mxu0 0.0
        %6155 = vmatpush1.msra.mxu0 %v3956
        %6156 = vmatprep.subr.mxu0 0.0
        %6157 = vmatpush1.msra.mxu0 %v3955
        %6158 = vmatprep.subr.mxu0 0.0
        %6159 = vmatpush1.msra.mxu0 %v3954
        %6160 = vmatprep.subr.mxu0 0.0
        %6161 = vmatpush1.msra.mxu0 %v3953
        %6162 = vmatprep.subr.mxu0 0.0
        %6163 = vmatpush1.msra.mxu0 %v3952
        %6164 = vmatprep.subr.mxu0 0.0
        %6165 = vmatpush1.msra.mxu0 %v3951
        %6166 = vmatprep.subr.mxu0 0.0
        %6167 = vmatpush1.msra.mxu0 %v3950
        %6168 = vmatprep.subr.mxu0 0.0
        %6169 = vmatpush1.msra.mxu0 %v3949
        %6170 = vmatprep.subr.mxu0 0.0
        %6171 = vmatpush1.msra.mxu0 %v3948
        %6172 = vmatprep.subr.mxu0 0.0
        %6173 = vmatpush1.msra.mxu0 %v3947
        %6174 = vmatprep.subr.mxu0 0.0
        %6175 = vmatpush1.msra.mxu0 %v3946
        %6176 = vmatprep.subr.mxu0 0.0
        %6177 = vmatpush1.msra.mxu0 %v3945
        %6178 = vmatprep.subr.mxu0 0.0
        %6179 = vmatpush2.msra.mxu0 0.0
        %6180 = vmatprep.subr.mxu0 0.0
        %6181 = vmatpush2.msra.mxu0 0.0
        %6182 = vmatprep.subr.mxu0 0.0
        %6183 = vmatpush2.msra.mxu0 0.0
        %6184 = vmatprep.subr.mxu0 0.0
        %6185 = vmatpush2.msra.mxu0 0.0
        %6186 = vmatprep.subr.mxu0 0.0
        %6187 = vmatpush2.msra.mxu0 0.0
        %6188 = vmatprep.subr.mxu0 0.0
        %6189 = vmatpush2.msra.mxu0 0.0
        %6190 = vmatprep.subr.mxu0 0.0
        %6191 = vmatpush2.msra.mxu0 0.0
        %6192 = vmatprep.subr.mxu0 0.0
        %6193 = vmatpush2.msra.mxu0 0.0
        %6194 = vmatprep.subr.mxu0 0.0
        %6195 = vmatpush2.msra.mxu0 0.0
        %6196 = vmatprep.subr.mxu0 0.0
        %6197 = vmatpush2.msra.mxu0 0.0
        %6198 = vmatprep.subr.mxu0 0.0
        %6199 = vmatpush2.msra.mxu0 0.0
        %6200 = vmatprep.subr.mxu0 0.0
        %6201 = vmatpush2.msra.mxu0 0.0
        %6202 = vmatprep.subr.mxu0 0.0
        %6203 = vmatpush2.msra.mxu0 0.0
        %6204 = vmatprep.subr.mxu0 0.0
        %6205 = vmatpush2.msra.mxu0 0.0
        %6206 = vmatprep.subr.mxu0 0.0
        %6207 = vmatpush2.msra.mxu0 0.0
        %6208 = vmatprep.subr.mxu0 0.0
        %6209 = vmatpush2.msra.mxu0 0.0
        %6210 = vmatprep.mubr.f32.mxu0 0.0
        %6211 = vmatmul.mubr.f32.gmra.mxu0 %v6141
        %v6212 = vpop.f32.mrf.mxu0
        %v6213 = vadd.f32 %v3962, %v6212
        %v6214 = vpop.f32.mrf.mxu0
        %6215 = vmatprep.mubr.f32.mxu0 0.0
        %6216 = vmatmul.mubr.f32.gmra.mxu0 %v6144
        %v6217 = vpop.f32.mrf.mxu0
        %v6218 = vadd.f32 %v3962, %v6217
        %v6219 = vpop.f32.mrf.mxu0
        %6220 = vdwg.mxu0
        %v6222 = vsel %vm2369, %v6036, 0
        %6224 = vmatprep.subr.mxu0 0.0
        %6225 = vmatpush1.msra.mxu0 0.0
        %6226 = vmatprep.subr.mxu0 0.0
        %6227 = vmatpush1.msra.mxu0 0.0
        %6228 = vmatprep.subr.mxu0 0.0
        %6229 = vmatpush1.msra.mxu0 0.0
        %6230 = vmatprep.subr.mxu0 0.0
        %6231 = vmatpush1.msra.mxu0 0.0
        %6232 = vmatprep.subr.mxu0 0.0
        %6233 = vmatpush1.msra.mxu0 0.0
        %6234 = vmatprep.subr.mxu0 0.0
        %6235 = vmatpush1.msra.mxu0 0.0
        %6236 = vmatprep.subr.mxu0 0.0
        %6237 = vmatpush1.msra.mxu0 0.0
        %6238 = vmatprep.subr.mxu0 0.0
        %6239 = vmatpush1.msra.mxu0 0.0
        %6240 = vmatprep.subr.mxu0 0.0
        %6241 = vmatpush1.msra.mxu0 0.0
        %6242 = vmatprep.subr.mxu0 0.0
        %6243 = vmatpush1.msra.mxu0 0.0
        %6244 = vmatprep.subr.mxu0 0.0
        %6245 = vmatpush1.msra.mxu0 0.0
        %6246 = vmatprep.subr.mxu0 0.0
        %6247 = vmatpush1.msra.mxu0 0.0
        %6248 = vmatprep.subr.mxu0 0.0
        %6249 = vmatpush1.msra.mxu0 %v4132
        %6250 = vmatprep.subr.mxu0 0.0
        %6251 = vmatpush1.msra.mxu0 %v4131
        %6252 = vmatprep.subr.mxu0 0.0
        %6253 = vmatpush1.msra.mxu0 %v4130
        %6254 = vmatprep.subr.mxu0 0.0
        %6255 = vmatpush1.msra.mxu0 %v4129
        %6256 = vmatprep.subr.mxu0 0.0
        %6257 = vmatpush2.msra.mxu0 0.0
        %6258 = vmatprep.subr.mxu0 0.0
        %6259 = vmatpush2.msra.mxu0 0.0
        %6260 = vmatprep.subr.mxu0 0.0
        %6261 = vmatpush2.msra.mxu0 0.0
        %6262 = vmatprep.subr.mxu0 0.0
        %6263 = vmatpush2.msra.mxu0 0.0
        %6264 = vmatprep.subr.mxu0 0.0
        %6265 = vmatpush2.msra.mxu0 0.0
        %6266 = vmatprep.subr.mxu0 0.0
        %6267 = vmatpush2.msra.mxu0 0.0
        %6268 = vmatprep.subr.mxu0 0.0
        %6269 = vmatpush2.msra.mxu0 0.0
        %6270 = vmatprep.subr.mxu0 0.0
        %6271 = vmatpush2.msra.mxu0 0.0
        %6272 = vmatprep.subr.mxu0 0.0
        %6273 = vmatpush2.msra.mxu0 0.0
        %6274 = vmatprep.subr.mxu0 0.0
        %6275 = vmatpush2.msra.mxu0 0.0
        %6276 = vmatprep.subr.mxu0 0.0
        %6277 = vmatpush2.msra.mxu0 0.0
        %6278 = vmatprep.subr.mxu0 0.0
        %6279 = vmatpush2.msra.mxu0 0.0
        %6280 = vmatprep.subr.mxu0 0.0
        %6281 = vmatpush2.msra.mxu0 0.0
        %6282 = vmatprep.subr.mxu0 0.0
        %6283 = vmatpush2.msra.mxu0 0.0
        %6284 = vmatprep.subr.mxu0 0.0
        %6285 = vmatpush2.msra.mxu0 0.0
        %6286 = vmatprep.subr.mxu0 0.0
        %6287 = vmatpush2.msra.mxu0 0.0
        %6288 = vmatprep.mubr.f32.mxu0 0.0
        %6289 = vmatmul.mubr.f32.gmra.mxu0 %v6222
        %v6290 = vpop.f32.mrf.mxu0
        %v6291 = vadd.f32 %v4133, %v6290
        %v6292 = vpop.f32.mrf.mxu0
        %6293 = vdwg.mxu0
        %v6294 = vmul.f32 %v6291, 0.17677669
        %v6295 = vlaneseq
        %v6296 = vshrl.u32 %v6295, 7
        %v6297 = vsub.s32 0, %v6296
        %v6298 = vrot.slane %v6294, %v6297
        %v6299 = vmul.f32 %v4126, %v6298
        %v6300 = vlaneseq
        %v6301 = vshrl.u32 %v6300, 7
        %v6302 = vsub.s32 0, %v6301
        %v6303 = vrot.slane %v6291, %v6302
        %v6304 = vmul.f32 %v4126, %v6303
        %v6306 = vsel %vm2369, %v6213, 0
        %v6309 = vsel %vm2369, %v6218, 0
        %v6312 = vsel %vm2369, %v6299, 0
        %6314 = vmatprep.subr.mxu0 0.0
        %6315 = vmatpush1.xpose.msra.mxu0 0.0
        %6316 = vmatprep.subr.mxu0 0.0
        %6317 = vmatpush1.xpose.msra.mxu0 0.0
        %6318 = vmatprep.subr.mxu0 0.0
        %6319 = vmatpush1.xpose.msra.mxu0 0.0
        %6320 = vmatprep.subr.mxu0 0.0
        %6321 = vmatpush1.xpose.msra.mxu0 0.0
        %6322 = vmatprep.subr.mxu0 0.0
        %6323 = vmatpush1.xpose.msra.mxu0 0.0
        %6324 = vmatprep.subr.mxu0 0.0
        %6325 = vmatpush1.xpose.msra.mxu0 0.0
        %6326 = vmatprep.subr.mxu0 0.0
        %6327 = vmatpush1.xpose.msra.mxu0 0.0
        %6328 = vmatprep.subr.mxu0 0.0
        %6329 = vmatpush1.xpose.msra.mxu0 0.0
        %6330 = vmatprep.subr.mxu0 0.0
        %6331 = vmatpush1.xpose.msra.mxu0 0.0
        %6332 = vmatprep.subr.mxu0 0.0
        %6333 = vmatpush1.xpose.msra.mxu0 0.0
        %6334 = vmatprep.subr.mxu0 0.0
        %6335 = vmatpush1.xpose.msra.mxu0 0.0
        %6336 = vmatprep.subr.mxu0 0.0
        %6337 = vmatpush1.xpose.msra.mxu0 0.0
        %6338 = vmatprep.subr.mxu0 0.0
        %6339 = vmatpush1.xpose.msra.mxu0 0.0
        %6340 = vmatprep.subr.mxu0 0.0
        %6341 = vmatpush1.xpose.msra.mxu0 0.0
        %6342 = vmatprep.subr.mxu0 0.0
        %6343 = vmatpush1.xpose.msra.mxu0 0.0
        %6344 = vmatprep.subr.mxu0 0.0
        %6345 = vmatpush1.xpose.msra.mxu0 %v6312
        %6346 = vmatprep.subr.mxu0 0.0
        %6347 = vmatpush2.xpose.msra.mxu0 0.0
        %6348 = vmatprep.subr.mxu0 0.0
        %6349 = vmatpush2.xpose.msra.mxu0 0.0
        %6350 = vmatprep.subr.mxu0 0.0
        %6351 = vmatpush2.xpose.msra.mxu0 0.0
        %6352 = vmatprep.subr.mxu0 0.0
        %6353 = vmatpush2.xpose.msra.mxu0 0.0
        %6354 = vmatprep.subr.mxu0 0.0
        %6355 = vmatpush2.xpose.msra.mxu0 0.0
        %6356 = vmatprep.subr.mxu0 0.0
        %6357 = vmatpush2.xpose.msra.mxu0 0.0
        %6358 = vmatprep.subr.mxu0 0.0
        %6359 = vmatpush2.xpose.msra.mxu0 0.0
        %6360 = vmatprep.subr.mxu0 0.0
        %6361 = vmatpush2.xpose.msra.mxu0 0.0
        %6362 = vmatprep.subr.mxu0 0.0
        %6363 = vmatpush2.xpose.msra.mxu0 0.0
        %6364 = vmatprep.subr.mxu0 0.0
        %6365 = vmatpush2.xpose.msra.mxu0 0.0
        %6366 = vmatprep.subr.mxu0 0.0
        %6367 = vmatpush2.xpose.msra.mxu0 0.0
        %6368 = vmatprep.subr.mxu0 0.0
        %6369 = vmatpush2.xpose.msra.mxu0 0.0
        %6370 = vmatprep.subr.mxu0 0.0
        %6371 = vmatpush2.xpose.msra.mxu0 0.0
        %6372 = vmatprep.subr.mxu0 0.0
        %6373 = vmatpush2.xpose.msra.mxu0 0.0
        %6374 = vmatprep.subr.mxu0 0.0
        %6375 = vmatpush2.xpose.msra.mxu0 0.0
        %6376 = vmatprep.subr.mxu0 0.0
        %6377 = vmatpush2.xpose.msra.mxu0 0.0
        %6378 = vmatprep.mubr.f32.mxu0 0.0
        %6379 = vmatmul.mubr.f32.gmra.mxu0 %v6306
        %v6380 = vpop.f32.mrf.mxu0
        %v6381 = vadd.f32 0.0, %v6380
        %v6382 = vpop.f32.mrf.mxu0
        %6383 = vmatprep.mubr.f32.mxu0 0.0
        %6384 = vmatmul.mubr.f32.gmra.mxu0 %v6309
        %v6385 = vpop.f32.mrf.mxu0
        %v6386 = vadd.f32 0.0, %v6385
        %v6387 = vpop.f32.mrf.mxu0
        %6388 = vdwg.mxu0
        %v6389 = vsel %vm4302, -1e+30, %v6381
        %v6390 = vsel %vm4303, -1e+30, %v6386
        %v6391 = vsel %vm2621, %v6389, -inf
        %6392 = vmax.xlane.f32.xlu0 %v6391
        %v6393 = vpop.xlane.xlu0 %6392
        %v6394 = vsel %vm2621, %v6390, -inf
        %6395 = vmax.xlane.f32.xlu0 %v6394
        %v6396 = vpop.xlane.xlu0 %6395
        %v6397 = vsub.f32 %v6389, %v6393
        %v6398 = vsub.f32 %v6390, %v6396
        %v6399 = vmul.f32 %v6397, 1.442695
        %v6400 = vpow.pop %v6399
        %v6401 = vmul.f32 %v6398, 1.442695
        %v6402 = vpow.pop %v6401
        %v6403 = vsel %vm2621, %v6400, 0.0
        %6404 = vadd.xlane.f32.xlu0 %v6403
        %v6405 = vpop.xlane.xlu0 %6404
        %v6406 = vsel %vm2621, %v6402, 0.0
        %6407 = vadd.xlane.f32.xlu0 %v6406
        %v6408 = vpop.xlane.xlu0 %6407
        %v6409 = vrcp.pop %v6405
        %v6410 = vmul.f32 %v6400, %v6409
        %v6411 = vrcp.pop %v6408
        %v6412 = vmul.f32 %v6402, %v6411
        %6414 = vrot.lane.b32.xlu0 %v6304, 96
        %v6415 = vpop.permute.xlu0 %6414
        %v6418 = vsel %vm2621, %v6410, 0
        %v6421 = vsel %vm2621, %v6412, 0
        %6423 = vmatprep.subr.mxu0 0.0
        %6424 = vmatpush1.msra.mxu0 0.0
        %6425 = vmatprep.subr.mxu0 0.0
        %6426 = vmatpush1.msra.mxu0 0.0
        %6427 = vmatprep.subr.mxu0 0.0
        %6428 = vmatpush1.msra.mxu0 0.0
        %6429 = vmatprep.subr.mxu0 0.0
        %6430 = vmatpush1.msra.mxu0 0.0
        %6431 = vmatprep.subr.mxu0 0.0
        %6432 = vmatpush1.msra.mxu0 0.0
        %6433 = vmatprep.subr.mxu0 0.0
        %6434 = vmatpush1.msra.mxu0 0.0
        %6435 = vmatprep.subr.mxu0 0.0
        %6436 = vmatpush1.msra.mxu0 0.0
        %6437 = vmatprep.subr.mxu0 0.0
        %6438 = vmatpush1.msra.mxu0 0.0
        %6439 = vmatprep.subr.mxu0 0.0
        %6440 = vmatpush1.msra.mxu0 0.0
        %6441 = vmatprep.subr.mxu0 0.0
        %6442 = vmatpush1.msra.mxu0 0.0
        %6443 = vmatprep.subr.mxu0 0.0
        %6444 = vmatpush1.msra.mxu0 0.0
        %6445 = vmatprep.subr.mxu0 0.0
        %6446 = vmatpush1.msra.mxu0 0.0
        %6447 = vmatprep.subr.mxu0 0.0
        %6448 = vmatpush1.msra.mxu0 0.0
        %6449 = vmatprep.subr.mxu0 0.0
        %6450 = vmatpush1.msra.mxu0 0.0
        %6451 = vmatprep.subr.mxu0 0.0
        %6452 = vmatpush1.msra.mxu0 0.0
        %6453 = vmatprep.subr.mxu0 0.0
        %6454 = vmatpush1.msra.mxu0 %v6415
        %6455 = vmatprep.subr.mxu0 0.0
        %6456 = vmatpush2.msra.mxu0 0.0
        %6457 = vmatprep.subr.mxu0 0.0
        %6458 = vmatpush2.msra.mxu0 0.0
        %6459 = vmatprep.subr.mxu0 0.0
        %6460 = vmatpush2.msra.mxu0 0.0
        %6461 = vmatprep.subr.mxu0 0.0
        %6462 = vmatpush2.msra.mxu0 0.0
        %6463 = vmatprep.subr.mxu0 0.0
        %6464 = vmatpush2.msra.mxu0 0.0
        %6465 = vmatprep.subr.mxu0 0.0
        %6466 = vmatpush2.msra.mxu0 0.0
        %6467 = vmatprep.subr.mxu0 0.0
        %6468 = vmatpush2.msra.mxu0 0.0
        %6469 = vmatprep.subr.mxu0 0.0
        %6470 = vmatpush2.msra.mxu0 0.0
        %6471 = vmatprep.subr.mxu0 0.0
        %6472 = vmatpush2.msra.mxu0 0.0
        %6473 = vmatprep.subr.mxu0 0.0
        %6474 = vmatpush2.msra.mxu0 0.0
        %6475 = vmatprep.subr.mxu0 0.0
        %6476 = vmatpush2.msra.mxu0 0.0
        %6477 = vmatprep.subr.mxu0 0.0
        %6478 = vmatpush2.msra.mxu0 0.0
        %6479 = vmatprep.subr.mxu0 0.0
        %6480 = vmatpush2.msra.mxu0 0.0
        %6481 = vmatprep.subr.mxu0 0.0
        %6482 = vmatpush2.msra.mxu0 0.0
        %6483 = vmatprep.subr.mxu0 0.0
        %6484 = vmatpush2.msra.mxu0 0.0
        %6485 = vmatprep.subr.mxu0 0.0
        %6486 = vmatpush2.msra.mxu0 0.0
        %6487 = vmatprep.mubr.f32.mxu0 0.0
        %6488 = vmatmul.mubr.f32.gmra.mxu0 %v6418
        %v6489 = vpop.f32.mrf.mxu0
        %v6490 = vadd.f32 0.0, %v6489
        %v6491 = vpop.f32.mrf.mxu0
        %6492 = vmatprep.mubr.f32.mxu0 0.0
        %6493 = vmatmul.mubr.f32.gmra.mxu0 %v6421
        %v6494 = vpop.f32.mrf.mxu0
        %v6495 = vadd.f32 0.0, %v6494
        %v6496 = vpop.f32.mrf.mxu0
        %6497 = vdwg.mxu0
        %6500 = vrot.lane.b32.xlu0 %v6490, 32
        %v6501 = vpop.permute.xlu0 %6500
        %6502 = vrot.lane.b32.xlu0 %v6495, 32
        %v6503 = vpop.permute.xlu0 %6502
        %v6506 = vsel %vm2369, %v4875, %v6501
        %v6507 = vsel %vm2369, %v4876, %v6503
        %v6509 = vsel %vm2236, %v6506, 0
        %v6512 = vsel %vm2236, %v6507, 0
        %6514 = vmatprep.subr.mxu0 0.0
        %6515 = vmatpush1.msra.mxu0 0.0
        %6516 = vmatprep.subr.mxu0 0.0
        %6517 = vmatpush1.msra.mxu0 0.0
        %6518 = vmatprep.subr.mxu0 0.0
        %6519 = vmatpush1.msra.mxu0 0.0
        %6520 = vmatprep.subr.mxu0 0.0
        %6521 = vmatpush1.msra.mxu0 0.0
        %6522 = vmatprep.subr.mxu0 0.0
        %6523 = vmatpush1.msra.mxu0 0.0
        %6524 = vmatprep.subr.mxu0 0.0
        %6525 = vmatpush1.msra.mxu0 0.0
        %6526 = vmatprep.subr.mxu0 0.0
        %6527 = vmatpush1.msra.mxu0 0.0
        %6528 = vmatprep.subr.mxu0 0.0
        %6529 = vmatpush1.msra.mxu0 0.0
        %6530 = vmatprep.subr.mxu0 0.0
        %6531 = vmatpush1.msra.mxu0 %v4430
        %6532 = vmatprep.subr.mxu0 0.0
        %6533 = vmatpush1.msra.mxu0 %v4429
        %6534 = vmatprep.subr.mxu0 0.0
        %6535 = vmatpush1.msra.mxu0 %v4428
        %6536 = vmatprep.subr.mxu0 0.0
        %6537 = vmatpush1.msra.mxu0 %v4427
        %6538 = vmatprep.subr.mxu0 0.0
        %6539 = vmatpush1.msra.mxu0 %v4426
        %6540 = vmatprep.subr.mxu0 0.0
        %6541 = vmatpush1.msra.mxu0 %v4425
        %6542 = vmatprep.subr.mxu0 0.0
        %6543 = vmatpush1.msra.mxu0 %v4424
        %6544 = vmatprep.subr.mxu0 0.0
        %6545 = vmatpush1.msra.mxu0 %v4423
        %6546 = vmatprep.subr.mxu0 0.0
        %6547 = vmatpush2.msra.mxu0 0.0
        %6548 = vmatprep.subr.mxu0 0.0
        %6549 = vmatpush2.msra.mxu0 0.0
        %6550 = vmatprep.subr.mxu0 0.0
        %6551 = vmatpush2.msra.mxu0 0.0
        %6552 = vmatprep.subr.mxu0 0.0
        %6553 = vmatpush2.msra.mxu0 0.0
        %6554 = vmatprep.subr.mxu0 0.0
        %6555 = vmatpush2.msra.mxu0 0.0
        %6556 = vmatprep.subr.mxu0 0.0
        %6557 = vmatpush2.msra.mxu0 0.0
        %6558 = vmatprep.subr.mxu0 0.0
        %6559 = vmatpush2.msra.mxu0 0.0
        %6560 = vmatprep.subr.mxu0 0.0
        %6561 = vmatpush2.msra.mxu0 0.0
        %6562 = vmatprep.subr.mxu0 0.0
        %6563 = vmatpush2.msra.mxu0 0.0
        %6564 = vmatprep.subr.mxu0 0.0
        %6565 = vmatpush2.msra.mxu0 0.0
        %6566 = vmatprep.subr.mxu0 0.0
        %6567 = vmatpush2.msra.mxu0 0.0
        %6568 = vmatprep.subr.mxu0 0.0
        %6569 = vmatpush2.msra.mxu0 0.0
        %6570 = vmatprep.subr.mxu0 0.0
        %6571 = vmatpush2.msra.mxu0 0.0
        %6572 = vmatprep.subr.mxu0 0.0
        %6573 = vmatpush2.msra.mxu0 0.0
        %6574 = vmatprep.subr.mxu0 0.0
        %6575 = vmatpush2.msra.mxu0 0.0
        %6576 = vmatprep.subr.mxu0 0.0
        %6577 = vmatpush2.msra.mxu0 0.0
        %6578 = vmatprep.mubr.f32.mxu0 0.0
        %6579 = vmatmul.mubr.f32.gmra.mxu0 %v6509
        %v6580 = vpop.f32.mrf.mxu0
        %v6581 = vadd.f32 %v4436, %v6580
        %v6582 = vpop.f32.mrf.mxu0
        %6583 = vmatprep.mubr.f32.mxu0 0.0
        %6584 = vmatmul.mubr.f32.gmra.mxu0 %v6512
        %v6585 = vpop.f32.mrf.mxu0
        %v6586 = vadd.f32 %v4436, %v6585
        %v6587 = vpop.f32.mrf.mxu0
        %6588 = vdwg.mxu0
        %6589 = vmatprep.subr.mxu0 0.0
        %6590 = vmatpush1.msra.mxu0 0.0
        %6591 = vmatprep.subr.mxu0 0.0
        %6592 = vmatpush1.msra.mxu0 0.0
        %6593 = vmatprep.subr.mxu0 0.0
        %6594 = vmatpush1.msra.mxu0 0.0
        %6595 = vmatprep.subr.mxu0 0.0
        %6596 = vmatpush1.msra.mxu0 0.0
        %6597 = vmatprep.subr.mxu0 0.0
        %6598 = vmatpush1.msra.mxu0 0.0
        %6599 = vmatprep.subr.mxu0 0.0
        %6600 = vmatpush1.msra.mxu0 0.0
        %6601 = vmatprep.subr.mxu0 0.0
        %6602 = vmatpush1.msra.mxu0 0.0
        %6603 = vmatprep.subr.mxu0 0.0
        %6604 = vmatpush1.msra.mxu0 0.0
        %6605 = vmatprep.subr.mxu0 0.0
        %6606 = vmatpush1.msra.mxu0 0.0
        %6607 = vmatprep.subr.mxu0 0.0
        %6608 = vmatpush1.msra.mxu0 0.0
        %6609 = vmatprep.subr.mxu0 0.0
        %6610 = vmatpush1.msra.mxu0 0.0
        %6611 = vmatprep.subr.mxu0 0.0
        %6612 = vmatpush1.msra.mxu0 0.0
        %6613 = vmatprep.subr.mxu0 0.0
        %6614 = vmatpush1.msra.mxu0 0.0
        %6615 = vmatprep.subr.mxu0 0.0
        %6616 = vmatpush1.msra.mxu0 0.0
        %6617 = vmatprep.subr.mxu0 0.0
        %6618 = vmatpush1.msra.mxu0 %v5681
        %6619 = vmatprep.subr.mxu0 0.0
        %6620 = vmatpush1.msra.mxu0 %v5676
        %6621 = vmatprep.subr.mxu0 0.0
        %6622 = vmatpush2.msra.mxu0 0.0
        %6623 = vmatprep.subr.mxu0 0.0
        %6624 = vmatpush2.msra.mxu0 0.0
        %6625 = vmatprep.subr.mxu0 0.0
        %6626 = vmatpush2.msra.mxu0 0.0
        %6627 = vmatprep.subr.mxu0 0.0
        %6628 = vmatpush2.msra.mxu0 0.0
        %6629 = vmatprep.subr.mxu0 0.0
        %6630 = vmatpush2.msra.mxu0 0.0
        %6631 = vmatprep.subr.mxu0 0.0
        %6632 = vmatpush2.msra.mxu0 0.0
        %6633 = vmatprep.subr.mxu0 0.0
        %6634 = vmatpush2.msra.mxu0 0.0
        %6635 = vmatprep.subr.mxu0 0.0
        %6636 = vmatpush2.msra.mxu0 0.0
        %6637 = vmatprep.subr.mxu0 0.0
        %6638 = vmatpush2.msra.mxu0 0.0
        %6639 = vmatprep.subr.mxu0 0.0
        %6640 = vmatpush2.msra.mxu0 0.0
        %6641 = vmatprep.subr.mxu0 0.0
        %6642 = vmatpush2.msra.mxu0 0.0
        %6643 = vmatprep.subr.mxu0 0.0
        %6644 = vmatpush2.msra.mxu0 0.0
        %6645 = vmatprep.subr.mxu0 0.0
        %6646 = vmatpush2.msra.mxu0 0.0
        %6647 = vmatprep.subr.mxu0 0.0
        %6648 = vmatpush2.msra.mxu0 0.0
        %6649 = vmatprep.subr.mxu0 0.0
        %6650 = vmatpush2.msra.mxu0 0.0
        %6651 = vmatprep.subr.mxu0 0.0
        %6652 = vmatpush2.msra.mxu0 0.0
        %6653 = vmatprep.mubr.f32.mxu0 0.0
        %6654 = vmatmul.mubr.f32.gmra.mxu0 %v4522
        %v6655 = vpop.f32.mrf.mxu0
        %v6656 = vadd.f32 0.0, %v6655
        %v6657 = vpop.f32.mrf.mxu0
        %6658 = vdwg.mxu0
        %6659 = vmatprep.subr.mxu0 0.0
        %6660 = vmatpush1.msra.mxu0 0.0
        %6661 = vmatprep.subr.mxu0 0.0
        %6662 = vmatpush1.msra.mxu0 0.0
        %6663 = vmatprep.subr.mxu0 0.0
        %6664 = vmatpush1.msra.mxu0 0.0
        %6665 = vmatprep.subr.mxu0 0.0
        %6666 = vmatpush1.msra.mxu0 0.0
        %6667 = vmatprep.subr.mxu0 0.0
        %6668 = vmatpush1.msra.mxu0 0.0
        %6669 = vmatprep.subr.mxu0 0.0
        %6670 = vmatpush1.msra.mxu0 0.0
        %6671 = vmatprep.subr.mxu0 0.0
        %6672 = vmatpush1.msra.mxu0 0.0
        %6673 = vmatprep.subr.mxu0 0.0
        %6674 = vmatpush1.msra.mxu0 0.0
        %6675 = vmatprep.subr.mxu0 0.0
        %6676 = vmatpush1.msra.mxu0 0.0
        %6677 = vmatprep.subr.mxu0 0.0
        %6678 = vmatpush1.msra.mxu0 0.0
        %6679 = vmatprep.subr.mxu0 0.0
        %6680 = vmatpush1.msra.mxu0 0.0
        %6681 = vmatprep.subr.mxu0 0.0
        %6682 = vmatpush1.msra.mxu0 0.0
        %6683 = vmatprep.subr.mxu0 0.0
        %6684 = vmatpush1.msra.mxu0 0.0
        %6685 = vmatprep.subr.mxu0 0.0
        %6686 = vmatpush1.msra.mxu0 0.0
        %6687 = vmatprep.subr.mxu0 0.0
        %6688 = vmatpush1.msra.mxu0 %v6586
        %6689 = vmatprep.subr.mxu0 0.0
        %6690 = vmatpush1.msra.mxu0 %v6581
        %6691 = vmatprep.subr.mxu0 0.0
        %6692 = vmatpush2.msra.mxu0 0.0
        %6693 = vmatprep.subr.mxu0 0.0
        %6694 = vmatpush2.msra.mxu0 0.0
        %6695 = vmatprep.subr.mxu0 0.0
        %6696 = vmatpush2.msra.mxu0 0.0
        %6697 = vmatprep.subr.mxu0 0.0
        %6698 = vmatpush2.msra.mxu0 0.0
        %6699 = vmatprep.subr.mxu0 0.0
        %6700 = vmatpush2.msra.mxu0 0.0
        %6701 = vmatprep.subr.mxu0 0.0
        %6702 = vmatpush2.msra.mxu0 0.0
        %6703 = vmatprep.subr.mxu0 0.0
        %6704 = vmatpush2.msra.mxu0 0.0
        %6705 = vmatprep.subr.mxu0 0.0
        %6706 = vmatpush2.msra.mxu0 0.0
        %6707 = vmatprep.subr.mxu0 0.0
        %6708 = vmatpush2.msra.mxu0 0.0
        %6709 = vmatprep.subr.mxu0 0.0
        %6710 = vmatpush2.msra.mxu0 0.0
        %6711 = vmatprep.subr.mxu0 0.0
        %6712 = vmatpush2.msra.mxu0 0.0
        %6713 = vmatprep.subr.mxu0 0.0
        %6714 = vmatpush2.msra.mxu0 0.0
        %6715 = vmatprep.subr.mxu0 0.0
        %6716 = vmatpush2.msra.mxu0 0.0
        %6717 = vmatprep.subr.mxu0 0.0
        %6718 = vmatpush2.msra.mxu0 0.0
        %6719 = vmatprep.subr.mxu0 0.0
        %6720 = vmatpush2.msra.mxu0 0.0
        %6721 = vmatprep.subr.mxu0 0.0
        %6722 = vmatpush2.msra.mxu0 0.0
        %6723 = vmatprep.mubr.f32.mxu0 0.0
        %6724 = vmatmul.mubr.f32.gmra.mxu0 %v4522
        %v6725 = vpop.f32.mrf.mxu0
        %v6726 = vadd.f32 0.0, %v6725
        %v6727 = vpop.f32.mrf.mxu0
        %6728 = vdwg.mxu0
        %v6729 = vlaneseq
        %v6730 = vshrl.u32 %v6729, 7
        %v6731 = vsub.s32 0, %v6730
        %v6732 = vrot.slane %v6656, %v6731
        %v6733 = vmul.f32 %v6581, %v6732
        %v6734 = vmul.f32 %v6586, %v6732
        %v6735 = vmul.f32 %v5676, %v6732
        %v6736 = vmul.f32 %v5681, %v6732
        %v6737 = vlaneseq
        %v6738 = vshrl.u32 %v6737, 7
        %v6739 = vsub.s32 0, %v6738
        %v6740 = vrot.slane %v6726, %v6739
        %v6741 = vmul.f32 %v6581, %v6740
        %v6742 = vmul.f32 %v6586, %v6740
        %v6743 = vmul.f32 %v5676, %v6740
        %v6744 = vmul.f32 %v5681, %v6740
        %v6745 = vmul.f32 %v6733, %v6733
        %v6746 = vmul.f32 %v6734, %v6734
        %v6747 = vmul.f32 %v6735, %v6735
        %v6748 = vmul.f32 %v6736, %v6736
        %v6749 = vmul.f32 %v6741, %v6741
        %v6750 = vmul.f32 %v6742, %v6742
        %v6751 = vmul.f32 %v6743, %v6743
        %v6752 = vmul.f32 %v6744, %v6744
        %v6753 = vsel %vm2369, %v6745, 0.0
        %6754 = vadd.xlane.f32.xlu0 %v6753
        %v6755 = vpop.xlane.xlu0 %6754
        %v6756 = vsel %vm2369, %v6746, 0.0
        %6757 = vadd.xlane.f32.xlu0 %v6756
        %v6758 = vpop.xlane.xlu0 %6757
        %v6759 = vsel %vm2369, %v6747, 0.0
        %6760 = vadd.xlane.f32.xlu0 %v6759
        %v6761 = vpop.xlane.xlu0 %6760
        %v6762 = vsel %vm2369, %v6748, 0.0
        %6763 = vadd.xlane.f32.xlu0 %v6762
        %v6764 = vpop.xlane.xlu0 %6763
        %v6765 = vsel %vm2369, %v6749, 0.0
        %6766 = vadd.xlane.f32.xlu0 %v6765
        %v6767 = vpop.xlane.xlu0 %6766
        %v6768 = vsel %vm2369, %v6750, 0.0
        %6769 = vadd.xlane.f32.xlu0 %v6768
        %v6770 = vpop.xlane.xlu0 %6769
        %v6771 = vsel %vm2369, %v6751, 0.0
        %6772 = vadd.xlane.f32.xlu0 %v6771
        %v6773 = vpop.xlane.xlu0 %6772
        %v6774 = vsel %vm2369, %v6752, 0.0
        %6775 = vadd.xlane.f32.xlu0 %v6774
        %v6776 = vpop.xlane.xlu0 %6775
        %v6777 = vmax.f32 %v6755, 1e-24
        %v6778 = vmax.f32 %v6758, 1e-24
        %v6779 = vmax.f32 %v6761, 1e-24
        %v6780 = vmax.f32 %v6764, 1e-24
        %v6781 = vmax.f32 %v6767, 1e-24
        %v6782 = vmax.f32 %v6770, 1e-24
        %v6783 = vmax.f32 %v6773, 1e-24
        %v6784 = vmax.f32 %v6776, 1e-24
        %v6785 = vrsqrt.pop %v6777
        %v6786 = vrsqrt.pop %v6778
        %v6787 = vrsqrt.pop %v6779
        %v6788 = vrsqrt.pop %v6780
        %v6789 = vrsqrt.pop %v6781
        %v6790 = vrsqrt.pop %v6782
        %v6791 = vrsqrt.pop %v6783
        %v6792 = vrsqrt.pop %v6784
        %v6793 = vmul.f32 %v6733, %v6785
        %v6794 = vmul.f32 %v6734, %v6786
        %v6795 = vmul.f32 %v6735, %v6787
        %v6796 = vmul.f32 %v6736, %v6788
        %v6797 = vmul.f32 %v6741, %v6789
        %v6798 = vmul.f32 %v6742, %v6790
        %v6799 = vmul.f32 %v6743, %v6791
        %v6800 = vmul.f32 %v6744, %v6792
        %v6801 = vmul.f32 %v4737, %v6793
        %v6802 = vmul.f32 %v4737, %v6794
        %v6803 = vmul.f32 %v4741, %v6795
        %v6804 = vmul.f32 %v4741, %v6796
        %v6805 = vadd.f32 %v6801, %v6803
        %v6806 = vadd.f32 %v6802, %v6804
        %v6807 = vmul.f32 %v4747, %v6797
        %v6808 = vmul.f32 %v4747, %v6798
        %v6809 = vadd.f32 %v6805, %v6807
        %v6810 = vadd.f32 %v6806, %v6808
        %v6811 = vmul.f32 %v4753, %v6799
        %v6812 = vmul.f32 %v4753, %v6800
        %v6813 = vadd.f32 %v6809, %v6811
        %v6814 = vadd.f32 %v6810, %v6812
        %v6815 = vadd.f32 %v6813, %v4759
        %v6816 = vadd.f32 %v6814, %v4759
        %v6817 = vmul.f32 %v4763, %v6793
        %v6818 = vmul.f32 %v4763, %v6794
        %v6819 = vmul.f32 %v4767, %v6795
        %v6820 = vmul.f32 %v4767, %v6796
        %v6821 = vadd.f32 %v6817, %v6819
        %v6822 = vadd.f32 %v6818, %v6820
        %v6823 = vmul.f32 %v4773, %v6797
        %v6824 = vmul.f32 %v4773, %v6798
        %v6825 = vadd.f32 %v6821, %v6823
        %v6826 = vadd.f32 %v6822, %v6824
        %v6827 = vmul.f32 %v4779, %v6799
        %v6828 = vmul.f32 %v4779, %v6800
        %v6829 = vadd.f32 %v6825, %v6827
        %v6830 = vadd.f32 %v6826, %v6828
        %v6831 = vadd.f32 %v6829, %v4785
        %v6832 = vadd.f32 %v6830, %v4785
        %v6833 = vsel %vm2369, %v6815, 0.0
        %6834 = vadd.xlane.f32.xlu0 %v6833
        %v6835 = vpop.xlane.xlu0 %6834
        %v6836 = vsel %vm2369, %v6816, 0.0
        %6837 = vadd.xlane.f32.xlu0 %v6836
        %v6838 = vpop.xlane.xlu0 %6837
        %v6839 = vmul.f32 %v6835, %v4796
        %v6840 = vmul.f32 %v6838, %v4796
        %v6841 = vsub.f32 %v6815, %v6839
        %v6842 = vsub.f32 %v6816, %v6840
        %v6843 = vmul.f32 %v6841, %v6841
        %v6844 = vmul.f32 %v6842, %v6842
        %v6845 = vsel %vm2369, %v6843, 0.0
        %6846 = vadd.xlane.f32.xlu0 %v6845
        %v6847 = vpop.xlane.xlu0 %6846
        %v6848 = vsel %vm2369, %v6844, 0.0
        %6849 = vadd.xlane.f32.xlu0 %v6848
        %v6850 = vpop.xlane.xlu0 %6849
        %v6851 = vmul.f32 %v6847, %v4796
        %v6852 = vmul.f32 %v6850, %v4796
        %v6853 = vadd.f32 %v6851, 1e-05
        %v6854 = vadd.f32 %v6852, 1e-05
        %v6855 = vrsqrt.pop %v6853
        %v6856 = vrsqrt.pop %v6854
        %v6857 = vmul.f32 %v6841, %v6855
        %v6858 = vmul.f32 %v6842, %v6856
        %v6859 = vmul.f32 %v6857, %v4821
        %v6860 = vmul.f32 %v6858, %v4821
        %v6861 = vadd.f32 %v6859, %v4829
        %v6862 = vadd.f32 %v6860, %v4829
        %v6863 = vsel %vm2369, %v6831, 0.0
        %6864 = vadd.xlane.f32.xlu0 %v6863
        %v6865 = vpop.xlane.xlu0 %6864
        %v6866 = vsel %vm2369, %v6832, 0.0
        %6867 = vadd.xlane.f32.xlu0 %v6866
        %v6868 = vpop.xlane.xlu0 %6867
        %v6869 = vmul.f32 %v6865, %v4796
        %v6870 = vmul.f32 %v6868, %v4796
        %v6871 = vsub.f32 %v6831, %v6869
        %v6872 = vsub.f32 %v6832, %v6870
        %v6873 = vmul.f32 %v6871, %v6871
        %v6874 = vmul.f32 %v6872, %v6872
        %v6875 = vsel %vm2369, %v6873, 0.0
        %6876 = vadd.xlane.f32.xlu0 %v6875
        %v6877 = vpop.xlane.xlu0 %6876
        %v6878 = vsel %vm2369, %v6874, 0.0
        %6879 = vadd.xlane.f32.xlu0 %v6878
        %v6880 = vpop.xlane.xlu0 %6879
        %v6881 = vmul.f32 %v6877, %v4796
        %v6882 = vmul.f32 %v6880, %v4796
        %v6883 = vadd.f32 %v6881, 1e-05
        %v6884 = vadd.f32 %v6882, 1e-05
        %v6885 = vrsqrt.pop %v6883
        %v6886 = vrsqrt.pop %v6884
        %v6887 = vmul.f32 %v6871, %v6885
        %v6888 = vmul.f32 %v6872, %v6886
        %v6889 = vmul.f32 %v6887, %v4865
        %v6890 = vmul.f32 %v6888, %v4865
        %v6891 = vadd.f32 %v6889, %v4873
        %v6892 = vadd.f32 %v6890, %v4873
        %6895 = vrot.lane.b32.xlu0 %v6861, 32
        %v6896 = vpop.permute.xlu0 %6895
        %6897 = vrot.lane.b32.xlu0 %v6862, 32
        %v6898 = vpop.permute.xlu0 %6897
        %6903 = vrot.lane.b32.xlu0 %v6891, 64
        %v6904 = vpop.permute.xlu0 %6903
        %6905 = vrot.lane.b32.xlu0 %v6892, 64
        %v6906 = vpop.permute.xlu0 %6905
        %v6909 = vsel %vm2369, %v2337, %v6896
        %v6910 = vsel %vm2369, %v2342, %v6898
        %v6911 = vsel %vm2236, %v6909, %v6904
        %v6912 = vsel %vm2236, %v6910, %v6906
        %v6913 = vld [vmem:[%s101] sm:$0xff]
        %v6914 = vld [vmem:[%s101 + $0x8] sm:$0xff]
        %v6915 = vld [vmem:[%s101 + $0x10] sm:$0xff]
        %v6916 = vld [vmem:[%s101 + $0x18] sm:$0xff]
        %v6917 = vld [vmem:[%s101 + $0x20] sm:$0xff]
        %v6918 = vld [vmem:[%s101 + $0x28] sm:$0xff]
        %v6919 = vld [vmem:[%s101 + $0x30] sm:$0xff]
        %v6920 = vld [vmem:[%s101 + $0x38] sm:$0xff]
        %v6921 = vld [vmem:[%s101 + $0x40] sm:$0xff]
        %v6922 = vld [vmem:[%s101 + $0x48] sm:$0xff]
        %v6923 = vld [vmem:[%s101 + $0x50] sm:$0xff]
        %v6924 = vld [vmem:[%s101 + $0x58] sm:$0xff]
        %v6925 = vld [vmem:[#allocation46] sm:$0x1]
        %v6927 = vlaneseq
        %v6928 = vshrl.u32 %v6927, 7
        %v6929 = vsub.s32 0, %v6928
        %v6930 = vrot.slane %v6925, %v6929
        %v6933 = vsel %vm2911, %v6911, 0
        %v6936 = vsel %vm2911, %v6912, 0
        %6938 = vmatprep.subr.mxu0 0.0
        %6939 = vmatpush1.msra.mxu0 0.0
        %6940 = vmatprep.subr.mxu0 0.0
        %6941 = vmatpush1.msra.mxu0 0.0
        %6942 = vmatprep.subr.mxu0 0.0
        %6943 = vmatpush1.msra.mxu0 0.0
        %6944 = vmatprep.subr.mxu0 0.0
        %6945 = vmatpush1.msra.mxu0 0.0
        %6946 = vmatprep.subr.mxu0 0.0
        %6947 = vmatpush1.msra.mxu0 %v6924
        %6948 = vmatprep.subr.mxu0 0.0
        %6949 = vmatpush1.msra.mxu0 %v6923
        %6950 = vmatprep.subr.mxu0 0.0
        %6951 = vmatpush1.msra.mxu0 %v6922
        %6952 = vmatprep.subr.mxu0 0.0
        %6953 = vmatpush1.msra.mxu0 %v6921
        %6954 = vmatprep.subr.mxu0 0.0
        %6955 = vmatpush1.msra.mxu0 %v6920
        %6956 = vmatprep.subr.mxu0 0.0
        %6957 = vmatpush1.msra.mxu0 %v6919
        %6958 = vmatprep.subr.mxu0 0.0
        %6959 = vmatpush1.msra.mxu0 %v6918
        %6960 = vmatprep.subr.mxu0 0.0
        %6961 = vmatpush1.msra.mxu0 %v6917
        %6962 = vmatprep.subr.mxu0 0.0
        %6963 = vmatpush1.msra.mxu0 %v6916
        %6964 = vmatprep.subr.mxu0 0.0
        %6965 = vmatpush1.msra.mxu0 %v6915
        %6966 = vmatprep.subr.mxu0 0.0
        %6967 = vmatpush1.msra.mxu0 %v6914
        %6968 = vmatprep.subr.mxu0 0.0
        %6969 = vmatpush1.msra.mxu0 %v6913
        %6970 = vmatprep.subr.mxu0 0.0
        %6971 = vmatpush2.msra.mxu0 0.0
        %6972 = vmatprep.subr.mxu0 0.0
        %6973 = vmatpush2.msra.mxu0 0.0
        %6974 = vmatprep.subr.mxu0 0.0
        %6975 = vmatpush2.msra.mxu0 0.0
        %6976 = vmatprep.subr.mxu0 0.0
        %6977 = vmatpush2.msra.mxu0 0.0
        %6978 = vmatprep.subr.mxu0 0.0
        %6979 = vmatpush2.msra.mxu0 0.0
        %6980 = vmatprep.subr.mxu0 0.0
        %6981 = vmatpush2.msra.mxu0 0.0
        %6982 = vmatprep.subr.mxu0 0.0
        %6983 = vmatpush2.msra.mxu0 0.0
        %6984 = vmatprep.subr.mxu0 0.0
        %6985 = vmatpush2.msra.mxu0 0.0
        %6986 = vmatprep.subr.mxu0 0.0
        %6987 = vmatpush2.msra.mxu0 0.0
        %6988 = vmatprep.subr.mxu0 0.0
        %6989 = vmatpush2.msra.mxu0 0.0
        %6990 = vmatprep.subr.mxu0 0.0
        %6991 = vmatpush2.msra.mxu0 0.0
        %6992 = vmatprep.subr.mxu0 0.0
        %6993 = vmatpush2.msra.mxu0 0.0
        %6994 = vmatprep.subr.mxu0 0.0
        %6995 = vmatpush2.msra.mxu0 0.0
        %6996 = vmatprep.subr.mxu0 0.0
        %6997 = vmatpush2.msra.mxu0 0.0
        %6998 = vmatprep.subr.mxu0 0.0
        %6999 = vmatpush2.msra.mxu0 0.0
        %7000 = vmatprep.subr.mxu0 0.0
        %7001 = vmatpush2.msra.mxu0 0.0
        %7002 = vmatprep.mubr.f32.mxu0 0.0
        %7003 = vmatmul.mubr.f32.gmra.mxu0 %v6933
        %v7004 = vpop.f32.mrf.mxu0
        %v7005 = vadd.f32 %v6930, %v7004
        %v7006 = vpop.f32.mrf.mxu0
        %7007 = vmatprep.mubr.f32.mxu0 0.0
        %7008 = vmatmul.mubr.f32.gmra.mxu0 %v6936
        %v7009 = vpop.f32.mrf.mxu0
        %v7010 = vadd.f32 %v6930, %v7009
        %v7011 = vpop.f32.mrf.mxu0
        %7012 = vdwg.mxu0
        %7013 = vst.msk [vmem:[%s2195] sm:$0xff] %vm2369, %v7005
        %7014 = vst.msk [vmem:[%s2195 + $0x8] sm:$0xff] %vm2369, %v7010
        %s7015 = sand.u32 %s1388, 1
        %s7016 = scalar_lea.sflag [#allocation5], %s7015
        %s7017 = sand.u32 %s1388, 1
        %s7018 = smul.addr %s7017, 16
        %s7019 = scalar_lea.vmem [#allocation52], %s7018
        // Predicated region
        $region369: #{lcgn_forward.1} parent=243 // pred_check
          %p7020 = pneg %p1398
        $region370: #{lcgn_forward.1} parent=243 // pred_check_branch
          %7022 = sbr.rel (%p7020) target = $region372
        $region371: #{lcgn_forward.1} parent=243 // pred_region
          %s7024 = ssub.s32 256, 256
          %7025 = vsyncadd %s7016, %s7024
          %s7026 = smul.addr %s149, 2
          %s7027 = smul.addr %s7026, 128
          %s7028 = scalar_lea.hbm %s113, %s7027
          %s7029 = sshll.u32 %s7019, 4
          %s7030 = int_to_ptr.vmem [resolvable:$true] %s7029
          %7035 = dma.vmem_to_hbm [thread:$0]  %s7030, 256, %s7028, %s7016, 128, 128, 8
        $region372: #{lcgn_forward.1} parent=243 // pred_fallthru
          _
      $region244: #{lcgn_forward.1} parent=5 // pred_fallthru
        _
      %p7036 = scmp.le.s32.totalorder 2, %s144
      // Predicated region
      $region373: #{lcgn_forward.1} parent=5 // pred_check
        %p7037 = pneg %p7036
      $region374: #{lcgn_forward.1} parent=5 // pred_check_branch
        %7039 = sbr.rel (%p7037) target = $region376
      $region375: #{lcgn_forward.1} parent=5 // pred_region
        %s7040 = ssub.s32 %s144, 2
        // Predicated region
        $region377: #{lcgn_forward.1} parent=375 // pred_check
          %p7041 = pneg %p1404
        $region378: #{lcgn_forward.1} parent=375 // pred_check_branch
          %7043 = sbr.rel (%p7041) target = $region380
        $region379: #{lcgn_forward.1} parent=375 // pred_region
          %s7044 = sand.u32 %s1389, 1
          %s7045 = scalar_lea.sflag [#allocation5], %s7044
          %s7046 = sand.u32 %s1389, 1
          %s7047 = smul.addr %s7046, 16
          %s7048 = scalar_lea.vmem [#allocation52], %s7047
          %7049 = dma.done %s7045, 256
        $region380: #{lcgn_forward.1} parent=375 // pred_fallthru
          _
      $region376: #{lcgn_forward.1} parent=5 // pred_fallthru
        _
    $region6: #{lcgn_forward.1} parent=1 // loop_footer
      %s148 = sadd.s32 1, %s144
    $region7: #{lcgn_forward.1} parent=1 // loop_footer_branch
      %143 = sbr.rel target = $region3
    $region8: #{lcgn_forward.1} parent=1 // loop_exit
      _
    %7050 = vsyncpa [#allocation4], 1
    %s7051 = scalar_lea.sflag [#allocation4], 1
    %7052 = vsyncpa %s7051, 1
    %7053 = vsyncpa [#allocation8], 1
    %s7054 = scalar_lea.sflag [#allocation8], 1
    %7055 = vsyncpa %s7054, 1
    %7056 = vsyncpa [#allocation11], 1
    %7057 = vsyncpa [#allocation14], 1
    %7058 = vsyncpa [#allocation17], 1
    %7059 = vsyncpa [#allocation20], 1
    %7060 = vsyncpa [#allocation23], 1
    %7061 = vsyncpa [#allocation26], 1
    %7062 = vsyncpa [#allocation29], 1
    %7063 = vsyncpa [#allocation32], 1
    %7064 = vsyncpa [#allocation35], 1
    %7065 = vsyncpa [#allocation38], 1
    %7066 = vsyncpa [#allocation41], 1
    %7067 = vsyncpa [#allocation44], 1
    %7068 = vsyncpa [#allocation47], 1
    %7069 = vsyncpa [#allocation5], 1
    %s7070 = scalar_lea.sflag [#allocation5], 1
    %7071 = vsyncpa %s7070, 1
    %7072 = vsyncpa [#allocation6], 1
    %s7073 = scalar_lea.sflag [#allocation6], 1
    %7074 = vsyncpa %s7073, 1
    %7075 = vsyncpa [#allocation50], 1

</llo_original>
